<compile_context>
chip_gen: v6e
topology: v6e:2x2x1
jax: 0.10.0
libtpu: 0.0.40
codegen_flags: <defaults>
</compile_context>

<pallas_src>
import functools

import numpy as np
import jax
import jax.numpy as jnp
from jax.experimental import pallas as pl
from jax.experimental.pallas import tpu as pltpu


# ----------------------------------------------------------------------------
# Pallas kernels: GEMM + bias (+ReLU)  and  GEMM + bias + GDN/IGDN epilogue
# ----------------------------------------------------------------------------
def _gemm_bias_kernel(a_ref, w_ref, b_ref, o_ref, *, act):
    acc = jnp.dot(a_ref[...], w_ref[...], preferred_element_type=jnp.float32)
    acc = acc + b_ref[...]
    if act == "relu":
        acc = jnp.maximum(acc, 0.0)
    o_ref[...] = acc


def _gemm_bias_gdn_kernel(a_ref, w_ref, b_ref, g_ref, bt_ref, o_ref, *, inverse):
    acc = jnp.dot(a_ref[...], w_ref[...], preferred_element_type=jnp.float32)
    acc = acc + b_ref[...]
    # GDN norm pool: s = (acc^2) @ gamma^T + beta   (second dot also on the MXU)
    s = jnp.dot((acc * acc).astype(g_ref.dtype), g_ref[...],
                preferred_element_type=jnp.float32) + bt_ref[...]
    s = jnp.maximum(s, 1e-6)            # guard (mirrors non-negative reparam)
    if inverse:
        o_ref[...] = acc * jnp.sqrt(s)          # IGDN
    else:
        o_ref[...] = acc * jax.lax.rsqrt(s)     # GDN (rsqrt -> EUP slot)


# ----------------------------------------------------------------------------
# Tiling helpers
# ----------------------------------------------------------------------------
def _round_up(x, m):
    return ((x + m - 1) // m) * m


def _row_tiling(rows, target=512):
    """Pick row tile: big tiles (amortize grid-step overhead) but >=2 steps
    for v7x's two TensorCores whenever the row count allows it."""
    r8 = max(_round_up(rows, 8), 8)
    n = max(1, -(-r8 // target))
    if n == 1 and r8 >= 16:
        n = 2
    tile = _round_up(-(-r8 // n), 8)
    return tile * n, tile, n


def _fused_gemm(a, layer):
    """(R, Kp) bf16 patches @ (Kp, Coutp) bf16 weights + bias, fused epilogue."""
    R, Kp = a.shape
    Coutp = layer["w"].shape[1]
    Rp, tile_r, n_tiles = _row_tiling(R)
    if Rp != R:
        a = jnp.pad(a, ((0, Rp - R), (0, 0)))

    row = lambda i: (i, 0)
    full = lambda i: (0, 0)
    in_specs = [
        pl.BlockSpec((tile_r, Kp), row),
        pl.BlockSpec((Kp, Coutp), full),
        pl.BlockSpec((1, Coutp), full),
    ]
    args = [a, layer["w"], layer["b"]]
    if "gamma_t" in layer:
        kern = functools.partial(_gemm_bias_gdn_kernel, inverse=layer["inverse"])
        in_specs += [pl.BlockSpec((Coutp, Coutp), full),
                     pl.BlockSpec((1, Coutp), full)]
        args += [layer["gamma_t"], layer["gdn_beta"]]
    else:
        kern = functools.partial(_gemm_bias_kernel, act=layer.get("act"))

    out = pl.pallas_call(
        kern,
        out_shape=jax.ShapeDtypeStruct((Rp, Coutp), jnp.float32),
        grid=(n_tiles,),
        in_specs=in_specs,
        out_specs=pl.BlockSpec((tile_r, Coutp), row),
        compiler_params=pltpu.CompilerParams(dimension_semantics=("parallel",)),
    )(*args)
    return out[:R]


# ----------------------------------------------------------------------------
# Conv / sub-pixel deconv application (patch extraction is glue; GEMM is Pallas)
# ----------------------------------------------------------------------------
def _extract_patches(xp, kh, kw, stride, Ho, Wo, kp):
    B, _, _, Cin = xp.shape
    cols = []
    for i in range(kh):
        for j in range(kw):
            cols.append(xp[:, i:i + stride * (Ho - 1) + 1:stride,
                           j:j + stride * (Wo - 1) + 1:stride, :])
    k = kh * kw * Cin
    if kp > k:                                   # pad K up to a lane multiple
        cols.append(jnp.zeros((B, Ho, Wo, kp - k), xp.dtype))
    return jnp.concatenate(cols, axis=-1).reshape(B * Ho * Wo, kp)


def conv_apply(layer, x):
    B, H, W, _ = x.shape
    k, s, p = layer["k"], layer["stride"], layer["pad"]
    Ho = (H + 2 * p - k) // s + 1
    Wo = (W + 2 * p - k) // s + 1
    xp = jnp.pad(x.astype(jnp.bfloat16), ((0, 0), (p, p), (p, p), (0, 0)))
    a = _extract_patches(xp, k, k, s, Ho, Wo, layer["kp"])
    out = _fused_gemm(a, layer)
    return out[:, :layer["cout"]].reshape(B, Ho, Wo, layer["cout"])


def deconv_apply(layer, x):
    # ConvTranspose2d(k=5, s=2, p=2, op=1) == stride-1 3x3 conv over x padded by
    # one pixel, producing 4*Cout "phase" channels, followed by a pixel shuffle.
    B, H, W, _ = x.shape
    xp = jnp.pad(x.astype(jnp.bfloat16), ((0, 0), (1, 1), (1, 1), (0, 0)))
    a = _extract_patches(xp, 3, 3, 1, H, W, layer["kp"])
    out = _fused_gemm(a, layer)
    C = layer["cout"]
    out = out[:, :4 * C].reshape(B, H, W, 2, 2, C)
    out = jnp.transpose(out, (0, 1, 3, 2, 4, 5)).reshape(B, 2 * H, 2 * W, C)
    return out


# ----------------------------------------------------------------------------
# One-time parameter preprocessing (GEMM-ready, padded, bf16 weights)
# ----------------------------------------------------------------------------
def _prep_gdn(gdn, cout, coutp, phases, inverse):
    gt = np.zeros((coutp, coutp), np.float32)
    bt = np.ones((1, coutp), np.float32)          # padded lanes -> s = 1 (finite)
    g_t = np.asarray(gdn["gamma"], np.float32).T
    be = np.asarray(gdn["beta"], np.float32)
    for ph in range(phases):                      # block-diagonal over phases
        s0 = ph * cout
        gt[s0:s0 + cout, s0:s0 + cout] = g_t
        bt[0, s0:s0 + cout] = be
    return dict(gamma_t=jnp.asarray(gt, jnp.bfloat16),
                gdn_beta=jnp.asarray(bt), inverse=inverse)


def _prep_conv(cp, cin, cout, k, stride, act=None, gdn=None, inverse=False):
    K = k * k * cin
    Kp = _round_up(K, 128)
    Coutp = _round_up(cout, 128)
    w2 = np.transpose(np.asarray(cp["w"], np.float32), (2, 3, 1, 0)).reshape(K, cout)
    w_pad = np.zeros((Kp, Coutp), np.float32)
    w_pad[:K, :cout] = w2
    b_pad = np.zeros((1, Coutp), np.float32)
    b_pad[0, :cout] = np.asarray(cp["b"], np.float32)
    layer = dict(k=k, stride=stride, pad=k // 2, kp=Kp, cout=cout,
                 w=jnp.asarray(w_pad, jnp.bfloat16), b=jnp.asarray(b_pad), act=act)
    if gdn is not None:
        layer.update(_prep_gdn(gdn, cout, Coutp, phases=1, inverse=inverse))
    return layer


# padded-tap offset t in {0,1,2} -> ConvTranspose2d kernel index, per phase r.
_PHASE_TAP = ((4, 2, 0), (None, 3, 1))


def _prep_deconv(dp, cin, cout, act=None, gdn=None, inverse=False):
    w = np.asarray(dp["w"], np.float32)           # (cin, cout, 5, 5)
    wsub = np.zeros((3, 3, cin, 2, 2, cout), np.float32)
    for r in range(2):
        for c in range(2):
            for tr in range(3):
                for tc in range(3):
                    ar, ac = _PHASE_TAP[r][tr], _PHASE_TAP[c][tc]
                    if ar is None or ac is None:
                        continue
                    wsub[tr, tc, :, r, c, :] = w[:, :, ar, ac]
    K = 9 * cin
    cout4 = 4 * cout
    Kp = _round_up(K, 128)
    Coutp = _round_up(cout4, 128)
    w_pad = np.zeros((Kp, Coutp), np.float32)
    w_pad[:K, :cout4] = wsub.reshape(K, cout4)
    b_pad = np.zeros((1, Coutp), np.float32)
    b_pad[0, :cout4] = np.tile(np.asarray(dp["b"], np.float32), 4)
    layer = dict(kp=Kp, cout=cout,
                 w=jnp.asarray(w_pad, jnp.bfloat16), b=jnp.asarray(b_pad), act=act)
    if gdn is not None:
        layer.update(_prep_gdn(gdn, cout, Coutp, phases=4, inverse=inverse))
    return layer


def prepare_model(params, N, M):
    ga, gg = params["ga"], params["ga_gdn"]
    gs, sg = params["gs"], params["gs_gdn"]
    ha, hs = params["ha"], params["hs"]
    return {
        "ga": [_prep_conv(ga[0], 1, N, 5, 2, gdn=gg[0]),
               _prep_conv(ga[1], N, N, 5, 2, gdn=gg[1]),
               _prep_conv(ga[2], N, N, 5, 2, gdn=gg[2]),
               _prep_conv(ga[3], N, M, 5, 2)],
        "ha": [_prep_conv(ha[0], M, N, 3, 1, act="relu"),
               _prep_conv(ha[1], N, N, 5, 2, act="relu"),
               _prep_conv(ha[2], N, N, 5, 2)],
        "hs": [_prep_deconv(hs[0], N, N, act="relu"),
               _prep_deconv(hs[1], N, N, act="relu"),
               _prep_conv(hs[2], N, M, 3, 1, act="relu")],
        "gs": [_prep_deconv(gs[0], M, N, gdn=sg[0], inverse=True),
               _prep_deconv(gs[1], N, N, gdn=sg[1], inverse=True),
               _prep_deconv(gs[2], N, N, gdn=sg[2], inverse=True),
               _prep_deconv(gs[3], N, 1)],
        "eb": params["eb"],
    }


# ----------------------------------------------------------------------------
# Entropy bottleneck (factorized prior) + Gaussian conditional   (plain JAX)
# ----------------------------------------------------------------------------
def entropy_bottleneck_forward(z_nhwc, eb):
    B, H, W, C = z_nhwc.shape
    v = jnp.transpose(z_nhwc, (3, 0, 1, 2)).reshape(C, -1)          # (C, L)
    medians = eb["quantiles"][:, 0, 1][:, None]
    v_hat = jnp.round(v - medians) + medians                        # eval-mode quantize

    def logits_cumulative(u):
        logits = u[:, None, :]                                      # (C,1,L)
        for i, m in enumerate(eb["matrices"]):
            logits = jnp.einsum("cij,cjl->cil", jax.nn.softplus(m), logits)
            logits = logits + eb["biases"][i]
            if i < len(eb["factors"]):
                logits = logits + jnp.tanh(eb["factors"][i]) * jnp.tanh(logits)
        return logits[:, 0, :]

    lower = logits_cumulative(v_hat - 0.5)
    upper = logits_cumulative(v_hat + 0.5)
    sign = -jnp.sign(lower + upper)                                 # stability trick
    lik = jnp.abs(jax.nn.sigmoid(sign * upper) - jax.nn.sigmoid(sign * lower))
    lik = jnp.maximum(lik, 1e-9)                                    # likelihood bound

    z_hat = jnp.transpose(v_hat.reshape(C, B, H, W), (1, 2, 3, 0))
    z_lik = jnp.transpose(lik.reshape(C, B, H, W), (1, 2, 3, 0))
    return z_hat, z_lik


def gaussian_conditional_forward(y, scales_hat):
    y_hat = jnp.round(y)                                            # eval-mode quantize
    scales = jnp.maximum(scales_hat, 0.11)                          # scale lower bound
    vals = jnp.abs(y_hat)
    std_cum = lambda v: 0.5 * jax.scipy.special.erfc(-v * (2.0 ** -0.5))
    upper = std_cum((0.5 - vals) / scales)
    lower = std_cum((-0.5 - vals) / scales)
    lik = jnp.maximum(upper - lower, 1e-9)
    return y_hat, lik


# ----------------------------------------------------------------------------
# Parameter init (deterministic, synthetic, PyTorch layouts)
# ----------------------------------------------------------------------------
def init_params(key, N, M):
    keys = iter(jax.random.split(key, 64))

    def conv_p(cout, cin, k):
        w = jax.random.normal(next(keys), (cout, cin, k, k), jnp.float32) / np.sqrt(cin * k * k)
        b = 0.01 * jax.random.normal(next(keys), (cout,), jnp.float32)
        return {"w": w, "b": b}

    def deconv_p(cin, cout, k):
        w = jax.random.normal(next(keys), (cin, cout, k, k), jnp.float32) / np.sqrt(cout * k * k)
        b = 0.01 * jax.random.normal(next(keys), (cout,), jnp.float32)
        return {"w": w, "b": b}

    def gdn_p(c):
        return {"gamma": 0.1 * jnp.eye(c, dtype=jnp.float32),
                "beta": jnp.ones((c,), jnp.float32)}

    p = {
        "ga": [conv_p(N, 1, 5), conv_p(N, N, 5), conv_p(N, N, 5), conv_p(M, N, 5)],
        "ga_gdn": [gdn_p(N) for _ in range(3)],
        "gs": [deconv_p(M, N, 5), deconv_p(N, N, 5), deconv_p(N, N, 5), deconv_p(N, 1, 5)],
        "gs_gdn": [gdn_p(N) for _ in range(3)],
        "ha": [conv_p(N, M, 3), conv_p(N, N, 5), conv_p(N, N, 5)],
        "hs": [deconv_p(N, N, 5), deconv_p(N, N, 5), conv_p(M, N, 3)],
    }

    # EntropyBottleneck(N): filters=(3,3,3,3), init_scale=10
    filters = (3, 3, 3, 3)
    f = (1,) + filters + (1,)
    init_scale = 10.0
    scale = init_scale ** (1.0 / (len(filters) + 1))
    matrices, biases, factors = [], [], []
    for i in range(len(filters) + 1):
        init_m = float(np.log(np.expm1(1.0 / scale / f[i + 1])))
        matrices.append(jnp.full((N, f[i + 1], f[i]), init_m, jnp.float32))
        biases.append(jax.random.uniform(next(keys), (N, f[i + 1], 1),
                                         jnp.float32, -0.5, 0.5))
        if i < len(filters):
            factors.append(jnp.zeros((N, f[i + 1], 1), jnp.float32))
    quantiles = jnp.tile(jnp.array([-init_scale, 0.0, init_scale], jnp.float32),
                         (N, 1)).reshape(N, 1, 3)
    p["eb"] = {"matrices": matrices, "biases": biases, "factors": factors,
               "quantiles": quantiles}
    return p


# ----------------------------------------------------------------------------
# Full forward pass
# ----------------------------------------------------------------------------
def scale_hyperprior_forward(layers, x_nchw):
    x = jnp.transpose(x_nchw, (0, 2, 3, 1)).astype(jnp.float32)     # NCHW -> NHWC

    # g_a (GDN fused into the conv GEMMs)
    h = x
    for lyr in layers["ga"]:
        h = conv_apply(lyr, h)
    y = h

    # h_a on |y|
    t = jnp.abs(y)
    for lyr in layers["ha"]:
        t = conv_apply(lyr, t)
    z = t

    # entropy bottleneck
    z_hat, z_lik = entropy_bottleneck_forward(z, layers["eb"])

    # h_s
    s = deconv_apply(layers["hs"][0], z_hat)
    s = deconv_apply(layers["hs"][1], s)
    scales_hat = conv_apply(layers["hs"][2], s)

    # gaussian conditional
    y_hat, y_lik = gaussian_conditional_forward(y, scales_hat)

    # g_s (IGDN fused into the sub-pixel deconv GEMMs)
    u = y_hat
    for lyr in layers["gs"]:
        u = deconv_apply(lyr, u)
    x_hat = u

    to_nchw = lambda a: jnp.transpose(a, (0, 3, 1, 2))
    return {"x_hat": to_nchw(x_hat),
            "likelihoods": {"y": to_nchw(y_lik), "z": to_nchw(z_lik)}}


# ----------------------------------------------------------------------------
if __name__ == "__main__":
    N, M = 8, 12                       # small synthetic sizes
    key = jax.random.PRNGKey(0)
    kparam, kx = jax.random.split(key)
    raw_params = init_params(kparam, N, M)
    layers = prepare_model(raw_params, N, M)     # one-time GEMM-ready weights

    x = jax.random.uniform(kx, (2, 1, 64, 64), jnp.float32)   # NCHW, 1 input channel

    fwd = jax.jit(lambda inp: scale_hyperprior_forward(layers, inp))
    out = fwd(x)
    jax.block_until_ready(out)

    assert out["x_hat"].shape == (2, 1, 64, 64)
    assert out["likelihoods"]["y"].shape == (2, M, 4, 4)
    assert out["likelihoods"]["z"].shape == (2, N, 1, 1)
    assert bool(jnp.all(jnp.isfinite(out["x_hat"])))
    assert bool(jnp.all(jnp.isfinite(out["likelihoods"]["y"])))
    assert bool(jnp.all(jnp.isfinite(out["likelihoods"]["z"])))
    print("KERNEL_OK")
</pallas_src>

<mosaic_0001>
module attributes {stable_mosaic.version = 11 : i64} {
  func.func @_gemm_bias_gdn_kernel(%arg0: i32, %arg1: memref<512x128xbf16, #tpu.memory_space<vmem>>, %arg2: memref<128x128xbf16, #tpu.memory_space<vmem>>, %arg3: memref<1x128xf32, #tpu.memory_space<vmem>>, %arg4: memref<128x128xbf16, #tpu.memory_space<vmem>>, %arg5: memref<1x128xf32, #tpu.memory_space<vmem>>, %arg6: memref<512x128xf32, #tpu.memory_space<vmem>>) attributes {dimension_semantics = [#tpu.dimension_semantics<parallel>], iteration_bounds = array<i64: 4>, scalar_prefetch = 0 : i64, scratch_operands = 0 : i64, tpu.core_type = #tpu.core_type<tc>, window_params = [{transform_indices = @transform_0, window_bounds = array<i64: 512, 128>}, {pipeline_mode = #tpu.pipeline_mode<synchronous>, transform_indices = @transform_1, window_bounds = array<i64: 128, 128>}, {pipeline_mode = #tpu.pipeline_mode<synchronous>, transform_indices = @transform_2, window_bounds = array<i64: 1, 128>}, {pipeline_mode = #tpu.pipeline_mode<synchronous>, transform_indices = @transform_3, window_bounds = array<i64: 128, 128>}, {pipeline_mode = #tpu.pipeline_mode<synchronous>, transform_indices = @transform_4, window_bounds = array<i64: 1, 128>}, {transform_indices = @transform_5, window_bounds = array<i64: 512, 128>}]} {
    %c0 = arith.constant 0 : index
    %c0_0 = arith.constant 0 : index
    %0 = vector.load %arg1[%c0, %c0_0] : memref<512x128xbf16, #tpu.memory_space<vmem>>, vector<512x128xbf16>
    %c0_1 = arith.constant 0 : index
    %c0_2 = arith.constant 0 : index
    %1 = vector.load %arg2[%c0_1, %c0_2] : memref<128x128xbf16, #tpu.memory_space<vmem>>, vector<128x128xbf16>
    %cst = arith.constant dense<0.000000e+00> : vector<512x128xf32>
    %2 = tpu.matmul %0, %1, %cst {dimension_numbers = #tpu.dot_dimension_numbers<[1], [0], [0], [1], [0, 0, 1, 1], [], []>} : vector<512x128xbf16>, vector<128x128xbf16>, vector<512x128xf32> -> vector<512x128xf32>
    %c0_3 = arith.constant 0 : index
    %c0_4 = arith.constant 0 : index
    %3 = vector.load %arg3[%c0_3, %c0_4] : memref<1x128xf32, #tpu.memory_space<vmem>>, vector<1x128xf32>
    %4 = vector.broadcast %3 : vector<1x128xf32> to vector<512x128xf32>
    %5 = arith.addf %2, %4 : vector<512x128xf32>
    %6 = arith.mulf %5, %5 : vector<512x128xf32>
    %7 = arith.truncf %6 : vector<512x128xf32> to vector<512x128xbf16>
    %c0_5 = arith.constant 0 : index
    %c0_6 = arith.constant 0 : index
    %8 = vector.load %arg4[%c0_5, %c0_6] : memref<128x128xbf16, #tpu.memory_space<vmem>>, vector<128x128xbf16>
    %cst_7 = arith.constant dense<0.000000e+00> : vector<512x128xf32>
    %9 = tpu.matmul %7, %8, %cst_7 {dimension_numbers = #tpu.dot_dimension_numbers<[1], [0], [0], [1], [0, 0, 1, 1], [], []>} : vector<512x128xbf16>, vector<128x128xbf16>, vector<512x128xf32> -> vector<512x128xf32>
    %c0_8 = arith.constant 0 : index
    %c0_9 = arith.constant 0 : index
    %10 = vector.load %arg5[%c0_8, %c0_9] : memref<1x128xf32, #tpu.memory_space<vmem>>, vector<1x128xf32>
    %11 = vector.broadcast %10 : vector<1x128xf32> to vector<512x128xf32>
    %12 = arith.addf %9, %11 : vector<512x128xf32>
    %cst_10 = arith.constant 9.99999997E-7 : f32
    %13 = vector.broadcast %cst_10 : f32 to vector<512x128xf32>
    %14 = arith.maximumf %12, %13 : vector<512x128xf32>
    %15 = math.rsqrt %14 : vector<512x128xf32>
    %16 = arith.mulf %5, %15 : vector<512x128xf32>
    %c0_11 = arith.constant 0 : index
    %c0_12 = arith.constant 0 : index
    %17 = vector.load %arg6[%c0_11, %c0_12] : memref<512x128xf32, #tpu.memory_space<vmem>>, vector<512x128xf32>
    tpu.vector_store %arg6[%c0_11, %c0_12], %16 {strides = array<i32>} : memref<512x128xf32, #tpu.memory_space<vmem>>, vector<512x128xf32>,
    return
  }
  func.func @transform_0(%arg0: i32) -> (i32, i32) {
    %c0_i32 = arith.constant 0 : i32
    %c0_i32_0 = arith.constant 0 : i32
    return %arg0, %c0_i32 : i32, i32
  }
  func.func @transform_1(%arg0: i32) -> (i32, i32) {
    %c0_i32 = arith.constant 0 : i32
    %c0_i32_0 = arith.constant 0 : i32
    %c0_i32_1 = arith.constant 0 : i32
    return %c0_i32, %c0_i32_0 : i32, i32
  }
  func.func @transform_2(%arg0: i32) -> (i32, i32) {
    %c0_i32 = arith.constant 0 : i32
    %c0_i32_0 = arith.constant 0 : i32
    %c0_i32_1 = arith.constant 0 : i32
    return %c0_i32, %c0_i32_0 : i32, i32
  }
  func.func @transform_3(%arg0: i32) -> (i32, i32) {
    %c0_i32 = arith.constant 0 : i32
    %c0_i32_0 = arith.constant 0 : i32
    %c0_i32_1 = arith.constant 0 : i32
    return %c0_i32, %c0_i32_0 : i32, i32
  }
  func.func @transform_4(%arg0: i32) -> (i32, i32) {
    %c0_i32 = arith.constant 0 : i32
    %c0_i32_0 = arith.constant 0 : i32
    %c0_i32_1 = arith.constant 0 : i32
    return %c0_i32, %c0_i32_0 : i32, i32
  }
  func.func @transform_5(%arg0: i32) -> (i32, i32) {
    %c0_i32 = arith.constant 0 : i32
    %c0_i32_0 = arith.constant 0 : i32
    return %arg0, %c0_i32 : i32, i32
  }
}

module attributes {stable_mosaic.version = 11 : i64} {
  func.func @_gemm_bias_gdn_kernel(%arg0: i32, %arg1: memref<256x256xbf16, #tpu.memory_space<vmem>>, %arg2: memref<256x128xbf16, #tpu.memory_space<vmem>>, %arg3: memref<1x128xf32, #tpu.memory_space<vmem>>, %arg4: memref<128x128xbf16, #tpu.memory_space<vmem>>, %arg5: memref<1x128xf32, #tpu.memory_space<vmem>>, %arg6: memref<256x128xf32, #tpu.memory_space<vmem>>) attributes {dimension_semantics = [#tpu.dimension_semantics<parallel>], iteration_bounds = array<i64: 2>, scalar_prefetch = 0 : i64, scratch_operands = 0 : i64, tpu.core_type = #tpu.core_type<tc>, window_params = [{transform_indices = @transform_0, window_bounds = array<i64: 256, 256>}, {pipeline_mode = #tpu.pipeline_mode<synchronous>, transform_indices = @transform_1, window_bounds = array<i64: 256, 128>}, {pipeline_mode = #tpu.pipeline_mode<synchronous>, transform_indices = @transform_2, window_bounds = array<i64: 1, 128>}, {pipeline_mode = #tpu.pipeline_mode<synchronous>, transform_indices = @transform_3, window_bounds = array<i64: 128, 128>}, {pipeline_mode = #tpu.pipeline_mode<synchronous>, transform_indices = @transform_4, window_bounds = array<i64: 1, 128>}, {transform_indices = @transform_5, window_bounds = array<i64: 256, 128>}]} {
    %c0 = arith.constant 0 : index
    %c0_0 = arith.constant 0 : index
    %0 = vector.load %arg1[%c0, %c0_0] : memref<256x256xbf16, #tpu.memory_space<vmem>>, vector<256x256xbf16>
    %c0_1 = arith.constant 0 : index
    %c0_2 = arith.constant 0 : index
    %1 = vector.load %arg2[%c0_1, %c0_2] : memref<256x128xbf16, #tpu.memory_space<vmem>>, vector<256x128xbf16>
    %cst = arith.constant dense<0.000000e+00> : vector<256x128xf32>
    %2 = tpu.matmul %0, %1, %cst {dimension_numbers = #tpu.dot_dimension_numbers<[1], [0], [0], [1], [0, 0, 1, 1], [], []>} : vector<256x256xbf16>, vector<256x128xbf16>, vector<256x128xf32> -> vector<256x128xf32>
    %c0_3 = arith.constant 0 : index
    %c0_4 = arith.constant 0 : index
    %3 = vector.load %arg3[%c0_3, %c0_4] : memref<1x128xf32, #tpu.memory_space<vmem>>, vector<1x128xf32>
    %4 = vector.broadcast %3 : vector<1x128xf32> to vector<256x128xf32>
    %5 = arith.addf %2, %4 : vector<256x128xf32>
    %6 = arith.mulf %5, %5 : vector<256x128xf32>
    %7 = arith.truncf %6 : vector<256x128xf32> to vector<256x128xbf16>
    %c0_5 = arith.constant 0 : index
    %c0_6 = arith.constant 0 : index
    %8 = vector.load %arg4[%c0_5, %c0_6] : memref<128x128xbf16, #tpu.memory_space<vmem>>, vector<128x128xbf16>
    %cst_7 = arith.constant dense<0.000000e+00> : vector<256x128xf32>
    %9 = tpu.matmul %7, %8, %cst_7 {dimension_numbers = #tpu.dot_dimension_numbers<[1], [0], [0], [1], [0, 0, 1, 1], [], []>} : vector<256x128xbf16>, vector<128x128xbf16>, vector<256x128xf32> -> vector<256x128xf32>
    %c0_8 = arith.constant 0 : index
    %c0_9 = arith.constant 0 : index
    %10 = vector.load %arg5[%c0_8, %c0_9] : memref<1x128xf32, #tpu.memory_space<vmem>>, vector<1x128xf32>
    %11 = vector.broadcast %10 : vector<1x128xf32> to vector<256x128xf32>
    %12 = arith.addf %9, %11 : vector<256x128xf32>
    %cst_10 = arith.constant 9.99999997E-7 : f32
    %13 = vector.broadcast %cst_10 : f32 to vector<256x128xf32>
    %14 = arith.maximumf %12, %13 : vector<256x128xf32>
    %15 = math.rsqrt %14 : vector<256x128xf32>
    %16 = arith.mulf %5, %15 : vector<256x128xf32>
    %c0_11 = arith.constant 0 : index
    %c0_12 = arith.constant 0 : index
    %17 = vector.load %arg6[%c0_11, %c0_12] : memref<256x128xf32, #tpu.memory_space<vmem>>, vector<256x128xf32>
    tpu.vector_store %arg6[%c0_11, %c0_12], %16 {strides = array<i32>} : memref<256x128xf32, #tpu.memory_space<vmem>>, vector<256x128xf32>,
    return
  }
  func.func @transform_0(%arg0: i32) -> (i32, i32) {
    %c0_i32 = arith.constant 0 : i32
    %c0_i32_0 = arith.constant 0 : i32
    return %arg0, %c0_i32 : i32, i32
  }
  func.func @transform_1(%arg0: i32) -> (i32, i32) {
    %c0_i32 = arith.constant 0 : i32
    %c0_i32_0 = arith.constant 0 : i32
    %c0_i32_1 = arith.constant 0 : i32
    return %c0_i32, %c0_i32_0 : i32, i32
  }
  func.func @transform_2(%arg0: i32) -> (i32, i32) {
    %c0_i32 = arith.constant 0 : i32
    %c0_i32_0 = arith.constant 0 : i32
    %c0_i32_1 = arith.constant 0 : i32
    return %c0_i32, %c0_i32_0 : i32, i32
  }
  func.func @transform_3(%arg0: i32) -> (i32, i32) {
    %c0_i32 = arith.constant 0 : i32
    %c0_i32_0 = arith.constant 0 : i32
    %c0_i32_1 = arith.constant 0 : i32
    return %c0_i32, %c0_i32_0 : i32, i32
  }
  func.func @transform_4(%arg0: i32) -> (i32, i32) {
    %c0_i32 = arith.constant 0 : i32
    %c0_i32_0 = arith.constant 0 : i32
    %c0_i32_1 = arith.constant 0 : i32
    return %c0_i32, %c0_i32_0 : i32, i32
  }
  func.func @transform_5(%arg0: i32) -> (i32, i32) {
    %c0_i32 = arith.constant 0 : i32
    %c0_i32_0 = arith.constant 0 : i32
    return %arg0, %c0_i32 : i32, i32
  }
}

module attributes {stable_mosaic.version = 11 : i64} {
  func.func @_gemm_bias_gdn_kernel(%arg0: i32, %arg1: memref<64x256xbf16, #tpu.memory_space<vmem>>, %arg2: memref<256x128xbf16, #tpu.memory_space<vmem>>, %arg3: memref<1x128xf32, #tpu.memory_space<vmem>>, %arg4: memref<128x128xbf16, #tpu.memory_space<vmem>>, %arg5: memref<1x128xf32, #tpu.memory_space<vmem>>, %arg6: memref<64x128xf32, #tpu.memory_space<vmem>>) attributes {dimension_semantics = [#tpu.dimension_semantics<parallel>], iteration_bounds = array<i64: 2>, scalar_prefetch = 0 : i64, scratch_operands = 0 : i64, tpu.core_type = #tpu.core_type<tc>, window_params = [{transform_indices = @transform_0, window_bounds = array<i64: 64, 256>}, {pipeline_mode = #tpu.pipeline_mode<synchronous>, transform_indices = @transform_1, window_bounds = array<i64: 256, 128>}, {pipeline_mode = #tpu.pipeline_mode<synchronous>, transform_indices = @transform_2, window_bounds = array<i64: 1, 128>}, {pipeline_mode = #tpu.pipeline_mode<synchronous>, transform_indices = @transform_3, window_bounds = array<i64: 128, 128>}, {pipeline_mode = #tpu.pipeline_mode<synchronous>, transform_indices = @transform_4, window_bounds = array<i64: 1, 128>}, {transform_indices = @transform_5, window_bounds = array<i64: 64, 128>}]} {
    %c0 = arith.constant 0 : index
    %c0_0 = arith.constant 0 : index
    %0 = vector.load %arg1[%c0, %c0_0] : memref<64x256xbf16, #tpu.memory_space<vmem>>, vector<64x256xbf16>
    %c0_1 = arith.constant 0 : index
    %c0_2 = arith.constant 0 : index
    %1 = vector.load %arg2[%c0_1, %c0_2] : memref<256x128xbf16, #tpu.memory_space<vmem>>, vector<256x128xbf16>
    %cst = arith.constant dense<0.000000e+00> : vector<64x128xf32>
    %2 = tpu.matmul %0, %1, %cst {dimension_numbers = #tpu.dot_dimension_numbers<[1], [0], [0], [1], [0, 0, 1, 1], [], []>} : vector<64x256xbf16>, vector<256x128xbf16>, vector<64x128xf32> -> vector<64x128xf32>
    %c0_3 = arith.constant 0 : index
    %c0_4 = arith.constant 0 : index
    %3 = vector.load %arg3[%c0_3, %c0_4] : memref<1x128xf32, #tpu.memory_space<vmem>>, vector<1x128xf32>
    %4 = vector.broadcast %3 : vector<1x128xf32> to vector<64x128xf32>
    %5 = arith.addf %2, %4 : vector<64x128xf32>
    %6 = arith.mulf %5, %5 : vector<64x128xf32>
    %7 = arith.truncf %6 : vector<64x128xf32> to vector<64x128xbf16>
    %c0_5 = arith.constant 0 : index
    %c0_6 = arith.constant 0 : index
    %8 = vector.load %arg4[%c0_5, %c0_6] : memref<128x128xbf16, #tpu.memory_space<vmem>>, vector<128x128xbf16>
    %cst_7 = arith.constant dense<0.000000e+00> : vector<64x128xf32>
    %9 = tpu.matmul %7, %8, %cst_7 {dimension_numbers = #tpu.dot_dimension_numbers<[1], [0], [0], [1], [0, 0, 1, 1], [], []>} : vector<64x128xbf16>, vector<128x128xbf16>, vector<64x128xf32> -> vector<64x128xf32>
    %c0_8 = arith.constant 0 : index
    %c0_9 = arith.constant 0 : index
    %10 = vector.load %arg5[%c0_8, %c0_9] : memref<1x128xf32, #tpu.memory_space<vmem>>, vector<1x128xf32>
    %11 = vector.broadcast %10 : vector<1x128xf32> to vector<64x128xf32>
    %12 = arith.addf %9, %11 : vector<64x128xf32>
    %cst_10 = arith.constant 9.99999997E-7 : f32
    %13 = vector.broadcast %cst_10 : f32 to vector<64x128xf32>
    %14 = arith.maximumf %12, %13 : vector<64x128xf32>
    %15 = math.rsqrt %14 : vector<64x128xf32>
    %16 = arith.mulf %5, %15 : vector<64x128xf32>
    %c0_11 = arith.constant 0 : index
    %c0_12 = arith.constant 0 : index
    %17 = vector.load %arg6[%c0_11, %c0_12] : memref<64x128xf32, #tpu.memory_space<vmem>>, vector<64x128xf32>
    tpu.vector_store %arg6[%c0_11, %c0_12], %16 {strides = array<i32>} : memref<64x128xf32, #tpu.memory_space<vmem>>, vector<64x128xf32>,
    return
  }
  func.func @transform_0(%arg0: i32) -> (i32, i32) {
    %c0_i32 = arith.constant 0 : i32
    %c0_i32_0 = arith.constant 0 : i32
    return %arg0, %c0_i32 : i32, i32
  }
  func.func @transform_1(%arg0: i32) -> (i32, i32) {
    %c0_i32 = arith.constant 0 : i32
    %c0_i32_0 = arith.constant 0 : i32
    %c0_i32_1 = arith.constant 0 : i32
    return %c0_i32, %c0_i32_0 : i32, i32
  }
  func.func @transform_2(%arg0: i32) -> (i32, i32) {
    %c0_i32 = arith.constant 0 : i32
    %c0_i32_0 = arith.constant 0 : i32
    %c0_i32_1 = arith.constant 0 : i32
    return %c0_i32, %c0_i32_0 : i32, i32
  }
  func.func @transform_3(%arg0: i32) -> (i32, i32) {
    %c0_i32 = arith.constant 0 : i32
    %c0_i32_0 = arith.constant 0 : i32
    %c0_i32_1 = arith.constant 0 : i32
    return %c0_i32, %c0_i32_0 : i32, i32
  }
  func.func @transform_4(%arg0: i32) -> (i32, i32) {
    %c0_i32 = arith.constant 0 : i32
    %c0_i32_0 = arith.constant 0 : i32
    %c0_i32_1 = arith.constant 0 : i32
    return %c0_i32, %c0_i32_0 : i32, i32
  }
  func.func @transform_5(%arg0: i32) -> (i32, i32) {
    %c0_i32 = arith.constant 0 : i32
    %c0_i32_0 = arith.constant 0 : i32
    return %arg0, %c0_i32 : i32, i32
  }
}

module attributes {stable_mosaic.version = 11 : i64} {
  func.func @_gemm_bias_kernel(%arg0: i32, %arg1: memref<16x256xbf16, #tpu.memory_space<vmem>>, %arg2: memref<256x128xbf16, #tpu.memory_space<vmem>>, %arg3: memref<1x128xf32, #tpu.memory_space<vmem>>, %arg4: memref<16x128xf32, #tpu.memory_space<vmem>>) attributes {dimension_semantics = [#tpu.dimension_semantics<parallel>], iteration_bounds = array<i64: 2>, scalar_prefetch = 0 : i64, scratch_operands = 0 : i64, tpu.core_type = #tpu.core_type<tc>, window_params = [{transform_indices = @transform_0, window_bounds = array<i64: 16, 256>}, {pipeline_mode = #tpu.pipeline_mode<synchronous>, transform_indices = @transform_1, window_bounds = array<i64: 256, 128>}, {pipeline_mode = #tpu.pipeline_mode<synchronous>, transform_indices = @transform_2, window_bounds = array<i64: 1, 128>}, {transform_indices = @transform_3, window_bounds = array<i64: 16, 128>}]} {
    %c0 = arith.constant 0 : index
    %c0_0 = arith.constant 0 : index
    %0 = vector.load %arg1[%c0, %c0_0] : memref<16x256xbf16, #tpu.memory_space<vmem>>, vector<16x256xbf16>
    %c0_1 = arith.constant 0 : index
    %c0_2 = arith.constant 0 : index
    %1 = vector.load %arg2[%c0_1, %c0_2] : memref<256x128xbf16, #tpu.memory_space<vmem>>, vector<256x128xbf16>
    %cst = arith.constant dense<0.000000e+00> : vector<16x128xf32>
    %2 = tpu.matmul %0, %1, %cst {dimension_numbers = #tpu.dot_dimension_numbers<[1], [0], [0], [1], [0, 0, 1, 1], [], []>} : vector<16x256xbf16>, vector<256x128xbf16>, vector<16x128xf32> -> vector<16x128xf32>
    %c0_3 = arith.constant 0 : index
    %c0_4 = arith.constant 0 : index
    %3 = vector.load %arg3[%c0_3, %c0_4] : memref<1x128xf32, #tpu.memory_space<vmem>>, vector<1x128xf32>
    %4 = vector.broadcast %3 : vector<1x128xf32> to vector<16x128xf32>
    %5 = arith.addf %2, %4 : vector<16x128xf32>
    %c0_5 = arith.constant 0 : index
    %c0_6 = arith.constant 0 : index
    %6 = vector.load %arg4[%c0_5, %c0_6] : memref<16x128xf32, #tpu.memory_space<vmem>>, vector<16x128xf32>
    tpu.vector_store %arg4[%c0_5, %c0_6], %5 {strides = array<i32>} : memref<16x128xf32, #tpu.memory_space<vmem>>, vector<16x128xf32>,
    return
  }
  func.func @transform_0(%arg0: i32) -> (i32, i32) {
    %c0_i32 = arith.constant 0 : i32
    %c0_i32_0 = arith.constant 0 : i32
    return %arg0, %c0_i32 : i32, i32
  }
  func.func @transform_1(%arg0: i32) -> (i32, i32) {
    %c0_i32 = arith.constant 0 : i32
    %c0_i32_0 = arith.constant 0 : i32
    %c0_i32_1 = arith.constant 0 : i32
    return %c0_i32, %c0_i32_0 : i32, i32
  }
  func.func @transform_2(%arg0: i32) -> (i32, i32) {
    %c0_i32 = arith.constant 0 : i32
    %c0_i32_0 = arith.constant 0 : i32
    %c0_i32_1 = arith.constant 0 : i32
    return %c0_i32, %c0_i32_0 : i32, i32
  }
  func.func @transform_3(%arg0: i32) -> (i32, i32) {
    %c0_i32 = arith.constant 0 : i32
    %c0_i32_0 = arith.constant 0 : i32
    return %arg0, %c0_i32 : i32, i32
  }
}

module attributes {stable_mosaic.version = 11 : i64} {
  func.func @_gemm_bias_kernel(%arg0: i32, %arg1: memref<16x128xbf16, #tpu.memory_space<vmem>>, %arg2: memref<128x128xbf16, #tpu.memory_space<vmem>>, %arg3: memref<1x128xf32, #tpu.memory_space<vmem>>, %arg4: memref<16x128xf32, #tpu.memory_space<vmem>>) attributes {dimension_semantics = [#tpu.dimension_semantics<parallel>], iteration_bounds = array<i64: 2>, scalar_prefetch = 0 : i64, scratch_operands = 0 : i64, tpu.core_type = #tpu.core_type<tc>, window_params = [{transform_indices = @transform_0, window_bounds = array<i64: 16, 128>}, {pipeline_mode = #tpu.pipeline_mode<synchronous>, transform_indices = @transform_1, window_bounds = array<i64: 128, 128>}, {pipeline_mode = #tpu.pipeline_mode<synchronous>, transform_indices = @transform_2, window_bounds = array<i64: 1, 128>}, {transform_indices = @transform_3, window_bounds = array<i64: 16, 128>}]} {
    %c0 = arith.constant 0 : index
    %c0_0 = arith.constant 0 : index
    %0 = vector.load %arg1[%c0, %c0_0] : memref<16x128xbf16, #tpu.memory_space<vmem>>, vector<16x128xbf16>
    %c0_1 = arith.constant 0 : index
    %c0_2 = arith.constant 0 : index
    %1 = vector.load %arg2[%c0_1, %c0_2] : memref<128x128xbf16, #tpu.memory_space<vmem>>, vector<128x128xbf16>
    %cst = arith.constant dense<0.000000e+00> : vector<16x128xf32>
    %2 = tpu.matmul %0, %1, %cst {dimension_numbers = #tpu.dot_dimension_numbers<[1], [0], [0], [1], [0, 0, 1, 1], [], []>} : vector<16x128xbf16>, vector<128x128xbf16>, vector<16x128xf32> -> vector<16x128xf32>
    %c0_3 = arith.constant 0 : index
    %c0_4 = arith.constant 0 : index
    %3 = vector.load %arg3[%c0_3, %c0_4] : memref<1x128xf32, #tpu.memory_space<vmem>>, vector<1x128xf32>
    %4 = vector.broadcast %3 : vector<1x128xf32> to vector<16x128xf32>
    %5 = arith.addf %2, %4 : vector<16x128xf32>
    %cst_5 = arith.constant 0.000000e+00 : f32
    %6 = vector.broadcast %cst_5 : f32 to vector<16x128xf32>
    %7 = arith.maximumf %5, %6 : vector<16x128xf32>
    %c0_6 = arith.constant 0 : index
    %c0_7 = arith.constant 0 : index
    %8 = vector.load %arg4[%c0_6, %c0_7] : memref<16x128xf32, #tpu.memory_space<vmem>>, vector<16x128xf32>
    tpu.vector_store %arg4[%c0_6, %c0_7], %7 {strides = array<i32>} : memref<16x128xf32, #tpu.memory_space<vmem>>, vector<16x128xf32>,
    return
  }
  func.func @transform_0(%arg0: i32) -> (i32, i32) {
    %c0_i32 = arith.constant 0 : i32
    %c0_i32_0 = arith.constant 0 : i32
    return %arg0, %c0_i32 : i32, i32
  }
  func.func @transform_1(%arg0: i32) -> (i32, i32) {
    %c0_i32 = arith.constant 0 : i32
    %c0_i32_0 = arith.constant 0 : i32
    %c0_i32_1 = arith.constant 0 : i32
    return %c0_i32, %c0_i32_0 : i32, i32
  }
  func.func @transform_2(%arg0: i32) -> (i32, i32) {
    %c0_i32 = arith.constant 0 : i32
    %c0_i32_0 = arith.constant 0 : i32
    %c0_i32_1 = arith.constant 0 : i32
    return %c0_i32, %c0_i32_0 : i32, i32
  }
  func.func @transform_3(%arg0: i32) -> (i32, i32) {
    %c0_i32 = arith.constant 0 : i32
    %c0_i32_0 = arith.constant 0 : i32
    return %arg0, %c0_i32 : i32, i32
  }
}

module attributes {stable_mosaic.version = 11 : i64} {
  func.func @_gemm_bias_kernel(%arg0: i32, %arg1: memref<8x256xbf16, #tpu.memory_space<vmem>>, %arg2: memref<256x128xbf16, #tpu.memory_space<vmem>>, %arg3: memref<1x128xf32, #tpu.memory_space<vmem>>, %arg4: memref<8x128xf32, #tpu.memory_space<vmem>>) attributes {dimension_semantics = [#tpu.dimension_semantics<parallel>], iteration_bounds = array<i64: 1>, scalar_prefetch = 0 : i64, scratch_operands = 0 : i64, tpu.core_type = #tpu.core_type<tc>, window_params = [{transform_indices = @transform_0, window_bounds = array<i64: 8, 256>}, {pipeline_mode = #tpu.pipeline_mode<synchronous>, transform_indices = @transform_1, window_bounds = array<i64: 256, 128>}, {pipeline_mode = #tpu.pipeline_mode<synchronous>, transform_indices = @transform_2, window_bounds = array<i64: 1, 128>}, {transform_indices = @transform_3, window_bounds = array<i64: 8, 128>}]} {
    %c0 = arith.constant 0 : index
    %c0_0 = arith.constant 0 : index
    %0 = vector.load %arg1[%c0, %c0_0] : memref<8x256xbf16, #tpu.memory_space<vmem>>, vector<8x256xbf16>
    %c0_1 = arith.constant 0 : index
    %c0_2 = arith.constant 0 : index
    %1 = vector.load %arg2[%c0_1, %c0_2] : memref<256x128xbf16, #tpu.memory_space<vmem>>, vector<256x128xbf16>
    %cst = arith.constant dense<0.000000e+00> : vector<8x128xf32>
    %2 = tpu.matmul %0, %1, %cst {dimension_numbers = #tpu.dot_dimension_numbers<[1], [0], [0], [1], [0, 0, 1, 1], [], []>} : vector<8x256xbf16>, vector<256x128xbf16>, vector<8x128xf32> -> vector<8x128xf32>
    %c0_3 = arith.constant 0 : index
    %c0_4 = arith.constant 0 : index
    %3 = vector.load %arg3[%c0_3, %c0_4] : memref<1x128xf32, #tpu.memory_space<vmem>>, vector<1x128xf32>
    %4 = vector.broadcast %3 : vector<1x128xf32> to vector<8x128xf32>
    %5 = arith.addf %2, %4 : vector<8x128xf32>
    %cst_5 = arith.constant 0.000000e+00 : f32
    %6 = vector.broadcast %cst_5 : f32 to vector<8x128xf32>
    %7 = arith.maximumf %5, %6 : vector<8x128xf32>
    %c0_6 = arith.constant 0 : index
    %c0_7 = arith.constant 0 : index
    %8 = vector.load %arg4[%c0_6, %c0_7] : memref<8x128xf32, #tpu.memory_space<vmem>>, vector<8x128xf32>
    tpu.vector_store %arg4[%c0_6, %c0_7], %7 {strides = array<i32>} : memref<8x128xf32, #tpu.memory_space<vmem>>, vector<8x128xf32>,
    return
  }
  func.func @transform_0(%arg0: i32) -> (i32, i32) {
    %c0_i32 = arith.constant 0 : i32
    %c0_i32_0 = arith.constant 0 : i32
    return %arg0, %c0_i32 : i32, i32
  }
  func.func @transform_1(%arg0: i32) -> (i32, i32) {
    %c0_i32 = arith.constant 0 : i32
    %c0_i32_0 = arith.constant 0 : i32
    %c0_i32_1 = arith.constant 0 : i32
    return %c0_i32, %c0_i32_0 : i32, i32
  }
  func.func @transform_2(%arg0: i32) -> (i32, i32) {
    %c0_i32 = arith.constant 0 : i32
    %c0_i32_0 = arith.constant 0 : i32
    %c0_i32_1 = arith.constant 0 : i32
    return %c0_i32, %c0_i32_0 : i32, i32
  }
  func.func @transform_3(%arg0: i32) -> (i32, i32) {
    %c0_i32 = arith.constant 0 : i32
    %c0_i32_0 = arith.constant 0 : i32
    return %arg0, %c0_i32 : i32, i32
  }
}

module attributes {stable_mosaic.version = 11 : i64} {
  func.func @_gemm_bias_kernel(%arg0: i32, %arg1: memref<8x256xbf16, #tpu.memory_space<vmem>>, %arg2: memref<256x128xbf16, #tpu.memory_space<vmem>>, %arg3: memref<1x128xf32, #tpu.memory_space<vmem>>, %arg4: memref<8x128xf32, #tpu.memory_space<vmem>>) attributes {dimension_semantics = [#tpu.dimension_semantics<parallel>], iteration_bounds = array<i64: 1>, scalar_prefetch = 0 : i64, scratch_operands = 0 : i64, tpu.core_type = #tpu.core_type<tc>, window_params = [{transform_indices = @transform_0, window_bounds = array<i64: 8, 256>}, {pipeline_mode = #tpu.pipeline_mode<synchronous>, transform_indices = @transform_1, window_bounds = array<i64: 256, 128>}, {pipeline_mode = #tpu.pipeline_mode<synchronous>, transform_indices = @transform_2, window_bounds = array<i64: 1, 128>}, {transform_indices = @transform_3, window_bounds = array<i64: 8, 128>}]} {
    %c0 = arith.constant 0 : index
    %c0_0 = arith.constant 0 : index
    %0 = vector.load %arg1[%c0, %c0_0] : memref<8x256xbf16, #tpu.memory_space<vmem>>, vector<8x256xbf16>
    %c0_1 = arith.constant 0 : index
    %c0_2 = arith.constant 0 : index
    %1 = vector.load %arg2[%c0_1, %c0_2] : memref<256x128xbf16, #tpu.memory_space<vmem>>, vector<256x128xbf16>
    %cst = arith.constant dense<0.000000e+00> : vector<8x128xf32>
    %2 = tpu.matmul %0, %1, %cst {dimension_numbers = #tpu.dot_dimension_numbers<[1], [0], [0], [1], [0, 0, 1, 1], [], []>} : vector<8x256xbf16>, vector<256x128xbf16>, vector<8x128xf32> -> vector<8x128xf32>
    %c0_3 = arith.constant 0 : index
    %c0_4 = arith.constant 0 : index
    %3 = vector.load %arg3[%c0_3, %c0_4] : memref<1x128xf32, #tpu.memory_space<vmem>>, vector<1x128xf32>
    %4 = vector.broadcast %3 : vector<1x128xf32> to vector<8x128xf32>
    %5 = arith.addf %2, %4 : vector<8x128xf32>
    %c0_5 = arith.constant 0 : index
    %c0_6 = arith.constant 0 : index
    %6 = vector.load %arg4[%c0_5, %c0_6] : memref<8x128xf32, #tpu.memory_space<vmem>>, vector<8x128xf32>
    tpu.vector_store %arg4[%c0_5, %c0_6], %5 {strides = array<i32>} : memref<8x128xf32, #tpu.memory_space<vmem>>, vector<8x128xf32>,
    return
  }
  func.func @transform_0(%arg0: i32) -> (i32, i32) {
    %c0_i32 = arith.constant 0 : i32
    %c0_i32_0 = arith.constant 0 : i32
    return %arg0, %c0_i32 : i32, i32
  }
  func.func @transform_1(%arg0: i32) -> (i32, i32) {
    %c0_i32 = arith.constant 0 : i32
    %c0_i32_0 = arith.constant 0 : i32
    %c0_i32_1 = arith.constant 0 : i32
    return %c0_i32, %c0_i32_0 : i32, i32
  }
  func.func @transform_2(%arg0: i32) -> (i32, i32) {
    %c0_i32 = arith.constant 0 : i32
    %c0_i32_0 = arith.constant 0 : i32
    %c0_i32_1 = arith.constant 0 : i32
    return %c0_i32, %c0_i32_0 : i32, i32
  }
  func.func @transform_3(%arg0: i32) -> (i32, i32) {
    %c0_i32 = arith.constant 0 : i32
    %c0_i32_0 = arith.constant 0 : i32
    return %arg0, %c0_i32 : i32, i32
  }
}

module attributes {stable_mosaic.version = 11 : i64} {
  func.func @_gemm_bias_kernel(%arg0: i32, %arg1: memref<8x128xbf16, #tpu.memory_space<vmem>>, %arg2: memref<128x128xbf16, #tpu.memory_space<vmem>>, %arg3: memref<1x128xf32, #tpu.memory_space<vmem>>, %arg4: memref<8x128xf32, #tpu.memory_space<vmem>>) attributes {dimension_semantics = [#tpu.dimension_semantics<parallel>], iteration_bounds = array<i64: 1>, scalar_prefetch = 0 : i64, scratch_operands = 0 : i64, tpu.core_type = #tpu.core_type<tc>, window_params = [{transform_indices = @transform_0, window_bounds = array<i64: 8, 128>}, {pipeline_mode = #tpu.pipeline_mode<synchronous>, transform_indices = @transform_1, window_bounds = array<i64: 128, 128>}, {pipeline_mode = #tpu.pipeline_mode<synchronous>, transform_indices = @transform_2, window_bounds = array<i64: 1, 128>}, {transform_indices = @transform_3, window_bounds = array<i64: 8, 128>}]} {
    %c0 = arith.constant 0 : index
    %c0_0 = arith.constant 0 : index
    %0 = vector.load %arg1[%c0, %c0_0] : memref<8x128xbf16, #tpu.memory_space<vmem>>, vector<8x128xbf16>
    %c0_1 = arith.constant 0 : index
    %c0_2 = arith.constant 0 : index
    %1 = vector.load %arg2[%c0_1, %c0_2] : memref<128x128xbf16, #tpu.memory_space<vmem>>, vector<128x128xbf16>
    %cst = arith.constant dense<0.000000e+00> : vector<8x128xf32>
    %2 = tpu.matmul %0, %1, %cst {dimension_numbers = #tpu.dot_dimension_numbers<[1], [0], [0], [1], [0, 0, 1, 1], [], []>} : vector<8x128xbf16>, vector<128x128xbf16>, vector<8x128xf32> -> vector<8x128xf32>
    %c0_3 = arith.constant 0 : index
    %c0_4 = arith.constant 0 : index
    %3 = vector.load %arg3[%c0_3, %c0_4] : memref<1x128xf32, #tpu.memory_space<vmem>>, vector<1x128xf32>
    %4 = vector.broadcast %3 : vector<1x128xf32> to vector<8x128xf32>
    %5 = arith.addf %2, %4 : vector<8x128xf32>
    %cst_5 = arith.constant 0.000000e+00 : f32
    %6 = vector.broadcast %cst_5 : f32 to vector<8x128xf32>
    %7 = arith.maximumf %5, %6 : vector<8x128xf32>
    %c0_6 = arith.constant 0 : index
    %c0_7 = arith.constant 0 : index
    %8 = vector.load %arg4[%c0_6, %c0_7] : memref<8x128xf32, #tpu.memory_space<vmem>>, vector<8x128xf32>
    tpu.vector_store %arg4[%c0_6, %c0_7], %7 {strides = array<i32>} : memref<8x128xf32, #tpu.memory_space<vmem>>, vector<8x128xf32>,
    return
  }
  func.func @transform_0(%arg0: i32) -> (i32, i32) {
    %c0_i32 = arith.constant 0 : i32
    %c0_i32_0 = arith.constant 0 : i32
    return %arg0, %c0_i32 : i32, i32
  }
  func.func @transform_1(%arg0: i32) -> (i32, i32) {
    %c0_i32 = arith.constant 0 : i32
    %c0_i32_0 = arith.constant 0 : i32
    %c0_i32_1 = arith.constant 0 : i32
    return %c0_i32, %c0_i32_0 : i32, i32
  }
  func.func @transform_2(%arg0: i32) -> (i32, i32) {
    %c0_i32 = arith.constant 0 : i32
    %c0_i32_0 = arith.constant 0 : i32
    %c0_i32_1 = arith.constant 0 : i32
    return %c0_i32, %c0_i32_0 : i32, i32
  }
  func.func @transform_3(%arg0: i32) -> (i32, i32) {
    %c0_i32 = arith.constant 0 : i32
    %c0_i32_0 = arith.constant 0 : i32
    return %arg0, %c0_i32 : i32, i32
  }
}

module attributes {stable_mosaic.version = 11 : i64} {
  func.func @_gemm_bias_gdn_kernel(%arg0: i32, %arg1: memref<16x128xbf16, #tpu.memory_space<vmem>>, %arg2: memref<128x128xbf16, #tpu.memory_space<vmem>>, %arg3: memref<1x128xf32, #tpu.memory_space<vmem>>, %arg4: memref<128x128xbf16, #tpu.memory_space<vmem>>, %arg5: memref<1x128xf32, #tpu.memory_space<vmem>>, %arg6: memref<16x128xf32, #tpu.memory_space<vmem>>) attributes {dimension_semantics = [#tpu.dimension_semantics<parallel>], iteration_bounds = array<i64: 2>, scalar_prefetch = 0 : i64, scratch_operands = 0 : i64, tpu.core_type = #tpu.core_type<tc>, window_params = [{transform_indices = @transform_0, window_bounds = array<i64: 16, 128>}, {pipeline_mode = #tpu.pipeline_mode<synchronous>, transform_indices = @transform_1, window_bounds = array<i64: 128, 128>}, {pipeline_mode = #tpu.pipeline_mode<synchronous>, transform_indices = @transform_2, window_bounds = array<i64: 1, 128>}, {pipeline_mode = #tpu.pipeline_mode<synchronous>, transform_indices = @transform_3, window_bounds = array<i64: 128, 128>}, {pipeline_mode = #tpu.pipeline_mode<synchronous>, transform_indices = @transform_4, window_bounds = array<i64: 1, 128>}, {transform_indices = @transform_5, window_bounds = array<i64: 16, 128>}]} {
    %c0 = arith.constant 0 : index
    %c0_0 = arith.constant 0 : index
    %0 = vector.load %arg1[%c0, %c0_0] : memref<16x128xbf16, #tpu.memory_space<vmem>>, vector<16x128xbf16>
    %c0_1 = arith.constant 0 : index
    %c0_2 = arith.constant 0 : index
    %1 = vector.load %arg2[%c0_1, %c0_2] : memref<128x128xbf16, #tpu.memory_space<vmem>>, vector<128x128xbf16>
    %cst = arith.constant dense<0.000000e+00> : vector<16x128xf32>
    %2 = tpu.matmul %0, %1, %cst {dimension_numbers = #tpu.dot_dimension_numbers<[1], [0], [0], [1], [0, 0, 1, 1], [], []>} : vector<16x128xbf16>, vector<128x128xbf16>, vector<16x128xf32> -> vector<16x128xf32>
    %c0_3 = arith.constant 0 : index
    %c0_4 = arith.constant 0 : index
    %3 = vector.load %arg3[%c0_3, %c0_4] : memref<1x128xf32, #tpu.memory_space<vmem>>, vector<1x128xf32>
    %4 = vector.broadcast %3 : vector<1x128xf32> to vector<16x128xf32>
    %5 = arith.addf %2, %4 : vector<16x128xf32>
    %6 = arith.mulf %5, %5 : vector<16x128xf32>
    %7 = arith.truncf %6 : vector<16x128xf32> to vector<16x128xbf16>
    %c0_5 = arith.constant 0 : index
    %c0_6 = arith.constant 0 : index
    %8 = vector.load %arg4[%c0_5, %c0_6] : memref<128x128xbf16, #tpu.memory_space<vmem>>, vector<128x128xbf16>
    %cst_7 = arith.constant dense<0.000000e+00> : vector<16x128xf32>
    %9 = tpu.matmul %7, %8, %cst_7 {dimension_numbers = #tpu.dot_dimension_numbers<[1], [0], [0], [1], [0, 0, 1, 1], [], []>} : vector<16x128xbf16>, vector<128x128xbf16>, vector<16x128xf32> -> vector<16x128xf32>
    %c0_8 = arith.constant 0 : index
    %c0_9 = arith.constant 0 : index
    %10 = vector.load %arg5[%c0_8, %c0_9] : memref<1x128xf32, #tpu.memory_space<vmem>>, vector<1x128xf32>
    %11 = vector.broadcast %10 : vector<1x128xf32> to vector<16x128xf32>
    %12 = arith.addf %9, %11 : vector<16x128xf32>
    %cst_10 = arith.constant 9.99999997E-7 : f32
    %13 = vector.broadcast %cst_10 : f32 to vector<16x128xf32>
    %14 = arith.maximumf %12, %13 : vector<16x128xf32>
    %15 = math.sqrt %14 : vector<16x128xf32>
    %16 = arith.mulf %5, %15 : vector<16x128xf32>
    %c0_11 = arith.constant 0 : index
    %c0_12 = arith.constant 0 : index
    %17 = vector.load %arg6[%c0_11, %c0_12] : memref<16x128xf32, #tpu.memory_space<vmem>>, vector<16x128xf32>
    tpu.vector_store %arg6[%c0_11, %c0_12], %16 {strides = array<i32>} : memref<16x128xf32, #tpu.memory_space<vmem>>, vector<16x128xf32>,
    return
  }
  func.func @transform_0(%arg0: i32) -> (i32, i32) {
    %c0_i32 = arith.constant 0 : i32
    %c0_i32_0 = arith.constant 0 : i32
    return %arg0, %c0_i32 : i32, i32
  }
  func.func @transform_1(%arg0: i32) -> (i32, i32) {
    %c0_i32 = arith.constant 0 : i32
    %c0_i32_0 = arith.constant 0 : i32
    %c0_i32_1 = arith.constant 0 : i32
    return %c0_i32, %c0_i32_0 : i32, i32
  }
  func.func @transform_2(%arg0: i32) -> (i32, i32) {
    %c0_i32 = arith.constant 0 : i32
    %c0_i32_0 = arith.constant 0 : i32
    %c0_i32_1 = arith.constant 0 : i32
    return %c0_i32, %c0_i32_0 : i32, i32
  }
  func.func @transform_3(%arg0: i32) -> (i32, i32) {
    %c0_i32 = arith.constant 0 : i32
    %c0_i32_0 = arith.constant 0 : i32
    %c0_i32_1 = arith.constant 0 : i32
    return %c0_i32, %c0_i32_0 : i32, i32
  }
  func.func @transform_4(%arg0: i32) -> (i32, i32) {
    %c0_i32 = arith.constant 0 : i32
    %c0_i32_0 = arith.constant 0 : i32
    %c0_i32_1 = arith.constant 0 : i32
    return %c0_i32, %c0_i32_0 : i32, i32
  }
  func.func @transform_5(%arg0: i32) -> (i32, i32) {
    %c0_i32 = arith.constant 0 : i32
    %c0_i32_0 = arith.constant 0 : i32
    return %arg0, %c0_i32 : i32, i32
  }
}

module attributes {stable_mosaic.version = 11 : i64} {
  func.func @_gemm_bias_gdn_kernel(%arg0: i32, %arg1: memref<64x128xbf16, #tpu.memory_space<vmem>>, %arg2: memref<128x128xbf16, #tpu.memory_space<vmem>>, %arg3: memref<1x128xf32, #tpu.memory_space<vmem>>, %arg4: memref<128x128xbf16, #tpu.memory_space<vmem>>, %arg5: memref<1x128xf32, #tpu.memory_space<vmem>>, %arg6: memref<64x128xf32, #tpu.memory_space<vmem>>) attributes {dimension_semantics = [#tpu.dimension_semantics<parallel>], iteration_bounds = array<i64: 2>, scalar_prefetch = 0 : i64, scratch_operands = 0 : i64, tpu.core_type = #tpu.core_type<tc>, window_params = [{transform_indices = @transform_0, window_bounds = array<i64: 64, 128>}, {pipeline_mode = #tpu.pipeline_mode<synchronous>, transform_indices = @transform_1, window_bounds = array<i64: 128, 128>}, {pipeline_mode = #tpu.pipeline_mode<synchronous>, transform_indices = @transform_2, window_bounds = array<i64: 1, 128>}, {pipeline_mode = #tpu.pipeline_mode<synchronous>, transform_indices = @transform_3, window_bounds = array<i64: 128, 128>}, {pipeline_mode = #tpu.pipeline_mode<synchronous>, transform_indices = @transform_4, window_bounds = array<i64: 1, 128>}, {transform_indices = @transform_5, window_bounds = array<i64: 64, 128>}]} {
    %c0 = arith.constant 0 : index
    %c0_0 = arith.constant 0 : index
    %0 = vector.load %arg1[%c0, %c0_0] : memref<64x128xbf16, #tpu.memory_space<vmem>>, vector<64x128xbf16>
    %c0_1 = arith.constant 0 : index
    %c0_2 = arith.constant 0 : index
    %1 = vector.load %arg2[%c0_1, %c0_2] : memref<128x128xbf16, #tpu.memory_space<vmem>>, vector<128x128xbf16>
    %cst = arith.constant dense<0.000000e+00> : vector<64x128xf32>
    %2 = tpu.matmul %0, %1, %cst {dimension_numbers = #tpu.dot_dimension_numbers<[1], [0], [0], [1], [0, 0, 1, 1], [], []>} : vector<64x128xbf16>, vector<128x128xbf16>, vector<64x128xf32> -> vector<64x128xf32>
    %c0_3 = arith.constant 0 : index
    %c0_4 = arith.constant 0 : index
    %3 = vector.load %arg3[%c0_3, %c0_4] : memref<1x128xf32, #tpu.memory_space<vmem>>, vector<1x128xf32>
    %4 = vector.broadcast %3 : vector<1x128xf32> to vector<64x128xf32>
    %5 = arith.addf %2, %4 : vector<64x128xf32>
    %6 = arith.mulf %5, %5 : vector<64x128xf32>
    %7 = arith.truncf %6 : vector<64x128xf32> to vector<64x128xbf16>
    %c0_5 = arith.constant 0 : index
    %c0_6 = arith.constant 0 : index
    %8 = vector.load %arg4[%c0_5, %c0_6] : memref<128x128xbf16, #tpu.memory_space<vmem>>, vector<128x128xbf16>
    %cst_7 = arith.constant dense<0.000000e+00> : vector<64x128xf32>
    %9 = tpu.matmul %7, %8, %cst_7 {dimension_numbers = #tpu.dot_dimension_numbers<[1], [0], [0], [1], [0, 0, 1, 1], [], []>} : vector<64x128xbf16>, vector<128x128xbf16>, vector<64x128xf32> -> vector<64x128xf32>
    %c0_8 = arith.constant 0 : index
    %c0_9 = arith.constant 0 : index
    %10 = vector.load %arg5[%c0_8, %c0_9] : memref<1x128xf32, #tpu.memory_space<vmem>>, vector<1x128xf32>
    %11 = vector.broadcast %10 : vector<1x128xf32> to vector<64x128xf32>
    %12 = arith.addf %9, %11 : vector<64x128xf32>
    %cst_10 = arith.constant 9.99999997E-7 : f32
    %13 = vector.broadcast %cst_10 : f32 to vector<64x128xf32>
    %14 = arith.maximumf %12, %13 : vector<64x128xf32>
    %15 = math.sqrt %14 : vector<64x128xf32>
    %16 = arith.mulf %5, %15 : vector<64x128xf32>
    %c0_11 = arith.constant 0 : index
    %c0_12 = arith.constant 0 : index
    %17 = vector.load %arg6[%c0_11, %c0_12] : memref<64x128xf32, #tpu.memory_space<vmem>>, vector<64x128xf32>
    tpu.vector_store %arg6[%c0_11, %c0_12], %16 {strides = array<i32>} : memref<64x128xf32, #tpu.memory_space<vmem>>, vector<64x128xf32>,
    return
  }
  func.func @transform_0(%arg0: i32) -> (i32, i32) {
    %c0_i32 = arith.constant 0 : i32
    %c0_i32_0 = arith.constant 0 : i32
    return %arg0, %c0_i32 : i32, i32
  }
  func.func @transform_1(%arg0: i32) -> (i32, i32) {
    %c0_i32 = arith.constant 0 : i32
    %c0_i32_0 = arith.constant 0 : i32
    %c0_i32_1 = arith.constant 0 : i32
    return %c0_i32, %c0_i32_0 : i32, i32
  }
  func.func @transform_2(%arg0: i32) -> (i32, i32) {
    %c0_i32 = arith.constant 0 : i32
    %c0_i32_0 = arith.constant 0 : i32
    %c0_i32_1 = arith.constant 0 : i32
    return %c0_i32, %c0_i32_0 : i32, i32
  }
  func.func @transform_3(%arg0: i32) -> (i32, i32) {
    %c0_i32 = arith.constant 0 : i32
    %c0_i32_0 = arith.constant 0 : i32
    %c0_i32_1 = arith.constant 0 : i32
    return %c0_i32, %c0_i32_0 : i32, i32
  }
  func.func @transform_4(%arg0: i32) -> (i32, i32) {
    %c0_i32 = arith.constant 0 : i32
    %c0_i32_0 = arith.constant 0 : i32
    %c0_i32_1 = arith.constant 0 : i32
    return %c0_i32, %c0_i32_0 : i32, i32
  }
  func.func @transform_5(%arg0: i32) -> (i32, i32) {
    %c0_i32 = arith.constant 0 : i32
    %c0_i32_0 = arith.constant 0 : i32
    return %arg0, %c0_i32 : i32, i32
  }
}

module attributes {stable_mosaic.version = 11 : i64} {
  func.func @_gemm_bias_gdn_kernel(%arg0: i32, %arg1: memref<256x128xbf16, #tpu.memory_space<vmem>>, %arg2: memref<128x128xbf16, #tpu.memory_space<vmem>>, %arg3: memref<1x128xf32, #tpu.memory_space<vmem>>, %arg4: memref<128x128xbf16, #tpu.memory_space<vmem>>, %arg5: memref<1x128xf32, #tpu.memory_space<vmem>>, %arg6: memref<256x128xf32, #tpu.memory_space<vmem>>) attributes {dimension_semantics = [#tpu.dimension_semantics<parallel>], iteration_bounds = array<i64: 2>, scalar_prefetch = 0 : i64, scratch_operands = 0 : i64, tpu.core_type = #tpu.core_type<tc>, window_params = [{transform_indices = @transform_0, window_bounds = array<i64: 256, 128>}, {pipeline_mode = #tpu.pipeline_mode<synchronous>, transform_indices = @transform_1, window_bounds = array<i64: 128, 128>}, {pipeline_mode = #tpu.pipeline_mode<synchronous>, transform_indices = @transform_2, window_bounds = array<i64: 1, 128>}, {pipeline_mode = #tpu.pipeline_mode<synchronous>, transform_indices = @transform_3, window_bounds = array<i64: 128, 128>}, {pipeline_mode = #tpu.pipeline_mode<synchronous>, transform_indices = @transform_4, window_bounds = array<i64: 1, 128>}, {transform_indices = @transform_5, window_bounds = array<i64: 256, 128>}]} {
    %c0 = arith.constant 0 : index
    %c0_0 = arith.constant 0 : index
    %0 = vector.load %arg1[%c0, %c0_0] : memref<256x128xbf16, #tpu.memory_space<vmem>>, vector<256x128xbf16>
    %c0_1 = arith.constant 0 : index
    %c0_2 = arith.constant 0 : index
    %1 = vector.load %arg2[%c0_1, %c0_2] : memref<128x128xbf16, #tpu.memory_space<vmem>>, vector<128x128xbf16>
    %cst = arith.constant dense<0.000000e+00> : vector<256x128xf32>
    %2 = tpu.matmul %0, %1, %cst {dimension_numbers = #tpu.dot_dimension_numbers<[1], [0], [0], [1], [0, 0, 1, 1], [], []>} : vector<256x128xbf16>, vector<128x128xbf16>, vector<256x128xf32> -> vector<256x128xf32>
    %c0_3 = arith.constant 0 : index
    %c0_4 = arith.constant 0 : index
    %3 = vector.load %arg3[%c0_3, %c0_4] : memref<1x128xf32, #tpu.memory_space<vmem>>, vector<1x128xf32>
    %4 = vector.broadcast %3 : vector<1x128xf32> to vector<256x128xf32>
    %5 = arith.addf %2, %4 : vector<256x128xf32>
    %6 = arith.mulf %5, %5 : vector<256x128xf32>
    %7 = arith.truncf %6 : vector<256x128xf32> to vector<256x128xbf16>
    %c0_5 = arith.constant 0 : index
    %c0_6 = arith.constant 0 : index
    %8 = vector.load %arg4[%c0_5, %c0_6] : memref<128x128xbf16, #tpu.memory_space<vmem>>, vector<128x128xbf16>
    %cst_7 = arith.constant dense<0.000000e+00> : vector<256x128xf32>
    %9 = tpu.matmul %7, %8, %cst_7 {dimension_numbers = #tpu.dot_dimension_numbers<[1], [0], [0], [1], [0, 0, 1, 1], [], []>} : vector<256x128xbf16>, vector<128x128xbf16>, vector<256x128xf32> -> vector<256x128xf32>
    %c0_8 = arith.constant 0 : index
    %c0_9 = arith.constant 0 : index
    %10 = vector.load %arg5[%c0_8, %c0_9] : memref<1x128xf32, #tpu.memory_space<vmem>>, vector<1x128xf32>
    %11 = vector.broadcast %10 : vector<1x128xf32> to vector<256x128xf32>
    %12 = arith.addf %9, %11 : vector<256x128xf32>
    %cst_10 = arith.constant 9.99999997E-7 : f32
    %13 = vector.broadcast %cst_10 : f32 to vector<256x128xf32>
    %14 = arith.maximumf %12, %13 : vector<256x128xf32>
    %15 = math.sqrt %14 : vector<256x128xf32>
    %16 = arith.mulf %5, %15 : vector<256x128xf32>
    %c0_11 = arith.constant 0 : index
    %c0_12 = arith.constant 0 : index
    %17 = vector.load %arg6[%c0_11, %c0_12] : memref<256x128xf32, #tpu.memory_space<vmem>>, vector<256x128xf32>
    tpu.vector_store %arg6[%c0_11, %c0_12], %16 {strides = array<i32>} : memref<256x128xf32, #tpu.memory_space<vmem>>, vector<256x128xf32>,
    return
  }
  func.func @transform_0(%arg0: i32) -> (i32, i32) {
    %c0_i32 = arith.constant 0 : i32
    %c0_i32_0 = arith.constant 0 : i32
    return %arg0, %c0_i32 : i32, i32
  }
  func.func @transform_1(%arg0: i32) -> (i32, i32) {
    %c0_i32 = arith.constant 0 : i32
    %c0_i32_0 = arith.constant 0 : i32
    %c0_i32_1 = arith.constant 0 : i32
    return %c0_i32, %c0_i32_0 : i32, i32
  }
  func.func @transform_2(%arg0: i32) -> (i32, i32) {
    %c0_i32 = arith.constant 0 : i32
    %c0_i32_0 = arith.constant 0 : i32
    %c0_i32_1 = arith.constant 0 : i32
    return %c0_i32, %c0_i32_0 : i32, i32
  }
  func.func @transform_3(%arg0: i32) -> (i32, i32) {
    %c0_i32 = arith.constant 0 : i32
    %c0_i32_0 = arith.constant 0 : i32
    %c0_i32_1 = arith.constant 0 : i32
    return %c0_i32, %c0_i32_0 : i32, i32
  }
  func.func @transform_4(%arg0: i32) -> (i32, i32) {
    %c0_i32 = arith.constant 0 : i32
    %c0_i32_0 = arith.constant 0 : i32
    %c0_i32_1 = arith.constant 0 : i32
    return %c0_i32, %c0_i32_0 : i32, i32
  }
  func.func @transform_5(%arg0: i32) -> (i32, i32) {
    %c0_i32 = arith.constant 0 : i32
    %c0_i32_0 = arith.constant 0 : i32
    return %arg0, %c0_i32 : i32, i32
  }
}

module attributes {stable_mosaic.version = 11 : i64} {
  func.func @_gemm_bias_kernel(%arg0: i32, %arg1: memref<512x128xbf16, #tpu.memory_space<vmem>>, %arg2: memref<128x128xbf16, #tpu.memory_space<vmem>>, %arg3: memref<1x128xf32, #tpu.memory_space<vmem>>, %arg4: memref<512x128xf32, #tpu.memory_space<vmem>>) attributes {dimension_semantics = [#tpu.dimension_semantics<parallel>], iteration_bounds = array<i64: 4>, scalar_prefetch = 0 : i64, scratch_operands = 0 : i64, tpu.core_type = #tpu.core_type<tc>, window_params = [{transform_indices = @transform_0, window_bounds = array<i64: 512, 128>}, {pipeline_mode = #tpu.pipeline_mode<synchronous>, transform_indices = @transform_1, window_bounds = array<i64: 128, 128>}, {pipeline_mode = #tpu.pipeline_mode<synchronous>, transform_indices = @transform_2, window_bounds = array<i64: 1, 128>}, {transform_indices = @transform_3, window_bounds = array<i64: 512, 128>}]} {
    %c0 = arith.constant 0 : index
    %c0_0 = arith.constant 0 : index
    %0 = vector.load %arg1[%c0, %c0_0] : memref<512x128xbf16, #tpu.memory_space<vmem>>, vector<512x128xbf16>
    %c0_1 = arith.constant 0 : index
    %c0_2 = arith.constant 0 : index
    %1 = vector.load %arg2[%c0_1, %c0_2] : memref<128x128xbf16, #tpu.memory_space<vmem>>, vector<128x128xbf16>
    %cst = arith.constant dense<0.000000e+00> : vector<512x128xf32>
    %2 = tpu.matmul %0, %1, %cst {dimension_numbers = #tpu.dot_dimension_numbers<[1], [0], [0], [1], [0, 0, 1, 1], [], []>} : vector<512x128xbf16>, vector<128x128xbf16>, vector<512x128xf32> -> vector<512x128xf32>
    %c0_3 = arith.constant 0 : index
    %c0_4 = arith.constant 0 : index
    %3 = vector.load %arg3[%c0_3, %c0_4] : memref<1x128xf32, #tpu.memory_space<vmem>>, vector<1x128xf32>
    %4 = vector.broadcast %3 : vector<1x128xf32> to vector<512x128xf32>
    %5 = arith.addf %2, %4 : vector<512x128xf32>
    %c0_5 = arith.constant 0 : index
    %c0_6 = arith.constant 0 : index
    %6 = vector.load %arg4[%c0_5, %c0_6] : memref<512x128xf32, #tpu.memory_space<vmem>>, vector<512x128xf32>
    tpu.vector_store %arg4[%c0_5, %c0_6], %5 {strides = array<i32>} : memref<512x128xf32, #tpu.memory_space<vmem>>, vector<512x128xf32>,
    return
  }
  func.func @transform_0(%arg0: i32) -> (i32, i32) {
    %c0_i32 = arith.constant 0 : i32
    %c0_i32_0 = arith.constant 0 : i32
    return %arg0, %c0_i32 : i32, i32
  }
  func.func @transform_1(%arg0: i32) -> (i32, i32) {
    %c0_i32 = arith.constant 0 : i32
    %c0_i32_0 = arith.constant 0 : i32
    %c0_i32_1 = arith.constant 0 : i32
    return %c0_i32, %c0_i32_0 : i32, i32
  }
  func.func @transform_2(%arg0: i32) -> (i32, i32) {
    %c0_i32 = arith.constant 0 : i32
    %c0_i32_0 = arith.constant 0 : i32
    %c0_i32_1 = arith.constant 0 : i32
    return %c0_i32, %c0_i32_0 : i32, i32
  }
  func.func @transform_3(%arg0: i32) -> (i32, i32) {
    %c0_i32 = arith.constant 0 : i32
    %c0_i32_0 = arith.constant 0 : i32
    return %arg0, %c0_i32 : i32, i32
  }
}

</mosaic_0001>

<llo_original>
// kernel: _lambda_.14
$region0: #{_lambda_.14}
  #allocation0 [shape = 'u32[]', space=smem, size = 0x4, offset = 0x4, fixed_abs, tag = 'smem constant byte address 0x4 - core index']
  #allocation1 [shape = 'u32[144,128]{1,0:T(1,128)}', space=vmem, size = 0x12000, scoped, tag = 'internal scratch']
  %s0 = inlined_call_operand.vmem [shape: bf16[2048,128], index: 0, kind: input, shape index: {}]
  %s1 = inlined_call_operand.vmem [shape: bf16[128,128], index: 1, kind: input, shape index: {}]
  %s2 = inlined_call_operand.vmem [shape: f32[1,128], index: 2, kind: input, shape index: {}]
  %s3 = inlined_call_operand.vmem [shape: bf16[128,128], index: 3, kind: input, shape index: {}]
  %s4 = inlined_call_operand.vmem [shape: f32[1,128], index: 4, kind: input, shape index: {}]
  %s5 = inlined_call_operand.vmem [shape: f32[2048,128], index: 5, kind: output, shape index: {}]
  %s6 = sld [smem:[#allocation0]]
  $region53: #{_lambda_.14} parent=0
    _
  %s8 = ssub.s32 1, %s6
  %s9 = scalar_select 0, %s8, %s6
  loop: start=0, step=1, limit=6
  $region2: #{_lambda_.14} parent=0 // loop_pre_header
    _
  $region3: #{_lambda_.14} parent=0 // loop_header
    %s11 = sphi 0, %s15
    %p12 = scmp.ge.s32.totalorder %s11, 6
    %s21 = sphi 0, %s23
    %s24 = sphi 0, %s21
    %s25 = sphi 0, %s24
    %s41 = sphi 0, %s25
    %s45 = sphi 0, %s45
    %s47 = sphi 0, %s45
    %s48 = sphi 0, %s47
    %s62 = sphi 0, %s48
    %s66 = sphi 0, %s66
    %s68 = sphi 0, %s66
    %s69 = sphi 0, %s68
    %s83 = sphi 0, %s69
    %s87 = sphi 0, %s87
    %s89 = sphi 0, %s87
    %s90 = sphi 0, %s89
    %s104 = sphi 0, %s90
    %s108 = sphi 0, %s108
    %s110 = sphi 0, %s108
    %s111 = sphi 0, %s110
    %s125 = sphi 0, %s111
    %s131 = sphi 0, %s133
    %s134 = sphi 0, %s131
    %s135 = sphi 0, %s134
    %s151 = sphi 0, %s135
  $region4: #{_lambda_.14} parent=0 // loop_header_branch
    %14 = sbr.rel (%p12) target = $region8
  $region5: #{_lambda_.14} parent=0 // loop_body
    %s16 = ssub.s32 %s11, 1
    %s17 = ssub.s32 %s11, 2
    %s18 = sadd.s32 %s11, 1
    %s19 = ssub.s32 %s11, %s18
    %p20 = scmp.eq.s32.totalorder %s19, 0
    %s22 = sadd.s32 %s21, 1
    %s23 = scalar_select %p20, %s21, %s22
    %p26 = pneg %p20
    %p27 = scmp.eq.s32.totalorder %s11, 3
    %p28 = por %p26, %p27
    %p29 = scmp.ne.s32.totalorder %s21, %s24
    %p30 = scmp.eq.s32.totalorder %s11, 0
    %p31 = por %p29, %p30
    %p32 = scmp.ne.s32.totalorder %s21, %s24
    %p33 = scmp.eq.s32.totalorder %s16, 3
    %p34 = por %p32, %p33
    %p35 = scmp.ne.s32.totalorder %s24, %s25
    %p36 = scmp.eq.s32.totalorder %s16, 0
    %p37 = por %p35, %p36
    %p38 = scmp.ne.s32.totalorder %s24, %s25
    %p39 = scmp.eq.s32.totalorder %s17, 3
    %p40 = por %p38, %p39
    %p42 = scmp.ne.s32.totalorder %s25, %s41
    %p43 = scmp.eq.s32.totalorder %s17, 0
    %p44 = por %p42, %p43
    %s46 = sadd.s32 %s45, 1
    %p49 = scmp.eq.s32.totalorder %s11, 3
    %p50 = scmp.ne.s32.totalorder %s45, %s47
    %p51 = scmp.eq.s32.totalorder %s11, 0
    %p52 = por %p50, %p51
    %p53 = scmp.ne.s32.totalorder %s45, %s47
    %p54 = scmp.eq.s32.totalorder %s16, 3
    %p55 = por %p53, %p54
    %p56 = scmp.ne.s32.totalorder %s47, %s48
    %p57 = scmp.eq.s32.totalorder %s16, 0
    %p58 = por %p56, %p57
    %p59 = scmp.ne.s32.totalorder %s47, %s48
    %p60 = scmp.eq.s32.totalorder %s17, 3
    %p61 = por %p59, %p60
    %p63 = scmp.ne.s32.totalorder %s48, %s62
    %p64 = scmp.eq.s32.totalorder %s17, 0
    %p65 = por %p63, %p64
    %s67 = sadd.s32 %s66, 1
    %p70 = scmp.eq.s32.totalorder %s11, 3
    %p71 = scmp.ne.s32.totalorder %s66, %s68
    %p72 = scmp.eq.s32.totalorder %s11, 0
    %p73 = por %p71, %p72
    %p74 = scmp.ne.s32.totalorder %s66, %s68
    %p75 = scmp.eq.s32.totalorder %s16, 3
    %p76 = por %p74, %p75
    %p77 = scmp.ne.s32.totalorder %s68, %s69
    %p78 = scmp.eq.s32.totalorder %s16, 0
    %p79 = por %p77, %p78
    %p80 = scmp.ne.s32.totalorder %s68, %s69
    %p81 = scmp.eq.s32.totalorder %s17, 3
    %p82 = por %p80, %p81
    %p84 = scmp.ne.s32.totalorder %s69, %s83
    %p85 = scmp.eq.s32.totalorder %s17, 0
    %p86 = por %p84, %p85
    %s88 = sadd.s32 %s87, 1
    %p91 = scmp.eq.s32.totalorder %s11, 3
    %p92 = scmp.ne.s32.totalorder %s87, %s89
    %p93 = scmp.eq.s32.totalorder %s11, 0
    %p94 = por %p92, %p93
    %p95 = scmp.ne.s32.totalorder %s87, %s89
    %p96 = scmp.eq.s32.totalorder %s16, 3
    %p97 = por %p95, %p96
    %p98 = scmp.ne.s32.totalorder %s89, %s90
    %p99 = scmp.eq.s32.totalorder %s16, 0
    %p100 = por %p98, %p99
    %p101 = scmp.ne.s32.totalorder %s89, %s90
    %p102 = scmp.eq.s32.totalorder %s17, 3
    %p103 = por %p101, %p102
    %p105 = scmp.ne.s32.totalorder %s90, %s104
    %p106 = scmp.eq.s32.totalorder %s17, 0
    %p107 = por %p105, %p106
    %s109 = sadd.s32 %s108, 1
    %p112 = scmp.eq.s32.totalorder %s11, 3
    %p113 = scmp.ne.s32.totalorder %s108, %s110
    %p114 = scmp.eq.s32.totalorder %s11, 0
    %p115 = por %p113, %p114
    %p116 = scmp.ne.s32.totalorder %s108, %s110
    %p117 = scmp.eq.s32.totalorder %s16, 3
    %p118 = por %p116, %p117
    %p119 = scmp.ne.s32.totalorder %s110, %s111
    %p120 = scmp.eq.s32.totalorder %s16, 0
    %p121 = por %p119, %p120
    %p122 = scmp.ne.s32.totalorder %s110, %s111
    %p123 = scmp.eq.s32.totalorder %s17, 3
    %p124 = por %p122, %p123
    %p126 = scmp.ne.s32.totalorder %s111, %s125
    %p127 = scmp.eq.s32.totalorder %s17, 0
    %p128 = por %p126, %p127
    %s129 = ssub.s32 %s11, %s18
    %p130 = scmp.eq.s32.totalorder %s129, 0
    %s132 = sadd.s32 %s131, 1
    %s133 = scalar_select %p130, %s131, %s132
    %p136 = pneg %p130
    %p137 = scmp.eq.s32.totalorder %s11, 3
    %p138 = por %p136, %p137
    %p139 = scmp.ne.s32.totalorder %s131, %s134
    %p140 = scmp.eq.s32.totalorder %s11, 0
    %p141 = por %p139, %p140
    %p142 = scmp.ne.s32.totalorder %s131, %s134
    %p143 = scmp.eq.s32.totalorder %s16, 3
    %p144 = por %p142, %p143
    %p145 = scmp.ne.s32.totalorder %s134, %s135
    %p146 = scmp.eq.s32.totalorder %s16, 0
    %p147 = por %p145, %p146
    %p148 = scmp.ne.s32.totalorder %s134, %s135
    %p149 = scmp.eq.s32.totalorder %s17, 3
    %p150 = por %p148, %p149
    %p152 = scmp.ne.s32.totalorder %s135, %s151
    %p153 = scmp.eq.s32.totalorder %s17, 0
    %p154 = por %p152, %p153
    %p155 = scmp.le.s32.totalorder 1, %s11
    %p156 = scmp.lt.s32.totalorder %s11, 5
    %p157 = pnand %p155, %p156
    %p158 = pneg %p157
    // Predicated region
    $region9: #{_lambda_.14} parent=5 // pred_check
      _
    $region10: #{_lambda_.14} parent=5 // pred_check_branch
      %160 = sbr.rel (%p157) target = $region12
    $region11: #{_lambda_.14} parent=5 // pred_region
      %s161 = ssub.s32 %s11, 1
      // Predicated region
      $region13: #{_lambda_.14} parent=11 // pred_check
        %p162 = pneg %p58
      $region14: #{_lambda_.14} parent=11 // pred_check_branch
        %164 = sbr.rel (%p162) target = $region16
      $region15: #{_lambda_.14} parent=11 // pred_region
        _
      $region16: #{_lambda_.14} parent=11 // pred_fallthru
        _
      // Predicated region
      $region17: #{_lambda_.14} parent=11 // pred_check
        %p165 = pneg %p79
      $region18: #{_lambda_.14} parent=11 // pred_check_branch
        %167 = sbr.rel (%p165) target = $region20
      $region19: #{_lambda_.14} parent=11 // pred_region
        _
      $region20: #{_lambda_.14} parent=11 // pred_fallthru
        _
      // Predicated region
      $region21: #{_lambda_.14} parent=11 // pred_check
        %p168 = pneg %p100
      $region22: #{_lambda_.14} parent=11 // pred_check_branch
        %170 = sbr.rel (%p168) target = $region24
      $region23: #{_lambda_.14} parent=11 // pred_region
        _
      $region24: #{_lambda_.14} parent=11 // pred_fallthru
        _
      // Predicated region
      $region25: #{_lambda_.14} parent=11 // pred_check
        %p171 = pneg %p121
      $region26: #{_lambda_.14} parent=11 // pred_check_branch
        %173 = sbr.rel (%p171) target = $region28
      $region27: #{_lambda_.14} parent=11 // pred_region
        _
      $region28: #{_lambda_.14} parent=11 // pred_fallthru
        _
    $region12: #{_lambda_.14} parent=5 // pred_fallthru
      _
    %p174 = scmp.lt.s32.totalorder %s11, 4
    // Predicated region
    $region29: #{_lambda_.14} parent=5 // pred_check
      %p175 = pneg %p174
    $region30: #{_lambda_.14} parent=5 // pred_check_branch
      %177 = sbr.rel (%p175) target = $region32
    $region31: #{_lambda_.14} parent=5 // pred_region
      // Predicated region
      $region33: #{_lambda_.14} parent=31 // pred_check
        %p178 = pneg %p31
      $region34: #{_lambda_.14} parent=31 // pred_check_branch
        %180 = sbr.rel (%p178) target = $region36
      $region35: #{_lambda_.14} parent=31 // pred_region
        %s181 = smul.u32 64, %s11
        %p182 = scmp.lt.s32.totalorder %s181, 255
        %s183 = scalar_select %p182, %s181, 255
        %s184 = smul.addr %s183, 4
        %s185 = scalar_lea.vmem %s0, %s184
        %s186 = smul.u32 64, %s11
      $region36: #{_lambda_.14} parent=31 // pred_fallthru
        _
    $region32: #{_lambda_.14} parent=5 // pred_fallthru
      _
    %p187 = scmp.le.s32.totalorder 1, %s11
    %p188 = scmp.lt.s32.totalorder %s11, 5
    %p189 = pnand %p187, %p188
    %p190 = pneg %p189
    // Predicated region
    $region37: #{_lambda_.14} parent=5 // pred_check
      _
    $region38: #{_lambda_.14} parent=5 // pred_check_branch
      %192 = sbr.rel (%p189) target = $region40
    $region39: #{_lambda_.14} parent=5 // pred_region
      %s193 = ssub.s32 %s11, 1
      %s194 = smul.u32 64, %s16
      %p195 = scmp.lt.s32.totalorder %s194, 255
      %s196 = scalar_select %p195, %s194, 255
      %s197 = smul.addr %s196, 4
      %s198 = scalar_lea.vmem %s0, %s197
      %p199 = pneg %p37
      %p200 = pneg %p34
      %p201 = pneg %p58
      %p202 = pneg %p55
      %p203 = pneg %p79
      %p204 = pneg %p76
      %p205 = pneg %p100
      %p206 = pneg %p97
      %p207 = pneg %p121
      %p208 = pneg %p118
      %p209 = pneg %p147
      %p210 = pneg %p144
      %s211 = smul.u32 64, %s16
      %p212 = scmp.lt.s32.totalorder %s211, 255
      %s213 = scalar_select %p212, %s211, 255
      %s214 = smul.addr %s213, 8
      %s215 = scalar_lea.vmem %s5, %s214
      %s216 = smul.u32 64, %s16
      %p217 = scmp.lt.s32.totalorder %s216, 255
      %s218 = scalar_select %p217, %s216, 255
      %s219 = smul.addr %s218, 4
      %s220 = scalar_lea.vmem %s0, %s219
      %s221 = smul.u32 64, %s16
      %s222 = smul.u32 64, %s16
      %p223 = scmp.lt.s32.totalorder %s222, 255
      %s224 = scalar_select %p223, %s222, 255
      %s225 = smul.addr %s224, 8
      %s226 = scalar_lea.vmem %s5, %s225
      %s227 = smul.u32 64, %s16
      %v229 = vld [vmem:[%s220] sm:$0xf]
      %v230 = vld [vmem:[%s220 + $0x4] sm:$0xf]
      %v231 = vld [vmem:[%s220 + $0x8] sm:$0xf]
      %v232 = vld [vmem:[%s220 + $0xc] sm:$0xf]
      %v233 = vld [vmem:[%s220 + $0x10] sm:$0xf]
      %v234 = vld [vmem:[%s220 + $0x14] sm:$0xf]
      %v235 = vld [vmem:[%s220 + $0x18] sm:$0xf]
      %v236 = vld [vmem:[%s220 + $0x1c] sm:$0xf]
      %v237 = vld [vmem:[%s220 + $0x20] sm:$0xf]
      %v238 = vld [vmem:[%s220 + $0x24] sm:$0xf]
      %v239 = vld [vmem:[%s220 + $0x28] sm:$0xf]
      %v240 = vld [vmem:[%s220 + $0x2c] sm:$0xf]
      %v241 = vld [vmem:[%s220 + $0x30] sm:$0xf]
      %v242 = vld [vmem:[%s220 + $0x34] sm:$0xf]
      %v243 = vld [vmem:[%s220 + $0x38] sm:$0xf]
      %v244 = vld [vmem:[%s220 + $0x3c] sm:$0xf]
      %v245 = vld [vmem:[%s220 + $0x40] sm:$0xf]
      %v246 = vld [vmem:[%s220 + $0x44] sm:$0xf]
      %v247 = vld [vmem:[%s220 + $0x48] sm:$0xf]
      %v248 = vld [vmem:[%s220 + $0x4c] sm:$0xf]
      %v249 = vld [vmem:[%s220 + $0x50] sm:$0xf]
      %v250 = vld [vmem:[%s220 + $0x54] sm:$0xf]
      %v251 = vld [vmem:[%s220 + $0x58] sm:$0xf]
      %v252 = vld [vmem:[%s220 + $0x5c] sm:$0xf]
      %v253 = vld [vmem:[%s220 + $0x60] sm:$0xf]
      %v254 = vld [vmem:[%s220 + $0x64] sm:$0xf]
      %v255 = vld [vmem:[%s220 + $0x68] sm:$0xf]
      %v256 = vld [vmem:[%s220 + $0x6c] sm:$0xf]
      %v257 = vld [vmem:[%s220 + $0x70] sm:$0xf]
      %v258 = vld [vmem:[%s220 + $0x74] sm:$0xf]
      %v259 = vld [vmem:[%s220 + $0x78] sm:$0xf]
      %v260 = vld [vmem:[%s220 + $0x7c] sm:$0xf]
      %v261 = vld [vmem:[%s220 + $0x80] sm:$0xf]
      %v262 = vld [vmem:[%s220 + $0x84] sm:$0xf]
      %v263 = vld [vmem:[%s220 + $0x88] sm:$0xf]
      %v264 = vld [vmem:[%s220 + $0x8c] sm:$0xf]
      %v265 = vld [vmem:[%s220 + $0x90] sm:$0xf]
      %v266 = vld [vmem:[%s220 + $0x94] sm:$0xf]
      %v267 = vld [vmem:[%s220 + $0x98] sm:$0xf]
      %v268 = vld [vmem:[%s220 + $0x9c] sm:$0xf]
      %v269 = vld [vmem:[%s220 + $0xa0] sm:$0xf]
      %v270 = vld [vmem:[%s220 + $0xa4] sm:$0xf]
      %v271 = vld [vmem:[%s220 + $0xa8] sm:$0xf]
      %v272 = vld [vmem:[%s220 + $0xac] sm:$0xf]
      %v273 = vld [vmem:[%s220 + $0xb0] sm:$0xf]
      %v274 = vld [vmem:[%s220 + $0xb4] sm:$0xf]
      %v275 = vld [vmem:[%s220 + $0xb8] sm:$0xf]
      %v276 = vld [vmem:[%s220 + $0xbc] sm:$0xf]
      %v277 = vld [vmem:[%s220 + $0xc0] sm:$0xf]
      %v278 = vld [vmem:[%s220 + $0xc4] sm:$0xf]
      %v279 = vld [vmem:[%s220 + $0xc8] sm:$0xf]
      %v280 = vld [vmem:[%s220 + $0xcc] sm:$0xf]
      %v281 = vld [vmem:[%s220 + $0xd0] sm:$0xf]
      %v282 = vld [vmem:[%s220 + $0xd4] sm:$0xf]
      %v283 = vld [vmem:[%s220 + $0xd8] sm:$0xf]
      %v284 = vld [vmem:[%s220 + $0xdc] sm:$0xf]
      %v285 = vld [vmem:[%s220 + $0xe0] sm:$0xf]
      %v286 = vld [vmem:[%s220 + $0xe4] sm:$0xf]
      %v287 = vld [vmem:[%s220 + $0xe8] sm:$0xf]
      %v288 = vld [vmem:[%s220 + $0xec] sm:$0xf]
      %v289 = vld [vmem:[%s220 + $0xf0] sm:$0xf]
      %v290 = vld [vmem:[%s220 + $0xf4] sm:$0xf]
      %v291 = vld [vmem:[%s220 + $0xf8] sm:$0xf]
      %v292 = vld [vmem:[%s220 + $0xfc] sm:$0xf]
      %v293 = vld [vmem:[%s1] sm:$0xf]
      %v294 = vld [vmem:[%s1 + $0x4] sm:$0xf]
      %v295 = vld [vmem:[%s1 + $0x8] sm:$0xf]
      %v296 = vld [vmem:[%s1 + $0xc] sm:$0xf]
      %v297 = vld [vmem:[%s1 + $0x10] sm:$0xf]
      %v298 = vld [vmem:[%s1 + $0x14] sm:$0xf]
      %v299 = vld [vmem:[%s1 + $0x18] sm:$0xf]
      %v300 = vld [vmem:[%s1 + $0x1c] sm:$0xf]
      %v301 = vld [vmem:[%s1 + $0x20] sm:$0xf]
      %v302 = vld [vmem:[%s1 + $0x24] sm:$0xf]
      %v303 = vld [vmem:[%s1 + $0x28] sm:$0xf]
      %v304 = vld [vmem:[%s1 + $0x2c] sm:$0xf]
      %v305 = vld [vmem:[%s1 + $0x30] sm:$0xf]
      %v306 = vld [vmem:[%s1 + $0x34] sm:$0xf]
      %v307 = vld [vmem:[%s1 + $0x38] sm:$0xf]
      %v308 = vld [vmem:[%s1 + $0x3c] sm:$0xf]
      %v309 = vld [vmem:[%s2] sm:$0x1]
      %v311 = vlaneseq
      %v312 = vshrl.u32 %v311, 7
      %v313 = vsub.s32 0, %v312
      %v314 = vrot.slane %v309, %v313
      %v380 = vunpack.c.l.b16 %v229
      %v381 = vunpack.c.l.b16 %v230
      %v382 = vunpack.c.l.b16 %v231
      %v383 = vunpack.c.l.b16 %v232
      %v384 = vunpack.c.l.b16 %v233
      %v385 = vunpack.c.l.b16 %v234
      %v386 = vunpack.c.l.b16 %v235
      %v387 = vunpack.c.l.b16 %v236
      %v388 = vunpack.c.l.b16 %v237
      %v389 = vunpack.c.l.b16 %v238
      %v390 = vunpack.c.l.b16 %v239
      %v391 = vunpack.c.l.b16 %v240
      %v392 = vunpack.c.l.b16 %v241
      %v393 = vunpack.c.l.b16 %v242
      %v394 = vunpack.c.l.b16 %v243
      %v395 = vunpack.c.l.b16 %v244
      %v396 = vunpack.c.l.b16 %v245
      %v397 = vunpack.c.l.b16 %v246
      %v398 = vunpack.c.l.b16 %v247
      %v399 = vunpack.c.l.b16 %v248
      %v400 = vunpack.c.l.b16 %v249
      %v401 = vunpack.c.l.b16 %v250
      %v402 = vunpack.c.l.b16 %v251
      %v403 = vunpack.c.l.b16 %v252
      %v404 = vunpack.c.l.b16 %v253
      %v405 = vunpack.c.l.b16 %v254
      %v406 = vunpack.c.l.b16 %v255
      %v407 = vunpack.c.l.b16 %v256
      %v408 = vunpack.c.l.b16 %v257
      %v409 = vunpack.c.l.b16 %v258
      %v410 = vunpack.c.l.b16 %v259
      %v411 = vunpack.c.l.b16 %v260
      %v412 = vunpack.c.l.b16 %v261
      %v413 = vunpack.c.l.b16 %v262
      %v414 = vunpack.c.l.b16 %v263
      %v415 = vunpack.c.l.b16 %v264
      %v416 = vunpack.c.l.b16 %v265
      %v417 = vunpack.c.l.b16 %v266
      %v418 = vunpack.c.l.b16 %v267
      %v419 = vunpack.c.l.b16 %v268
      %v420 = vunpack.c.l.b16 %v269
      %v421 = vunpack.c.l.b16 %v270
      %v422 = vunpack.c.l.b16 %v271
      %v423 = vunpack.c.l.b16 %v272
      %v424 = vunpack.c.l.b16 %v273
      %v425 = vunpack.c.l.b16 %v274
      %v426 = vunpack.c.l.b16 %v275
      %v427 = vunpack.c.l.b16 %v276
      %v428 = vunpack.c.l.b16 %v277
      %v429 = vunpack.c.l.b16 %v278
      %v430 = vunpack.c.l.b16 %v279
      %v431 = vunpack.c.l.b16 %v280
      %v432 = vunpack.c.l.b16 %v281
      %v433 = vunpack.c.l.b16 %v282
      %v434 = vunpack.c.l.b16 %v283
      %v435 = vunpack.c.l.b16 %v284
      %v436 = vunpack.c.l.b16 %v285
      %v437 = vunpack.c.l.b16 %v286
      %v438 = vunpack.c.l.b16 %v287
      %v439 = vunpack.c.l.b16 %v288
      %v440 = vunpack.c.l.b16 %v289
      %v441 = vunpack.c.l.b16 %v290
      %v442 = vunpack.c.l.b16 %v291
      %v443 = vunpack.c.l.b16 %v292
      %v444 = vpack.c.b16 %v381, %v380
      %v445 = vpack.c.b16 %v383, %v382
      %v446 = vpack.c.b16 %v385, %v384
      %v447 = vpack.c.b16 %v387, %v386
      %v448 = vpack.c.b16 %v389, %v388
      %v449 = vpack.c.b16 %v391, %v390
      %v450 = vpack.c.b16 %v393, %v392
      %v451 = vpack.c.b16 %v395, %v394
      %v452 = vpack.c.b16 %v397, %v396
      %v453 = vpack.c.b16 %v399, %v398
      %v454 = vpack.c.b16 %v401, %v400
      %v455 = vpack.c.b16 %v403, %v402
      %v456 = vpack.c.b16 %v405, %v404
      %v457 = vpack.c.b16 %v407, %v406
      %v458 = vpack.c.b16 %v409, %v408
      %v459 = vpack.c.b16 %v411, %v410
      %v460 = vpack.c.b16 %v413, %v412
      %v461 = vpack.c.b16 %v415, %v414
      %v462 = vpack.c.b16 %v417, %v416
      %v463 = vpack.c.b16 %v419, %v418
      %v464 = vpack.c.b16 %v421, %v420
      %v465 = vpack.c.b16 %v423, %v422
      %v466 = vpack.c.b16 %v425, %v424
      %v467 = vpack.c.b16 %v427, %v426
      %v468 = vpack.c.b16 %v429, %v428
      %v469 = vpack.c.b16 %v431, %v430
      %v470 = vpack.c.b16 %v433, %v432
      %v471 = vpack.c.b16 %v435, %v434
      %v472 = vpack.c.b16 %v437, %v436
      %v473 = vpack.c.b16 %v439, %v438
      %v474 = vpack.c.b16 %v441, %v440
      %v475 = vpack.c.b16 %v443, %v442
      %v524 = vunpack.c.l.b16 %v293
      %v525 = vunpack.c.l.b16 %v294
      %v526 = vunpack.c.l.b16 %v295
      %v527 = vunpack.c.l.b16 %v296
      %v528 = vunpack.c.l.b16 %v297
      %v529 = vunpack.c.l.b16 %v298
      %v530 = vunpack.c.l.b16 %v299
      %v531 = vunpack.c.l.b16 %v300
      %v532 = vunpack.c.l.b16 %v301
      %v533 = vunpack.c.l.b16 %v302
      %v534 = vunpack.c.l.b16 %v303
      %v535 = vunpack.c.l.b16 %v304
      %v536 = vunpack.c.l.b16 %v305
      %v537 = vunpack.c.l.b16 %v306
      %v538 = vunpack.c.l.b16 %v307
      %v539 = vunpack.c.l.b16 %v308
      %v540 = vpack.c.b16 %v525, %v524
      %v541 = vpack.c.b16 %v527, %v526
      %v542 = vpack.c.b16 %v529, %v528
      %v543 = vpack.c.b16 %v531, %v530
      %v544 = vpack.c.b16 %v533, %v532
      %v545 = vpack.c.b16 %v535, %v534
      %v546 = vpack.c.b16 %v537, %v536
      %v547 = vpack.c.b16 %v539, %v538
      %556 = vmatprep.subr.bf16.mxu0 0
      %557 = vmatpush1.bf16.msra.mxu0 %v547
      %558 = vmatprep.subr.bf16.mxu0 0
      %559 = vmatpush1.bf16.msra.mxu0 %v546
      %560 = vmatprep.subr.bf16.mxu0 0
      %561 = vmatpush1.bf16.msra.mxu0 %v545
      %562 = vmatprep.subr.bf16.mxu0 0
      %563 = vmatpush1.bf16.msra.mxu0 %v544
      %564 = vmatprep.subr.bf16.mxu0 0
      %565 = vmatpush1.bf16.msra.mxu0 %v543
      %566 = vmatprep.subr.bf16.mxu0 0
      %567 = vmatpush1.bf16.msra.mxu0 %v542
      %568 = vmatprep.subr.bf16.mxu0 0
      %569 = vmatpush1.bf16.msra.mxu0 %v541
      %570 = vmatprep.subr.bf16.mxu0 0
      %571 = vmatpush1.bf16.msra.mxu0 %v540
      %572 = vmatprep.subr.bf16.mxu0 0
      %573 = vmatpush2.bf16.msra.mxu0 0
      %574 = vmatprep.subr.bf16.mxu0 0
      %575 = vmatpush2.bf16.msra.mxu0 0
      %576 = vmatprep.subr.bf16.mxu0 0
      %577 = vmatpush2.bf16.msra.mxu0 0
      %578 = vmatprep.subr.bf16.mxu0 0
      %579 = vmatpush2.bf16.msra.mxu0 0
      %580 = vmatprep.subr.bf16.mxu0 0
      %581 = vmatpush2.bf16.msra.mxu0 0
      %582 = vmatprep.subr.bf16.mxu0 0
      %583 = vmatpush2.bf16.msra.mxu0 0
      %584 = vmatprep.subr.bf16.mxu0 0
      %585 = vmatpush2.bf16.msra.mxu0 0
      %586 = vmatprep.subr.bf16.mxu0 0
      %587 = vmatpush2.bf16.msra.mxu0 0
      %588 = vmatprep.mubr.bf16.mxu0 0
      %589 = vmatmul.mubr.bf16.gmra.mxu0 %v444
      %v590 = vpop.f32.mrf.mxu0
      %v591 = vadd.f32 %v314, %v590
      %v592 = vpop.f32.mrf.mxu0
      %v593 = vpop.f32.mrf.mxu0
      %v594 = vadd.f32 %v314, %v593
      %v595 = vpop.f32.mrf.mxu0
      %596 = vmatprep.mubr.bf16.mxu0 0
      %597 = vmatmul.mubr.bf16.gmra.mxu0 %v445
      %v598 = vpop.f32.mrf.mxu0
      %v599 = vadd.f32 %v314, %v598
      %v600 = vpop.f32.mrf.mxu0
      %v601 = vpop.f32.mrf.mxu0
      %v602 = vadd.f32 %v314, %v601
      %v603 = vpop.f32.mrf.mxu0
      %604 = vmatprep.mubr.bf16.mxu0 0
      %605 = vmatmul.mubr.bf16.gmra.mxu0 %v446
      %v606 = vpop.f32.mrf.mxu0
      %v607 = vadd.f32 %v314, %v606
      %v608 = vpop.f32.mrf.mxu0
      %v609 = vpop.f32.mrf.mxu0
      %v610 = vadd.f32 %v314, %v609
      %v611 = vpop.f32.mrf.mxu0
      %612 = vmatprep.mubr.bf16.mxu0 0
      %613 = vmatmul.mubr.bf16.gmra.mxu0 %v447
      %v614 = vpop.f32.mrf.mxu0
      %v615 = vadd.f32 %v314, %v614
      %v616 = vpop.f32.mrf.mxu0
      %v617 = vpop.f32.mrf.mxu0
      %v618 = vadd.f32 %v314, %v617
      %v619 = vpop.f32.mrf.mxu0
      %620 = vmatprep.mubr.bf16.mxu0 0
      %621 = vmatmul.mubr.bf16.gmra.mxu0 %v448
      %v622 = vpop.f32.mrf.mxu0
      %v623 = vadd.f32 %v314, %v622
      %v624 = vpop.f32.mrf.mxu0
      %v625 = vpop.f32.mrf.mxu0
      %v626 = vadd.f32 %v314, %v625
      %v627 = vpop.f32.mrf.mxu0
      %628 = vmatprep.mubr.bf16.mxu0 0
      %629 = vmatmul.mubr.bf16.gmra.mxu0 %v449
      %v630 = vpop.f32.mrf.mxu0
      %v631 = vadd.f32 %v314, %v630
      %v632 = vpop.f32.mrf.mxu0
      %v633 = vpop.f32.mrf.mxu0
      %v634 = vadd.f32 %v314, %v633
      %v635 = vpop.f32.mrf.mxu0
      %636 = vmatprep.mubr.bf16.mxu0 0
      %637 = vmatmul.mubr.bf16.gmra.mxu0 %v450
      %v638 = vpop.f32.mrf.mxu0
      %v639 = vadd.f32 %v314, %v638
      %v640 = vpop.f32.mrf.mxu0
      %v641 = vpop.f32.mrf.mxu0
      %v642 = vadd.f32 %v314, %v641
      %v643 = vpop.f32.mrf.mxu0
      %644 = vmatprep.mubr.bf16.mxu0 0
      %645 = vmatmul.mubr.bf16.gmra.mxu0 %v451
      %v646 = vpop.f32.mrf.mxu0
      %v647 = vadd.f32 %v314, %v646
      %v648 = vpop.f32.mrf.mxu0
      %v649 = vpop.f32.mrf.mxu0
      %v650 = vadd.f32 %v314, %v649
      %v651 = vpop.f32.mrf.mxu0
      %652 = vmatprep.mubr.bf16.mxu0 0
      %653 = vmatmul.mubr.bf16.gmra.mxu0 %v452
      %v654 = vpop.f32.mrf.mxu0
      %v655 = vadd.f32 %v314, %v654
      %v656 = vpop.f32.mrf.mxu0
      %v657 = vpop.f32.mrf.mxu0
      %v658 = vadd.f32 %v314, %v657
      %v659 = vpop.f32.mrf.mxu0
      %660 = vmatprep.mubr.bf16.mxu0 0
      %661 = vmatmul.mubr.bf16.gmra.mxu0 %v453
      %v662 = vpop.f32.mrf.mxu0
      %v663 = vadd.f32 %v314, %v662
      %v664 = vpop.f32.mrf.mxu0
      %v665 = vpop.f32.mrf.mxu0
      %v666 = vadd.f32 %v314, %v665
      %v667 = vpop.f32.mrf.mxu0
      %668 = vmatprep.mubr.bf16.mxu0 0
      %669 = vmatmul.mubr.bf16.gmra.mxu0 %v454
      %v670 = vpop.f32.mrf.mxu0
      %v671 = vadd.f32 %v314, %v670
      %v672 = vpop.f32.mrf.mxu0
      %v673 = vpop.f32.mrf.mxu0
      %v674 = vadd.f32 %v314, %v673
      %v675 = vpop.f32.mrf.mxu0
      %676 = vmatprep.mubr.bf16.mxu0 0
      %677 = vmatmul.mubr.bf16.gmra.mxu0 %v455
      %v678 = vpop.f32.mrf.mxu0
      %v679 = vadd.f32 %v314, %v678
      %v680 = vpop.f32.mrf.mxu0
      %v681 = vpop.f32.mrf.mxu0
      %v682 = vadd.f32 %v314, %v681
      %v683 = vpop.f32.mrf.mxu0
      %684 = vmatprep.mubr.bf16.mxu0 0
      %685 = vmatmul.mubr.bf16.gmra.mxu0 %v456
      %v686 = vpop.f32.mrf.mxu0
      %v687 = vadd.f32 %v314, %v686
      %v688 = vpop.f32.mrf.mxu0
      %v689 = vpop.f32.mrf.mxu0
      %v690 = vadd.f32 %v314, %v689
      %v691 = vpop.f32.mrf.mxu0
      %692 = vmatprep.mubr.bf16.mxu0 0
      %693 = vmatmul.mubr.bf16.gmra.mxu0 %v457
      %v694 = vpop.f32.mrf.mxu0
      %v695 = vadd.f32 %v314, %v694
      %v696 = vpop.f32.mrf.mxu0
      %v697 = vpop.f32.mrf.mxu0
      %v698 = vadd.f32 %v314, %v697
      %v699 = vpop.f32.mrf.mxu0
      %700 = vmatprep.mubr.bf16.mxu0 0
      %701 = vmatmul.mubr.bf16.gmra.mxu0 %v458
      %v702 = vpop.f32.mrf.mxu0
      %v703 = vadd.f32 %v314, %v702
      %v704 = vpop.f32.mrf.mxu0
      %v705 = vpop.f32.mrf.mxu0
      %v706 = vadd.f32 %v314, %v705
      %v707 = vpop.f32.mrf.mxu0
      %708 = vmatprep.mubr.bf16.mxu0 0
      %709 = vmatmul.mubr.bf16.gmra.mxu0 %v459
      %v710 = vpop.f32.mrf.mxu0
      %v711 = vadd.f32 %v314, %v710
      %v712 = vpop.f32.mrf.mxu0
      %v713 = vpop.f32.mrf.mxu0
      %v714 = vadd.f32 %v314, %v713
      %v715 = vpop.f32.mrf.mxu0
      %716 = vmatprep.mubr.bf16.mxu0 0
      %717 = vmatmul.mubr.bf16.gmra.mxu0 %v460
      %v718 = vpop.f32.mrf.mxu0
      %v719 = vadd.f32 %v314, %v718
      %v720 = vpop.f32.mrf.mxu0
      %v721 = vpop.f32.mrf.mxu0
      %v722 = vadd.f32 %v314, %v721
      %v723 = vpop.f32.mrf.mxu0
      %724 = vmatprep.mubr.bf16.mxu0 0
      %725 = vmatmul.mubr.bf16.gmra.mxu0 %v461
      %v726 = vpop.f32.mrf.mxu0
      %v727 = vadd.f32 %v314, %v726
      %v728 = vpop.f32.mrf.mxu0
      %v729 = vpop.f32.mrf.mxu0
      %v730 = vadd.f32 %v314, %v729
      %v731 = vpop.f32.mrf.mxu0
      %732 = vmatprep.mubr.bf16.mxu0 0
      %733 = vmatmul.mubr.bf16.gmra.mxu0 %v462
      %v734 = vpop.f32.mrf.mxu0
      %v735 = vadd.f32 %v314, %v734
      %v736 = vpop.f32.mrf.mxu0
      %v737 = vpop.f32.mrf.mxu0
      %v738 = vadd.f32 %v314, %v737
      %v739 = vpop.f32.mrf.mxu0
      %740 = vmatprep.mubr.bf16.mxu0 0
      %741 = vmatmul.mubr.bf16.gmra.mxu0 %v463
      %v742 = vpop.f32.mrf.mxu0
      %v743 = vadd.f32 %v314, %v742
      %v744 = vpop.f32.mrf.mxu0
      %v745 = vpop.f32.mrf.mxu0
      %v746 = vadd.f32 %v314, %v745
      %v747 = vpop.f32.mrf.mxu0
      %748 = vmatprep.mubr.bf16.mxu0 0
      %749 = vmatmul.mubr.bf16.gmra.mxu0 %v464
      %v750 = vpop.f32.mrf.mxu0
      %v751 = vadd.f32 %v314, %v750
      %v752 = vpop.f32.mrf.mxu0
      %v753 = vpop.f32.mrf.mxu0
      %v754 = vadd.f32 %v314, %v753
      %v755 = vpop.f32.mrf.mxu0
      %756 = vmatprep.mubr.bf16.mxu0 0
      %757 = vmatmul.mubr.bf16.gmra.mxu0 %v465
      %v758 = vpop.f32.mrf.mxu0
      %v759 = vadd.f32 %v314, %v758
      %v760 = vpop.f32.mrf.mxu0
      %v761 = vpop.f32.mrf.mxu0
      %v762 = vadd.f32 %v314, %v761
      %v763 = vpop.f32.mrf.mxu0
      %764 = vmatprep.mubr.bf16.mxu0 0
      %765 = vmatmul.mubr.bf16.gmra.mxu0 %v466
      %v766 = vpop.f32.mrf.mxu0
      %v767 = vadd.f32 %v314, %v766
      %v768 = vpop.f32.mrf.mxu0
      %v769 = vpop.f32.mrf.mxu0
      %v770 = vadd.f32 %v314, %v769
      %v771 = vpop.f32.mrf.mxu0
      %772 = vmatprep.mubr.bf16.mxu0 0
      %773 = vmatmul.mubr.bf16.gmra.mxu0 %v467
      %v774 = vpop.f32.mrf.mxu0
      %v775 = vadd.f32 %v314, %v774
      %v776 = vpop.f32.mrf.mxu0
      %v777 = vpop.f32.mrf.mxu0
      %v778 = vadd.f32 %v314, %v777
      %v779 = vpop.f32.mrf.mxu0
      %780 = vmatprep.mubr.bf16.mxu0 0
      %781 = vmatmul.mubr.bf16.gmra.mxu0 %v468
      %v782 = vpop.f32.mrf.mxu0
      %v783 = vadd.f32 %v314, %v782
      %v784 = vpop.f32.mrf.mxu0
      %v785 = vpop.f32.mrf.mxu0
      %v786 = vadd.f32 %v314, %v785
      %v787 = vpop.f32.mrf.mxu0
      %788 = vmatprep.mubr.bf16.mxu0 0
      %789 = vmatmul.mubr.bf16.gmra.mxu0 %v469
      %v790 = vpop.f32.mrf.mxu0
      %v791 = vadd.f32 %v314, %v790
      %v792 = vpop.f32.mrf.mxu0
      %v793 = vpop.f32.mrf.mxu0
      %v794 = vadd.f32 %v314, %v793
      %v795 = vpop.f32.mrf.mxu0
      %796 = vmatprep.mubr.bf16.mxu0 0
      %797 = vmatmul.mubr.bf16.gmra.mxu0 %v470
      %v798 = vpop.f32.mrf.mxu0
      %v799 = vadd.f32 %v314, %v798
      %v800 = vpop.f32.mrf.mxu0
      %v801 = vpop.f32.mrf.mxu0
      %v802 = vadd.f32 %v314, %v801
      %v803 = vpop.f32.mrf.mxu0
      %804 = vmatprep.mubr.bf16.mxu0 0
      %805 = vmatmul.mubr.bf16.gmra.mxu0 %v471
      %v806 = vpop.f32.mrf.mxu0
      %v807 = vadd.f32 %v314, %v806
      %v808 = vpop.f32.mrf.mxu0
      %v809 = vpop.f32.mrf.mxu0
      %v810 = vadd.f32 %v314, %v809
      %v811 = vpop.f32.mrf.mxu0
      %812 = vmatprep.mubr.bf16.mxu0 0
      %813 = vmatmul.mubr.bf16.gmra.mxu0 %v472
      %v814 = vpop.f32.mrf.mxu0
      %v815 = vadd.f32 %v314, %v814
      %v816 = vpop.f32.mrf.mxu0
      %v817 = vpop.f32.mrf.mxu0
      %v818 = vadd.f32 %v314, %v817
      %v819 = vpop.f32.mrf.mxu0
      %820 = vmatprep.mubr.bf16.mxu0 0
      %821 = vmatmul.mubr.bf16.gmra.mxu0 %v473
      %v822 = vpop.f32.mrf.mxu0
      %v823 = vadd.f32 %v314, %v822
      %v824 = vpop.f32.mrf.mxu0
      %v825 = vpop.f32.mrf.mxu0
      %v826 = vadd.f32 %v314, %v825
      %v827 = vpop.f32.mrf.mxu0
      %828 = vmatprep.mubr.bf16.mxu0 0
      %829 = vmatmul.mubr.bf16.gmra.mxu0 %v474
      %v830 = vpop.f32.mrf.mxu0
      %v831 = vadd.f32 %v314, %v830
      %v832 = vpop.f32.mrf.mxu0
      %v833 = vpop.f32.mrf.mxu0
      %v834 = vadd.f32 %v314, %v833
      %v835 = vpop.f32.mrf.mxu0
      %836 = vmatprep.mubr.bf16.mxu0 0
      %837 = vmatmul.mubr.bf16.gmra.mxu0 %v475
      %v838 = vpop.f32.mrf.mxu0
      %v839 = vadd.f32 %v314, %v838
      %v840 = vpop.f32.mrf.mxu0
      %v841 = vpop.f32.mrf.mxu0
      %v842 = vadd.f32 %v314, %v841
      %v843 = vpop.f32.mrf.mxu0
      %844 = vdwg.mxu0
      %v845 = vmul.f32 %v591, %v591
      %v846 = vmul.f32 %v594, %v594
      %v847 = vmul.f32 %v599, %v599
      %v848 = vmul.f32 %v602, %v602
      %v849 = vmul.f32 %v607, %v607
      %v850 = vmul.f32 %v610, %v610
      %v851 = vmul.f32 %v615, %v615
      %v852 = vmul.f32 %v618, %v618
      %v853 = vmul.f32 %v623, %v623
      %v854 = vmul.f32 %v626, %v626
      %v855 = vmul.f32 %v631, %v631
      %v856 = vmul.f32 %v634, %v634
      %v857 = vmul.f32 %v639, %v639
      %v858 = vmul.f32 %v642, %v642
      %v859 = vmul.f32 %v647, %v647
      %v860 = vmul.f32 %v650, %v650
      %v861 = vmul.f32 %v655, %v655
      %v862 = vmul.f32 %v658, %v658
      %v863 = vmul.f32 %v663, %v663
      %v864 = vmul.f32 %v666, %v666
      %v865 = vmul.f32 %v671, %v671
      %v866 = vmul.f32 %v674, %v674
      %v867 = vmul.f32 %v679, %v679
      %v868 = vmul.f32 %v682, %v682
      %v869 = vmul.f32 %v687, %v687
      %v870 = vmul.f32 %v690, %v690
      %v871 = vmul.f32 %v695, %v695
      %v872 = vmul.f32 %v698, %v698
      %v873 = vmul.f32 %v703, %v703
      %v874 = vmul.f32 %v706, %v706
      %v875 = vmul.f32 %v711, %v711
      %v876 = vmul.f32 %v714, %v714
      %v877 = vmul.f32 %v719, %v719
      %v878 = vmul.f32 %v722, %v722
      %v879 = vmul.f32 %v727, %v727
      %v880 = vmul.f32 %v730, %v730
      %v881 = vmul.f32 %v735, %v735
      %v882 = vmul.f32 %v738, %v738
      %v883 = vmul.f32 %v743, %v743
      %v884 = vmul.f32 %v746, %v746
      %v885 = vmul.f32 %v751, %v751
      %v886 = vmul.f32 %v754, %v754
      %v887 = vmul.f32 %v759, %v759
      %v888 = vmul.f32 %v762, %v762
      %v889 = vmul.f32 %v767, %v767
      %v890 = vmul.f32 %v770, %v770
      %v891 = vmul.f32 %v775, %v775
      %v892 = vmul.f32 %v778, %v778
      %v893 = vmul.f32 %v783, %v783
      %v894 = vmul.f32 %v786, %v786
      %v895 = vmul.f32 %v791, %v791
      %v896 = vmul.f32 %v794, %v794
      %v897 = vmul.f32 %v799, %v799
      %v898 = vmul.f32 %v802, %v802
      %v899 = vmul.f32 %v807, %v807
      %v900 = vmul.f32 %v810, %v810
      %v901 = vmul.f32 %v815, %v815
      %v902 = vmul.f32 %v818, %v818
      %v903 = vmul.f32 %v823, %v823
      %v904 = vmul.f32 %v826, %v826
      %v905 = vmul.f32 %v831, %v831
      %v906 = vmul.f32 %v834, %v834
      %v907 = vmul.f32 %v839, %v839
      %v908 = vmul.f32 %v842, %v842
      %v909 = vpack.c.bf16 %v846, %v845
      %v910 = vpack.c.bf16 %v848, %v847
      %v911 = vpack.c.bf16 %v850, %v849
      %v912 = vpack.c.bf16 %v852, %v851
      %v913 = vpack.c.bf16 %v854, %v853
      %v914 = vpack.c.bf16 %v856, %v855
      %v915 = vpack.c.bf16 %v858, %v857
      %v916 = vpack.c.bf16 %v860, %v859
      %v917 = vpack.c.bf16 %v862, %v861
      %v918 = vpack.c.bf16 %v864, %v863
      %v919 = vpack.c.bf16 %v866, %v865
      %v920 = vpack.c.bf16 %v868, %v867
      %v921 = vpack.c.bf16 %v870, %v869
      %v922 = vpack.c.bf16 %v872, %v871
      %v923 = vpack.c.bf16 %v874, %v873
      %v924 = vpack.c.bf16 %v876, %v875
      %v925 = vpack.c.bf16 %v878, %v877
      %v926 = vpack.c.bf16 %v880, %v879
      %v927 = vpack.c.bf16 %v882, %v881
      %v928 = vpack.c.bf16 %v884, %v883
      %v929 = vpack.c.bf16 %v886, %v885
      %v930 = vpack.c.bf16 %v888, %v887
      %v931 = vpack.c.bf16 %v890, %v889
      %v932 = vpack.c.bf16 %v892, %v891
      %v933 = vpack.c.bf16 %v894, %v893
      %v934 = vpack.c.bf16 %v896, %v895
      %v935 = vpack.c.bf16 %v898, %v897
      %v936 = vpack.c.bf16 %v900, %v899
      %v937 = vpack.c.bf16 %v902, %v901
      %v938 = vpack.c.bf16 %v904, %v903
      %v939 = vpack.c.bf16 %v906, %v905
      %v940 = vpack.c.bf16 %v908, %v907
      %v941 = vld [vmem:[%s3] sm:$0xf]
      %v942 = vld [vmem:[%s3 + $0x4] sm:$0xf]
      %v943 = vld [vmem:[%s3 + $0x8] sm:$0xf]
      %v944 = vld [vmem:[%s3 + $0xc] sm:$0xf]
      %v945 = vld [vmem:[%s3 + $0x10] sm:$0xf]
      %v946 = vld [vmem:[%s3 + $0x14] sm:$0xf]
      %v947 = vld [vmem:[%s3 + $0x18] sm:$0xf]
      %v948 = vld [vmem:[%s3 + $0x1c] sm:$0xf]
      %v949 = vld [vmem:[%s3 + $0x20] sm:$0xf]
      %v950 = vld [vmem:[%s3 + $0x24] sm:$0xf]
      %v951 = vld [vmem:[%s3 + $0x28] sm:$0xf]
      %v952 = vld [vmem:[%s3 + $0x2c] sm:$0xf]
      %v953 = vld [vmem:[%s3 + $0x30] sm:$0xf]
      %v954 = vld [vmem:[%s3 + $0x34] sm:$0xf]
      %v955 = vld [vmem:[%s3 + $0x38] sm:$0xf]
      %v956 = vld [vmem:[%s3 + $0x3c] sm:$0xf]
      %v957 = vld [vmem:[%s4] sm:$0x1]
      %v959 = vlaneseq
      %v960 = vshrl.u32 %v959, 7
      %v961 = vsub.s32 0, %v960
      %v962 = vrot.slane %v957, %v961
      %v980 = vunpack.c.l.b16 %v941
      %v981 = vunpack.c.l.b16 %v942
      %v982 = vunpack.c.l.b16 %v943
      %v983 = vunpack.c.l.b16 %v944
      %v984 = vunpack.c.l.b16 %v945
      %v985 = vunpack.c.l.b16 %v946
      %v986 = vunpack.c.l.b16 %v947
      %v987 = vunpack.c.l.b16 %v948
      %v988 = vunpack.c.l.b16 %v949
      %v989 = vunpack.c.l.b16 %v950
      %v990 = vunpack.c.l.b16 %v951
      %v991 = vunpack.c.l.b16 %v952
      %v992 = vunpack.c.l.b16 %v953
      %v993 = vunpack.c.l.b16 %v954
      %v994 = vunpack.c.l.b16 %v955
      %v995 = vunpack.c.l.b16 %v956
      %v996 = vpack.c.b16 %v981, %v980
      %v997 = vpack.c.b16 %v983, %v982
      %v998 = vpack.c.b16 %v985, %v984
      %v999 = vpack.c.b16 %v987, %v986
      %v1000 = vpack.c.b16 %v989, %v988
      %v1001 = vpack.c.b16 %v991, %v990
      %v1002 = vpack.c.b16 %v993, %v992
      %v1003 = vpack.c.b16 %v995, %v994
      %1012 = vmatprep.subr.bf16.mxu0 0
      %1013 = vmatpush1.bf16.msra.mxu0 %v1003
      %1014 = vmatprep.subr.bf16.mxu0 0
      %1015 = vmatpush1.bf16.msra.mxu0 %v1002
      %1016 = vmatprep.subr.bf16.mxu0 0
      %1017 = vmatpush1.bf16.msra.mxu0 %v1001
      %1018 = vmatprep.subr.bf16.mxu0 0
      %1019 = vmatpush1.bf16.msra.mxu0 %v1000
      %1020 = vmatprep.subr.bf16.mxu0 0
      %1021 = vmatpush1.bf16.msra.mxu0 %v999
      %1022 = vmatprep.subr.bf16.mxu0 0
      %1023 = vmatpush1.bf16.msra.mxu0 %v998
      %1024 = vmatprep.subr.bf16.mxu0 0
      %1025 = vmatpush1.bf16.msra.mxu0 %v997
      %1026 = vmatprep.subr.bf16.mxu0 0
      %1027 = vmatpush1.bf16.msra.mxu0 %v996
      %1028 = vmatprep.subr.bf16.mxu0 0
      %1029 = vmatpush2.bf16.msra.mxu0 0
      %1030 = vmatprep.subr.bf16.mxu0 0
      %1031 = vmatpush2.bf16.msra.mxu0 0
      %1032 = vmatprep.subr.bf16.mxu0 0
      %1033 = vmatpush2.bf16.msra.mxu0 0
      %1034 = vmatprep.subr.bf16.mxu0 0
      %1035 = vmatpush2.bf16.msra.mxu0 0
      %1036 = vmatprep.subr.bf16.mxu0 0
      %1037 = vmatpush2.bf16.msra.mxu0 0
      %1038 = vmatprep.subr.bf16.mxu0 0
      %1039 = vmatpush2.bf16.msra.mxu0 0
      %1040 = vmatprep.subr.bf16.mxu0 0
      %1041 = vmatpush2.bf16.msra.mxu0 0
      %1042 = vmatprep.subr.bf16.mxu0 0
      %1043 = vmatpush2.bf16.msra.mxu0 0
      %1044 = vmatprep.mubr.bf16.mxu0 0
      %1045 = vmatmul.mubr.bf16.gmra.mxu0 %v909
      %v1046 = vpop.f32.mrf.mxu0
      %v1047 = vadd.f32 %v962, %v1046
      %v1048 = vpop.f32.mrf.mxu0
      %v1049 = vpop.f32.mrf.mxu0
      %v1050 = vadd.f32 %v962, %v1049
      %v1051 = vpop.f32.mrf.mxu0
      %1052 = vmatprep.mubr.bf16.mxu0 0
      %1053 = vmatmul.mubr.bf16.gmra.mxu0 %v910
      %v1054 = vpop.f32.mrf.mxu0
      %v1055 = vadd.f32 %v962, %v1054
      %v1056 = vpop.f32.mrf.mxu0
      %v1057 = vpop.f32.mrf.mxu0
      %v1058 = vadd.f32 %v962, %v1057
      %v1059 = vpop.f32.mrf.mxu0
      %1060 = vmatprep.mubr.bf16.mxu0 0
      %1061 = vmatmul.mubr.bf16.gmra.mxu0 %v911
      %v1062 = vpop.f32.mrf.mxu0
      %v1063 = vadd.f32 %v962, %v1062
      %v1064 = vpop.f32.mrf.mxu0
      %v1065 = vpop.f32.mrf.mxu0
      %v1066 = vadd.f32 %v962, %v1065
      %v1067 = vpop.f32.mrf.mxu0
      %1068 = vmatprep.mubr.bf16.mxu0 0
      %1069 = vmatmul.mubr.bf16.gmra.mxu0 %v912
      %v1070 = vpop.f32.mrf.mxu0
      %v1071 = vadd.f32 %v962, %v1070
      %v1072 = vpop.f32.mrf.mxu0
      %v1073 = vpop.f32.mrf.mxu0
      %v1074 = vadd.f32 %v962, %v1073
      %v1075 = vpop.f32.mrf.mxu0
      %1076 = vmatprep.mubr.bf16.mxu0 0
      %1077 = vmatmul.mubr.bf16.gmra.mxu0 %v913
      %v1078 = vpop.f32.mrf.mxu0
      %v1079 = vadd.f32 %v962, %v1078
      %v1080 = vpop.f32.mrf.mxu0
      %v1081 = vpop.f32.mrf.mxu0
      %v1082 = vadd.f32 %v962, %v1081
      %v1083 = vpop.f32.mrf.mxu0
      %1084 = vmatprep.mubr.bf16.mxu0 0
      %1085 = vmatmul.mubr.bf16.gmra.mxu0 %v914
      %v1086 = vpop.f32.mrf.mxu0
      %v1087 = vadd.f32 %v962, %v1086
      %v1088 = vpop.f32.mrf.mxu0
      %v1089 = vpop.f32.mrf.mxu0
      %v1090 = vadd.f32 %v962, %v1089
      %v1091 = vpop.f32.mrf.mxu0
      %1092 = vmatprep.mubr.bf16.mxu0 0
      %1093 = vmatmul.mubr.bf16.gmra.mxu0 %v915
      %v1094 = vpop.f32.mrf.mxu0
      %v1095 = vadd.f32 %v962, %v1094
      %v1096 = vpop.f32.mrf.mxu0
      %v1097 = vpop.f32.mrf.mxu0
      %v1098 = vadd.f32 %v962, %v1097
      %v1099 = vpop.f32.mrf.mxu0
      %1100 = vmatprep.mubr.bf16.mxu0 0
      %1101 = vmatmul.mubr.bf16.gmra.mxu0 %v916
      %v1102 = vpop.f32.mrf.mxu0
      %v1103 = vadd.f32 %v962, %v1102
      %v1104 = vpop.f32.mrf.mxu0
      %v1105 = vpop.f32.mrf.mxu0
      %v1106 = vadd.f32 %v962, %v1105
      %v1107 = vpop.f32.mrf.mxu0
      %1108 = vmatprep.mubr.bf16.mxu0 0
      %1109 = vmatmul.mubr.bf16.gmra.mxu0 %v917
      %v1110 = vpop.f32.mrf.mxu0
      %v1111 = vadd.f32 %v962, %v1110
      %v1112 = vpop.f32.mrf.mxu0
      %v1113 = vpop.f32.mrf.mxu0
      %v1114 = vadd.f32 %v962, %v1113
      %v1115 = vpop.f32.mrf.mxu0
      %1116 = vmatprep.mubr.bf16.mxu0 0
      %1117 = vmatmul.mubr.bf16.gmra.mxu0 %v918
      %v1118 = vpop.f32.mrf.mxu0
      %v1119 = vadd.f32 %v962, %v1118
      %v1120 = vpop.f32.mrf.mxu0
      %v1121 = vpop.f32.mrf.mxu0
      %v1122 = vadd.f32 %v962, %v1121
      %v1123 = vpop.f32.mrf.mxu0
      %1124 = vmatprep.mubr.bf16.mxu0 0
      %1125 = vmatmul.mubr.bf16.gmra.mxu0 %v919
      %v1126 = vpop.f32.mrf.mxu0
      %v1127 = vadd.f32 %v962, %v1126
      %v1128 = vpop.f32.mrf.mxu0
      %v1129 = vpop.f32.mrf.mxu0
      %v1130 = vadd.f32 %v962, %v1129
      %v1131 = vpop.f32.mrf.mxu0
      %1132 = vmatprep.mubr.bf16.mxu0 0
      %1133 = vmatmul.mubr.bf16.gmra.mxu0 %v920
      %v1134 = vpop.f32.mrf.mxu0
      %v1135 = vadd.f32 %v962, %v1134
      %v1136 = vpop.f32.mrf.mxu0
      %v1137 = vpop.f32.mrf.mxu0
      %v1138 = vadd.f32 %v962, %v1137
      %v1139 = vpop.f32.mrf.mxu0
      %1140 = vmatprep.mubr.bf16.mxu0 0
      %1141 = vmatmul.mubr.bf16.gmra.mxu0 %v921
      %v1142 = vpop.f32.mrf.mxu0
      %v1143 = vadd.f32 %v962, %v1142
      %v1144 = vpop.f32.mrf.mxu0
      %v1145 = vpop.f32.mrf.mxu0
      %v1146 = vadd.f32 %v962, %v1145
      %v1147 = vpop.f32.mrf.mxu0
      %1148 = vmatprep.mubr.bf16.mxu0 0
      %1149 = vmatmul.mubr.bf16.gmra.mxu0 %v922
      %v1150 = vpop.f32.mrf.mxu0
      %v1151 = vadd.f32 %v962, %v1150
      %v1152 = vpop.f32.mrf.mxu0
      %v1153 = vpop.f32.mrf.mxu0
      %v1154 = vadd.f32 %v962, %v1153
      %v1155 = vpop.f32.mrf.mxu0
      %1156 = vmatprep.mubr.bf16.mxu0 0
      %1157 = vmatmul.mubr.bf16.gmra.mxu0 %v923
      %v1158 = vpop.f32.mrf.mxu0
      %v1159 = vadd.f32 %v962, %v1158
      %v1160 = vpop.f32.mrf.mxu0
      %v1161 = vpop.f32.mrf.mxu0
      %v1162 = vadd.f32 %v962, %v1161
      %v1163 = vpop.f32.mrf.mxu0
      %1164 = vmatprep.mubr.bf16.mxu0 0
      %1165 = vmatmul.mubr.bf16.gmra.mxu0 %v924
      %v1166 = vpop.f32.mrf.mxu0
      %v1167 = vadd.f32 %v962, %v1166
      %v1168 = vpop.f32.mrf.mxu0
      %v1169 = vpop.f32.mrf.mxu0
      %v1170 = vadd.f32 %v962, %v1169
      %v1171 = vpop.f32.mrf.mxu0
      %1172 = vmatprep.mubr.bf16.mxu0 0
      %1173 = vmatmul.mubr.bf16.gmra.mxu0 %v925
      %v1174 = vpop.f32.mrf.mxu0
      %v1175 = vadd.f32 %v962, %v1174
      %v1176 = vpop.f32.mrf.mxu0
      %v1177 = vpop.f32.mrf.mxu0
      %v1178 = vadd.f32 %v962, %v1177
      %v1179 = vpop.f32.mrf.mxu0
      %1180 = vmatprep.mubr.bf16.mxu0 0
      %1181 = vmatmul.mubr.bf16.gmra.mxu0 %v926
      %v1182 = vpop.f32.mrf.mxu0
      %v1183 = vadd.f32 %v962, %v1182
      %v1184 = vpop.f32.mrf.mxu0
      %v1185 = vpop.f32.mrf.mxu0
      %v1186 = vadd.f32 %v962, %v1185
      %v1187 = vpop.f32.mrf.mxu0
      %1188 = vmatprep.mubr.bf16.mxu0 0
      %1189 = vmatmul.mubr.bf16.gmra.mxu0 %v927
      %v1190 = vpop.f32.mrf.mxu0
      %v1191 = vadd.f32 %v962, %v1190
      %v1192 = vpop.f32.mrf.mxu0
      %v1193 = vpop.f32.mrf.mxu0
      %v1194 = vadd.f32 %v962, %v1193
      %v1195 = vpop.f32.mrf.mxu0
      %1196 = vmatprep.mubr.bf16.mxu0 0
      %1197 = vmatmul.mubr.bf16.gmra.mxu0 %v928
      %v1198 = vpop.f32.mrf.mxu0
      %v1199 = vadd.f32 %v962, %v1198
      %v1200 = vpop.f32.mrf.mxu0
      %v1201 = vpop.f32.mrf.mxu0
      %v1202 = vadd.f32 %v962, %v1201
      %v1203 = vpop.f32.mrf.mxu0
      %1204 = vmatprep.mubr.bf16.mxu0 0
      %1205 = vmatmul.mubr.bf16.gmra.mxu0 %v929
      %v1206 = vpop.f32.mrf.mxu0
      %v1207 = vadd.f32 %v962, %v1206
      %v1208 = vpop.f32.mrf.mxu0
      %v1209 = vpop.f32.mrf.mxu0
      %v1210 = vadd.f32 %v962, %v1209
      %v1211 = vpop.f32.mrf.mxu0
      %1212 = vmatprep.mubr.bf16.mxu0 0
      %1213 = vmatmul.mubr.bf16.gmra.mxu0 %v930
      %v1214 = vpop.f32.mrf.mxu0
      %v1215 = vadd.f32 %v962, %v1214
      %v1216 = vpop.f32.mrf.mxu0
      %v1217 = vpop.f32.mrf.mxu0
      %v1218 = vadd.f32 %v962, %v1217
      %v1219 = vpop.f32.mrf.mxu0
      %1220 = vmatprep.mubr.bf16.mxu0 0
      %1221 = vmatmul.mubr.bf16.gmra.mxu0 %v931
      %v1222 = vpop.f32.mrf.mxu0
      %v1223 = vadd.f32 %v962, %v1222
      %v1224 = vpop.f32.mrf.mxu0
      %v1225 = vpop.f32.mrf.mxu0
      %v1226 = vadd.f32 %v962, %v1225
      %v1227 = vpop.f32.mrf.mxu0
      %1228 = vmatprep.mubr.bf16.mxu0 0
      %1229 = vmatmul.mubr.bf16.gmra.mxu0 %v932
      %v1230 = vpop.f32.mrf.mxu0
      %v1231 = vadd.f32 %v962, %v1230
      %v1232 = vpop.f32.mrf.mxu0
      %v1233 = vpop.f32.mrf.mxu0
      %v1234 = vadd.f32 %v962, %v1233
      %v1235 = vpop.f32.mrf.mxu0
      %1236 = vmatprep.mubr.bf16.mxu0 0
      %1237 = vmatmul.mubr.bf16.gmra.mxu0 %v933
      %v1238 = vpop.f32.mrf.mxu0
      %v1239 = vadd.f32 %v962, %v1238
      %v1240 = vpop.f32.mrf.mxu0
      %v1241 = vpop.f32.mrf.mxu0
      %v1242 = vadd.f32 %v962, %v1241
      %v1243 = vpop.f32.mrf.mxu0
      %1244 = vmatprep.mubr.bf16.mxu0 0
      %1245 = vmatmul.mubr.bf16.gmra.mxu0 %v934
      %v1246 = vpop.f32.mrf.mxu0
      %v1247 = vadd.f32 %v962, %v1246
      %v1248 = vpop.f32.mrf.mxu0
      %v1249 = vpop.f32.mrf.mxu0
      %v1250 = vadd.f32 %v962, %v1249
      %v1251 = vpop.f32.mrf.mxu0
      %1252 = vmatprep.mubr.bf16.mxu0 0
      %1253 = vmatmul.mubr.bf16.gmra.mxu0 %v935
      %v1254 = vpop.f32.mrf.mxu0
      %v1255 = vadd.f32 %v962, %v1254
      %v1256 = vpop.f32.mrf.mxu0
      %v1257 = vpop.f32.mrf.mxu0
      %v1258 = vadd.f32 %v962, %v1257
      %v1259 = vpop.f32.mrf.mxu0
      %1260 = vmatprep.mubr.bf16.mxu0 0
      %1261 = vmatmul.mubr.bf16.gmra.mxu0 %v936
      %v1262 = vpop.f32.mrf.mxu0
      %v1263 = vadd.f32 %v962, %v1262
      %v1264 = vpop.f32.mrf.mxu0
      %v1265 = vpop.f32.mrf.mxu0
      %v1266 = vadd.f32 %v962, %v1265
      %v1267 = vpop.f32.mrf.mxu0
      %1268 = vmatprep.mubr.bf16.mxu0 0
      %1269 = vmatmul.mubr.bf16.gmra.mxu0 %v937
      %v1270 = vpop.f32.mrf.mxu0
      %v1271 = vadd.f32 %v962, %v1270
      %v1272 = vpop.f32.mrf.mxu0
      %v1273 = vpop.f32.mrf.mxu0
      %v1274 = vadd.f32 %v962, %v1273
      %v1275 = vpop.f32.mrf.mxu0
      %1276 = vmatprep.mubr.bf16.mxu0 0
      %1277 = vmatmul.mubr.bf16.gmra.mxu0 %v938
      %v1278 = vpop.f32.mrf.mxu0
      %v1279 = vadd.f32 %v962, %v1278
      %v1280 = vpop.f32.mrf.mxu0
      %v1281 = vpop.f32.mrf.mxu0
      %v1282 = vadd.f32 %v962, %v1281
      %v1283 = vpop.f32.mrf.mxu0
      %1284 = vmatprep.mubr.bf16.mxu0 0
      %1285 = vmatmul.mubr.bf16.gmra.mxu0 %v939
      %v1286 = vpop.f32.mrf.mxu0
      %v1287 = vadd.f32 %v962, %v1286
      %v1288 = vpop.f32.mrf.mxu0
      %v1289 = vpop.f32.mrf.mxu0
      %v1290 = vadd.f32 %v962, %v1289
      %v1291 = vpop.f32.mrf.mxu0
      %1292 = vmatprep.mubr.bf16.mxu0 0
      %1293 = vmatmul.mubr.bf16.gmra.mxu0 %v940
      %v1294 = vpop.f32.mrf.mxu0
      %v1295 = vadd.f32 %v962, %v1294
      %v1296 = vpop.f32.mrf.mxu0
      %v1297 = vpop.f32.mrf.mxu0
      %v1298 = vadd.f32 %v962, %v1297
      %v1299 = vpop.f32.mrf.mxu0
      %1300 = vdwg.mxu0
      %v1301 = vmax.f32 %v1047, 1e-06
      %v1302 = vmax.f32 %v1050, 1e-06
      %v1303 = vmax.f32 %v1055, 1e-06
      %v1304 = vmax.f32 %v1058, 1e-06
      %v1305 = vmax.f32 %v1063, 1e-06
      %v1306 = vmax.f32 %v1066, 1e-06
      %v1307 = vmax.f32 %v1071, 1e-06
      %v1308 = vmax.f32 %v1074, 1e-06
      %v1309 = vmax.f32 %v1079, 1e-06
      %v1310 = vmax.f32 %v1082, 1e-06
      %v1311 = vmax.f32 %v1087, 1e-06
      %v1312 = vmax.f32 %v1090, 1e-06
      %v1313 = vmax.f32 %v1095, 1e-06
      %v1314 = vmax.f32 %v1098, 1e-06
      %v1315 = vmax.f32 %v1103, 1e-06
      %v1316 = vmax.f32 %v1106, 1e-06
      %v1317 = vmax.f32 %v1111, 1e-06
      %v1318 = vmax.f32 %v1114, 1e-06
      %v1319 = vmax.f32 %v1119, 1e-06
      %v1320 = vmax.f32 %v1122, 1e-06
      %v1321 = vmax.f32 %v1127, 1e-06
      %v1322 = vmax.f32 %v1130, 1e-06
      %v1323 = vmax.f32 %v1135, 1e-06
      %v1324 = vmax.f32 %v1138, 1e-06
      %v1325 = vmax.f32 %v1143, 1e-06
      %v1326 = vmax.f32 %v1146, 1e-06
      %v1327 = vmax.f32 %v1151, 1e-06
      %v1328 = vmax.f32 %v1154, 1e-06
      %v1329 = vmax.f32 %v1159, 1e-06
      %v1330 = vmax.f32 %v1162, 1e-06
      %v1331 = vmax.f32 %v1167, 1e-06
      %v1332 = vmax.f32 %v1170, 1e-06
      %v1333 = vmax.f32 %v1175, 1e-06
      %v1334 = vmax.f32 %v1178, 1e-06
      %v1335 = vmax.f32 %v1183, 1e-06
      %v1336 = vmax.f32 %v1186, 1e-06
      %v1337 = vmax.f32 %v1191, 1e-06
      %v1338 = vmax.f32 %v1194, 1e-06
      %v1339 = vmax.f32 %v1199, 1e-06
      %v1340 = vmax.f32 %v1202, 1e-06
      %v1341 = vmax.f32 %v1207, 1e-06
      %v1342 = vmax.f32 %v1210, 1e-06
      %v1343 = vmax.f32 %v1215, 1e-06
      %v1344 = vmax.f32 %v1218, 1e-06
      %v1345 = vmax.f32 %v1223, 1e-06
      %v1346 = vmax.f32 %v1226, 1e-06
      %v1347 = vmax.f32 %v1231, 1e-06
      %v1348 = vmax.f32 %v1234, 1e-06
      %v1349 = vmax.f32 %v1239, 1e-06
      %v1350 = vmax.f32 %v1242, 1e-06
      %v1351 = vmax.f32 %v1247, 1e-06
      %v1352 = vmax.f32 %v1250, 1e-06
      %v1353 = vmax.f32 %v1255, 1e-06
      %v1354 = vmax.f32 %v1258, 1e-06
      %v1355 = vmax.f32 %v1263, 1e-06
      %v1356 = vmax.f32 %v1266, 1e-06
      %v1357 = vmax.f32 %v1271, 1e-06
      %v1358 = vmax.f32 %v1274, 1e-06
      %v1359 = vmax.f32 %v1279, 1e-06
      %v1360 = vmax.f32 %v1282, 1e-06
      %v1361 = vmax.f32 %v1287, 1e-06
      %v1362 = vmax.f32 %v1290, 1e-06
      %v1363 = vmax.f32 %v1295, 1e-06
      %v1364 = vmax.f32 %v1298, 1e-06
      %v1365 = vrsqrt.pop %v1301
      %v1366 = vrsqrt.pop %v1302
      %v1367 = vrsqrt.pop %v1303
      %v1368 = vrsqrt.pop %v1304
      %v1369 = vrsqrt.pop %v1305
      %v1370 = vrsqrt.pop %v1306
      %v1371 = vrsqrt.pop %v1307
      %v1372 = vrsqrt.pop %v1308
      %v1373 = vrsqrt.pop %v1309
      %v1374 = vrsqrt.pop %v1310
      %v1375 = vrsqrt.pop %v1311
      %v1376 = vrsqrt.pop %v1312
      %v1377 = vrsqrt.pop %v1313
      %v1378 = vrsqrt.pop %v1314
      %v1379 = vrsqrt.pop %v1315
      %v1380 = vrsqrt.pop %v1316
      %v1381 = vrsqrt.pop %v1317
      %v1382 = vrsqrt.pop %v1318
      %v1383 = vrsqrt.pop %v1319
      %v1384 = vrsqrt.pop %v1320
      %v1385 = vrsqrt.pop %v1321
      %v1386 = vrsqrt.pop %v1322
      %v1387 = vrsqrt.pop %v1323
      %v1388 = vrsqrt.pop %v1324
      %v1389 = vrsqrt.pop %v1325
      %v1390 = vrsqrt.pop %v1326
      %v1391 = vrsqrt.pop %v1327
      %v1392 = vrsqrt.pop %v1328
      %v1393 = vrsqrt.pop %v1329
      %v1394 = vrsqrt.pop %v1330
      %v1395 = vrsqrt.pop %v1331
      %v1396 = vrsqrt.pop %v1332
      %v1397 = vrsqrt.pop %v1333
      %v1398 = vrsqrt.pop %v1334
      %v1399 = vrsqrt.pop %v1335
      %v1400 = vrsqrt.pop %v1336
      %v1401 = vrsqrt.pop %v1337
      %v1402 = vrsqrt.pop %v1338
      %v1403 = vrsqrt.pop %v1339
      %v1404 = vrsqrt.pop %v1340
      %v1405 = vrsqrt.pop %v1341
      %v1406 = vrsqrt.pop %v1342
      %v1407 = vrsqrt.pop %v1343
      %v1408 = vrsqrt.pop %v1344
      %v1409 = vrsqrt.pop %v1345
      %v1410 = vrsqrt.pop %v1346
      %v1411 = vrsqrt.pop %v1347
      %v1412 = vrsqrt.pop %v1348
      %v1413 = vrsqrt.pop %v1349
      %v1414 = vrsqrt.pop %v1350
      %v1415 = vrsqrt.pop %v1351
      %v1416 = vrsqrt.pop %v1352
      %v1417 = vrsqrt.pop %v1353
      %v1418 = vrsqrt.pop %v1354
      %v1419 = vrsqrt.pop %v1355
      %v1420 = vrsqrt.pop %v1356
      %v1421 = vrsqrt.pop %v1357
      %v1422 = vrsqrt.pop %v1358
      %v1423 = vrsqrt.pop %v1359
      %v1424 = vrsqrt.pop %v1360
      %v1425 = vrsqrt.pop %v1361
      %v1426 = vrsqrt.pop %v1362
      %v1427 = vrsqrt.pop %v1363
      %v1428 = vrsqrt.pop %v1364
      %v1429 = vmul.f32 %v591, %v1365
      %v1430 = vmul.f32 %v594, %v1366
      %v1431 = vmul.f32 %v599, %v1367
      %v1432 = vmul.f32 %v602, %v1368
      %v1433 = vmul.f32 %v607, %v1369
      %v1434 = vmul.f32 %v610, %v1370
      %v1435 = vmul.f32 %v615, %v1371
      %v1436 = vmul.f32 %v618, %v1372
      %v1437 = vmul.f32 %v623, %v1373
      %v1438 = vmul.f32 %v626, %v1374
      %v1439 = vmul.f32 %v631, %v1375
      %v1440 = vmul.f32 %v634, %v1376
      %v1441 = vmul.f32 %v639, %v1377
      %v1442 = vmul.f32 %v642, %v1378
      %v1443 = vmul.f32 %v647, %v1379
      %v1444 = vmul.f32 %v650, %v1380
      %v1445 = vmul.f32 %v655, %v1381
      %v1446 = vmul.f32 %v658, %v1382
      %v1447 = vmul.f32 %v663, %v1383
      %v1448 = vmul.f32 %v666, %v1384
      %v1449 = vmul.f32 %v671, %v1385
      %v1450 = vmul.f32 %v674, %v1386
      %v1451 = vmul.f32 %v679, %v1387
      %v1452 = vmul.f32 %v682, %v1388
      %v1453 = vmul.f32 %v687, %v1389
      %v1454 = vmul.f32 %v690, %v1390
      %v1455 = vmul.f32 %v695, %v1391
      %v1456 = vmul.f32 %v698, %v1392
      %v1457 = vmul.f32 %v703, %v1393
      %v1458 = vmul.f32 %v706, %v1394
      %v1459 = vmul.f32 %v711, %v1395
      %v1460 = vmul.f32 %v714, %v1396
      %v1461 = vmul.f32 %v719, %v1397
      %v1462 = vmul.f32 %v722, %v1398
      %v1463 = vmul.f32 %v727, %v1399
      %v1464 = vmul.f32 %v730, %v1400
      %v1465 = vmul.f32 %v735, %v1401
      %v1466 = vmul.f32 %v738, %v1402
      %v1467 = vmul.f32 %v743, %v1403
      %v1468 = vmul.f32 %v746, %v1404
      %v1469 = vmul.f32 %v751, %v1405
      %v1470 = vmul.f32 %v754, %v1406
      %v1471 = vmul.f32 %v759, %v1407
      %v1472 = vmul.f32 %v762, %v1408
      %v1473 = vmul.f32 %v767, %v1409
      %v1474 = vmul.f32 %v770, %v1410
      %v1475 = vmul.f32 %v775, %v1411
      %v1476 = vmul.f32 %v778, %v1412
      %v1477 = vmul.f32 %v783, %v1413
      %v1478 = vmul.f32 %v786, %v1414
      %v1479 = vmul.f32 %v791, %v1415
      %v1480 = vmul.f32 %v794, %v1416
      %v1481 = vmul.f32 %v799, %v1417
      %v1482 = vmul.f32 %v802, %v1418
      %v1483 = vmul.f32 %v807, %v1419
      %v1484 = vmul.f32 %v810, %v1420
      %v1485 = vmul.f32 %v815, %v1421
      %v1486 = vmul.f32 %v818, %v1422
      %v1487 = vmul.f32 %v823, %v1423
      %v1488 = vmul.f32 %v826, %v1424
      %v1489 = vmul.f32 %v831, %v1425
      %v1490 = vmul.f32 %v834, %v1426
      %v1491 = vmul.f32 %v839, %v1427
      %v1492 = vmul.f32 %v842, %v1428
      %1493 = vst [vmem:[%s226] sm:$0xff] %v1429
      %1494 = vst [vmem:[%s226 + $0x8] sm:$0xff] %v1430
      %1495 = vst [vmem:[%s226 + $0x10] sm:$0xff] %v1431
      %1496 = vst [vmem:[%s226 + $0x18] sm:$0xff] %v1432
      %1497 = vst [vmem:[%s226 + $0x20] sm:$0xff] %v1433
      %1498 = vst [vmem:[%s226 + $0x28] sm:$0xff] %v1434
      %1499 = vst [vmem:[%s226 + $0x30] sm:$0xff] %v1435
      %1500 = vst [vmem:[%s226 + $0x38] sm:$0xff] %v1436
      %1501 = vst [vmem:[%s226 + $0x40] sm:$0xff] %v1437
      %1502 = vst [vmem:[%s226 + $0x48] sm:$0xff] %v1438
      %1503 = vst [vmem:[%s226 + $0x50] sm:$0xff] %v1439
      %1504 = vst [vmem:[%s226 + $0x58] sm:$0xff] %v1440
      %1505 = vst [vmem:[%s226 + $0x60] sm:$0xff] %v1441
      %1506 = vst [vmem:[%s226 + $0x68] sm:$0xff] %v1442
      %1507 = vst [vmem:[%s226 + $0x70] sm:$0xff] %v1443
      %1508 = vst [vmem:[%s226 + $0x78] sm:$0xff] %v1444
      %1509 = vst [vmem:[%s226 + $0x80] sm:$0xff] %v1445
      %1510 = vst [vmem:[%s226 + $0x88] sm:$0xff] %v1446
      %1511 = vst [vmem:[%s226 + $0x90] sm:$0xff] %v1447
      %1512 = vst [vmem:[%s226 + $0x98] sm:$0xff] %v1448
      %1513 = vst [vmem:[%s226 + $0xa0] sm:$0xff] %v1449
      %1514 = vst [vmem:[%s226 + $0xa8] sm:$0xff] %v1450
      %1515 = vst [vmem:[%s226 + $0xb0] sm:$0xff] %v1451
      %1516 = vst [vmem:[%s226 + $0xb8] sm:$0xff] %v1452
      %1517 = vst [vmem:[%s226 + $0xc0] sm:$0xff] %v1453
      %1518 = vst [vmem:[%s226 + $0xc8] sm:$0xff] %v1454
      %1519 = vst [vmem:[%s226 + $0xd0] sm:$0xff] %v1455
      %1520 = vst [vmem:[%s226 + $0xd8] sm:$0xff] %v1456
      %1521 = vst [vmem:[%s226 + $0xe0] sm:$0xff] %v1457
      %1522 = vst [vmem:[%s226 + $0xe8] sm:$0xff] %v1458
      %1523 = vst [vmem:[%s226 + $0xf0] sm:$0xff] %v1459
      %1524 = vst [vmem:[%s226 + $0xf8] sm:$0xff] %v1460
      %1525 = vst [vmem:[%s226 + $0x100] sm:$0xff] %v1461
      %1526 = vst [vmem:[%s226 + $0x108] sm:$0xff] %v1462
      %1527 = vst [vmem:[%s226 + $0x110] sm:$0xff] %v1463
      %1528 = vst [vmem:[%s226 + $0x118] sm:$0xff] %v1464
      %1529 = vst [vmem:[%s226 + $0x120] sm:$0xff] %v1465
      %1530 = vst [vmem:[%s226 + $0x128] sm:$0xff] %v1466
      %1531 = vst [vmem:[%s226 + $0x130] sm:$0xff] %v1467
      %1532 = vst [vmem:[%s226 + $0x138] sm:$0xff] %v1468
      %1533 = vst [vmem:[%s226 + $0x140] sm:$0xff] %v1469
      %1534 = vst [vmem:[%s226 + $0x148] sm:$0xff] %v1470
      %1535 = vst [vmem:[%s226 + $0x150] sm:$0xff] %v1471
      %1536 = vst [vmem:[%s226 + $0x158] sm:$0xff] %v1472
      %1537 = vst [vmem:[%s226 + $0x160] sm:$0xff] %v1473
      %1538 = vst [vmem:[%s226 + $0x168] sm:$0xff] %v1474
      %1539 = vst [vmem:[%s226 + $0x170] sm:$0xff] %v1475
      %1540 = vst [vmem:[%s226 + $0x178] sm:$0xff] %v1476
      %1541 = vst [vmem:[%s226 + $0x180] sm:$0xff] %v1477
      %1542 = vst [vmem:[%s226 + $0x188] sm:$0xff] %v1478
      %1543 = vst [vmem:[%s226 + $0x190] sm:$0xff] %v1479
      %1544 = vst [vmem:[%s226 + $0x198] sm:$0xff] %v1480
      %1545 = vst [vmem:[%s226 + $0x1a0] sm:$0xff] %v1481
      %1546 = vst [vmem:[%s226 + $0x1a8] sm:$0xff] %v1482
      %1547 = vst [vmem:[%s226 + $0x1b0] sm:$0xff] %v1483
      %1548 = vst [vmem:[%s226 + $0x1b8] sm:$0xff] %v1484
      %1549 = vst [vmem:[%s226 + $0x1c0] sm:$0xff] %v1485
      %1550 = vst [vmem:[%s226 + $0x1c8] sm:$0xff] %v1486
      %1551 = vst [vmem:[%s226 + $0x1d0] sm:$0xff] %v1487
      %1552 = vst [vmem:[%s226 + $0x1d8] sm:$0xff] %v1488
      %1553 = vst [vmem:[%s226 + $0x1e0] sm:$0xff] %v1489
      %1554 = vst [vmem:[%s226 + $0x1e8] sm:$0xff] %v1490
      %1555 = vst [vmem:[%s226 + $0x1f0] sm:$0xff] %v1491
      %1556 = vst [vmem:[%s226 + $0x1f8] sm:$0xff] %v1492
      %s1557 = smul.u32 64, %s16
      %p1558 = scmp.lt.s32.totalorder %s1557, 255
      %s1559 = scalar_select %p1558, %s1557, 255
      %s1560 = smul.addr %s1559, 8
      %s1561 = scalar_lea.vmem %s5, %s1560
      // Predicated region
      $region41: #{_lambda_.14} parent=39 // pred_check
        %p1562 = pneg %p144
      $region42: #{_lambda_.14} parent=39 // pred_check_branch
        %1564 = sbr.rel (%p1562) target = $region44
      $region43: #{_lambda_.14} parent=39 // pred_region
        %s1565 = smul.u32 64, %s16
      $region44: #{_lambda_.14} parent=39 // pred_fallthru
        _
    $region40: #{_lambda_.14} parent=5 // pred_fallthru
      _
    %p1566 = scmp.le.s32.totalorder 2, %s11
    // Predicated region
    $region45: #{_lambda_.14} parent=5 // pred_check
      %p1567 = pneg %p1566
    $region46: #{_lambda_.14} parent=5 // pred_check_branch
      %1569 = sbr.rel (%p1567) target = $region48
    $region47: #{_lambda_.14} parent=5 // pred_region
      %s1570 = ssub.s32 %s11, 2
      // Predicated region
      $region49: #{_lambda_.14} parent=47 // pred_check
        %p1571 = pneg %p150
      $region50: #{_lambda_.14} parent=47 // pred_check_branch
        %1573 = sbr.rel (%p1571) target = $region52
      $region51: #{_lambda_.14} parent=47 // pred_region
        %s1574 = smul.u32 64, %s17
        %p1575 = scmp.lt.s32.totalorder %s1574, 255
        %s1576 = scalar_select %p1575, %s1574, 255
        %s1577 = smul.addr %s1576, 8
        %s1578 = scalar_lea.vmem %s5, %s1577
      $region52: #{_lambda_.14} parent=47 // pred_fallthru
        _
    $region48: #{_lambda_.14} parent=5 // pred_fallthru
      _
  $region6: #{_lambda_.14} parent=0 // loop_footer
    %s15 = sadd.s32 1, %s11
  $region7: #{_lambda_.14} parent=0 // loop_footer_branch
    %10 = sbr.rel target = $region3
  $region8: #{_lambda_.14} parent=0 // loop_exit
    _

// kernel: _lambda_.15
$region0: #{_lambda_.15}
  #allocation0 [shape = 'u32[]', space=smem, size = 0x4, offset = 0x4, fixed_abs, tag = 'smem constant byte address 0x4 - core index']
  #allocation1 [shape = 'u32[144,128]{1,0:T(1,128)}', space=vmem, size = 0x12000, scoped, tag = 'internal scratch']
  %s0 = inlined_call_operand.vmem [shape: bf16[512,256], index: 0, kind: input, shape index: {}]
  %s1 = inlined_call_operand.vmem [shape: bf16[256,128], index: 1, kind: input, shape index: {}]
  %s2 = inlined_call_operand.vmem [shape: f32[1,128], index: 2, kind: input, shape index: {}]
  %s3 = inlined_call_operand.vmem [shape: bf16[128,128], index: 3, kind: input, shape index: {}]
  %s4 = inlined_call_operand.vmem [shape: f32[1,128], index: 4, kind: input, shape index: {}]
  %s5 = inlined_call_operand.vmem [shape: f32[512,128], index: 5, kind: output, shape index: {}]
  %s6 = sld [smem:[#allocation0]]
  $region53: #{_lambda_.15} parent=0
    _
  %s8 = ssub.s32 1, %s6
  %s9 = scalar_select 0, %s8, %s6
  loop: start=0, step=1, limit=4
  $region2: #{_lambda_.15} parent=0 // loop_pre_header
    _
  $region3: #{_lambda_.15} parent=0 // loop_header
    %s11 = sphi 0, %s15
    %p12 = scmp.ge.s32.totalorder %s11, 4
    %s21 = sphi 0, %s23
    %s24 = sphi 0, %s21
    %s25 = sphi 0, %s24
    %s41 = sphi 0, %s25
    %s45 = sphi 0, %s45
    %s47 = sphi 0, %s45
    %s48 = sphi 0, %s47
    %s62 = sphi 0, %s48
    %s66 = sphi 0, %s66
    %s68 = sphi 0, %s66
    %s69 = sphi 0, %s68
    %s83 = sphi 0, %s69
    %s87 = sphi 0, %s87
    %s89 = sphi 0, %s87
    %s90 = sphi 0, %s89
    %s104 = sphi 0, %s90
    %s108 = sphi 0, %s108
    %s110 = sphi 0, %s108
    %s111 = sphi 0, %s110
    %s125 = sphi 0, %s111
    %s131 = sphi 0, %s133
    %s134 = sphi 0, %s131
    %s135 = sphi 0, %s134
    %s151 = sphi 0, %s135
  $region4: #{_lambda_.15} parent=0 // loop_header_branch
    %14 = sbr.rel (%p12) target = $region8
  $region5: #{_lambda_.15} parent=0 // loop_body
    %s16 = ssub.s32 %s11, 1
    %s17 = ssub.s32 %s11, 2
    %s18 = sadd.s32 %s11, 1
    %s19 = ssub.s32 %s11, %s18
    %p20 = scmp.eq.s32.totalorder %s19, 0
    %s22 = sadd.s32 %s21, 1
    %s23 = scalar_select %p20, %s21, %s22
    %p26 = pneg %p20
    %p27 = scmp.eq.s32.totalorder %s11, 1
    %p28 = por %p26, %p27
    %p29 = scmp.ne.s32.totalorder %s21, %s24
    %p30 = scmp.eq.s32.totalorder %s11, 0
    %p31 = por %p29, %p30
    %p32 = scmp.ne.s32.totalorder %s21, %s24
    %p33 = scmp.eq.s32.totalorder %s16, 1
    %p34 = por %p32, %p33
    %p35 = scmp.ne.s32.totalorder %s24, %s25
    %p36 = scmp.eq.s32.totalorder %s16, 0
    %p37 = por %p35, %p36
    %p38 = scmp.ne.s32.totalorder %s24, %s25
    %p39 = scmp.eq.s32.totalorder %s17, 1
    %p40 = por %p38, %p39
    %p42 = scmp.ne.s32.totalorder %s25, %s41
    %p43 = scmp.eq.s32.totalorder %s17, 0
    %p44 = por %p42, %p43
    %s46 = sadd.s32 %s45, 1
    %p49 = scmp.eq.s32.totalorder %s11, 1
    %p50 = scmp.ne.s32.totalorder %s45, %s47
    %p51 = scmp.eq.s32.totalorder %s11, 0
    %p52 = por %p50, %p51
    %p53 = scmp.ne.s32.totalorder %s45, %s47
    %p54 = scmp.eq.s32.totalorder %s16, 1
    %p55 = por %p53, %p54
    %p56 = scmp.ne.s32.totalorder %s47, %s48
    %p57 = scmp.eq.s32.totalorder %s16, 0
    %p58 = por %p56, %p57
    %p59 = scmp.ne.s32.totalorder %s47, %s48
    %p60 = scmp.eq.s32.totalorder %s17, 1
    %p61 = por %p59, %p60
    %p63 = scmp.ne.s32.totalorder %s48, %s62
    %p64 = scmp.eq.s32.totalorder %s17, 0
    %p65 = por %p63, %p64
    %s67 = sadd.s32 %s66, 1
    %p70 = scmp.eq.s32.totalorder %s11, 1
    %p71 = scmp.ne.s32.totalorder %s66, %s68
    %p72 = scmp.eq.s32.totalorder %s11, 0
    %p73 = por %p71, %p72
    %p74 = scmp.ne.s32.totalorder %s66, %s68
    %p75 = scmp.eq.s32.totalorder %s16, 1
    %p76 = por %p74, %p75
    %p77 = scmp.ne.s32.totalorder %s68, %s69
    %p78 = scmp.eq.s32.totalorder %s16, 0
    %p79 = por %p77, %p78
    %p80 = scmp.ne.s32.totalorder %s68, %s69
    %p81 = scmp.eq.s32.totalorder %s17, 1
    %p82 = por %p80, %p81
    %p84 = scmp.ne.s32.totalorder %s69, %s83
    %p85 = scmp.eq.s32.totalorder %s17, 0
    %p86 = por %p84, %p85
    %s88 = sadd.s32 %s87, 1
    %p91 = scmp.eq.s32.totalorder %s11, 1
    %p92 = scmp.ne.s32.totalorder %s87, %s89
    %p93 = scmp.eq.s32.totalorder %s11, 0
    %p94 = por %p92, %p93
    %p95 = scmp.ne.s32.totalorder %s87, %s89
    %p96 = scmp.eq.s32.totalorder %s16, 1
    %p97 = por %p95, %p96
    %p98 = scmp.ne.s32.totalorder %s89, %s90
    %p99 = scmp.eq.s32.totalorder %s16, 0
    %p100 = por %p98, %p99
    %p101 = scmp.ne.s32.totalorder %s89, %s90
    %p102 = scmp.eq.s32.totalorder %s17, 1
    %p103 = por %p101, %p102
    %p105 = scmp.ne.s32.totalorder %s90, %s104
    %p106 = scmp.eq.s32.totalorder %s17, 0
    %p107 = por %p105, %p106
    %s109 = sadd.s32 %s108, 1
    %p112 = scmp.eq.s32.totalorder %s11, 1
    %p113 = scmp.ne.s32.totalorder %s108, %s110
    %p114 = scmp.eq.s32.totalorder %s11, 0
    %p115 = por %p113, %p114
    %p116 = scmp.ne.s32.totalorder %s108, %s110
    %p117 = scmp.eq.s32.totalorder %s16, 1
    %p118 = por %p116, %p117
    %p119 = scmp.ne.s32.totalorder %s110, %s111
    %p120 = scmp.eq.s32.totalorder %s16, 0
    %p121 = por %p119, %p120
    %p122 = scmp.ne.s32.totalorder %s110, %s111
    %p123 = scmp.eq.s32.totalorder %s17, 1
    %p124 = por %p122, %p123
    %p126 = scmp.ne.s32.totalorder %s111, %s125
    %p127 = scmp.eq.s32.totalorder %s17, 0
    %p128 = por %p126, %p127
    %s129 = ssub.s32 %s11, %s18
    %p130 = scmp.eq.s32.totalorder %s129, 0
    %s132 = sadd.s32 %s131, 1
    %s133 = scalar_select %p130, %s131, %s132
    %p136 = pneg %p130
    %p137 = scmp.eq.s32.totalorder %s11, 1
    %p138 = por %p136, %p137
    %p139 = scmp.ne.s32.totalorder %s131, %s134
    %p140 = scmp.eq.s32.totalorder %s11, 0
    %p141 = por %p139, %p140
    %p142 = scmp.ne.s32.totalorder %s131, %s134
    %p143 = scmp.eq.s32.totalorder %s16, 1
    %p144 = por %p142, %p143
    %p145 = scmp.ne.s32.totalorder %s134, %s135
    %p146 = scmp.eq.s32.totalorder %s16, 0
    %p147 = por %p145, %p146
    %p148 = scmp.ne.s32.totalorder %s134, %s135
    %p149 = scmp.eq.s32.totalorder %s17, 1
    %p150 = por %p148, %p149
    %p152 = scmp.ne.s32.totalorder %s135, %s151
    %p153 = scmp.eq.s32.totalorder %s17, 0
    %p154 = por %p152, %p153
    %p155 = scmp.le.s32.totalorder 1, %s11
    %p156 = scmp.lt.s32.totalorder %s11, 3
    %p157 = pnand %p155, %p156
    %p158 = pneg %p157
    // Predicated region
    $region9: #{_lambda_.15} parent=5 // pred_check
      _
    $region10: #{_lambda_.15} parent=5 // pred_check_branch
      %160 = sbr.rel (%p157) target = $region12
    $region11: #{_lambda_.15} parent=5 // pred_region
      %s161 = ssub.s32 %s11, 1
      // Predicated region
      $region13: #{_lambda_.15} parent=11 // pred_check
        %p162 = pneg %p58
      $region14: #{_lambda_.15} parent=11 // pred_check_branch
        %164 = sbr.rel (%p162) target = $region16
      $region15: #{_lambda_.15} parent=11 // pred_region
        _
      $region16: #{_lambda_.15} parent=11 // pred_fallthru
        _
      // Predicated region
      $region17: #{_lambda_.15} parent=11 // pred_check
        %p165 = pneg %p79
      $region18: #{_lambda_.15} parent=11 // pred_check_branch
        %167 = sbr.rel (%p165) target = $region20
      $region19: #{_lambda_.15} parent=11 // pred_region
        _
      $region20: #{_lambda_.15} parent=11 // pred_fallthru
        _
      // Predicated region
      $region21: #{_lambda_.15} parent=11 // pred_check
        %p168 = pneg %p100
      $region22: #{_lambda_.15} parent=11 // pred_check_branch
        %170 = sbr.rel (%p168) target = $region24
      $region23: #{_lambda_.15} parent=11 // pred_region
        _
      $region24: #{_lambda_.15} parent=11 // pred_fallthru
        _
      // Predicated region
      $region25: #{_lambda_.15} parent=11 // pred_check
        %p171 = pneg %p121
      $region26: #{_lambda_.15} parent=11 // pred_check_branch
        %173 = sbr.rel (%p171) target = $region28
      $region27: #{_lambda_.15} parent=11 // pred_region
        _
      $region28: #{_lambda_.15} parent=11 // pred_fallthru
        _
    $region12: #{_lambda_.15} parent=5 // pred_fallthru
      _
    %p174 = scmp.lt.s32.totalorder %s11, 2
    // Predicated region
    $region29: #{_lambda_.15} parent=5 // pred_check
      %p175 = pneg %p174
    $region30: #{_lambda_.15} parent=5 // pred_check_branch
      %177 = sbr.rel (%p175) target = $region32
    $region31: #{_lambda_.15} parent=5 // pred_region
      // Predicated region
      $region33: #{_lambda_.15} parent=31 // pred_check
        %p178 = pneg %p31
      $region34: #{_lambda_.15} parent=31 // pred_check_branch
        %180 = sbr.rel (%p178) target = $region36
      $region35: #{_lambda_.15} parent=31 // pred_region
        %s181 = smul.u32 32, %s11
        %p182 = scmp.lt.s32.totalorder %s181, 63
        %s183 = scalar_select %p182, %s181, 63
        %s184 = smul.addr %s183, 2
        %s185 = smul.addr %s184, 4
        %s186 = scalar_lea.vmem %s0, %s185
        %s187 = smul.u32 32, %s11
      $region36: #{_lambda_.15} parent=31 // pred_fallthru
        _
    $region32: #{_lambda_.15} parent=5 // pred_fallthru
      _
    %p188 = scmp.le.s32.totalorder 1, %s11
    %p189 = scmp.lt.s32.totalorder %s11, 3
    %p190 = pnand %p188, %p189
    %p191 = pneg %p190
    // Predicated region
    $region37: #{_lambda_.15} parent=5 // pred_check
      _
    $region38: #{_lambda_.15} parent=5 // pred_check_branch
      %193 = sbr.rel (%p190) target = $region40
    $region39: #{_lambda_.15} parent=5 // pred_region
      %s194 = ssub.s32 %s11, 1
      %s195 = smul.u32 32, %s16
      %p196 = scmp.lt.s32.totalorder %s195, 63
      %s197 = scalar_select %p196, %s195, 63
      %s198 = smul.addr %s197, 2
      %s199 = smul.addr %s198, 4
      %s200 = scalar_lea.vmem %s0, %s199
      %p201 = pneg %p37
      %p202 = pneg %p34
      %p203 = pneg %p58
      %p204 = pneg %p55
      %p205 = pneg %p79
      %p206 = pneg %p76
      %p207 = pneg %p100
      %p208 = pneg %p97
      %p209 = pneg %p121
      %p210 = pneg %p118
      %p211 = pneg %p147
      %p212 = pneg %p144
      %s213 = smul.u32 32, %s16
      %p214 = scmp.lt.s32.totalorder %s213, 63
      %s215 = scalar_select %p214, %s213, 63
      %s216 = smul.addr %s215, 8
      %s217 = scalar_lea.vmem %s5, %s216
      %s218 = smul.u32 32, %s16
      %p219 = scmp.lt.s32.totalorder %s218, 63
      %s220 = scalar_select %p219, %s218, 63
      %s221 = smul.addr %s220, 2
      %s222 = smul.addr %s221, 4
      %s223 = scalar_lea.vmem %s0, %s222
      %s224 = smul.u32 32, %s16
      %s225 = smul.u32 32, %s16
      %p226 = scmp.lt.s32.totalorder %s225, 63
      %s227 = scalar_select %p226, %s225, 63
      %s228 = smul.addr %s227, 8
      %s229 = scalar_lea.vmem %s5, %s228
      %s230 = smul.u32 32, %s16
      %v232 = vld [vmem:[%s223] sm:$0xff]
      %v233 = vld [vmem:[%s223 + $0x8] sm:$0xff]
      %v234 = vld [vmem:[%s223 + $0x10] sm:$0xff]
      %v235 = vld [vmem:[%s223 + $0x18] sm:$0xff]
      %v236 = vld [vmem:[%s223 + $0x20] sm:$0xff]
      %v237 = vld [vmem:[%s223 + $0x28] sm:$0xff]
      %v238 = vld [vmem:[%s223 + $0x30] sm:$0xff]
      %v239 = vld [vmem:[%s223 + $0x38] sm:$0xff]
      %v240 = vld [vmem:[%s223 + $0x40] sm:$0xff]
      %v241 = vld [vmem:[%s223 + $0x48] sm:$0xff]
      %v242 = vld [vmem:[%s223 + $0x50] sm:$0xff]
      %v243 = vld [vmem:[%s223 + $0x58] sm:$0xff]
      %v244 = vld [vmem:[%s223 + $0x60] sm:$0xff]
      %v245 = vld [vmem:[%s223 + $0x68] sm:$0xff]
      %v246 = vld [vmem:[%s223 + $0x70] sm:$0xff]
      %v247 = vld [vmem:[%s223 + $0x78] sm:$0xff]
      %v248 = vld [vmem:[%s223 + $0x80] sm:$0xff]
      %v249 = vld [vmem:[%s223 + $0x88] sm:$0xff]
      %v250 = vld [vmem:[%s223 + $0x90] sm:$0xff]
      %v251 = vld [vmem:[%s223 + $0x98] sm:$0xff]
      %v252 = vld [vmem:[%s223 + $0xa0] sm:$0xff]
      %v253 = vld [vmem:[%s223 + $0xa8] sm:$0xff]
      %v254 = vld [vmem:[%s223 + $0xb0] sm:$0xff]
      %v255 = vld [vmem:[%s223 + $0xb8] sm:$0xff]
      %v256 = vld [vmem:[%s223 + $0xc0] sm:$0xff]
      %v257 = vld [vmem:[%s223 + $0xc8] sm:$0xff]
      %v258 = vld [vmem:[%s223 + $0xd0] sm:$0xff]
      %v259 = vld [vmem:[%s223 + $0xd8] sm:$0xff]
      %v260 = vld [vmem:[%s223 + $0xe0] sm:$0xff]
      %v261 = vld [vmem:[%s223 + $0xe8] sm:$0xff]
      %v262 = vld [vmem:[%s223 + $0xf0] sm:$0xff]
      %v263 = vld [vmem:[%s223 + $0xf8] sm:$0xff]
      %v264 = vld [vmem:[%s1] sm:$0xf]
      %v265 = vld [vmem:[%s1 + $0x4] sm:$0xf]
      %v266 = vld [vmem:[%s1 + $0x8] sm:$0xf]
      %v267 = vld [vmem:[%s1 + $0xc] sm:$0xf]
      %v268 = vld [vmem:[%s1 + $0x10] sm:$0xf]
      %v269 = vld [vmem:[%s1 + $0x14] sm:$0xf]
      %v270 = vld [vmem:[%s1 + $0x18] sm:$0xf]
      %v271 = vld [vmem:[%s1 + $0x1c] sm:$0xf]
      %v272 = vld [vmem:[%s1 + $0x20] sm:$0xf]
      %v273 = vld [vmem:[%s1 + $0x24] sm:$0xf]
      %v274 = vld [vmem:[%s1 + $0x28] sm:$0xf]
      %v275 = vld [vmem:[%s1 + $0x2c] sm:$0xf]
      %v276 = vld [vmem:[%s1 + $0x30] sm:$0xf]
      %v277 = vld [vmem:[%s1 + $0x34] sm:$0xf]
      %v278 = vld [vmem:[%s1 + $0x38] sm:$0xf]
      %v279 = vld [vmem:[%s1 + $0x3c] sm:$0xf]
      %v280 = vld [vmem:[%s1 + $0x40] sm:$0xf]
      %v281 = vld [vmem:[%s1 + $0x44] sm:$0xf]
      %v282 = vld [vmem:[%s1 + $0x48] sm:$0xf]
      %v283 = vld [vmem:[%s1 + $0x4c] sm:$0xf]
      %v284 = vld [vmem:[%s1 + $0x50] sm:$0xf]
      %v285 = vld [vmem:[%s1 + $0x54] sm:$0xf]
      %v286 = vld [vmem:[%s1 + $0x58] sm:$0xf]
      %v287 = vld [vmem:[%s1 + $0x5c] sm:$0xf]
      %v288 = vld [vmem:[%s1 + $0x60] sm:$0xf]
      %v289 = vld [vmem:[%s1 + $0x64] sm:$0xf]
      %v290 = vld [vmem:[%s1 + $0x68] sm:$0xf]
      %v291 = vld [vmem:[%s1 + $0x6c] sm:$0xf]
      %v292 = vld [vmem:[%s1 + $0x70] sm:$0xf]
      %v293 = vld [vmem:[%s1 + $0x74] sm:$0xf]
      %v294 = vld [vmem:[%s1 + $0x78] sm:$0xf]
      %v295 = vld [vmem:[%s1 + $0x7c] sm:$0xf]
      %v296 = vld [vmem:[%s2] sm:$0x1]
      %v298 = vlaneseq
      %v299 = vshrl.u32 %v298, 7
      %v300 = vsub.s32 0, %v299
      %v301 = vrot.slane %v296, %v300
      %v335 = vunpack.c.l.b16 %v232
      %v336 = vunpack.c.h.b16 %v232
      %v337 = vunpack.c.l.b16 %v233
      %v338 = vunpack.c.h.b16 %v233
      %v339 = vunpack.c.l.b16 %v234
      %v340 = vunpack.c.h.b16 %v234
      %v341 = vunpack.c.l.b16 %v235
      %v342 = vunpack.c.h.b16 %v235
      %v343 = vunpack.c.l.b16 %v236
      %v344 = vunpack.c.h.b16 %v236
      %v345 = vunpack.c.l.b16 %v237
      %v346 = vunpack.c.h.b16 %v237
      %v347 = vunpack.c.l.b16 %v238
      %v348 = vunpack.c.h.b16 %v238
      %v349 = vunpack.c.l.b16 %v239
      %v350 = vunpack.c.h.b16 %v239
      %v351 = vunpack.c.l.b16 %v240
      %v352 = vunpack.c.h.b16 %v240
      %v353 = vunpack.c.l.b16 %v241
      %v354 = vunpack.c.h.b16 %v241
      %v355 = vunpack.c.l.b16 %v242
      %v356 = vunpack.c.h.b16 %v242
      %v357 = vunpack.c.l.b16 %v243
      %v358 = vunpack.c.h.b16 %v243
      %v359 = vunpack.c.l.b16 %v244
      %v360 = vunpack.c.h.b16 %v244
      %v361 = vunpack.c.l.b16 %v245
      %v362 = vunpack.c.h.b16 %v245
      %v363 = vunpack.c.l.b16 %v246
      %v364 = vunpack.c.h.b16 %v246
      %v365 = vunpack.c.l.b16 %v247
      %v366 = vunpack.c.h.b16 %v247
      %v367 = vunpack.c.l.b16 %v248
      %v368 = vunpack.c.h.b16 %v248
      %v369 = vunpack.c.l.b16 %v249
      %v370 = vunpack.c.h.b16 %v249
      %v371 = vunpack.c.l.b16 %v250
      %v372 = vunpack.c.h.b16 %v250
      %v373 = vunpack.c.l.b16 %v251
      %v374 = vunpack.c.h.b16 %v251
      %v375 = vunpack.c.l.b16 %v252
      %v376 = vunpack.c.h.b16 %v252
      %v377 = vunpack.c.l.b16 %v253
      %v378 = vunpack.c.h.b16 %v253
      %v379 = vunpack.c.l.b16 %v254
      %v380 = vunpack.c.h.b16 %v254
      %v381 = vunpack.c.l.b16 %v255
      %v382 = vunpack.c.h.b16 %v255
      %v383 = vunpack.c.l.b16 %v256
      %v384 = vunpack.c.h.b16 %v256
      %v385 = vunpack.c.l.b16 %v257
      %v386 = vunpack.c.h.b16 %v257
      %v387 = vunpack.c.l.b16 %v258
      %v388 = vunpack.c.h.b16 %v258
      %v389 = vunpack.c.l.b16 %v259
      %v390 = vunpack.c.h.b16 %v259
      %v391 = vunpack.c.l.b16 %v260
      %v392 = vunpack.c.h.b16 %v260
      %v393 = vunpack.c.l.b16 %v261
      %v394 = vunpack.c.h.b16 %v261
      %v395 = vunpack.c.l.b16 %v262
      %v396 = vunpack.c.h.b16 %v262
      %v397 = vunpack.c.l.b16 %v263
      %v398 = vunpack.c.h.b16 %v263
      %v399 = vpack.c.b16 %v337, %v335
      %v400 = vpack.c.b16 %v338, %v336
      %v401 = vpack.c.b16 %v341, %v339
      %v402 = vpack.c.b16 %v342, %v340
      %v403 = vpack.c.b16 %v345, %v343
      %v404 = vpack.c.b16 %v346, %v344
      %v405 = vpack.c.b16 %v349, %v347
      %v406 = vpack.c.b16 %v350, %v348
      %v407 = vpack.c.b16 %v353, %v351
      %v408 = vpack.c.b16 %v354, %v352
      %v409 = vpack.c.b16 %v357, %v355
      %v410 = vpack.c.b16 %v358, %v356
      %v411 = vpack.c.b16 %v361, %v359
      %v412 = vpack.c.b16 %v362, %v360
      %v413 = vpack.c.b16 %v365, %v363
      %v414 = vpack.c.b16 %v366, %v364
      %v415 = vpack.c.b16 %v369, %v367
      %v416 = vpack.c.b16 %v370, %v368
      %v417 = vpack.c.b16 %v373, %v371
      %v418 = vpack.c.b16 %v374, %v372
      %v419 = vpack.c.b16 %v377, %v375
      %v420 = vpack.c.b16 %v378, %v376
      %v421 = vpack.c.b16 %v381, %v379
      %v422 = vpack.c.b16 %v382, %v380
      %v423 = vpack.c.b16 %v385, %v383
      %v424 = vpack.c.b16 %v386, %v384
      %v425 = vpack.c.b16 %v389, %v387
      %v426 = vpack.c.b16 %v390, %v388
      %v427 = vpack.c.b16 %v393, %v391
      %v428 = vpack.c.b16 %v394, %v392
      %v429 = vpack.c.b16 %v397, %v395
      %v430 = vpack.c.b16 %v398, %v396
      %v495 = vunpack.c.l.b16 %v264
      %v496 = vunpack.c.l.b16 %v265
      %v497 = vunpack.c.l.b16 %v266
      %v498 = vunpack.c.l.b16 %v267
      %v499 = vunpack.c.l.b16 %v268
      %v500 = vunpack.c.l.b16 %v269
      %v501 = vunpack.c.l.b16 %v270
      %v502 = vunpack.c.l.b16 %v271
      %v503 = vunpack.c.l.b16 %v272
      %v504 = vunpack.c.l.b16 %v273
      %v505 = vunpack.c.l.b16 %v274
      %v506 = vunpack.c.l.b16 %v275
      %v507 = vunpack.c.l.b16 %v276
      %v508 = vunpack.c.l.b16 %v277
      %v509 = vunpack.c.l.b16 %v278
      %v510 = vunpack.c.l.b16 %v279
      %v511 = vunpack.c.l.b16 %v280
      %v512 = vunpack.c.l.b16 %v281
      %v513 = vunpack.c.l.b16 %v282
      %v514 = vunpack.c.l.b16 %v283
      %v515 = vunpack.c.l.b16 %v284
      %v516 = vunpack.c.l.b16 %v285
      %v517 = vunpack.c.l.b16 %v286
      %v518 = vunpack.c.l.b16 %v287
      %v519 = vunpack.c.l.b16 %v288
      %v520 = vunpack.c.l.b16 %v289
      %v521 = vunpack.c.l.b16 %v290
      %v522 = vunpack.c.l.b16 %v291
      %v523 = vunpack.c.l.b16 %v292
      %v524 = vunpack.c.l.b16 %v293
      %v525 = vunpack.c.l.b16 %v294
      %v526 = vunpack.c.l.b16 %v295
      %v527 = vpack.c.b16 %v496, %v495
      %v528 = vpack.c.b16 %v498, %v497
      %v529 = vpack.c.b16 %v500, %v499
      %v530 = vpack.c.b16 %v502, %v501
      %v531 = vpack.c.b16 %v504, %v503
      %v532 = vpack.c.b16 %v506, %v505
      %v533 = vpack.c.b16 %v508, %v507
      %v534 = vpack.c.b16 %v510, %v509
      %v535 = vpack.c.b16 %v512, %v511
      %v536 = vpack.c.b16 %v514, %v513
      %v537 = vpack.c.b16 %v516, %v515
      %v538 = vpack.c.b16 %v518, %v517
      %v539 = vpack.c.b16 %v520, %v519
      %v540 = vpack.c.b16 %v522, %v521
      %v541 = vpack.c.b16 %v524, %v523
      %v542 = vpack.c.b16 %v526, %v525
      %559 = vmatprep.subr.bf16.mxu0 0
      %560 = vmatpush1.bf16.msra.mxu0 %v534
      %561 = vmatprep.subr.bf16.mxu0 0
      %562 = vmatpush1.bf16.msra.mxu0 %v533
      %563 = vmatprep.subr.bf16.mxu0 0
      %564 = vmatpush1.bf16.msra.mxu0 %v532
      %565 = vmatprep.subr.bf16.mxu0 0
      %566 = vmatpush1.bf16.msra.mxu0 %v531
      %567 = vmatprep.subr.bf16.mxu0 0
      %568 = vmatpush1.bf16.msra.mxu0 %v530
      %569 = vmatprep.subr.bf16.mxu0 0
      %570 = vmatpush1.bf16.msra.mxu0 %v529
      %571 = vmatprep.subr.bf16.mxu0 0
      %572 = vmatpush1.bf16.msra.mxu0 %v528
      %573 = vmatprep.subr.bf16.mxu0 0
      %574 = vmatpush1.bf16.msra.mxu0 %v527
      %575 = vmatprep.subr.bf16.mxu0 0
      %576 = vmatpush2.bf16.msra.mxu0 %v542
      %577 = vmatprep.subr.bf16.mxu0 0
      %578 = vmatpush2.bf16.msra.mxu0 %v541
      %579 = vmatprep.subr.bf16.mxu0 0
      %580 = vmatpush2.bf16.msra.mxu0 %v540
      %581 = vmatprep.subr.bf16.mxu0 0
      %582 = vmatpush2.bf16.msra.mxu0 %v539
      %583 = vmatprep.subr.bf16.mxu0 0
      %584 = vmatpush2.bf16.msra.mxu0 %v538
      %585 = vmatprep.subr.bf16.mxu0 0
      %586 = vmatpush2.bf16.msra.mxu0 %v537
      %587 = vmatprep.subr.bf16.mxu0 0
      %588 = vmatpush2.bf16.msra.mxu0 %v536
      %589 = vmatprep.subr.bf16.mxu0 0
      %590 = vmatpush2.bf16.msra.mxu0 %v535
      %591 = vmatprep.mubr.bf16.mxu0 %v400
      %592 = vmatmul.mubr.bf16.gmra.mxu0 %v399
      %v593 = vpop.f32.mrf.mxu0
      %v594 = vadd.f32 %v301, %v593
      %v595 = vpop.f32.mrf.mxu0
      %v596 = vpop.f32.mrf.mxu0
      %v597 = vadd.f32 %v301, %v596
      %v598 = vpop.f32.mrf.mxu0
      %599 = vmatprep.mubr.bf16.mxu0 %v402
      %600 = vmatmul.mubr.bf16.gmra.mxu0 %v401
      %v601 = vpop.f32.mrf.mxu0
      %v602 = vadd.f32 %v301, %v601
      %v603 = vpop.f32.mrf.mxu0
      %v604 = vpop.f32.mrf.mxu0
      %v605 = vadd.f32 %v301, %v604
      %v606 = vpop.f32.mrf.mxu0
      %607 = vmatprep.mubr.bf16.mxu0 %v404
      %608 = vmatmul.mubr.bf16.gmra.mxu0 %v403
      %v609 = vpop.f32.mrf.mxu0
      %v610 = vadd.f32 %v301, %v609
      %v611 = vpop.f32.mrf.mxu0
      %v612 = vpop.f32.mrf.mxu0
      %v613 = vadd.f32 %v301, %v612
      %v614 = vpop.f32.mrf.mxu0
      %615 = vmatprep.mubr.bf16.mxu0 %v406
      %616 = vmatmul.mubr.bf16.gmra.mxu0 %v405
      %v617 = vpop.f32.mrf.mxu0
      %v618 = vadd.f32 %v301, %v617
      %v619 = vpop.f32.mrf.mxu0
      %v620 = vpop.f32.mrf.mxu0
      %v621 = vadd.f32 %v301, %v620
      %v622 = vpop.f32.mrf.mxu0
      %623 = vmatprep.mubr.bf16.mxu0 %v408
      %624 = vmatmul.mubr.bf16.gmra.mxu0 %v407
      %v625 = vpop.f32.mrf.mxu0
      %v626 = vadd.f32 %v301, %v625
      %v627 = vpop.f32.mrf.mxu0
      %v628 = vpop.f32.mrf.mxu0
      %v629 = vadd.f32 %v301, %v628
      %v630 = vpop.f32.mrf.mxu0
      %631 = vmatprep.mubr.bf16.mxu0 %v410
      %632 = vmatmul.mubr.bf16.gmra.mxu0 %v409
      %v633 = vpop.f32.mrf.mxu0
      %v634 = vadd.f32 %v301, %v633
      %v635 = vpop.f32.mrf.mxu0
      %v636 = vpop.f32.mrf.mxu0
      %v637 = vadd.f32 %v301, %v636
      %v638 = vpop.f32.mrf.mxu0
      %639 = vmatprep.mubr.bf16.mxu0 %v412
      %640 = vmatmul.mubr.bf16.gmra.mxu0 %v411
      %v641 = vpop.f32.mrf.mxu0
      %v642 = vadd.f32 %v301, %v641
      %v643 = vpop.f32.mrf.mxu0
      %v644 = vpop.f32.mrf.mxu0
      %v645 = vadd.f32 %v301, %v644
      %v646 = vpop.f32.mrf.mxu0
      %647 = vmatprep.mubr.bf16.mxu0 %v414
      %648 = vmatmul.mubr.bf16.gmra.mxu0 %v413
      %v649 = vpop.f32.mrf.mxu0
      %v650 = vadd.f32 %v301, %v649
      %v651 = vpop.f32.mrf.mxu0
      %v652 = vpop.f32.mrf.mxu0
      %v653 = vadd.f32 %v301, %v652
      %v654 = vpop.f32.mrf.mxu0
      %655 = vmatprep.mubr.bf16.mxu0 %v416
      %656 = vmatmul.mubr.bf16.gmra.mxu0 %v415
      %v657 = vpop.f32.mrf.mxu0
      %v658 = vadd.f32 %v301, %v657
      %v659 = vpop.f32.mrf.mxu0
      %v660 = vpop.f32.mrf.mxu0
      %v661 = vadd.f32 %v301, %v660
      %v662 = vpop.f32.mrf.mxu0
      %663 = vmatprep.mubr.bf16.mxu0 %v418
      %664 = vmatmul.mubr.bf16.gmra.mxu0 %v417
      %v665 = vpop.f32.mrf.mxu0
      %v666 = vadd.f32 %v301, %v665
      %v667 = vpop.f32.mrf.mxu0
      %v668 = vpop.f32.mrf.mxu0
      %v669 = vadd.f32 %v301, %v668
      %v670 = vpop.f32.mrf.mxu0
      %671 = vmatprep.mubr.bf16.mxu0 %v420
      %672 = vmatmul.mubr.bf16.gmra.mxu0 %v419
      %v673 = vpop.f32.mrf.mxu0
      %v674 = vadd.f32 %v301, %v673
      %v675 = vpop.f32.mrf.mxu0
      %v676 = vpop.f32.mrf.mxu0
      %v677 = vadd.f32 %v301, %v676
      %v678 = vpop.f32.mrf.mxu0
      %679 = vmatprep.mubr.bf16.mxu0 %v422
      %680 = vmatmul.mubr.bf16.gmra.mxu0 %v421
      %v681 = vpop.f32.mrf.mxu0
      %v682 = vadd.f32 %v301, %v681
      %v683 = vpop.f32.mrf.mxu0
      %v684 = vpop.f32.mrf.mxu0
      %v685 = vadd.f32 %v301, %v684
      %v686 = vpop.f32.mrf.mxu0
      %687 = vmatprep.mubr.bf16.mxu0 %v424
      %688 = vmatmul.mubr.bf16.gmra.mxu0 %v423
      %v689 = vpop.f32.mrf.mxu0
      %v690 = vadd.f32 %v301, %v689
      %v691 = vpop.f32.mrf.mxu0
      %v692 = vpop.f32.mrf.mxu0
      %v693 = vadd.f32 %v301, %v692
      %v694 = vpop.f32.mrf.mxu0
      %695 = vmatprep.mubr.bf16.mxu0 %v426
      %696 = vmatmul.mubr.bf16.gmra.mxu0 %v425
      %v697 = vpop.f32.mrf.mxu0
      %v698 = vadd.f32 %v301, %v697
      %v699 = vpop.f32.mrf.mxu0
      %v700 = vpop.f32.mrf.mxu0
      %v701 = vadd.f32 %v301, %v700
      %v702 = vpop.f32.mrf.mxu0
      %703 = vmatprep.mubr.bf16.mxu0 %v428
      %704 = vmatmul.mubr.bf16.gmra.mxu0 %v427
      %v705 = vpop.f32.mrf.mxu0
      %v706 = vadd.f32 %v301, %v705
      %v707 = vpop.f32.mrf.mxu0
      %v708 = vpop.f32.mrf.mxu0
      %v709 = vadd.f32 %v301, %v708
      %v710 = vpop.f32.mrf.mxu0
      %711 = vmatprep.mubr.bf16.mxu0 %v430
      %712 = vmatmul.mubr.bf16.gmra.mxu0 %v429
      %v713 = vpop.f32.mrf.mxu0
      %v714 = vadd.f32 %v301, %v713
      %v715 = vpop.f32.mrf.mxu0
      %v716 = vpop.f32.mrf.mxu0
      %v717 = vadd.f32 %v301, %v716
      %v718 = vpop.f32.mrf.mxu0
      %719 = vdwg.mxu0
      %v720 = vmul.f32 %v594, %v594
      %v721 = vmul.f32 %v597, %v597
      %v722 = vmul.f32 %v602, %v602
      %v723 = vmul.f32 %v605, %v605
      %v724 = vmul.f32 %v610, %v610
      %v725 = vmul.f32 %v613, %v613
      %v726 = vmul.f32 %v618, %v618
      %v727 = vmul.f32 %v621, %v621
      %v728 = vmul.f32 %v626, %v626
      %v729 = vmul.f32 %v629, %v629
      %v730 = vmul.f32 %v634, %v634
      %v731 = vmul.f32 %v637, %v637
      %v732 = vmul.f32 %v642, %v642
      %v733 = vmul.f32 %v645, %v645
      %v734 = vmul.f32 %v650, %v650
      %v735 = vmul.f32 %v653, %v653
      %v736 = vmul.f32 %v658, %v658
      %v737 = vmul.f32 %v661, %v661
      %v738 = vmul.f32 %v666, %v666
      %v739 = vmul.f32 %v669, %v669
      %v740 = vmul.f32 %v674, %v674
      %v741 = vmul.f32 %v677, %v677
      %v742 = vmul.f32 %v682, %v682
      %v743 = vmul.f32 %v685, %v685
      %v744 = vmul.f32 %v690, %v690
      %v745 = vmul.f32 %v693, %v693
      %v746 = vmul.f32 %v698, %v698
      %v747 = vmul.f32 %v701, %v701
      %v748 = vmul.f32 %v706, %v706
      %v749 = vmul.f32 %v709, %v709
      %v750 = vmul.f32 %v714, %v714
      %v751 = vmul.f32 %v717, %v717
      %v752 = vpack.c.bf16 %v721, %v720
      %v753 = vpack.c.bf16 %v723, %v722
      %v754 = vpack.c.bf16 %v725, %v724
      %v755 = vpack.c.bf16 %v727, %v726
      %v756 = vpack.c.bf16 %v729, %v728
      %v757 = vpack.c.bf16 %v731, %v730
      %v758 = vpack.c.bf16 %v733, %v732
      %v759 = vpack.c.bf16 %v735, %v734
      %v760 = vpack.c.bf16 %v737, %v736
      %v761 = vpack.c.bf16 %v739, %v738
      %v762 = vpack.c.bf16 %v741, %v740
      %v763 = vpack.c.bf16 %v743, %v742
      %v764 = vpack.c.bf16 %v745, %v744
      %v765 = vpack.c.bf16 %v747, %v746
      %v766 = vpack.c.bf16 %v749, %v748
      %v767 = vpack.c.bf16 %v751, %v750
      %v768 = vld [vmem:[%s3] sm:$0xf]
      %v769 = vld [vmem:[%s3 + $0x4] sm:$0xf]
      %v770 = vld [vmem:[%s3 + $0x8] sm:$0xf]
      %v771 = vld [vmem:[%s3 + $0xc] sm:$0xf]
      %v772 = vld [vmem:[%s3 + $0x10] sm:$0xf]
      %v773 = vld [vmem:[%s3 + $0x14] sm:$0xf]
      %v774 = vld [vmem:[%s3 + $0x18] sm:$0xf]
      %v775 = vld [vmem:[%s3 + $0x1c] sm:$0xf]
      %v776 = vld [vmem:[%s3 + $0x20] sm:$0xf]
      %v777 = vld [vmem:[%s3 + $0x24] sm:$0xf]
      %v778 = vld [vmem:[%s3 + $0x28] sm:$0xf]
      %v779 = vld [vmem:[%s3 + $0x2c] sm:$0xf]
      %v780 = vld [vmem:[%s3 + $0x30] sm:$0xf]
      %v781 = vld [vmem:[%s3 + $0x34] sm:$0xf]
      %v782 = vld [vmem:[%s3 + $0x38] sm:$0xf]
      %v783 = vld [vmem:[%s3 + $0x3c] sm:$0xf]
      %v784 = vld [vmem:[%s4] sm:$0x1]
      %v786 = vlaneseq
      %v787 = vshrl.u32 %v786, 7
      %v788 = vsub.s32 0, %v787
      %v789 = vrot.slane %v784, %v788
      %v807 = vunpack.c.l.b16 %v768
      %v808 = vunpack.c.l.b16 %v769
      %v809 = vunpack.c.l.b16 %v770
      %v810 = vunpack.c.l.b16 %v771
      %v811 = vunpack.c.l.b16 %v772
      %v812 = vunpack.c.l.b16 %v773
      %v813 = vunpack.c.l.b16 %v774
      %v814 = vunpack.c.l.b16 %v775
      %v815 = vunpack.c.l.b16 %v776
      %v816 = vunpack.c.l.b16 %v777
      %v817 = vunpack.c.l.b16 %v778
      %v818 = vunpack.c.l.b16 %v779
      %v819 = vunpack.c.l.b16 %v780
      %v820 = vunpack.c.l.b16 %v781
      %v821 = vunpack.c.l.b16 %v782
      %v822 = vunpack.c.l.b16 %v783
      %v823 = vpack.c.b16 %v808, %v807
      %v824 = vpack.c.b16 %v810, %v809
      %v825 = vpack.c.b16 %v812, %v811
      %v826 = vpack.c.b16 %v814, %v813
      %v827 = vpack.c.b16 %v816, %v815
      %v828 = vpack.c.b16 %v818, %v817
      %v829 = vpack.c.b16 %v820, %v819
      %v830 = vpack.c.b16 %v822, %v821
      %839 = vmatprep.subr.bf16.mxu0 0
      %840 = vmatpush1.bf16.msra.mxu0 %v830
      %841 = vmatprep.subr.bf16.mxu0 0
      %842 = vmatpush1.bf16.msra.mxu0 %v829
      %843 = vmatprep.subr.bf16.mxu0 0
      %844 = vmatpush1.bf16.msra.mxu0 %v828
      %845 = vmatprep.subr.bf16.mxu0 0
      %846 = vmatpush1.bf16.msra.mxu0 %v827
      %847 = vmatprep.subr.bf16.mxu0 0
      %848 = vmatpush1.bf16.msra.mxu0 %v826
      %849 = vmatprep.subr.bf16.mxu0 0
      %850 = vmatpush1.bf16.msra.mxu0 %v825
      %851 = vmatprep.subr.bf16.mxu0 0
      %852 = vmatpush1.bf16.msra.mxu0 %v824
      %853 = vmatprep.subr.bf16.mxu0 0
      %854 = vmatpush1.bf16.msra.mxu0 %v823
      %855 = vmatprep.subr.bf16.mxu0 0
      %856 = vmatpush2.bf16.msra.mxu0 0
      %857 = vmatprep.subr.bf16.mxu0 0
      %858 = vmatpush2.bf16.msra.mxu0 0
      %859 = vmatprep.subr.bf16.mxu0 0
      %860 = vmatpush2.bf16.msra.mxu0 0
      %861 = vmatprep.subr.bf16.mxu0 0
      %862 = vmatpush2.bf16.msra.mxu0 0
      %863 = vmatprep.subr.bf16.mxu0 0
      %864 = vmatpush2.bf16.msra.mxu0 0
      %865 = vmatprep.subr.bf16.mxu0 0
      %866 = vmatpush2.bf16.msra.mxu0 0
      %867 = vmatprep.subr.bf16.mxu0 0
      %868 = vmatpush2.bf16.msra.mxu0 0
      %869 = vmatprep.subr.bf16.mxu0 0
      %870 = vmatpush2.bf16.msra.mxu0 0
      %871 = vmatprep.mubr.bf16.mxu0 0
      %872 = vmatmul.mubr.bf16.gmra.mxu0 %v752
      %v873 = vpop.f32.mrf.mxu0
      %v874 = vadd.f32 %v789, %v873
      %v875 = vpop.f32.mrf.mxu0
      %v876 = vpop.f32.mrf.mxu0
      %v877 = vadd.f32 %v789, %v876
      %v878 = vpop.f32.mrf.mxu0
      %879 = vmatprep.mubr.bf16.mxu0 0
      %880 = vmatmul.mubr.bf16.gmra.mxu0 %v753
      %v881 = vpop.f32.mrf.mxu0
      %v882 = vadd.f32 %v789, %v881
      %v883 = vpop.f32.mrf.mxu0
      %v884 = vpop.f32.mrf.mxu0
      %v885 = vadd.f32 %v789, %v884
      %v886 = vpop.f32.mrf.mxu0
      %887 = vmatprep.mubr.bf16.mxu0 0
      %888 = vmatmul.mubr.bf16.gmra.mxu0 %v754
      %v889 = vpop.f32.mrf.mxu0
      %v890 = vadd.f32 %v789, %v889
      %v891 = vpop.f32.mrf.mxu0
      %v892 = vpop.f32.mrf.mxu0
      %v893 = vadd.f32 %v789, %v892
      %v894 = vpop.f32.mrf.mxu0
      %895 = vmatprep.mubr.bf16.mxu0 0
      %896 = vmatmul.mubr.bf16.gmra.mxu0 %v755
      %v897 = vpop.f32.mrf.mxu0
      %v898 = vadd.f32 %v789, %v897
      %v899 = vpop.f32.mrf.mxu0
      %v900 = vpop.f32.mrf.mxu0
      %v901 = vadd.f32 %v789, %v900
      %v902 = vpop.f32.mrf.mxu0
      %903 = vmatprep.mubr.bf16.mxu0 0
      %904 = vmatmul.mubr.bf16.gmra.mxu0 %v756
      %v905 = vpop.f32.mrf.mxu0
      %v906 = vadd.f32 %v789, %v905
      %v907 = vpop.f32.mrf.mxu0
      %v908 = vpop.f32.mrf.mxu0
      %v909 = vadd.f32 %v789, %v908
      %v910 = vpop.f32.mrf.mxu0
      %911 = vmatprep.mubr.bf16.mxu0 0
      %912 = vmatmul.mubr.bf16.gmra.mxu0 %v757
      %v913 = vpop.f32.mrf.mxu0
      %v914 = vadd.f32 %v789, %v913
      %v915 = vpop.f32.mrf.mxu0
      %v916 = vpop.f32.mrf.mxu0
      %v917 = vadd.f32 %v789, %v916
      %v918 = vpop.f32.mrf.mxu0
      %919 = vmatprep.mubr.bf16.mxu0 0
      %920 = vmatmul.mubr.bf16.gmra.mxu0 %v758
      %v921 = vpop.f32.mrf.mxu0
      %v922 = vadd.f32 %v789, %v921
      %v923 = vpop.f32.mrf.mxu0
      %v924 = vpop.f32.mrf.mxu0
      %v925 = vadd.f32 %v789, %v924
      %v926 = vpop.f32.mrf.mxu0
      %927 = vmatprep.mubr.bf16.mxu0 0
      %928 = vmatmul.mubr.bf16.gmra.mxu0 %v759
      %v929 = vpop.f32.mrf.mxu0
      %v930 = vadd.f32 %v789, %v929
      %v931 = vpop.f32.mrf.mxu0
      %v932 = vpop.f32.mrf.mxu0
      %v933 = vadd.f32 %v789, %v932
      %v934 = vpop.f32.mrf.mxu0
      %935 = vmatprep.mubr.bf16.mxu0 0
      %936 = vmatmul.mubr.bf16.gmra.mxu0 %v760
      %v937 = vpop.f32.mrf.mxu0
      %v938 = vadd.f32 %v789, %v937
      %v939 = vpop.f32.mrf.mxu0
      %v940 = vpop.f32.mrf.mxu0
      %v941 = vadd.f32 %v789, %v940
      %v942 = vpop.f32.mrf.mxu0
      %943 = vmatprep.mubr.bf16.mxu0 0
      %944 = vmatmul.mubr.bf16.gmra.mxu0 %v761
      %v945 = vpop.f32.mrf.mxu0
      %v946 = vadd.f32 %v789, %v945
      %v947 = vpop.f32.mrf.mxu0
      %v948 = vpop.f32.mrf.mxu0
      %v949 = vadd.f32 %v789, %v948
      %v950 = vpop.f32.mrf.mxu0
      %951 = vmatprep.mubr.bf16.mxu0 0
      %952 = vmatmul.mubr.bf16.gmra.mxu0 %v762
      %v953 = vpop.f32.mrf.mxu0
      %v954 = vadd.f32 %v789, %v953
      %v955 = vpop.f32.mrf.mxu0
      %v956 = vpop.f32.mrf.mxu0
      %v957 = vadd.f32 %v789, %v956
      %v958 = vpop.f32.mrf.mxu0
      %959 = vmatprep.mubr.bf16.mxu0 0
      %960 = vmatmul.mubr.bf16.gmra.mxu0 %v763
      %v961 = vpop.f32.mrf.mxu0
      %v962 = vadd.f32 %v789, %v961
      %v963 = vpop.f32.mrf.mxu0
      %v964 = vpop.f32.mrf.mxu0
      %v965 = vadd.f32 %v789, %v964
      %v966 = vpop.f32.mrf.mxu0
      %967 = vmatprep.mubr.bf16.mxu0 0
      %968 = vmatmul.mubr.bf16.gmra.mxu0 %v764
      %v969 = vpop.f32.mrf.mxu0
      %v970 = vadd.f32 %v789, %v969
      %v971 = vpop.f32.mrf.mxu0
      %v972 = vpop.f32.mrf.mxu0
      %v973 = vadd.f32 %v789, %v972
      %v974 = vpop.f32.mrf.mxu0
      %975 = vmatprep.mubr.bf16.mxu0 0
      %976 = vmatmul.mubr.bf16.gmra.mxu0 %v765
      %v977 = vpop.f32.mrf.mxu0
      %v978 = vadd.f32 %v789, %v977
      %v979 = vpop.f32.mrf.mxu0
      %v980 = vpop.f32.mrf.mxu0
      %v981 = vadd.f32 %v789, %v980
      %v982 = vpop.f32.mrf.mxu0
      %983 = vmatprep.mubr.bf16.mxu0 0
      %984 = vmatmul.mubr.bf16.gmra.mxu0 %v766
      %v985 = vpop.f32.mrf.mxu0
      %v986 = vadd.f32 %v789, %v985
      %v987 = vpop.f32.mrf.mxu0
      %v988 = vpop.f32.mrf.mxu0
      %v989 = vadd.f32 %v789, %v988
      %v990 = vpop.f32.mrf.mxu0
      %991 = vmatprep.mubr.bf16.mxu0 0
      %992 = vmatmul.mubr.bf16.gmra.mxu0 %v767
      %v993 = vpop.f32.mrf.mxu0
      %v994 = vadd.f32 %v789, %v993
      %v995 = vpop.f32.mrf.mxu0
      %v996 = vpop.f32.mrf.mxu0
      %v997 = vadd.f32 %v789, %v996
      %v998 = vpop.f32.mrf.mxu0
      %999 = vdwg.mxu0
      %v1000 = vmax.f32 %v874, 1e-06
      %v1001 = vmax.f32 %v877, 1e-06
      %v1002 = vmax.f32 %v882, 1e-06
      %v1003 = vmax.f32 %v885, 1e-06
      %v1004 = vmax.f32 %v890, 1e-06
      %v1005 = vmax.f32 %v893, 1e-06
      %v1006 = vmax.f32 %v898, 1e-06
      %v1007 = vmax.f32 %v901, 1e-06
      %v1008 = vmax.f32 %v906, 1e-06
      %v1009 = vmax.f32 %v909, 1e-06
      %v1010 = vmax.f32 %v914, 1e-06
      %v1011 = vmax.f32 %v917, 1e-06
      %v1012 = vmax.f32 %v922, 1e-06
      %v1013 = vmax.f32 %v925, 1e-06
      %v1014 = vmax.f32 %v930, 1e-06
      %v1015 = vmax.f32 %v933, 1e-06
      %v1016 = vmax.f32 %v938, 1e-06
      %v1017 = vmax.f32 %v941, 1e-06
      %v1018 = vmax.f32 %v946, 1e-06
      %v1019 = vmax.f32 %v949, 1e-06
      %v1020 = vmax.f32 %v954, 1e-06
      %v1021 = vmax.f32 %v957, 1e-06
      %v1022 = vmax.f32 %v962, 1e-06
      %v1023 = vmax.f32 %v965, 1e-06
      %v1024 = vmax.f32 %v970, 1e-06
      %v1025 = vmax.f32 %v973, 1e-06
      %v1026 = vmax.f32 %v978, 1e-06
      %v1027 = vmax.f32 %v981, 1e-06
      %v1028 = vmax.f32 %v986, 1e-06
      %v1029 = vmax.f32 %v989, 1e-06
      %v1030 = vmax.f32 %v994, 1e-06
      %v1031 = vmax.f32 %v997, 1e-06
      %v1032 = vrsqrt.pop %v1000
      %v1033 = vrsqrt.pop %v1001
      %v1034 = vrsqrt.pop %v1002
      %v1035 = vrsqrt.pop %v1003
      %v1036 = vrsqrt.pop %v1004
      %v1037 = vrsqrt.pop %v1005
      %v1038 = vrsqrt.pop %v1006
      %v1039 = vrsqrt.pop %v1007
      %v1040 = vrsqrt.pop %v1008
      %v1041 = vrsqrt.pop %v1009
      %v1042 = vrsqrt.pop %v1010
      %v1043 = vrsqrt.pop %v1011
      %v1044 = vrsqrt.pop %v1012
      %v1045 = vrsqrt.pop %v1013
      %v1046 = vrsqrt.pop %v1014
      %v1047 = vrsqrt.pop %v1015
      %v1048 = vrsqrt.pop %v1016
      %v1049 = vrsqrt.pop %v1017
      %v1050 = vrsqrt.pop %v1018
      %v1051 = vrsqrt.pop %v1019
      %v1052 = vrsqrt.pop %v1020
      %v1053 = vrsqrt.pop %v1021
      %v1054 = vrsqrt.pop %v1022
      %v1055 = vrsqrt.pop %v1023
      %v1056 = vrsqrt.pop %v1024
      %v1057 = vrsqrt.pop %v1025
      %v1058 = vrsqrt.pop %v1026
      %v1059 = vrsqrt.pop %v1027
      %v1060 = vrsqrt.pop %v1028
      %v1061 = vrsqrt.pop %v1029
      %v1062 = vrsqrt.pop %v1030
      %v1063 = vrsqrt.pop %v1031
      %v1064 = vmul.f32 %v594, %v1032
      %v1065 = vmul.f32 %v597, %v1033
      %v1066 = vmul.f32 %v602, %v1034
      %v1067 = vmul.f32 %v605, %v1035
      %v1068 = vmul.f32 %v610, %v1036
      %v1069 = vmul.f32 %v613, %v1037
      %v1070 = vmul.f32 %v618, %v1038
      %v1071 = vmul.f32 %v621, %v1039
      %v1072 = vmul.f32 %v626, %v1040
      %v1073 = vmul.f32 %v629, %v1041
      %v1074 = vmul.f32 %v634, %v1042
      %v1075 = vmul.f32 %v637, %v1043
      %v1076 = vmul.f32 %v642, %v1044
      %v1077 = vmul.f32 %v645, %v1045
      %v1078 = vmul.f32 %v650, %v1046
      %v1079 = vmul.f32 %v653, %v1047
      %v1080 = vmul.f32 %v658, %v1048
      %v1081 = vmul.f32 %v661, %v1049
      %v1082 = vmul.f32 %v666, %v1050
      %v1083 = vmul.f32 %v669, %v1051
      %v1084 = vmul.f32 %v674, %v1052
      %v1085 = vmul.f32 %v677, %v1053
      %v1086 = vmul.f32 %v682, %v1054
      %v1087 = vmul.f32 %v685, %v1055
      %v1088 = vmul.f32 %v690, %v1056
      %v1089 = vmul.f32 %v693, %v1057
      %v1090 = vmul.f32 %v698, %v1058
      %v1091 = vmul.f32 %v701, %v1059
      %v1092 = vmul.f32 %v706, %v1060
      %v1093 = vmul.f32 %v709, %v1061
      %v1094 = vmul.f32 %v714, %v1062
      %v1095 = vmul.f32 %v717, %v1063
      %1096 = vst [vmem:[%s229] sm:$0xff] %v1064
      %1097 = vst [vmem:[%s229 + $0x8] sm:$0xff] %v1065
      %1098 = vst [vmem:[%s229 + $0x10] sm:$0xff] %v1066
      %1099 = vst [vmem:[%s229 + $0x18] sm:$0xff] %v1067
      %1100 = vst [vmem:[%s229 + $0x20] sm:$0xff] %v1068
      %1101 = vst [vmem:[%s229 + $0x28] sm:$0xff] %v1069
      %1102 = vst [vmem:[%s229 + $0x30] sm:$0xff] %v1070
      %1103 = vst [vmem:[%s229 + $0x38] sm:$0xff] %v1071
      %1104 = vst [vmem:[%s229 + $0x40] sm:$0xff] %v1072
      %1105 = vst [vmem:[%s229 + $0x48] sm:$0xff] %v1073
      %1106 = vst [vmem:[%s229 + $0x50] sm:$0xff] %v1074
      %1107 = vst [vmem:[%s229 + $0x58] sm:$0xff] %v1075
      %1108 = vst [vmem:[%s229 + $0x60] sm:$0xff] %v1076
      %1109 = vst [vmem:[%s229 + $0x68] sm:$0xff] %v1077
      %1110 = vst [vmem:[%s229 + $0x70] sm:$0xff] %v1078
      %1111 = vst [vmem:[%s229 + $0x78] sm:$0xff] %v1079
      %1112 = vst [vmem:[%s229 + $0x80] sm:$0xff] %v1080
      %1113 = vst [vmem:[%s229 + $0x88] sm:$0xff] %v1081
      %1114 = vst [vmem:[%s229 + $0x90] sm:$0xff] %v1082
      %1115 = vst [vmem:[%s229 + $0x98] sm:$0xff] %v1083
      %1116 = vst [vmem:[%s229 + $0xa0] sm:$0xff] %v1084
      %1117 = vst [vmem:[%s229 + $0xa8] sm:$0xff] %v1085
      %1118 = vst [vmem:[%s229 + $0xb0] sm:$0xff] %v1086
      %1119 = vst [vmem:[%s229 + $0xb8] sm:$0xff] %v1087
      %1120 = vst [vmem:[%s229 + $0xc0] sm:$0xff] %v1088
      %1121 = vst [vmem:[%s229 + $0xc8] sm:$0xff] %v1089
      %1122 = vst [vmem:[%s229 + $0xd0] sm:$0xff] %v1090
      %1123 = vst [vmem:[%s229 + $0xd8] sm:$0xff] %v1091
      %1124 = vst [vmem:[%s229 + $0xe0] sm:$0xff] %v1092
      %1125 = vst [vmem:[%s229 + $0xe8] sm:$0xff] %v1093
      %1126 = vst [vmem:[%s229 + $0xf0] sm:$0xff] %v1094
      %1127 = vst [vmem:[%s229 + $0xf8] sm:$0xff] %v1095
      %s1128 = smul.u32 32, %s16
      %p1129 = scmp.lt.s32.totalorder %s1128, 63
      %s1130 = scalar_select %p1129, %s1128, 63
      %s1131 = smul.addr %s1130, 8
      %s1132 = scalar_lea.vmem %s5, %s1131
      // Predicated region
      $region41: #{_lambda_.15} parent=39 // pred_check
        %p1133 = pneg %p144
      $region42: #{_lambda_.15} parent=39 // pred_check_branch
        %1135 = sbr.rel (%p1133) target = $region44
      $region43: #{_lambda_.15} parent=39 // pred_region
        %s1136 = smul.u32 32, %s16
      $region44: #{_lambda_.15} parent=39 // pred_fallthru
        _
    $region40: #{_lambda_.15} parent=5 // pred_fallthru
      _
    %p1137 = scmp.le.s32.totalorder 2, %s11
    // Predicated region
    $region45: #{_lambda_.15} parent=5 // pred_check
      %p1138 = pneg %p1137
    $region46: #{_lambda_.15} parent=5 // pred_check_branch
      %1140 = sbr.rel (%p1138) target = $region48
    $region47: #{_lambda_.15} parent=5 // pred_region
      %s1141 = ssub.s32 %s11, 2
      // Predicated region
      $region49: #{_lambda_.15} parent=47 // pred_check
        %p1142 = pneg %p150
      $region50: #{_lambda_.15} parent=47 // pred_check_branch
        %1144 = sbr.rel (%p1142) target = $region52
      $region51: #{_lambda_.15} parent=47 // pred_region
        %s1145 = smul.u32 32, %s17
        %p1146 = scmp.lt.s32.totalorder %s1145, 63
        %s1147 = scalar_select %p1146, %s1145, 63
        %s1148 = smul.addr %s1147, 8
        %s1149 = scalar_lea.vmem %s5, %s1148
      $region52: #{_lambda_.15} parent=47 // pred_fallthru
        _
    $region48: #{_lambda_.15} parent=5 // pred_fallthru
      _
  $region6: #{_lambda_.15} parent=0 // loop_footer
    %s15 = sadd.s32 1, %s11
  $region7: #{_lambda_.15} parent=0 // loop_footer_branch
    %10 = sbr.rel target = $region3
  $region8: #{_lambda_.15} parent=0 // loop_exit
    _

// kernel: _lambda_.16
$region0: #{_lambda_.16}
  #allocation0 [shape = 'u32[]', space=smem, size = 0x4, offset = 0x4, fixed_abs, tag = 'smem constant byte address 0x4 - core index']
  #allocation1 [shape = 'u32[144,128]{1,0:T(1,128)}', space=vmem, size = 0x12000, scoped, tag = 'internal scratch']
  %s0 = inlined_call_operand.vmem [shape: bf16[128,256], index: 0, kind: input, shape index: {}]
  %s1 = inlined_call_operand.vmem [shape: bf16[256,128], index: 1, kind: input, shape index: {}]
  %s2 = inlined_call_operand.vmem [shape: f32[1,128], index: 2, kind: input, shape index: {}]
  %s3 = inlined_call_operand.vmem [shape: bf16[128,128], index: 3, kind: input, shape index: {}]
  %s4 = inlined_call_operand.vmem [shape: f32[1,128], index: 4, kind: input, shape index: {}]
  %s5 = inlined_call_operand.vmem [shape: f32[128,128], index: 5, kind: output, shape index: {}]
  %s6 = sld [smem:[#allocation0]]
  $region53: #{_lambda_.16} parent=0
    _
  %s8 = ssub.s32 1, %s6
  %s9 = scalar_select 0, %s8, %s6
  loop: start=0, step=1, limit=4
  $region2: #{_lambda_.16} parent=0 // loop_pre_header
    _
  $region3: #{_lambda_.16} parent=0 // loop_header
    %s11 = sphi 0, %s15
    %p12 = scmp.ge.s32.totalorder %s11, 4
    %s21 = sphi 0, %s23
    %s24 = sphi 0, %s21
    %s25 = sphi 0, %s24
    %s41 = sphi 0, %s25
    %s45 = sphi 0, %s45
    %s47 = sphi 0, %s45
    %s48 = sphi 0, %s47
    %s62 = sphi 0, %s48
    %s66 = sphi 0, %s66
    %s68 = sphi 0, %s66
    %s69 = sphi 0, %s68
    %s83 = sphi 0, %s69
    %s87 = sphi 0, %s87
    %s89 = sphi 0, %s87
    %s90 = sphi 0, %s89
    %s104 = sphi 0, %s90
    %s108 = sphi 0, %s108
    %s110 = sphi 0, %s108
    %s111 = sphi 0, %s110
    %s125 = sphi 0, %s111
    %s131 = sphi 0, %s133
    %s134 = sphi 0, %s131
    %s135 = sphi 0, %s134
    %s151 = sphi 0, %s135
  $region4: #{_lambda_.16} parent=0 // loop_header_branch
    %14 = sbr.rel (%p12) target = $region8
  $region5: #{_lambda_.16} parent=0 // loop_body
    %s16 = ssub.s32 %s11, 1
    %s17 = ssub.s32 %s11, 2
    %s18 = sadd.s32 %s11, 1
    %s19 = ssub.s32 %s11, %s18
    %p20 = scmp.eq.s32.totalorder %s19, 0
    %s22 = sadd.s32 %s21, 1
    %s23 = scalar_select %p20, %s21, %s22
    %p26 = pneg %p20
    %p27 = scmp.eq.s32.totalorder %s11, 1
    %p28 = por %p26, %p27
    %p29 = scmp.ne.s32.totalorder %s21, %s24
    %p30 = scmp.eq.s32.totalorder %s11, 0
    %p31 = por %p29, %p30
    %p32 = scmp.ne.s32.totalorder %s21, %s24
    %p33 = scmp.eq.s32.totalorder %s16, 1
    %p34 = por %p32, %p33
    %p35 = scmp.ne.s32.totalorder %s24, %s25
    %p36 = scmp.eq.s32.totalorder %s16, 0
    %p37 = por %p35, %p36
    %p38 = scmp.ne.s32.totalorder %s24, %s25
    %p39 = scmp.eq.s32.totalorder %s17, 1
    %p40 = por %p38, %p39
    %p42 = scmp.ne.s32.totalorder %s25, %s41
    %p43 = scmp.eq.s32.totalorder %s17, 0
    %p44 = por %p42, %p43
    %s46 = sadd.s32 %s45, 1
    %p49 = scmp.eq.s32.totalorder %s11, 1
    %p50 = scmp.ne.s32.totalorder %s45, %s47
    %p51 = scmp.eq.s32.totalorder %s11, 0
    %p52 = por %p50, %p51
    %p53 = scmp.ne.s32.totalorder %s45, %s47
    %p54 = scmp.eq.s32.totalorder %s16, 1
    %p55 = por %p53, %p54
    %p56 = scmp.ne.s32.totalorder %s47, %s48
    %p57 = scmp.eq.s32.totalorder %s16, 0
    %p58 = por %p56, %p57
    %p59 = scmp.ne.s32.totalorder %s47, %s48
    %p60 = scmp.eq.s32.totalorder %s17, 1
    %p61 = por %p59, %p60
    %p63 = scmp.ne.s32.totalorder %s48, %s62
    %p64 = scmp.eq.s32.totalorder %s17, 0
    %p65 = por %p63, %p64
    %s67 = sadd.s32 %s66, 1
    %p70 = scmp.eq.s32.totalorder %s11, 1
    %p71 = scmp.ne.s32.totalorder %s66, %s68
    %p72 = scmp.eq.s32.totalorder %s11, 0
    %p73 = por %p71, %p72
    %p74 = scmp.ne.s32.totalorder %s66, %s68
    %p75 = scmp.eq.s32.totalorder %s16, 1
    %p76 = por %p74, %p75
    %p77 = scmp.ne.s32.totalorder %s68, %s69
    %p78 = scmp.eq.s32.totalorder %s16, 0
    %p79 = por %p77, %p78
    %p80 = scmp.ne.s32.totalorder %s68, %s69
    %p81 = scmp.eq.s32.totalorder %s17, 1
    %p82 = por %p80, %p81
    %p84 = scmp.ne.s32.totalorder %s69, %s83
    %p85 = scmp.eq.s32.totalorder %s17, 0
    %p86 = por %p84, %p85
    %s88 = sadd.s32 %s87, 1
    %p91 = scmp.eq.s32.totalorder %s11, 1
    %p92 = scmp.ne.s32.totalorder %s87, %s89
    %p93 = scmp.eq.s32.totalorder %s11, 0
    %p94 = por %p92, %p93
    %p95 = scmp.ne.s32.totalorder %s87, %s89
    %p96 = scmp.eq.s32.totalorder %s16, 1
    %p97 = por %p95, %p96
    %p98 = scmp.ne.s32.totalorder %s89, %s90
    %p99 = scmp.eq.s32.totalorder %s16, 0
    %p100 = por %p98, %p99
    %p101 = scmp.ne.s32.totalorder %s89, %s90
    %p102 = scmp.eq.s32.totalorder %s17, 1
    %p103 = por %p101, %p102
    %p105 = scmp.ne.s32.totalorder %s90, %s104
    %p106 = scmp.eq.s32.totalorder %s17, 0
    %p107 = por %p105, %p106
    %s109 = sadd.s32 %s108, 1
    %p112 = scmp.eq.s32.totalorder %s11, 1
    %p113 = scmp.ne.s32.totalorder %s108, %s110
    %p114 = scmp.eq.s32.totalorder %s11, 0
    %p115 = por %p113, %p114
    %p116 = scmp.ne.s32.totalorder %s108, %s110
    %p117 = scmp.eq.s32.totalorder %s16, 1
    %p118 = por %p116, %p117
    %p119 = scmp.ne.s32.totalorder %s110, %s111
    %p120 = scmp.eq.s32.totalorder %s16, 0
    %p121 = por %p119, %p120
    %p122 = scmp.ne.s32.totalorder %s110, %s111
    %p123 = scmp.eq.s32.totalorder %s17, 1
    %p124 = por %p122, %p123
    %p126 = scmp.ne.s32.totalorder %s111, %s125
    %p127 = scmp.eq.s32.totalorder %s17, 0
    %p128 = por %p126, %p127
    %s129 = ssub.s32 %s11, %s18
    %p130 = scmp.eq.s32.totalorder %s129, 0
    %s132 = sadd.s32 %s131, 1
    %s133 = scalar_select %p130, %s131, %s132
    %p136 = pneg %p130
    %p137 = scmp.eq.s32.totalorder %s11, 1
    %p138 = por %p136, %p137
    %p139 = scmp.ne.s32.totalorder %s131, %s134
    %p140 = scmp.eq.s32.totalorder %s11, 0
    %p141 = por %p139, %p140
    %p142 = scmp.ne.s32.totalorder %s131, %s134
    %p143 = scmp.eq.s32.totalorder %s16, 1
    %p144 = por %p142, %p143
    %p145 = scmp.ne.s32.totalorder %s134, %s135
    %p146 = scmp.eq.s32.totalorder %s16, 0
    %p147 = por %p145, %p146
    %p148 = scmp.ne.s32.totalorder %s134, %s135
    %p149 = scmp.eq.s32.totalorder %s17, 1
    %p150 = por %p148, %p149
    %p152 = scmp.ne.s32.totalorder %s135, %s151
    %p153 = scmp.eq.s32.totalorder %s17, 0
    %p154 = por %p152, %p153
    %p155 = scmp.le.s32.totalorder 1, %s11
    %p156 = scmp.lt.s32.totalorder %s11, 3
    %p157 = pnand %p155, %p156
    %p158 = pneg %p157
    // Predicated region
    $region9: #{_lambda_.16} parent=5 // pred_check
      _
    $region10: #{_lambda_.16} parent=5 // pred_check_branch
      %160 = sbr.rel (%p157) target = $region12
    $region11: #{_lambda_.16} parent=5 // pred_region
      %s161 = ssub.s32 %s11, 1
      // Predicated region
      $region13: #{_lambda_.16} parent=11 // pred_check
        %p162 = pneg %p58
      $region14: #{_lambda_.16} parent=11 // pred_check_branch
        %164 = sbr.rel (%p162) target = $region16
      $region15: #{_lambda_.16} parent=11 // pred_region
        _
      $region16: #{_lambda_.16} parent=11 // pred_fallthru
        _
      // Predicated region
      $region17: #{_lambda_.16} parent=11 // pred_check
        %p165 = pneg %p79
      $region18: #{_lambda_.16} parent=11 // pred_check_branch
        %167 = sbr.rel (%p165) target = $region20
      $region19: #{_lambda_.16} parent=11 // pred_region
        _
      $region20: #{_lambda_.16} parent=11 // pred_fallthru
        _
      // Predicated region
      $region21: #{_lambda_.16} parent=11 // pred_check
        %p168 = pneg %p100
      $region22: #{_lambda_.16} parent=11 // pred_check_branch
        %170 = sbr.rel (%p168) target = $region24
      $region23: #{_lambda_.16} parent=11 // pred_region
        _
      $region24: #{_lambda_.16} parent=11 // pred_fallthru
        _
      // Predicated region
      $region25: #{_lambda_.16} parent=11 // pred_check
        %p171 = pneg %p121
      $region26: #{_lambda_.16} parent=11 // pred_check_branch
        %173 = sbr.rel (%p171) target = $region28
      $region27: #{_lambda_.16} parent=11 // pred_region
        _
      $region28: #{_lambda_.16} parent=11 // pred_fallthru
        _
    $region12: #{_lambda_.16} parent=5 // pred_fallthru
      _
    %p174 = scmp.lt.s32.totalorder %s11, 2
    // Predicated region
    $region29: #{_lambda_.16} parent=5 // pred_check
      %p175 = pneg %p174
    $region30: #{_lambda_.16} parent=5 // pred_check_branch
      %177 = sbr.rel (%p175) target = $region32
    $region31: #{_lambda_.16} parent=5 // pred_region
      // Predicated region
      $region33: #{_lambda_.16} parent=31 // pred_check
        %p178 = pneg %p31
      $region34: #{_lambda_.16} parent=31 // pred_check_branch
        %180 = sbr.rel (%p178) target = $region36
      $region35: #{_lambda_.16} parent=31 // pred_region
        %s181 = smul.u32 8, %s11
        %p182 = scmp.lt.s32.totalorder %s181, 15
        %s183 = scalar_select %p182, %s181, 15
        %s184 = smul.addr %s183, 2
        %s185 = smul.addr %s184, 4
        %s186 = scalar_lea.vmem %s0, %s185
        %s187 = smul.u32 8, %s11
      $region36: #{_lambda_.16} parent=31 // pred_fallthru
        _
    $region32: #{_lambda_.16} parent=5 // pred_fallthru
      _
    %p188 = scmp.le.s32.totalorder 1, %s11
    %p189 = scmp.lt.s32.totalorder %s11, 3
    %p190 = pnand %p188, %p189
    %p191 = pneg %p190
    // Predicated region
    $region37: #{_lambda_.16} parent=5 // pred_check
      _
    $region38: #{_lambda_.16} parent=5 // pred_check_branch
      %193 = sbr.rel (%p190) target = $region40
    $region39: #{_lambda_.16} parent=5 // pred_region
      %s194 = ssub.s32 %s11, 1
      %s195 = smul.u32 8, %s16
      %p196 = scmp.lt.s32.totalorder %s195, 15
      %s197 = scalar_select %p196, %s195, 15
      %s198 = smul.addr %s197, 2
      %s199 = smul.addr %s198, 4
      %s200 = scalar_lea.vmem %s0, %s199
      %p201 = pneg %p37
      %p202 = pneg %p34
      %p203 = pneg %p58
      %p204 = pneg %p55
      %p205 = pneg %p79
      %p206 = pneg %p76
      %p207 = pneg %p100
      %p208 = pneg %p97
      %p209 = pneg %p121
      %p210 = pneg %p118
      %p211 = pneg %p147
      %p212 = pneg %p144
      %s213 = smul.u32 8, %s16
      %p214 = scmp.lt.s32.totalorder %s213, 15
      %s215 = scalar_select %p214, %s213, 15
      %s216 = smul.addr %s215, 8
      %s217 = scalar_lea.vmem %s5, %s216
      %s218 = smul.u32 8, %s16
      %p219 = scmp.lt.s32.totalorder %s218, 15
      %s220 = scalar_select %p219, %s218, 15
      %s221 = smul.addr %s220, 2
      %s222 = smul.addr %s221, 4
      %s223 = scalar_lea.vmem %s0, %s222
      %s224 = smul.u32 8, %s16
      %s225 = smul.u32 8, %s16
      %p226 = scmp.lt.s32.totalorder %s225, 15
      %s227 = scalar_select %p226, %s225, 15
      %s228 = smul.addr %s227, 8
      %s229 = scalar_lea.vmem %s5, %s228
      %s230 = smul.u32 8, %s16
      %v232 = vld [vmem:[%s223] sm:$0xff]
      %v233 = vld [vmem:[%s223 + $0x8] sm:$0xff]
      %v234 = vld [vmem:[%s223 + $0x10] sm:$0xff]
      %v235 = vld [vmem:[%s223 + $0x18] sm:$0xff]
      %v236 = vld [vmem:[%s223 + $0x20] sm:$0xff]
      %v237 = vld [vmem:[%s223 + $0x28] sm:$0xff]
      %v238 = vld [vmem:[%s223 + $0x30] sm:$0xff]
      %v239 = vld [vmem:[%s223 + $0x38] sm:$0xff]
      %v240 = vld [vmem:[%s1] sm:$0xf]
      %v241 = vld [vmem:[%s1 + $0x4] sm:$0xf]
      %v242 = vld [vmem:[%s1 + $0x8] sm:$0xf]
      %v243 = vld [vmem:[%s1 + $0xc] sm:$0xf]
      %v244 = vld [vmem:[%s1 + $0x10] sm:$0xf]
      %v245 = vld [vmem:[%s1 + $0x14] sm:$0xf]
      %v246 = vld [vmem:[%s1 + $0x18] sm:$0xf]
      %v247 = vld [vmem:[%s1 + $0x1c] sm:$0xf]
      %v248 = vld [vmem:[%s1 + $0x20] sm:$0xf]
      %v249 = vld [vmem:[%s1 + $0x24] sm:$0xf]
      %v250 = vld [vmem:[%s1 + $0x28] sm:$0xf]
      %v251 = vld [vmem:[%s1 + $0x2c] sm:$0xf]
      %v252 = vld [vmem:[%s1 + $0x30] sm:$0xf]
      %v253 = vld [vmem:[%s1 + $0x34] sm:$0xf]
      %v254 = vld [vmem:[%s1 + $0x38] sm:$0xf]
      %v255 = vld [vmem:[%s1 + $0x3c] sm:$0xf]
      %v256 = vld [vmem:[%s1 + $0x40] sm:$0xf]
      %v257 = vld [vmem:[%s1 + $0x44] sm:$0xf]
      %v258 = vld [vmem:[%s1 + $0x48] sm:$0xf]
      %v259 = vld [vmem:[%s1 + $0x4c] sm:$0xf]
      %v260 = vld [vmem:[%s1 + $0x50] sm:$0xf]
      %v261 = vld [vmem:[%s1 + $0x54] sm:$0xf]
      %v262 = vld [vmem:[%s1 + $0x58] sm:$0xf]
      %v263 = vld [vmem:[%s1 + $0x5c] sm:$0xf]
      %v264 = vld [vmem:[%s1 + $0x60] sm:$0xf]
      %v265 = vld [vmem:[%s1 + $0x64] sm:$0xf]
      %v266 = vld [vmem:[%s1 + $0x68] sm:$0xf]
      %v267 = vld [vmem:[%s1 + $0x6c] sm:$0xf]
      %v268 = vld [vmem:[%s1 + $0x70] sm:$0xf]
      %v269 = vld [vmem:[%s1 + $0x74] sm:$0xf]
      %v270 = vld [vmem:[%s1 + $0x78] sm:$0xf]
      %v271 = vld [vmem:[%s1 + $0x7c] sm:$0xf]
      %v272 = vld [vmem:[%s2] sm:$0x1]
      %v274 = vlaneseq
      %v275 = vshrl.u32 %v274, 7
      %v276 = vsub.s32 0, %v275
      %v277 = vrot.slane %v272, %v276
      %v287 = vunpack.c.l.b16 %v232
      %v288 = vunpack.c.h.b16 %v232
      %v289 = vunpack.c.l.b16 %v233
      %v290 = vunpack.c.h.b16 %v233
      %v291 = vunpack.c.l.b16 %v234
      %v292 = vunpack.c.h.b16 %v234
      %v293 = vunpack.c.l.b16 %v235
      %v294 = vunpack.c.h.b16 %v235
      %v295 = vunpack.c.l.b16 %v236
      %v296 = vunpack.c.h.b16 %v236
      %v297 = vunpack.c.l.b16 %v237
      %v298 = vunpack.c.h.b16 %v237
      %v299 = vunpack.c.l.b16 %v238
      %v300 = vunpack.c.h.b16 %v238
      %v301 = vunpack.c.l.b16 %v239
      %v302 = vunpack.c.h.b16 %v239
      %v303 = vpack.c.b16 %v289, %v287
      %v304 = vpack.c.b16 %v290, %v288
      %v305 = vpack.c.b16 %v293, %v291
      %v306 = vpack.c.b16 %v294, %v292
      %v307 = vpack.c.b16 %v297, %v295
      %v308 = vpack.c.b16 %v298, %v296
      %v309 = vpack.c.b16 %v301, %v299
      %v310 = vpack.c.b16 %v302, %v300
      %v351 = vunpack.c.l.b16 %v240
      %v352 = vunpack.c.l.b16 %v241
      %v353 = vunpack.c.l.b16 %v242
      %v354 = vunpack.c.l.b16 %v243
      %v355 = vunpack.c.l.b16 %v244
      %v356 = vunpack.c.l.b16 %v245
      %v357 = vunpack.c.l.b16 %v246
      %v358 = vunpack.c.l.b16 %v247
      %v359 = vunpack.c.l.b16 %v248
      %v360 = vunpack.c.l.b16 %v249
      %v361 = vunpack.c.l.b16 %v250
      %v362 = vunpack.c.l.b16 %v251
      %v363 = vunpack.c.l.b16 %v252
      %v364 = vunpack.c.l.b16 %v253
      %v365 = vunpack.c.l.b16 %v254
      %v366 = vunpack.c.l.b16 %v255
      %v367 = vunpack.c.l.b16 %v256
      %v368 = vunpack.c.l.b16 %v257
      %v369 = vunpack.c.l.b16 %v258
      %v370 = vunpack.c.l.b16 %v259
      %v371 = vunpack.c.l.b16 %v260
      %v372 = vunpack.c.l.b16 %v261
      %v373 = vunpack.c.l.b16 %v262
      %v374 = vunpack.c.l.b16 %v263
      %v375 = vunpack.c.l.b16 %v264
      %v376 = vunpack.c.l.b16 %v265
      %v377 = vunpack.c.l.b16 %v266
      %v378 = vunpack.c.l.b16 %v267
      %v379 = vunpack.c.l.b16 %v268
      %v380 = vunpack.c.l.b16 %v269
      %v381 = vunpack.c.l.b16 %v270
      %v382 = vunpack.c.l.b16 %v271
      %v383 = vpack.c.b16 %v352, %v351
      %v384 = vpack.c.b16 %v354, %v353
      %v385 = vpack.c.b16 %v356, %v355
      %v386 = vpack.c.b16 %v358, %v357
      %v387 = vpack.c.b16 %v360, %v359
      %v388 = vpack.c.b16 %v362, %v361
      %v389 = vpack.c.b16 %v364, %v363
      %v390 = vpack.c.b16 %v366, %v365
      %v391 = vpack.c.b16 %v368, %v367
      %v392 = vpack.c.b16 %v370, %v369
      %v393 = vpack.c.b16 %v372, %v371
      %v394 = vpack.c.b16 %v374, %v373
      %v395 = vpack.c.b16 %v376, %v375
      %v396 = vpack.c.b16 %v378, %v377
      %v397 = vpack.c.b16 %v380, %v379
      %v398 = vpack.c.b16 %v382, %v381
      %415 = vmatprep.subr.bf16.mxu0 0
      %416 = vmatpush1.bf16.msra.mxu0 %v390
      %417 = vmatprep.subr.bf16.mxu0 0
      %418 = vmatpush1.bf16.msra.mxu0 %v389
      %419 = vmatprep.subr.bf16.mxu0 0
      %420 = vmatpush1.bf16.msra.mxu0 %v388
      %421 = vmatprep.subr.bf16.mxu0 0
      %422 = vmatpush1.bf16.msra.mxu0 %v387
      %423 = vmatprep.subr.bf16.mxu0 0
      %424 = vmatpush1.bf16.msra.mxu0 %v386
      %425 = vmatprep.subr.bf16.mxu0 0
      %426 = vmatpush1.bf16.msra.mxu0 %v385
      %427 = vmatprep.subr.bf16.mxu0 0
      %428 = vmatpush1.bf16.msra.mxu0 %v384
      %429 = vmatprep.subr.bf16.mxu0 0
      %430 = vmatpush1.bf16.msra.mxu0 %v383
      %431 = vmatprep.subr.bf16.mxu0 0
      %432 = vmatpush2.bf16.msra.mxu0 %v398
      %433 = vmatprep.subr.bf16.mxu0 0
      %434 = vmatpush2.bf16.msra.mxu0 %v397
      %435 = vmatprep.subr.bf16.mxu0 0
      %436 = vmatpush2.bf16.msra.mxu0 %v396
      %437 = vmatprep.subr.bf16.mxu0 0
      %438 = vmatpush2.bf16.msra.mxu0 %v395
      %439 = vmatprep.subr.bf16.mxu0 0
      %440 = vmatpush2.bf16.msra.mxu0 %v394
      %441 = vmatprep.subr.bf16.mxu0 0
      %442 = vmatpush2.bf16.msra.mxu0 %v393
      %443 = vmatprep.subr.bf16.mxu0 0
      %444 = vmatpush2.bf16.msra.mxu0 %v392
      %445 = vmatprep.subr.bf16.mxu0 0
      %446 = vmatpush2.bf16.msra.mxu0 %v391
      %447 = vmatprep.mubr.bf16.mxu0 %v304
      %448 = vmatmul.mubr.bf16.gmra.mxu0 %v303
      %v449 = vpop.f32.mrf.mxu0
      %v450 = vadd.f32 %v277, %v449
      %v451 = vpop.f32.mrf.mxu0
      %v452 = vpop.f32.mrf.mxu0
      %v453 = vadd.f32 %v277, %v452
      %v454 = vpop.f32.mrf.mxu0
      %455 = vmatprep.mubr.bf16.mxu0 %v306
      %456 = vmatmul.mubr.bf16.gmra.mxu0 %v305
      %v457 = vpop.f32.mrf.mxu0
      %v458 = vadd.f32 %v277, %v457
      %v459 = vpop.f32.mrf.mxu0
      %v460 = vpop.f32.mrf.mxu0
      %v461 = vadd.f32 %v277, %v460
      %v462 = vpop.f32.mrf.mxu0
      %463 = vmatprep.mubr.bf16.mxu0 %v308
      %464 = vmatmul.mubr.bf16.gmra.mxu0 %v307
      %v465 = vpop.f32.mrf.mxu0
      %v466 = vadd.f32 %v277, %v465
      %v467 = vpop.f32.mrf.mxu0
      %v468 = vpop.f32.mrf.mxu0
      %v469 = vadd.f32 %v277, %v468
      %v470 = vpop.f32.mrf.mxu0
      %471 = vmatprep.mubr.bf16.mxu0 %v310
      %472 = vmatmul.mubr.bf16.gmra.mxu0 %v309
      %v473 = vpop.f32.mrf.mxu0
      %v474 = vadd.f32 %v277, %v473
      %v475 = vpop.f32.mrf.mxu0
      %v476 = vpop.f32.mrf.mxu0
      %v477 = vadd.f32 %v277, %v476
      %v478 = vpop.f32.mrf.mxu0
      %479 = vdwg.mxu0
      %v480 = vmul.f32 %v450, %v450
      %v481 = vmul.f32 %v453, %v453
      %v482 = vmul.f32 %v458, %v458
      %v483 = vmul.f32 %v461, %v461
      %v484 = vmul.f32 %v466, %v466
      %v485 = vmul.f32 %v469, %v469
      %v486 = vmul.f32 %v474, %v474
      %v487 = vmul.f32 %v477, %v477
      %v488 = vpack.c.bf16 %v481, %v480
      %v489 = vpack.c.bf16 %v483, %v482
      %v490 = vpack.c.bf16 %v485, %v484
      %v491 = vpack.c.bf16 %v487, %v486
      %v492 = vld [vmem:[%s3] sm:$0xf]
      %v493 = vld [vmem:[%s3 + $0x4] sm:$0xf]
      %v494 = vld [vmem:[%s3 + $0x8] sm:$0xf]
      %v495 = vld [vmem:[%s3 + $0xc] sm:$0xf]
      %v496 = vld [vmem:[%s3 + $0x10] sm:$0xf]
      %v497 = vld [vmem:[%s3 + $0x14] sm:$0xf]
      %v498 = vld [vmem:[%s3 + $0x18] sm:$0xf]
      %v499 = vld [vmem:[%s3 + $0x1c] sm:$0xf]
      %v500 = vld [vmem:[%s3 + $0x20] sm:$0xf]
      %v501 = vld [vmem:[%s3 + $0x24] sm:$0xf]
      %v502 = vld [vmem:[%s3 + $0x28] sm:$0xf]
      %v503 = vld [vmem:[%s3 + $0x2c] sm:$0xf]
      %v504 = vld [vmem:[%s3 + $0x30] sm:$0xf]
      %v505 = vld [vmem:[%s3 + $0x34] sm:$0xf]
      %v506 = vld [vmem:[%s3 + $0x38] sm:$0xf]
      %v507 = vld [vmem:[%s3 + $0x3c] sm:$0xf]
      %v508 = vld [vmem:[%s4] sm:$0x1]
      %v510 = vlaneseq
      %v511 = vshrl.u32 %v510, 7
      %v512 = vsub.s32 0, %v511
      %v513 = vrot.slane %v508, %v512
      %v531 = vunpack.c.l.b16 %v492
      %v532 = vunpack.c.l.b16 %v493
      %v533 = vunpack.c.l.b16 %v494
      %v534 = vunpack.c.l.b16 %v495
      %v535 = vunpack.c.l.b16 %v496
      %v536 = vunpack.c.l.b16 %v497
      %v537 = vunpack.c.l.b16 %v498
      %v538 = vunpack.c.l.b16 %v499
      %v539 = vunpack.c.l.b16 %v500
      %v540 = vunpack.c.l.b16 %v501
      %v541 = vunpack.c.l.b16 %v502
      %v542 = vunpack.c.l.b16 %v503
      %v543 = vunpack.c.l.b16 %v504
      %v544 = vunpack.c.l.b16 %v505
      %v545 = vunpack.c.l.b16 %v506
      %v546 = vunpack.c.l.b16 %v507
      %v547 = vpack.c.b16 %v532, %v531
      %v548 = vpack.c.b16 %v534, %v533
      %v549 = vpack.c.b16 %v536, %v535
      %v550 = vpack.c.b16 %v538, %v537
      %v551 = vpack.c.b16 %v540, %v539
      %v552 = vpack.c.b16 %v542, %v541
      %v553 = vpack.c.b16 %v544, %v543
      %v554 = vpack.c.b16 %v546, %v545
      %563 = vmatprep.subr.bf16.mxu0 0
      %564 = vmatpush1.bf16.msra.mxu0 %v554
      %565 = vmatprep.subr.bf16.mxu0 0
      %566 = vmatpush1.bf16.msra.mxu0 %v553
      %567 = vmatprep.subr.bf16.mxu0 0
      %568 = vmatpush1.bf16.msra.mxu0 %v552
      %569 = vmatprep.subr.bf16.mxu0 0
      %570 = vmatpush1.bf16.msra.mxu0 %v551
      %571 = vmatprep.subr.bf16.mxu0 0
      %572 = vmatpush1.bf16.msra.mxu0 %v550
      %573 = vmatprep.subr.bf16.mxu0 0
      %574 = vmatpush1.bf16.msra.mxu0 %v549
      %575 = vmatprep.subr.bf16.mxu0 0
      %576 = vmatpush1.bf16.msra.mxu0 %v548
      %577 = vmatprep.subr.bf16.mxu0 0
      %578 = vmatpush1.bf16.msra.mxu0 %v547
      %579 = vmatprep.subr.bf16.mxu0 0
      %580 = vmatpush2.bf16.msra.mxu0 0
      %581 = vmatprep.subr.bf16.mxu0 0
      %582 = vmatpush2.bf16.msra.mxu0 0
      %583 = vmatprep.subr.bf16.mxu0 0
      %584 = vmatpush2.bf16.msra.mxu0 0
      %585 = vmatprep.subr.bf16.mxu0 0
      %586 = vmatpush2.bf16.msra.mxu0 0
      %587 = vmatprep.subr.bf16.mxu0 0
      %588 = vmatpush2.bf16.msra.mxu0 0
      %589 = vmatprep.subr.bf16.mxu0 0
      %590 = vmatpush2.bf16.msra.mxu0 0
      %591 = vmatprep.subr.bf16.mxu0 0
      %592 = vmatpush2.bf16.msra.mxu0 0
      %593 = vmatprep.subr.bf16.mxu0 0
      %594 = vmatpush2.bf16.msra.mxu0 0
      %595 = vmatprep.mubr.bf16.mxu0 0
      %596 = vmatmul.mubr.bf16.gmra.mxu0 %v488
      %v597 = vpop.f32.mrf.mxu0
      %v598 = vadd.f32 %v513, %v597
      %v599 = vpop.f32.mrf.mxu0
      %v600 = vpop.f32.mrf.mxu0
      %v601 = vadd.f32 %v513, %v600
      %v602 = vpop.f32.mrf.mxu0
      %603 = vmatprep.mubr.bf16.mxu0 0
      %604 = vmatmul.mubr.bf16.gmra.mxu0 %v489
      %v605 = vpop.f32.mrf.mxu0
      %v606 = vadd.f32 %v513, %v605
      %v607 = vpop.f32.mrf.mxu0
      %v608 = vpop.f32.mrf.mxu0
      %v609 = vadd.f32 %v513, %v608
      %v610 = vpop.f32.mrf.mxu0
      %611 = vmatprep.mubr.bf16.mxu0 0
      %612 = vmatmul.mubr.bf16.gmra.mxu0 %v490
      %v613 = vpop.f32.mrf.mxu0
      %v614 = vadd.f32 %v513, %v613
      %v615 = vpop.f32.mrf.mxu0
      %v616 = vpop.f32.mrf.mxu0
      %v617 = vadd.f32 %v513, %v616
      %v618 = vpop.f32.mrf.mxu0
      %619 = vmatprep.mubr.bf16.mxu0 0
      %620 = vmatmul.mubr.bf16.gmra.mxu0 %v491
      %v621 = vpop.f32.mrf.mxu0
      %v622 = vadd.f32 %v513, %v621
      %v623 = vpop.f32.mrf.mxu0
      %v624 = vpop.f32.mrf.mxu0
      %v625 = vadd.f32 %v513, %v624
      %v626 = vpop.f32.mrf.mxu0
      %627 = vdwg.mxu0
      %v628 = vmax.f32 %v598, 1e-06
      %v629 = vmax.f32 %v601, 1e-06
      %v630 = vmax.f32 %v606, 1e-06
      %v631 = vmax.f32 %v609, 1e-06
      %v632 = vmax.f32 %v614, 1e-06
      %v633 = vmax.f32 %v617, 1e-06
      %v634 = vmax.f32 %v622, 1e-06
      %v635 = vmax.f32 %v625, 1e-06
      %v636 = vrsqrt.pop %v628
      %v637 = vrsqrt.pop %v629
      %v638 = vrsqrt.pop %v630
      %v639 = vrsqrt.pop %v631
      %v640 = vrsqrt.pop %v632
      %v641 = vrsqrt.pop %v633
      %v642 = vrsqrt.pop %v634
      %v643 = vrsqrt.pop %v635
      %v644 = vmul.f32 %v450, %v636
      %v645 = vmul.f32 %v453, %v637
      %v646 = vmul.f32 %v458, %v638
      %v647 = vmul.f32 %v461, %v639
      %v648 = vmul.f32 %v466, %v640
      %v649 = vmul.f32 %v469, %v641
      %v650 = vmul.f32 %v474, %v642
      %v651 = vmul.f32 %v477, %v643
      %652 = vst [vmem:[%s229] sm:$0xff] %v644
      %653 = vst [vmem:[%s229 + $0x8] sm:$0xff] %v645
      %654 = vst [vmem:[%s229 + $0x10] sm:$0xff] %v646
      %655 = vst [vmem:[%s229 + $0x18] sm:$0xff] %v647
      %656 = vst [vmem:[%s229 + $0x20] sm:$0xff] %v648
      %657 = vst [vmem:[%s229 + $0x28] sm:$0xff] %v649
      %658 = vst [vmem:[%s229 + $0x30] sm:$0xff] %v650
      %659 = vst [vmem:[%s229 + $0x38] sm:$0xff] %v651
      %s660 = smul.u32 8, %s16
      %p661 = scmp.lt.s32.totalorder %s660, 15
      %s662 = scalar_select %p661, %s660, 15
      %s663 = smul.addr %s662, 8
      %s664 = scalar_lea.vmem %s5, %s663
      // Predicated region
      $region41: #{_lambda_.16} parent=39 // pred_check
        %p665 = pneg %p144
      $region42: #{_lambda_.16} parent=39 // pred_check_branch
        %667 = sbr.rel (%p665) target = $region44
      $region43: #{_lambda_.16} parent=39 // pred_region
        %s668 = smul.u32 8, %s16
      $region44: #{_lambda_.16} parent=39 // pred_fallthru
        _
    $region40: #{_lambda_.16} parent=5 // pred_fallthru
      _
    %p669 = scmp.le.s32.totalorder 2, %s11
    // Predicated region
    $region45: #{_lambda_.16} parent=5 // pred_check
      %p670 = pneg %p669
    $region46: #{_lambda_.16} parent=5 // pred_check_branch
      %672 = sbr.rel (%p670) target = $region48
    $region47: #{_lambda_.16} parent=5 // pred_region
      %s673 = ssub.s32 %s11, 2
      // Predicated region
      $region49: #{_lambda_.16} parent=47 // pred_check
        %p674 = pneg %p150
      $region50: #{_lambda_.16} parent=47 // pred_check_branch
        %676 = sbr.rel (%p674) target = $region52
      $region51: #{_lambda_.16} parent=47 // pred_region
        %s677 = smul.u32 8, %s17
        %p678 = scmp.lt.s32.totalorder %s677, 15
        %s679 = scalar_select %p678, %s677, 15
        %s680 = smul.addr %s679, 8
        %s681 = scalar_lea.vmem %s5, %s680
      $region52: #{_lambda_.16} parent=47 // pred_fallthru
        _
    $region48: #{_lambda_.16} parent=5 // pred_fallthru
      _
  $region6: #{_lambda_.16} parent=0 // loop_footer
    %s15 = sadd.s32 1, %s11
  $region7: #{_lambda_.16} parent=0 // loop_footer_branch
    %10 = sbr.rel target = $region3
  $region8: #{_lambda_.16} parent=0 // loop_exit
    _

// kernel: _lambda_.17
$region0: #{_lambda_.17}
  #allocation0 [shape = 'u32[]', space=smem, size = 0x4, offset = 0x4, fixed_abs, tag = 'smem constant byte address 0x4 - core index']
  #allocation1 [shape = 'u32[144,128]{1,0:T(1,128)}', space=vmem, size = 0x12000, scoped, tag = 'internal scratch']
  %s0 = inlined_call_operand.vmem [shape: bf16[32,256], index: 0, kind: input, shape index: {}]
  %s1 = inlined_call_operand.vmem [shape: bf16[256,128], index: 1, kind: input, shape index: {}]
  %s2 = inlined_call_operand.vmem [shape: f32[1,128], index: 2, kind: input, shape index: {}]
  %s3 = inlined_call_operand.vmem [shape: f32[32,128], index: 3, kind: output, shape index: {}]
  %s4 = sld [smem:[#allocation0]]
  $region45: #{_lambda_.17} parent=0
    _
  %s6 = ssub.s32 1, %s4
  %s7 = scalar_select 0, %s6, %s4
  loop: start=0, step=1, limit=4
  $region2: #{_lambda_.17} parent=0 // loop_pre_header
    _
  $region3: #{_lambda_.17} parent=0 // loop_header
    %s9 = sphi 0, %s13
    %p10 = scmp.ge.s32.totalorder %s9, 4
    %s19 = sphi 0, %s21
    %s22 = sphi 0, %s19
    %s23 = sphi 0, %s22
    %s39 = sphi 0, %s23
    %s43 = sphi 0, %s43
    %s45 = sphi 0, %s43
    %s46 = sphi 0, %s45
    %s60 = sphi 0, %s46
    %s64 = sphi 0, %s64
    %s66 = sphi 0, %s64
    %s67 = sphi 0, %s66
    %s81 = sphi 0, %s67
    %s87 = sphi 0, %s89
    %s90 = sphi 0, %s87
    %s91 = sphi 0, %s90
    %s107 = sphi 0, %s91
  $region4: #{_lambda_.17} parent=0 // loop_header_branch
    %12 = sbr.rel (%p10) target = $region8
  $region5: #{_lambda_.17} parent=0 // loop_body
    %s14 = ssub.s32 %s9, 1
    %s15 = ssub.s32 %s9, 2
    %s16 = sadd.s32 %s9, 1
    %s17 = ssub.s32 %s9, %s16
    %p18 = scmp.eq.s32.totalorder %s17, 0
    %s20 = sadd.s32 %s19, 1
    %s21 = scalar_select %p18, %s19, %s20
    %p24 = pneg %p18
    %p25 = scmp.eq.s32.totalorder %s9, 1
    %p26 = por %p24, %p25
    %p27 = scmp.ne.s32.totalorder %s19, %s22
    %p28 = scmp.eq.s32.totalorder %s9, 0
    %p29 = por %p27, %p28
    %p30 = scmp.ne.s32.totalorder %s19, %s22
    %p31 = scmp.eq.s32.totalorder %s14, 1
    %p32 = por %p30, %p31
    %p33 = scmp.ne.s32.totalorder %s22, %s23
    %p34 = scmp.eq.s32.totalorder %s14, 0
    %p35 = por %p33, %p34
    %p36 = scmp.ne.s32.totalorder %s22, %s23
    %p37 = scmp.eq.s32.totalorder %s15, 1
    %p38 = por %p36, %p37
    %p40 = scmp.ne.s32.totalorder %s23, %s39
    %p41 = scmp.eq.s32.totalorder %s15, 0
    %p42 = por %p40, %p41
    %s44 = sadd.s32 %s43, 1
    %p47 = scmp.eq.s32.totalorder %s9, 1
    %p48 = scmp.ne.s32.totalorder %s43, %s45
    %p49 = scmp.eq.s32.totalorder %s9, 0
    %p50 = por %p48, %p49
    %p51 = scmp.ne.s32.totalorder %s43, %s45
    %p52 = scmp.eq.s32.totalorder %s14, 1
    %p53 = por %p51, %p52
    %p54 = scmp.ne.s32.totalorder %s45, %s46
    %p55 = scmp.eq.s32.totalorder %s14, 0
    %p56 = por %p54, %p55
    %p57 = scmp.ne.s32.totalorder %s45, %s46
    %p58 = scmp.eq.s32.totalorder %s15, 1
    %p59 = por %p57, %p58
    %p61 = scmp.ne.s32.totalorder %s46, %s60
    %p62 = scmp.eq.s32.totalorder %s15, 0
    %p63 = por %p61, %p62
    %s65 = sadd.s32 %s64, 1
    %p68 = scmp.eq.s32.totalorder %s9, 1
    %p69 = scmp.ne.s32.totalorder %s64, %s66
    %p70 = scmp.eq.s32.totalorder %s9, 0
    %p71 = por %p69, %p70
    %p72 = scmp.ne.s32.totalorder %s64, %s66
    %p73 = scmp.eq.s32.totalorder %s14, 1
    %p74 = por %p72, %p73
    %p75 = scmp.ne.s32.totalorder %s66, %s67
    %p76 = scmp.eq.s32.totalorder %s14, 0
    %p77 = por %p75, %p76
    %p78 = scmp.ne.s32.totalorder %s66, %s67
    %p79 = scmp.eq.s32.totalorder %s15, 1
    %p80 = por %p78, %p79
    %p82 = scmp.ne.s32.totalorder %s67, %s81
    %p83 = scmp.eq.s32.totalorder %s15, 0
    %p84 = por %p82, %p83
    %s85 = ssub.s32 %s9, %s16
    %p86 = scmp.eq.s32.totalorder %s85, 0
    %s88 = sadd.s32 %s87, 1
    %s89 = scalar_select %p86, %s87, %s88
    %p92 = pneg %p86
    %p93 = scmp.eq.s32.totalorder %s9, 1
    %p94 = por %p92, %p93
    %p95 = scmp.ne.s32.totalorder %s87, %s90
    %p96 = scmp.eq.s32.totalorder %s9, 0
    %p97 = por %p95, %p96
    %p98 = scmp.ne.s32.totalorder %s87, %s90
    %p99 = scmp.eq.s32.totalorder %s14, 1
    %p100 = por %p98, %p99
    %p101 = scmp.ne.s32.totalorder %s90, %s91
    %p102 = scmp.eq.s32.totalorder %s14, 0
    %p103 = por %p101, %p102
    %p104 = scmp.ne.s32.totalorder %s90, %s91
    %p105 = scmp.eq.s32.totalorder %s15, 1
    %p106 = por %p104, %p105
    %p108 = scmp.ne.s32.totalorder %s91, %s107
    %p109 = scmp.eq.s32.totalorder %s15, 0
    %p110 = por %p108, %p109
    %p111 = scmp.le.s32.totalorder 1, %s9
    %p112 = scmp.lt.s32.totalorder %s9, 3
    %p113 = pnand %p111, %p112
    %p114 = pneg %p113
    // Predicated region
    $region9: #{_lambda_.17} parent=5 // pred_check
      _
    $region10: #{_lambda_.17} parent=5 // pred_check_branch
      %116 = sbr.rel (%p113) target = $region12
    $region11: #{_lambda_.17} parent=5 // pred_region
      %s117 = ssub.s32 %s9, 1
      // Predicated region
      $region13: #{_lambda_.17} parent=11 // pred_check
        %p118 = pneg %p56
      $region14: #{_lambda_.17} parent=11 // pred_check_branch
        %120 = sbr.rel (%p118) target = $region16
      $region15: #{_lambda_.17} parent=11 // pred_region
        _
      $region16: #{_lambda_.17} parent=11 // pred_fallthru
        _
      // Predicated region
      $region17: #{_lambda_.17} parent=11 // pred_check
        %p121 = pneg %p77
      $region18: #{_lambda_.17} parent=11 // pred_check_branch
        %123 = sbr.rel (%p121) target = $region20
      $region19: #{_lambda_.17} parent=11 // pred_region
        _
      $region20: #{_lambda_.17} parent=11 // pred_fallthru
        _
    $region12: #{_lambda_.17} parent=5 // pred_fallthru
      _
    %p124 = scmp.lt.s32.totalorder %s9, 2
    // Predicated region
    $region21: #{_lambda_.17} parent=5 // pred_check
      %p125 = pneg %p124
    $region22: #{_lambda_.17} parent=5 // pred_check_branch
      %127 = sbr.rel (%p125) target = $region24
    $region23: #{_lambda_.17} parent=5 // pred_region
      // Predicated region
      $region25: #{_lambda_.17} parent=23 // pred_check
        %p128 = pneg %p29
      $region26: #{_lambda_.17} parent=23 // pred_check_branch
        %130 = sbr.rel (%p128) target = $region28
      $region27: #{_lambda_.17} parent=23 // pred_region
        %s131 = smul.u32 2, %s9
        %p132 = scmp.lt.s32.totalorder %s131, 3
        %s133 = scalar_select %p132, %s131, 3
        %s134 = smul.addr %s133, 2
        %s135 = smul.addr %s134, 4
        %s136 = scalar_lea.vmem %s0, %s135
        %s137 = smul.u32 2, %s9
      $region28: #{_lambda_.17} parent=23 // pred_fallthru
        _
    $region24: #{_lambda_.17} parent=5 // pred_fallthru
      _
    %p138 = scmp.le.s32.totalorder 1, %s9
    %p139 = scmp.lt.s32.totalorder %s9, 3
    %p140 = pnand %p138, %p139
    %p141 = pneg %p140
    // Predicated region
    $region29: #{_lambda_.17} parent=5 // pred_check
      _
    $region30: #{_lambda_.17} parent=5 // pred_check_branch
      %143 = sbr.rel (%p140) target = $region32
    $region31: #{_lambda_.17} parent=5 // pred_region
      %s144 = ssub.s32 %s9, 1
      %s145 = smul.u32 2, %s14
      %p146 = scmp.lt.s32.totalorder %s145, 3
      %s147 = scalar_select %p146, %s145, 3
      %s148 = smul.addr %s147, 2
      %s149 = smul.addr %s148, 4
      %s150 = scalar_lea.vmem %s0, %s149
      %p151 = pneg %p35
      %p152 = pneg %p32
      %p153 = pneg %p56
      %p154 = pneg %p53
      %p155 = pneg %p77
      %p156 = pneg %p74
      %p157 = pneg %p103
      %p158 = pneg %p100
      %s159 = smul.u32 2, %s14
      %p160 = scmp.lt.s32.totalorder %s159, 3
      %s161 = scalar_select %p160, %s159, 3
      %s162 = smul.addr %s161, 8
      %s163 = scalar_lea.vmem %s3, %s162
      %s164 = smul.u32 2, %s14
      %p165 = scmp.lt.s32.totalorder %s164, 3
      %s166 = scalar_select %p165, %s164, 3
      %s167 = smul.addr %s166, 2
      %s168 = smul.addr %s167, 4
      %s169 = scalar_lea.vmem %s0, %s168
      %s170 = smul.u32 2, %s14
      %s171 = smul.u32 2, %s14
      %p172 = scmp.lt.s32.totalorder %s171, 3
      %s173 = scalar_select %p172, %s171, 3
      %s174 = smul.addr %s173, 8
      %s175 = scalar_lea.vmem %s3, %s174
      %s176 = smul.u32 2, %s14
      %v178 = vld [vmem:[%s169] sm:$0xff]
      %v179 = vld [vmem:[%s169 + $0x8] sm:$0xff]
      %v180 = vld [vmem:[%s1] sm:$0xf]
      %v181 = vld [vmem:[%s1 + $0x4] sm:$0xf]
      %v182 = vld [vmem:[%s1 + $0x8] sm:$0xf]
      %v183 = vld [vmem:[%s1 + $0xc] sm:$0xf]
      %v184 = vld [vmem:[%s1 + $0x10] sm:$0xf]
      %v185 = vld [vmem:[%s1 + $0x14] sm:$0xf]
      %v186 = vld [vmem:[%s1 + $0x18] sm:$0xf]
      %v187 = vld [vmem:[%s1 + $0x1c] sm:$0xf]
      %v188 = vld [vmem:[%s1 + $0x20] sm:$0xf]
      %v189 = vld [vmem:[%s1 + $0x24] sm:$0xf]
      %v190 = vld [vmem:[%s1 + $0x28] sm:$0xf]
      %v191 = vld [vmem:[%s1 + $0x2c] sm:$0xf]
      %v192 = vld [vmem:[%s1 + $0x30] sm:$0xf]
      %v193 = vld [vmem:[%s1 + $0x34] sm:$0xf]
      %v194 = vld [vmem:[%s1 + $0x38] sm:$0xf]
      %v195 = vld [vmem:[%s1 + $0x3c] sm:$0xf]
      %v196 = vld [vmem:[%s1 + $0x40] sm:$0xf]
      %v197 = vld [vmem:[%s1 + $0x44] sm:$0xf]
      %v198 = vld [vmem:[%s1 + $0x48] sm:$0xf]
      %v199 = vld [vmem:[%s1 + $0x4c] sm:$0xf]
      %v200 = vld [vmem:[%s1 + $0x50] sm:$0xf]
      %v201 = vld [vmem:[%s1 + $0x54] sm:$0xf]
      %v202 = vld [vmem:[%s1 + $0x58] sm:$0xf]
      %v203 = vld [vmem:[%s1 + $0x5c] sm:$0xf]
      %v204 = vld [vmem:[%s1 + $0x60] sm:$0xf]
      %v205 = vld [vmem:[%s1 + $0x64] sm:$0xf]
      %v206 = vld [vmem:[%s1 + $0x68] sm:$0xf]
      %v207 = vld [vmem:[%s1 + $0x6c] sm:$0xf]
      %v208 = vld [vmem:[%s1 + $0x70] sm:$0xf]
      %v209 = vld [vmem:[%s1 + $0x74] sm:$0xf]
      %v210 = vld [vmem:[%s1 + $0x78] sm:$0xf]
      %v211 = vld [vmem:[%s1 + $0x7c] sm:$0xf]
      %v212 = vld [vmem:[%s2] sm:$0x1]
      %v214 = vlaneseq
      %v215 = vshrl.u32 %v214, 7
      %v216 = vsub.s32 0, %v215
      %v217 = vrot.slane %v212, %v216
      %v221 = vunpack.c.l.b16 %v178
      %v222 = vunpack.c.h.b16 %v178
      %v223 = vunpack.c.l.b16 %v179
      %v224 = vunpack.c.h.b16 %v179
      %v225 = vpack.c.b16 %v223, %v221
      %v226 = vpack.c.b16 %v224, %v222
      %v261 = vunpack.c.l.b16 %v180
      %v262 = vunpack.c.l.b16 %v181
      %v263 = vunpack.c.l.b16 %v182
      %v264 = vunpack.c.l.b16 %v183
      %v265 = vunpack.c.l.b16 %v184
      %v266 = vunpack.c.l.b16 %v185
      %v267 = vunpack.c.l.b16 %v186
      %v268 = vunpack.c.l.b16 %v187
      %v269 = vunpack.c.l.b16 %v188
      %v270 = vunpack.c.l.b16 %v189
      %v271 = vunpack.c.l.b16 %v190
      %v272 = vunpack.c.l.b16 %v191
      %v273 = vunpack.c.l.b16 %v192
      %v274 = vunpack.c.l.b16 %v193
      %v275 = vunpack.c.l.b16 %v194
      %v276 = vunpack.c.l.b16 %v195
      %v277 = vunpack.c.l.b16 %v196
      %v278 = vunpack.c.l.b16 %v197
      %v279 = vunpack.c.l.b16 %v198
      %v280 = vunpack.c.l.b16 %v199
      %v281 = vunpack.c.l.b16 %v200
      %v282 = vunpack.c.l.b16 %v201
      %v283 = vunpack.c.l.b16 %v202
      %v284 = vunpack.c.l.b16 %v203
      %v285 = vunpack.c.l.b16 %v204
      %v286 = vunpack.c.l.b16 %v205
      %v287 = vunpack.c.l.b16 %v206
      %v288 = vunpack.c.l.b16 %v207
      %v289 = vunpack.c.l.b16 %v208
      %v290 = vunpack.c.l.b16 %v209
      %v291 = vunpack.c.l.b16 %v210
      %v292 = vunpack.c.l.b16 %v211
      %v293 = vpack.c.b16 %v262, %v261
      %v294 = vpack.c.b16 %v264, %v263
      %v295 = vpack.c.b16 %v266, %v265
      %v296 = vpack.c.b16 %v268, %v267
      %v297 = vpack.c.b16 %v270, %v269
      %v298 = vpack.c.b16 %v272, %v271
      %v299 = vpack.c.b16 %v274, %v273
      %v300 = vpack.c.b16 %v276, %v275
      %v301 = vpack.c.b16 %v278, %v277
      %v302 = vpack.c.b16 %v280, %v279
      %v303 = vpack.c.b16 %v282, %v281
      %v304 = vpack.c.b16 %v284, %v283
      %v305 = vpack.c.b16 %v286, %v285
      %v306 = vpack.c.b16 %v288, %v287
      %v307 = vpack.c.b16 %v290, %v289
      %v308 = vpack.c.b16 %v292, %v291
      %325 = vmatprep.subr.bf16.mxu0 0
      %326 = vmatpush1.bf16.msra.mxu0 %v300
      %327 = vmatprep.subr.bf16.mxu0 0
      %328 = vmatpush1.bf16.msra.mxu0 %v299
      %329 = vmatprep.subr.bf16.mxu0 0
      %330 = vmatpush1.bf16.msra.mxu0 %v298
      %331 = vmatprep.subr.bf16.mxu0 0
      %332 = vmatpush1.bf16.msra.mxu0 %v297
      %333 = vmatprep.subr.bf16.mxu0 0
      %334 = vmatpush1.bf16.msra.mxu0 %v296
      %335 = vmatprep.subr.bf16.mxu0 0
      %336 = vmatpush1.bf16.msra.mxu0 %v295
      %337 = vmatprep.subr.bf16.mxu0 0
      %338 = vmatpush1.bf16.msra.mxu0 %v294
      %339 = vmatprep.subr.bf16.mxu0 0
      %340 = vmatpush1.bf16.msra.mxu0 %v293
      %341 = vmatprep.subr.bf16.mxu0 0
      %342 = vmatpush2.bf16.msra.mxu0 %v308
      %343 = vmatprep.subr.bf16.mxu0 0
      %344 = vmatpush2.bf16.msra.mxu0 %v307
      %345 = vmatprep.subr.bf16.mxu0 0
      %346 = vmatpush2.bf16.msra.mxu0 %v306
      %347 = vmatprep.subr.bf16.mxu0 0
      %348 = vmatpush2.bf16.msra.mxu0 %v305
      %349 = vmatprep.subr.bf16.mxu0 0
      %350 = vmatpush2.bf16.msra.mxu0 %v304
      %351 = vmatprep.subr.bf16.mxu0 0
      %352 = vmatpush2.bf16.msra.mxu0 %v303
      %353 = vmatprep.subr.bf16.mxu0 0
      %354 = vmatpush2.bf16.msra.mxu0 %v302
      %355 = vmatprep.subr.bf16.mxu0 0
      %356 = vmatpush2.bf16.msra.mxu0 %v301
      %357 = vmatprep.mubr.bf16.mxu0 %v226
      %358 = vmatmul.mubr.bf16.gmra.mxu0 %v225
      %v359 = vpop.f32.mrf.mxu0
      %v360 = vadd.f32 %v217, %v359
      %v361 = vpop.f32.mrf.mxu0
      %v362 = vpop.f32.mrf.mxu0
      %v363 = vadd.f32 %v217, %v362
      %v364 = vpop.f32.mrf.mxu0
      %365 = vdwg.mxu0
      %366 = vst [vmem:[%s175] sm:$0xff] %v360
      %367 = vst [vmem:[%s175 + $0x8] sm:$0xff] %v363
      %s368 = smul.u32 2, %s14
      %p369 = scmp.lt.s32.totalorder %s368, 3
      %s370 = scalar_select %p369, %s368, 3
      %s371 = smul.addr %s370, 8
      %s372 = scalar_lea.vmem %s3, %s371
      // Predicated region
      $region33: #{_lambda_.17} parent=31 // pred_check
        %p373 = pneg %p100
      $region34: #{_lambda_.17} parent=31 // pred_check_branch
        %375 = sbr.rel (%p373) target = $region36
      $region35: #{_lambda_.17} parent=31 // pred_region
        %s376 = smul.u32 2, %s14
      $region36: #{_lambda_.17} parent=31 // pred_fallthru
        _
    $region32: #{_lambda_.17} parent=5 // pred_fallthru
      _
    %p377 = scmp.le.s32.totalorder 2, %s9
    // Predicated region
    $region37: #{_lambda_.17} parent=5 // pred_check
      %p378 = pneg %p377
    $region38: #{_lambda_.17} parent=5 // pred_check_branch
      %380 = sbr.rel (%p378) target = $region40
    $region39: #{_lambda_.17} parent=5 // pred_region
      %s381 = ssub.s32 %s9, 2
      // Predicated region
      $region41: #{_lambda_.17} parent=39 // pred_check
        %p382 = pneg %p106
      $region42: #{_lambda_.17} parent=39 // pred_check_branch
        %384 = sbr.rel (%p382) target = $region44
      $region43: #{_lambda_.17} parent=39 // pred_region
        %s385 = smul.u32 2, %s15
        %p386 = scmp.lt.s32.totalorder %s385, 3
        %s387 = scalar_select %p386, %s385, 3
        %s388 = smul.addr %s387, 8
        %s389 = scalar_lea.vmem %s3, %s388
      $region44: #{_lambda_.17} parent=39 // pred_fallthru
        _
    $region40: #{_lambda_.17} parent=5 // pred_fallthru
      _
  $region6: #{_lambda_.17} parent=0 // loop_footer
    %s13 = sadd.s32 1, %s9
  $region7: #{_lambda_.17} parent=0 // loop_footer_branch
    %8 = sbr.rel target = $region3
  $region8: #{_lambda_.17} parent=0 // loop_exit
    _

// kernel: _lambda_.18
$region0: #{_lambda_.18}
  #allocation0 [shape = 'u32[]', space=smem, size = 0x4, offset = 0x4, fixed_abs, tag = 'smem constant byte address 0x4 - core index']
  #allocation1 [shape = 'u32[144,128]{1,0:T(1,128)}', space=vmem, size = 0x12000, scoped, tag = 'internal scratch']
  %s0 = inlined_call_operand.vmem [shape: bf16[32,128], index: 0, kind: input, shape index: {}]
  %s1 = inlined_call_operand.vmem [shape: bf16[128,128], index: 1, kind: input, shape index: {}]
  %s2 = inlined_call_operand.vmem [shape: f32[1,128], index: 2, kind: input, shape index: {}]
  %s3 = inlined_call_operand.vmem [shape: f32[32,128], index: 3, kind: output, shape index: {}]
  %s4 = sld [smem:[#allocation0]]
  $region45: #{_lambda_.18} parent=0
    _
  %s6 = ssub.s32 1, %s4
  %s7 = scalar_select 0, %s6, %s4
  loop: start=0, step=1, limit=4
  $region2: #{_lambda_.18} parent=0 // loop_pre_header
    _
  $region3: #{_lambda_.18} parent=0 // loop_header
    %s9 = sphi 0, %s13
    %p10 = scmp.ge.s32.totalorder %s9, 4
    %s19 = sphi 0, %s21
    %s22 = sphi 0, %s19
    %s23 = sphi 0, %s22
    %s39 = sphi 0, %s23
    %s43 = sphi 0, %s43
    %s45 = sphi 0, %s43
    %s46 = sphi 0, %s45
    %s60 = sphi 0, %s46
    %s64 = sphi 0, %s64
    %s66 = sphi 0, %s64
    %s67 = sphi 0, %s66
    %s81 = sphi 0, %s67
    %s87 = sphi 0, %s89
    %s90 = sphi 0, %s87
    %s91 = sphi 0, %s90
    %s107 = sphi 0, %s91
  $region4: #{_lambda_.18} parent=0 // loop_header_branch
    %12 = sbr.rel (%p10) target = $region8
  $region5: #{_lambda_.18} parent=0 // loop_body
    %s14 = ssub.s32 %s9, 1
    %s15 = ssub.s32 %s9, 2
    %s16 = sadd.s32 %s9, 1
    %s17 = ssub.s32 %s9, %s16
    %p18 = scmp.eq.s32.totalorder %s17, 0
    %s20 = sadd.s32 %s19, 1
    %s21 = scalar_select %p18, %s19, %s20
    %p24 = pneg %p18
    %p25 = scmp.eq.s32.totalorder %s9, 1
    %p26 = por %p24, %p25
    %p27 = scmp.ne.s32.totalorder %s19, %s22
    %p28 = scmp.eq.s32.totalorder %s9, 0
    %p29 = por %p27, %p28
    %p30 = scmp.ne.s32.totalorder %s19, %s22
    %p31 = scmp.eq.s32.totalorder %s14, 1
    %p32 = por %p30, %p31
    %p33 = scmp.ne.s32.totalorder %s22, %s23
    %p34 = scmp.eq.s32.totalorder %s14, 0
    %p35 = por %p33, %p34
    %p36 = scmp.ne.s32.totalorder %s22, %s23
    %p37 = scmp.eq.s32.totalorder %s15, 1
    %p38 = por %p36, %p37
    %p40 = scmp.ne.s32.totalorder %s23, %s39
    %p41 = scmp.eq.s32.totalorder %s15, 0
    %p42 = por %p40, %p41
    %s44 = sadd.s32 %s43, 1
    %p47 = scmp.eq.s32.totalorder %s9, 1
    %p48 = scmp.ne.s32.totalorder %s43, %s45
    %p49 = scmp.eq.s32.totalorder %s9, 0
    %p50 = por %p48, %p49
    %p51 = scmp.ne.s32.totalorder %s43, %s45
    %p52 = scmp.eq.s32.totalorder %s14, 1
    %p53 = por %p51, %p52
    %p54 = scmp.ne.s32.totalorder %s45, %s46
    %p55 = scmp.eq.s32.totalorder %s14, 0
    %p56 = por %p54, %p55
    %p57 = scmp.ne.s32.totalorder %s45, %s46
    %p58 = scmp.eq.s32.totalorder %s15, 1
    %p59 = por %p57, %p58
    %p61 = scmp.ne.s32.totalorder %s46, %s60
    %p62 = scmp.eq.s32.totalorder %s15, 0
    %p63 = por %p61, %p62
    %s65 = sadd.s32 %s64, 1
    %p68 = scmp.eq.s32.totalorder %s9, 1
    %p69 = scmp.ne.s32.totalorder %s64, %s66
    %p70 = scmp.eq.s32.totalorder %s9, 0
    %p71 = por %p69, %p70
    %p72 = scmp.ne.s32.totalorder %s64, %s66
    %p73 = scmp.eq.s32.totalorder %s14, 1
    %p74 = por %p72, %p73
    %p75 = scmp.ne.s32.totalorder %s66, %s67
    %p76 = scmp.eq.s32.totalorder %s14, 0
    %p77 = por %p75, %p76
    %p78 = scmp.ne.s32.totalorder %s66, %s67
    %p79 = scmp.eq.s32.totalorder %s15, 1
    %p80 = por %p78, %p79
    %p82 = scmp.ne.s32.totalorder %s67, %s81
    %p83 = scmp.eq.s32.totalorder %s15, 0
    %p84 = por %p82, %p83
    %s85 = ssub.s32 %s9, %s16
    %p86 = scmp.eq.s32.totalorder %s85, 0
    %s88 = sadd.s32 %s87, 1
    %s89 = scalar_select %p86, %s87, %s88
    %p92 = pneg %p86
    %p93 = scmp.eq.s32.totalorder %s9, 1
    %p94 = por %p92, %p93
    %p95 = scmp.ne.s32.totalorder %s87, %s90
    %p96 = scmp.eq.s32.totalorder %s9, 0
    %p97 = por %p95, %p96
    %p98 = scmp.ne.s32.totalorder %s87, %s90
    %p99 = scmp.eq.s32.totalorder %s14, 1
    %p100 = por %p98, %p99
    %p101 = scmp.ne.s32.totalorder %s90, %s91
    %p102 = scmp.eq.s32.totalorder %s14, 0
    %p103 = por %p101, %p102
    %p104 = scmp.ne.s32.totalorder %s90, %s91
    %p105 = scmp.eq.s32.totalorder %s15, 1
    %p106 = por %p104, %p105
    %p108 = scmp.ne.s32.totalorder %s91, %s107
    %p109 = scmp.eq.s32.totalorder %s15, 0
    %p110 = por %p108, %p109
    %p111 = scmp.le.s32.totalorder 1, %s9
    %p112 = scmp.lt.s32.totalorder %s9, 3
    %p113 = pnand %p111, %p112
    %p114 = pneg %p113
    // Predicated region
    $region9: #{_lambda_.18} parent=5 // pred_check
      _
    $region10: #{_lambda_.18} parent=5 // pred_check_branch
      %116 = sbr.rel (%p113) target = $region12
    $region11: #{_lambda_.18} parent=5 // pred_region
      %s117 = ssub.s32 %s9, 1
      // Predicated region
      $region13: #{_lambda_.18} parent=11 // pred_check
        %p118 = pneg %p56
      $region14: #{_lambda_.18} parent=11 // pred_check_branch
        %120 = sbr.rel (%p118) target = $region16
      $region15: #{_lambda_.18} parent=11 // pred_region
        _
      $region16: #{_lambda_.18} parent=11 // pred_fallthru
        _
      // Predicated region
      $region17: #{_lambda_.18} parent=11 // pred_check
        %p121 = pneg %p77
      $region18: #{_lambda_.18} parent=11 // pred_check_branch
        %123 = sbr.rel (%p121) target = $region20
      $region19: #{_lambda_.18} parent=11 // pred_region
        _
      $region20: #{_lambda_.18} parent=11 // pred_fallthru
        _
    $region12: #{_lambda_.18} parent=5 // pred_fallthru
      _
    %p124 = scmp.lt.s32.totalorder %s9, 2
    // Predicated region
    $region21: #{_lambda_.18} parent=5 // pred_check
      %p125 = pneg %p124
    $region22: #{_lambda_.18} parent=5 // pred_check_branch
      %127 = sbr.rel (%p125) target = $region24
    $region23: #{_lambda_.18} parent=5 // pred_region
      // Predicated region
      $region25: #{_lambda_.18} parent=23 // pred_check
        %p128 = pneg %p29
      $region26: #{_lambda_.18} parent=23 // pred_check_branch
        %130 = sbr.rel (%p128) target = $region28
      $region27: #{_lambda_.18} parent=23 // pred_region
        %s131 = smul.u32 2, %s9
        %p132 = scmp.lt.s32.totalorder %s131, 3
        %s133 = scalar_select %p132, %s131, 3
        %s134 = smul.addr %s133, 4
        %s135 = scalar_lea.vmem %s0, %s134
        %s136 = smul.u32 2, %s9
      $region28: #{_lambda_.18} parent=23 // pred_fallthru
        _
    $region24: #{_lambda_.18} parent=5 // pred_fallthru
      _
    %p137 = scmp.le.s32.totalorder 1, %s9
    %p138 = scmp.lt.s32.totalorder %s9, 3
    %p139 = pnand %p137, %p138
    %p140 = pneg %p139
    // Predicated region
    $region29: #{_lambda_.18} parent=5 // pred_check
      _
    $region30: #{_lambda_.18} parent=5 // pred_check_branch
      %142 = sbr.rel (%p139) target = $region32
    $region31: #{_lambda_.18} parent=5 // pred_region
      %s143 = ssub.s32 %s9, 1
      %s144 = smul.u32 2, %s14
      %p145 = scmp.lt.s32.totalorder %s144, 3
      %s146 = scalar_select %p145, %s144, 3
      %s147 = smul.addr %s146, 4
      %s148 = scalar_lea.vmem %s0, %s147
      %p149 = pneg %p35
      %p150 = pneg %p32
      %p151 = pneg %p56
      %p152 = pneg %p53
      %p153 = pneg %p77
      %p154 = pneg %p74
      %p155 = pneg %p103
      %p156 = pneg %p100
      %s157 = smul.u32 2, %s14
      %p158 = scmp.lt.s32.totalorder %s157, 3
      %s159 = scalar_select %p158, %s157, 3
      %s160 = smul.addr %s159, 8
      %s161 = scalar_lea.vmem %s3, %s160
      %s162 = smul.u32 2, %s14
      %p163 = scmp.lt.s32.totalorder %s162, 3
      %s164 = scalar_select %p163, %s162, 3
      %s165 = smul.addr %s164, 4
      %s166 = scalar_lea.vmem %s0, %s165
      %s167 = smul.u32 2, %s14
      %s168 = smul.u32 2, %s14
      %p169 = scmp.lt.s32.totalorder %s168, 3
      %s170 = scalar_select %p169, %s168, 3
      %s171 = smul.addr %s170, 8
      %s172 = scalar_lea.vmem %s3, %s171
      %s173 = smul.u32 2, %s14
      %v175 = vld [vmem:[%s166] sm:$0xf]
      %v176 = vld [vmem:[%s166 + $0x4] sm:$0xf]
      %v177 = vld [vmem:[%s1] sm:$0xf]
      %v178 = vld [vmem:[%s1 + $0x4] sm:$0xf]
      %v179 = vld [vmem:[%s1 + $0x8] sm:$0xf]
      %v180 = vld [vmem:[%s1 + $0xc] sm:$0xf]
      %v181 = vld [vmem:[%s1 + $0x10] sm:$0xf]
      %v182 = vld [vmem:[%s1 + $0x14] sm:$0xf]
      %v183 = vld [vmem:[%s1 + $0x18] sm:$0xf]
      %v184 = vld [vmem:[%s1 + $0x1c] sm:$0xf]
      %v185 = vld [vmem:[%s1 + $0x20] sm:$0xf]
      %v186 = vld [vmem:[%s1 + $0x24] sm:$0xf]
      %v187 = vld [vmem:[%s1 + $0x28] sm:$0xf]
      %v188 = vld [vmem:[%s1 + $0x2c] sm:$0xf]
      %v189 = vld [vmem:[%s1 + $0x30] sm:$0xf]
      %v190 = vld [vmem:[%s1 + $0x34] sm:$0xf]
      %v191 = vld [vmem:[%s1 + $0x38] sm:$0xf]
      %v192 = vld [vmem:[%s1 + $0x3c] sm:$0xf]
      %v193 = vld [vmem:[%s2] sm:$0x1]
      %v195 = vlaneseq
      %v196 = vshrl.u32 %v195, 7
      %v197 = vsub.s32 0, %v196
      %v198 = vrot.slane %v193, %v197
      %v202 = vunpack.c.l.b16 %v175
      %v203 = vunpack.c.l.b16 %v176
      %v204 = vpack.c.b16 %v203, %v202
      %v222 = vunpack.c.l.b16 %v177
      %v223 = vunpack.c.l.b16 %v178
      %v224 = vunpack.c.l.b16 %v179
      %v225 = vunpack.c.l.b16 %v180
      %v226 = vunpack.c.l.b16 %v181
      %v227 = vunpack.c.l.b16 %v182
      %v228 = vunpack.c.l.b16 %v183
      %v229 = vunpack.c.l.b16 %v184
      %v230 = vunpack.c.l.b16 %v185
      %v231 = vunpack.c.l.b16 %v186
      %v232 = vunpack.c.l.b16 %v187
      %v233 = vunpack.c.l.b16 %v188
      %v234 = vunpack.c.l.b16 %v189
      %v235 = vunpack.c.l.b16 %v190
      %v236 = vunpack.c.l.b16 %v191
      %v237 = vunpack.c.l.b16 %v192
      %v238 = vpack.c.b16 %v223, %v222
      %v239 = vpack.c.b16 %v225, %v224
      %v240 = vpack.c.b16 %v227, %v226
      %v241 = vpack.c.b16 %v229, %v228
      %v242 = vpack.c.b16 %v231, %v230
      %v243 = vpack.c.b16 %v233, %v232
      %v244 = vpack.c.b16 %v235, %v234
      %v245 = vpack.c.b16 %v237, %v236
      %254 = vmatprep.subr.bf16.mxu0 0
      %255 = vmatpush1.bf16.msra.mxu0 %v245
      %256 = vmatprep.subr.bf16.mxu0 0
      %257 = vmatpush1.bf16.msra.mxu0 %v244
      %258 = vmatprep.subr.bf16.mxu0 0
      %259 = vmatpush1.bf16.msra.mxu0 %v243
      %260 = vmatprep.subr.bf16.mxu0 0
      %261 = vmatpush1.bf16.msra.mxu0 %v242
      %262 = vmatprep.subr.bf16.mxu0 0
      %263 = vmatpush1.bf16.msra.mxu0 %v241
      %264 = vmatprep.subr.bf16.mxu0 0
      %265 = vmatpush1.bf16.msra.mxu0 %v240
      %266 = vmatprep.subr.bf16.mxu0 0
      %267 = vmatpush1.bf16.msra.mxu0 %v239
      %268 = vmatprep.subr.bf16.mxu0 0
      %269 = vmatpush1.bf16.msra.mxu0 %v238
      %270 = vmatprep.subr.bf16.mxu0 0
      %271 = vmatpush2.bf16.msra.mxu0 0
      %272 = vmatprep.subr.bf16.mxu0 0
      %273 = vmatpush2.bf16.msra.mxu0 0
      %274 = vmatprep.subr.bf16.mxu0 0
      %275 = vmatpush2.bf16.msra.mxu0 0
      %276 = vmatprep.subr.bf16.mxu0 0
      %277 = vmatpush2.bf16.msra.mxu0 0
      %278 = vmatprep.subr.bf16.mxu0 0
      %279 = vmatpush2.bf16.msra.mxu0 0
      %280 = vmatprep.subr.bf16.mxu0 0
      %281 = vmatpush2.bf16.msra.mxu0 0
      %282 = vmatprep.subr.bf16.mxu0 0
      %283 = vmatpush2.bf16.msra.mxu0 0
      %284 = vmatprep.subr.bf16.mxu0 0
      %285 = vmatpush2.bf16.msra.mxu0 0
      %286 = vmatprep.mubr.bf16.mxu0 0
      %287 = vmatmul.mubr.bf16.gmra.mxu0 %v204
      %v288 = vpop.f32.mrf.mxu0
      %v289 = vadd.f32 %v198, %v288
      %v290 = vpop.f32.mrf.mxu0
      %v291 = vpop.f32.mrf.mxu0
      %v292 = vadd.f32 %v198, %v291
      %v293 = vpop.f32.mrf.mxu0
      %294 = vdwg.mxu0
      %v295 = vmax.f32 %v289, 0.0
      %v296 = vmax.f32 %v292, 0.0
      %297 = vst [vmem:[%s172] sm:$0xff] %v295
      %298 = vst [vmem:[%s172 + $0x8] sm:$0xff] %v296
      %s299 = smul.u32 2, %s14
      %p300 = scmp.lt.s32.totalorder %s299, 3
      %s301 = scalar_select %p300, %s299, 3
      %s302 = smul.addr %s301, 8
      %s303 = scalar_lea.vmem %s3, %s302
      // Predicated region
      $region33: #{_lambda_.18} parent=31 // pred_check
        %p304 = pneg %p100
      $region34: #{_lambda_.18} parent=31 // pred_check_branch
        %306 = sbr.rel (%p304) target = $region36
      $region35: #{_lambda_.18} parent=31 // pred_region
        %s307 = smul.u32 2, %s14
      $region36: #{_lambda_.18} parent=31 // pred_fallthru
        _
    $region32: #{_lambda_.18} parent=5 // pred_fallthru
      _
    %p308 = scmp.le.s32.totalorder 2, %s9
    // Predicated region
    $region37: #{_lambda_.18} parent=5 // pred_check
      %p309 = pneg %p308
    $region38: #{_lambda_.18} parent=5 // pred_check_branch
      %311 = sbr.rel (%p309) target = $region40
    $region39: #{_lambda_.18} parent=5 // pred_region
      %s312 = ssub.s32 %s9, 2
      // Predicated region
      $region41: #{_lambda_.18} parent=39 // pred_check
        %p313 = pneg %p106
      $region42: #{_lambda_.18} parent=39 // pred_check_branch
        %315 = sbr.rel (%p313) target = $region44
      $region43: #{_lambda_.18} parent=39 // pred_region
        %s316 = smul.u32 2, %s15
        %p317 = scmp.lt.s32.totalorder %s316, 3
        %s318 = scalar_select %p317, %s316, 3
        %s319 = smul.addr %s318, 8
        %s320 = scalar_lea.vmem %s3, %s319
      $region44: #{_lambda_.18} parent=39 // pred_fallthru
        _
    $region40: #{_lambda_.18} parent=5 // pred_fallthru
      _
  $region6: #{_lambda_.18} parent=0 // loop_footer
    %s13 = sadd.s32 1, %s9
  $region7: #{_lambda_.18} parent=0 // loop_footer_branch
    %8 = sbr.rel target = $region3
  $region8: #{_lambda_.18} parent=0 // loop_exit
    _

// kernel: _lambda_.19
$region0: #{_lambda_.19}
  #allocation0 [shape = 'u32[]', space=smem, size = 0x4, offset = 0x4, fixed_abs, tag = 'smem constant byte address 0x4 - core index']
  #allocation1 [shape = 'u32[144,128]{1,0:T(1,128)}', space=vmem, size = 0x12000, scoped, tag = 'internal scratch']
  %s0 = inlined_call_operand.vmem [shape: bf16[8,256], index: 0, kind: input, shape index: {}]
  %s1 = inlined_call_operand.vmem [shape: bf16[256,128], index: 1, kind: input, shape index: {}]
  %s2 = inlined_call_operand.vmem [shape: f32[1,128], index: 2, kind: input, shape index: {}]
  %s3 = inlined_call_operand.vmem [shape: f32[8,128], index: 3, kind: output, shape index: {}]
  %s4 = sld [smem:[#allocation0]]
  $region22: #{_lambda_.19} parent=0
    _
  %s6 = ssub.s32 1, %s4
  %s7 = scalar_select 0, %s6, %s4
  // Predicated region
  $region2: #{_lambda_.19} parent=0 // pred_check
    _
  $region3: #{_lambda_.19} parent=0 // pred_check_branch
    %9 = sbr.rel (0) target = $region5
  $region4: #{_lambda_.19} parent=0 // pred_region
    _
  $region5: #{_lambda_.19} parent=0 // pred_fallthru
    _
  // Predicated region
  $region6: #{_lambda_.19} parent=0 // pred_check
    _
  $region7: #{_lambda_.19} parent=0 // pred_check_branch
    %11 = sbr.rel (0) target = $region9
  $region8: #{_lambda_.19} parent=0 // pred_region
    _
  $region9: #{_lambda_.19} parent=0 // pred_fallthru
    _
  // Predicated region
  $region10: #{_lambda_.19} parent=0 // pred_check
    _
  $region11: #{_lambda_.19} parent=0 // pred_check_branch
    %13 = sbr.rel (0) target = $region13
  $region12: #{_lambda_.19} parent=0 // pred_region
    _
  $region13: #{_lambda_.19} parent=0 // pred_fallthru
    _
  %v15 = vld [vmem:[%s0] sm:$0xff]
  %v16 = vld [vmem:[%s1] sm:$0xf]
  %v17 = vld [vmem:[%s1 + $0x4] sm:$0xf]
  %v18 = vld [vmem:[%s1 + $0x8] sm:$0xf]
  %v19 = vld [vmem:[%s1 + $0xc] sm:$0xf]
  %v20 = vld [vmem:[%s1 + $0x10] sm:$0xf]
  %v21 = vld [vmem:[%s1 + $0x14] sm:$0xf]
  %v22 = vld [vmem:[%s1 + $0x18] sm:$0xf]
  %v23 = vld [vmem:[%s1 + $0x1c] sm:$0xf]
  %v24 = vld [vmem:[%s1 + $0x20] sm:$0xf]
  %v25 = vld [vmem:[%s1 + $0x24] sm:$0xf]
  %v26 = vld [vmem:[%s1 + $0x28] sm:$0xf]
  %v27 = vld [vmem:[%s1 + $0x2c] sm:$0xf]
  %v28 = vld [vmem:[%s1 + $0x30] sm:$0xf]
  %v29 = vld [vmem:[%s1 + $0x34] sm:$0xf]
  %v30 = vld [vmem:[%s1 + $0x38] sm:$0xf]
  %v31 = vld [vmem:[%s1 + $0x3c] sm:$0xf]
  %v32 = vld [vmem:[%s1 + $0x40] sm:$0xf]
  %v33 = vld [vmem:[%s1 + $0x44] sm:$0xf]
  %v34 = vld [vmem:[%s1 + $0x48] sm:$0xf]
  %v35 = vld [vmem:[%s1 + $0x4c] sm:$0xf]
  %v36 = vld [vmem:[%s1 + $0x50] sm:$0xf]
  %v37 = vld [vmem:[%s1 + $0x54] sm:$0xf]
  %v38 = vld [vmem:[%s1 + $0x58] sm:$0xf]
  %v39 = vld [vmem:[%s1 + $0x5c] sm:$0xf]
  %v40 = vld [vmem:[%s1 + $0x60] sm:$0xf]
  %v41 = vld [vmem:[%s1 + $0x64] sm:$0xf]
  %v42 = vld [vmem:[%s1 + $0x68] sm:$0xf]
  %v43 = vld [vmem:[%s1 + $0x6c] sm:$0xf]
  %v44 = vld [vmem:[%s1 + $0x70] sm:$0xf]
  %v45 = vld [vmem:[%s1 + $0x74] sm:$0xf]
  %v46 = vld [vmem:[%s1 + $0x78] sm:$0xf]
  %v47 = vld [vmem:[%s1 + $0x7c] sm:$0xf]
  %v48 = vld [vmem:[%s2] sm:$0x1]
  %v50 = vlaneseq
  %v51 = vshrl.u32 %v50, 7
  %v52 = vsub.s32 0, %v51
  %v53 = vrot.slane %v48, %v52
  %v56 = vunpack.c.l.b16 %v15
  %v57 = vunpack.c.h.b16 %v15
  %v58 = vpack.c.b16 %v56, %v56
  %v59 = vpack.c.b16 %v57, %v57
  %v94 = vunpack.c.l.b16 %v16
  %v95 = vunpack.c.l.b16 %v17
  %v96 = vunpack.c.l.b16 %v18
  %v97 = vunpack.c.l.b16 %v19
  %v98 = vunpack.c.l.b16 %v20
  %v99 = vunpack.c.l.b16 %v21
  %v100 = vunpack.c.l.b16 %v22
  %v101 = vunpack.c.l.b16 %v23
  %v102 = vunpack.c.l.b16 %v24
  %v103 = vunpack.c.l.b16 %v25
  %v104 = vunpack.c.l.b16 %v26
  %v105 = vunpack.c.l.b16 %v27
  %v106 = vunpack.c.l.b16 %v28
  %v107 = vunpack.c.l.b16 %v29
  %v108 = vunpack.c.l.b16 %v30
  %v109 = vunpack.c.l.b16 %v31
  %v110 = vunpack.c.l.b16 %v32
  %v111 = vunpack.c.l.b16 %v33
  %v112 = vunpack.c.l.b16 %v34
  %v113 = vunpack.c.l.b16 %v35
  %v114 = vunpack.c.l.b16 %v36
  %v115 = vunpack.c.l.b16 %v37
  %v116 = vunpack.c.l.b16 %v38
  %v117 = vunpack.c.l.b16 %v39
  %v118 = vunpack.c.l.b16 %v40
  %v119 = vunpack.c.l.b16 %v41
  %v120 = vunpack.c.l.b16 %v42
  %v121 = vunpack.c.l.b16 %v43
  %v122 = vunpack.c.l.b16 %v44
  %v123 = vunpack.c.l.b16 %v45
  %v124 = vunpack.c.l.b16 %v46
  %v125 = vunpack.c.l.b16 %v47
  %v126 = vpack.c.b16 %v95, %v94
  %v127 = vpack.c.b16 %v97, %v96
  %v128 = vpack.c.b16 %v99, %v98
  %v129 = vpack.c.b16 %v101, %v100
  %v130 = vpack.c.b16 %v103, %v102
  %v131 = vpack.c.b16 %v105, %v104
  %v132 = vpack.c.b16 %v107, %v106
  %v133 = vpack.c.b16 %v109, %v108
  %v134 = vpack.c.b16 %v111, %v110
  %v135 = vpack.c.b16 %v113, %v112
  %v136 = vpack.c.b16 %v115, %v114
  %v137 = vpack.c.b16 %v117, %v116
  %v138 = vpack.c.b16 %v119, %v118
  %v139 = vpack.c.b16 %v121, %v120
  %v140 = vpack.c.b16 %v123, %v122
  %v141 = vpack.c.b16 %v125, %v124
  %158 = vmatprep.subr.bf16.mxu0 0
  %159 = vmatpush1.bf16.msra.mxu0 %v133
  %160 = vmatprep.subr.bf16.mxu0 0
  %161 = vmatpush1.bf16.msra.mxu0 %v132
  %162 = vmatprep.subr.bf16.mxu0 0
  %163 = vmatpush1.bf16.msra.mxu0 %v131
  %164 = vmatprep.subr.bf16.mxu0 0
  %165 = vmatpush1.bf16.msra.mxu0 %v130
  %166 = vmatprep.subr.bf16.mxu0 0
  %167 = vmatpush1.bf16.msra.mxu0 %v129
  %168 = vmatprep.subr.bf16.mxu0 0
  %169 = vmatpush1.bf16.msra.mxu0 %v128
  %170 = vmatprep.subr.bf16.mxu0 0
  %171 = vmatpush1.bf16.msra.mxu0 %v127
  %172 = vmatprep.subr.bf16.mxu0 0
  %173 = vmatpush1.bf16.msra.mxu0 %v126
  %174 = vmatprep.subr.bf16.mxu0 0
  %175 = vmatpush2.bf16.msra.mxu0 %v141
  %176 = vmatprep.subr.bf16.mxu0 0
  %177 = vmatpush2.bf16.msra.mxu0 %v140
  %178 = vmatprep.subr.bf16.mxu0 0
  %179 = vmatpush2.bf16.msra.mxu0 %v139
  %180 = vmatprep.subr.bf16.mxu0 0
  %181 = vmatpush2.bf16.msra.mxu0 %v138
  %182 = vmatprep.subr.bf16.mxu0 0
  %183 = vmatpush2.bf16.msra.mxu0 %v137
  %184 = vmatprep.subr.bf16.mxu0 0
  %185 = vmatpush2.bf16.msra.mxu0 %v136
  %186 = vmatprep.subr.bf16.mxu0 0
  %187 = vmatpush2.bf16.msra.mxu0 %v135
  %188 = vmatprep.subr.bf16.mxu0 0
  %189 = vmatpush2.bf16.msra.mxu0 %v134
  %190 = vmatprep.mubr.bf16.mxu0 %v59
  %191 = vmatmul.mubr.bf16.gmra.mxu0 %v58
  %v192 = vpop.f32.mrf.mxu0
  %v193 = vadd.f32 %v53, %v192
  %v194 = vpop.f32.mrf.mxu0
  %v195 = vpop.f32.mrf.mxu0
  %v196 = vpop.f32.mrf.mxu0
  %197 = vdwg.mxu0
  %v198 = vmax.f32 %v193, 0.0
  %199 = vst [vmem:[%s3] sm:$0xff] %v198
  // Predicated region
  $region14: #{_lambda_.19} parent=0 // pred_check
    _
  $region15: #{_lambda_.19} parent=0 // pred_check_branch
    %201 = sbr.rel (0) target = $region17
  $region16: #{_lambda_.19} parent=0 // pred_region
    _
  $region17: #{_lambda_.19} parent=0 // pred_fallthru
    _
  // Predicated region
  $region18: #{_lambda_.19} parent=0 // pred_check
    _
  $region19: #{_lambda_.19} parent=0 // pred_check_branch
    %203 = sbr.rel (0) target = $region21
  $region20: #{_lambda_.19} parent=0 // pred_region
    _
  $region21: #{_lambda_.19} parent=0 // pred_fallthru
    _

// kernel: _lambda_.20
$region0: #{_lambda_.20}
  #allocation0 [shape = 'u32[]', space=smem, size = 0x4, offset = 0x4, fixed_abs, tag = 'smem constant byte address 0x4 - core index']
  #allocation1 [shape = 'u32[144,128]{1,0:T(1,128)}', space=vmem, size = 0x12000, scoped, tag = 'internal scratch']
  %s0 = inlined_call_operand.vmem [shape: bf16[8,256], index: 0, kind: input, shape index: {}]
  %s1 = inlined_call_operand.vmem [shape: bf16[256,128], index: 1, kind: input, shape index: {}]
  %s2 = inlined_call_operand.vmem [shape: f32[1,128], index: 2, kind: input, shape index: {}]
  %s3 = inlined_call_operand.vmem [shape: f32[8,128], index: 3, kind: output, shape index: {}]
  %s4 = sld [smem:[#allocation0]]
  $region22: #{_lambda_.20} parent=0
    _
  %s6 = ssub.s32 1, %s4
  %s7 = scalar_select 0, %s6, %s4
  // Predicated region
  $region2: #{_lambda_.20} parent=0 // pred_check
    _
  $region3: #{_lambda_.20} parent=0 // pred_check_branch
    %9 = sbr.rel (0) target = $region5
  $region4: #{_lambda_.20} parent=0 // pred_region
    _
  $region5: #{_lambda_.20} parent=0 // pred_fallthru
    _
  // Predicated region
  $region6: #{_lambda_.20} parent=0 // pred_check
    _
  $region7: #{_lambda_.20} parent=0 // pred_check_branch
    %11 = sbr.rel (0) target = $region9
  $region8: #{_lambda_.20} parent=0 // pred_region
    _
  $region9: #{_lambda_.20} parent=0 // pred_fallthru
    _
  // Predicated region
  $region10: #{_lambda_.20} parent=0 // pred_check
    _
  $region11: #{_lambda_.20} parent=0 // pred_check_branch
    %13 = sbr.rel (0) target = $region13
  $region12: #{_lambda_.20} parent=0 // pred_region
    _
  $region13: #{_lambda_.20} parent=0 // pred_fallthru
    _
  %v15 = vld [vmem:[%s0] sm:$0xff]
  %v16 = vld [vmem:[%s1] sm:$0xf]
  %v17 = vld [vmem:[%s1 + $0x4] sm:$0xf]
  %v18 = vld [vmem:[%s1 + $0x8] sm:$0xf]
  %v19 = vld [vmem:[%s1 + $0xc] sm:$0xf]
  %v20 = vld [vmem:[%s1 + $0x10] sm:$0xf]
  %v21 = vld [vmem:[%s1 + $0x14] sm:$0xf]
  %v22 = vld [vmem:[%s1 + $0x18] sm:$0xf]
  %v23 = vld [vmem:[%s1 + $0x1c] sm:$0xf]
  %v24 = vld [vmem:[%s1 + $0x20] sm:$0xf]
  %v25 = vld [vmem:[%s1 + $0x24] sm:$0xf]
  %v26 = vld [vmem:[%s1 + $0x28] sm:$0xf]
  %v27 = vld [vmem:[%s1 + $0x2c] sm:$0xf]
  %v28 = vld [vmem:[%s1 + $0x30] sm:$0xf]
  %v29 = vld [vmem:[%s1 + $0x34] sm:$0xf]
  %v30 = vld [vmem:[%s1 + $0x38] sm:$0xf]
  %v31 = vld [vmem:[%s1 + $0x3c] sm:$0xf]
  %v32 = vld [vmem:[%s1 + $0x40] sm:$0xf]
  %v33 = vld [vmem:[%s1 + $0x44] sm:$0xf]
  %v34 = vld [vmem:[%s1 + $0x48] sm:$0xf]
  %v35 = vld [vmem:[%s1 + $0x4c] sm:$0xf]
  %v36 = vld [vmem:[%s1 + $0x50] sm:$0xf]
  %v37 = vld [vmem:[%s1 + $0x54] sm:$0xf]
  %v38 = vld [vmem:[%s1 + $0x58] sm:$0xf]
  %v39 = vld [vmem:[%s1 + $0x5c] sm:$0xf]
  %v40 = vld [vmem:[%s1 + $0x60] sm:$0xf]
  %v41 = vld [vmem:[%s1 + $0x64] sm:$0xf]
  %v42 = vld [vmem:[%s1 + $0x68] sm:$0xf]
  %v43 = vld [vmem:[%s1 + $0x6c] sm:$0xf]
  %v44 = vld [vmem:[%s1 + $0x70] sm:$0xf]
  %v45 = vld [vmem:[%s1 + $0x74] sm:$0xf]
  %v46 = vld [vmem:[%s1 + $0x78] sm:$0xf]
  %v47 = vld [vmem:[%s1 + $0x7c] sm:$0xf]
  %v48 = vld [vmem:[%s2] sm:$0x1]
  %v50 = vlaneseq
  %v51 = vshrl.u32 %v50, 7
  %v52 = vsub.s32 0, %v51
  %v53 = vrot.slane %v48, %v52
  %v56 = vunpack.c.l.b16 %v15
  %v57 = vunpack.c.h.b16 %v15
  %v58 = vpack.c.b16 %v56, %v56
  %v59 = vpack.c.b16 %v57, %v57
  %v94 = vunpack.c.l.b16 %v16
  %v95 = vunpack.c.l.b16 %v17
  %v96 = vunpack.c.l.b16 %v18
  %v97 = vunpack.c.l.b16 %v19
  %v98 = vunpack.c.l.b16 %v20
  %v99 = vunpack.c.l.b16 %v21
  %v100 = vunpack.c.l.b16 %v22
  %v101 = vunpack.c.l.b16 %v23
  %v102 = vunpack.c.l.b16 %v24
  %v103 = vunpack.c.l.b16 %v25
  %v104 = vunpack.c.l.b16 %v26
  %v105 = vunpack.c.l.b16 %v27
  %v106 = vunpack.c.l.b16 %v28
  %v107 = vunpack.c.l.b16 %v29
  %v108 = vunpack.c.l.b16 %v30
  %v109 = vunpack.c.l.b16 %v31
  %v110 = vunpack.c.l.b16 %v32
  %v111 = vunpack.c.l.b16 %v33
  %v112 = vunpack.c.l.b16 %v34
  %v113 = vunpack.c.l.b16 %v35
  %v114 = vunpack.c.l.b16 %v36
  %v115 = vunpack.c.l.b16 %v37
  %v116 = vunpack.c.l.b16 %v38
  %v117 = vunpack.c.l.b16 %v39
  %v118 = vunpack.c.l.b16 %v40
  %v119 = vunpack.c.l.b16 %v41
  %v120 = vunpack.c.l.b16 %v42
  %v121 = vunpack.c.l.b16 %v43
  %v122 = vunpack.c.l.b16 %v44
  %v123 = vunpack.c.l.b16 %v45
  %v124 = vunpack.c.l.b16 %v46
  %v125 = vunpack.c.l.b16 %v47
  %v126 = vpack.c.b16 %v95, %v94
  %v127 = vpack.c.b16 %v97, %v96
  %v128 = vpack.c.b16 %v99, %v98
  %v129 = vpack.c.b16 %v101, %v100
  %v130 = vpack.c.b16 %v103, %v102
  %v131 = vpack.c.b16 %v105, %v104
  %v132 = vpack.c.b16 %v107, %v106
  %v133 = vpack.c.b16 %v109, %v108
  %v134 = vpack.c.b16 %v111, %v110
  %v135 = vpack.c.b16 %v113, %v112
  %v136 = vpack.c.b16 %v115, %v114
  %v137 = vpack.c.b16 %v117, %v116
  %v138 = vpack.c.b16 %v119, %v118
  %v139 = vpack.c.b16 %v121, %v120
  %v140 = vpack.c.b16 %v123, %v122
  %v141 = vpack.c.b16 %v125, %v124
  %158 = vmatprep.subr.bf16.mxu0 0
  %159 = vmatpush1.bf16.msra.mxu0 %v133
  %160 = vmatprep.subr.bf16.mxu0 0
  %161 = vmatpush1.bf16.msra.mxu0 %v132
  %162 = vmatprep.subr.bf16.mxu0 0
  %163 = vmatpush1.bf16.msra.mxu0 %v131
  %164 = vmatprep.subr.bf16.mxu0 0
  %165 = vmatpush1.bf16.msra.mxu0 %v130
  %166 = vmatprep.subr.bf16.mxu0 0
  %167 = vmatpush1.bf16.msra.mxu0 %v129
  %168 = vmatprep.subr.bf16.mxu0 0
  %169 = vmatpush1.bf16.msra.mxu0 %v128
  %170 = vmatprep.subr.bf16.mxu0 0
  %171 = vmatpush1.bf16.msra.mxu0 %v127
  %172 = vmatprep.subr.bf16.mxu0 0
  %173 = vmatpush1.bf16.msra.mxu0 %v126
  %174 = vmatprep.subr.bf16.mxu0 0
  %175 = vmatpush2.bf16.msra.mxu0 %v141
  %176 = vmatprep.subr.bf16.mxu0 0
  %177 = vmatpush2.bf16.msra.mxu0 %v140
  %178 = vmatprep.subr.bf16.mxu0 0
  %179 = vmatpush2.bf16.msra.mxu0 %v139
  %180 = vmatprep.subr.bf16.mxu0 0
  %181 = vmatpush2.bf16.msra.mxu0 %v138
  %182 = vmatprep.subr.bf16.mxu0 0
  %183 = vmatpush2.bf16.msra.mxu0 %v137
  %184 = vmatprep.subr.bf16.mxu0 0
  %185 = vmatpush2.bf16.msra.mxu0 %v136
  %186 = vmatprep.subr.bf16.mxu0 0
  %187 = vmatpush2.bf16.msra.mxu0 %v135
  %188 = vmatprep.subr.bf16.mxu0 0
  %189 = vmatpush2.bf16.msra.mxu0 %v134
  %190 = vmatprep.mubr.bf16.mxu0 %v59
  %191 = vmatmul.mubr.bf16.gmra.mxu0 %v58
  %v192 = vpop.f32.mrf.mxu0
  %v193 = vadd.f32 %v53, %v192
  %v194 = vpop.f32.mrf.mxu0
  %v195 = vpop.f32.mrf.mxu0
  %v196 = vpop.f32.mrf.mxu0
  %197 = vdwg.mxu0
  %198 = vst [vmem:[%s3] sm:$0xff] %v193
  // Predicated region
  $region14: #{_lambda_.20} parent=0 // pred_check
    _
  $region15: #{_lambda_.20} parent=0 // pred_check_branch
    %200 = sbr.rel (0) target = $region17
  $region16: #{_lambda_.20} parent=0 // pred_region
    _
  $region17: #{_lambda_.20} parent=0 // pred_fallthru
    _
  // Predicated region
  $region18: #{_lambda_.20} parent=0 // pred_check
    _
  $region19: #{_lambda_.20} parent=0 // pred_check_branch
    %202 = sbr.rel (0) target = $region21
  $region20: #{_lambda_.20} parent=0 // pred_region
    _
  $region21: #{_lambda_.20} parent=0 // pred_fallthru
    _

// kernel: _lambda_.21
$region0: #{_lambda_.21}
  #allocation0 [shape = 'u32[]', space=smem, size = 0x4, offset = 0x4, fixed_abs, tag = 'smem constant byte address 0x4 - core index']
  #allocation1 [shape = 'u32[144,128]{1,0:T(1,128)}', space=vmem, size = 0x12000, scoped, tag = 'internal scratch']
  %s0 = inlined_call_operand.vmem [shape: bf16[8,128], index: 0, kind: input, shape index: {}]
  %s1 = inlined_call_operand.vmem [shape: bf16[128,128], index: 1, kind: input, shape index: {}]
  %s2 = inlined_call_operand.vmem [shape: f32[1,128], index: 2, kind: input, shape index: {}]
  %s3 = inlined_call_operand.vmem [shape: f32[8,128], index: 3, kind: output, shape index: {}]
  %s4 = sld [smem:[#allocation0]]
  $region22: #{_lambda_.21} parent=0
    _
  %s6 = ssub.s32 1, %s4
  %s7 = scalar_select 0, %s6, %s4
  // Predicated region
  $region2: #{_lambda_.21} parent=0 // pred_check
    _
  $region3: #{_lambda_.21} parent=0 // pred_check_branch
    %9 = sbr.rel (0) target = $region5
  $region4: #{_lambda_.21} parent=0 // pred_region
    _
  $region5: #{_lambda_.21} parent=0 // pred_fallthru
    _
  // Predicated region
  $region6: #{_lambda_.21} parent=0 // pred_check
    _
  $region7: #{_lambda_.21} parent=0 // pred_check_branch
    %11 = sbr.rel (0) target = $region9
  $region8: #{_lambda_.21} parent=0 // pred_region
    _
  $region9: #{_lambda_.21} parent=0 // pred_fallthru
    _
  // Predicated region
  $region10: #{_lambda_.21} parent=0 // pred_check
    _
  $region11: #{_lambda_.21} parent=0 // pred_check_branch
    %13 = sbr.rel (0) target = $region13
  $region12: #{_lambda_.21} parent=0 // pred_region
    _
  $region13: #{_lambda_.21} parent=0 // pred_fallthru
    _
  %v15 = vld [vmem:[%s0] sm:$0xf]
  %v16 = vld [vmem:[%s1] sm:$0xf]
  %v17 = vld [vmem:[%s1 + $0x4] sm:$0xf]
  %v18 = vld [vmem:[%s1 + $0x8] sm:$0xf]
  %v19 = vld [vmem:[%s1 + $0xc] sm:$0xf]
  %v20 = vld [vmem:[%s1 + $0x10] sm:$0xf]
  %v21 = vld [vmem:[%s1 + $0x14] sm:$0xf]
  %v22 = vld [vmem:[%s1 + $0x18] sm:$0xf]
  %v23 = vld [vmem:[%s1 + $0x1c] sm:$0xf]
  %v24 = vld [vmem:[%s1 + $0x20] sm:$0xf]
  %v25 = vld [vmem:[%s1 + $0x24] sm:$0xf]
  %v26 = vld [vmem:[%s1 + $0x28] sm:$0xf]
  %v27 = vld [vmem:[%s1 + $0x2c] sm:$0xf]
  %v28 = vld [vmem:[%s1 + $0x30] sm:$0xf]
  %v29 = vld [vmem:[%s1 + $0x34] sm:$0xf]
  %v30 = vld [vmem:[%s1 + $0x38] sm:$0xf]
  %v31 = vld [vmem:[%s1 + $0x3c] sm:$0xf]
  %v32 = vld [vmem:[%s2] sm:$0x1]
  %v34 = vlaneseq
  %v35 = vshrl.u32 %v34, 7
  %v36 = vsub.s32 0, %v35
  %v37 = vrot.slane %v32, %v36
  %v55 = vunpack.c.l.b16 %v16
  %v56 = vunpack.c.l.b16 %v17
  %v57 = vunpack.c.l.b16 %v18
  %v58 = vunpack.c.l.b16 %v19
  %v59 = vunpack.c.l.b16 %v20
  %v60 = vunpack.c.l.b16 %v21
  %v61 = vunpack.c.l.b16 %v22
  %v62 = vunpack.c.l.b16 %v23
  %v63 = vunpack.c.l.b16 %v24
  %v64 = vunpack.c.l.b16 %v25
  %v65 = vunpack.c.l.b16 %v26
  %v66 = vunpack.c.l.b16 %v27
  %v67 = vunpack.c.l.b16 %v28
  %v68 = vunpack.c.l.b16 %v29
  %v69 = vunpack.c.l.b16 %v30
  %v70 = vunpack.c.l.b16 %v31
  %v71 = vpack.c.b16 %v56, %v55
  %v72 = vpack.c.b16 %v58, %v57
  %v73 = vpack.c.b16 %v60, %v59
  %v74 = vpack.c.b16 %v62, %v61
  %v75 = vpack.c.b16 %v64, %v63
  %v76 = vpack.c.b16 %v66, %v65
  %v77 = vpack.c.b16 %v68, %v67
  %v78 = vpack.c.b16 %v70, %v69
  %87 = vmatprep.subr.bf16.mxu0 0
  %88 = vmatpush1.bf16.msra.mxu0 %v78
  %89 = vmatprep.subr.bf16.mxu0 0
  %90 = vmatpush1.bf16.msra.mxu0 %v77
  %91 = vmatprep.subr.bf16.mxu0 0
  %92 = vmatpush1.bf16.msra.mxu0 %v76
  %93 = vmatprep.subr.bf16.mxu0 0
  %94 = vmatpush1.bf16.msra.mxu0 %v75
  %95 = vmatprep.subr.bf16.mxu0 0
  %96 = vmatpush1.bf16.msra.mxu0 %v74
  %97 = vmatprep.subr.bf16.mxu0 0
  %98 = vmatpush1.bf16.msra.mxu0 %v73
  %99 = vmatprep.subr.bf16.mxu0 0
  %100 = vmatpush1.bf16.msra.mxu0 %v72
  %101 = vmatprep.subr.bf16.mxu0 0
  %102 = vmatpush1.bf16.msra.mxu0 %v71
  %103 = vmatprep.subr.bf16.mxu0 0
  %104 = vmatpush2.bf16.msra.mxu0 0
  %105 = vmatprep.subr.bf16.mxu0 0
  %106 = vmatpush2.bf16.msra.mxu0 0
  %107 = vmatprep.subr.bf16.mxu0 0
  %108 = vmatpush2.bf16.msra.mxu0 0
  %109 = vmatprep.subr.bf16.mxu0 0
  %110 = vmatpush2.bf16.msra.mxu0 0
  %111 = vmatprep.subr.bf16.mxu0 0
  %112 = vmatpush2.bf16.msra.mxu0 0
  %113 = vmatprep.subr.bf16.mxu0 0
  %114 = vmatpush2.bf16.msra.mxu0 0
  %115 = vmatprep.subr.bf16.mxu0 0
  %116 = vmatpush2.bf16.msra.mxu0 0
  %117 = vmatprep.subr.bf16.mxu0 0
  %118 = vmatpush2.bf16.msra.mxu0 0
  %119 = vmatprep.mubr.bf16.mxu0 0
  %120 = vmatmul.mubr.bf16.gmra.mxu0 %v15
  %v121 = vpop.f32.mrf.mxu0
  %v122 = vadd.f32 %v37, %v121
  %v123 = vpop.f32.mrf.mxu0
  %v124 = vpop.f32.mrf.mxu0
  %v125 = vpop.f32.mrf.mxu0
  %126 = vdwg.mxu0
  %v127 = vmax.f32 %v122, 0.0
  %128 = vst [vmem:[%s3] sm:$0xff] %v127
  // Predicated region
  $region14: #{_lambda_.21} parent=0 // pred_check
    _
  $region15: #{_lambda_.21} parent=0 // pred_check_branch
    %130 = sbr.rel (0) target = $region17
  $region16: #{_lambda_.21} parent=0 // pred_region
    _
  $region17: #{_lambda_.21} parent=0 // pred_fallthru
    _
  // Predicated region
  $region18: #{_lambda_.21} parent=0 // pred_check
    _
  $region19: #{_lambda_.21} parent=0 // pred_check_branch
    %132 = sbr.rel (0) target = $region21
  $region20: #{_lambda_.21} parent=0 // pred_region
    _
  $region21: #{_lambda_.21} parent=0 // pred_fallthru
    _

// kernel: _lambda_.24
$region0: #{_lambda_.24}
  #allocation0 [shape = 'u32[]', space=smem, size = 0x4, offset = 0x4, fixed_abs, tag = 'smem constant byte address 0x4 - core index']
  #allocation1 [shape = 'u32[144,128]{1,0:T(1,128)}', space=vmem, size = 0x12000, scoped, tag = 'internal scratch']
  %s0 = inlined_call_operand.vmem [shape: bf16[32,128], index: 0, kind: input, shape index: {}]
  %s1 = inlined_call_operand.vmem [shape: bf16[128,128], index: 1, kind: input, shape index: {}]
  %s2 = inlined_call_operand.vmem [shape: f32[1,128], index: 2, kind: input, shape index: {}]
  %s3 = inlined_call_operand.vmem [shape: bf16[128,128], index: 3, kind: input, shape index: {}]
  %s4 = inlined_call_operand.vmem [shape: f32[1,128], index: 4, kind: input, shape index: {}]
  %s5 = inlined_call_operand.vmem [shape: f32[32,128], index: 5, kind: output, shape index: {}]
  %s6 = sld [smem:[#allocation0]]
  $region53: #{_lambda_.24} parent=0
    _
  %s8 = ssub.s32 1, %s6
  %s9 = scalar_select 0, %s8, %s6
  loop: start=0, step=1, limit=4
  $region2: #{_lambda_.24} parent=0 // loop_pre_header
    _
  $region3: #{_lambda_.24} parent=0 // loop_header
    %s11 = sphi 0, %s15
    %p12 = scmp.ge.s32.totalorder %s11, 4
    %s21 = sphi 0, %s23
    %s24 = sphi 0, %s21
    %s25 = sphi 0, %s24
    %s41 = sphi 0, %s25
    %s45 = sphi 0, %s45
    %s47 = sphi 0, %s45
    %s48 = sphi 0, %s47
    %s62 = sphi 0, %s48
    %s66 = sphi 0, %s66
    %s68 = sphi 0, %s66
    %s69 = sphi 0, %s68
    %s83 = sphi 0, %s69
    %s87 = sphi 0, %s87
    %s89 = sphi 0, %s87
    %s90 = sphi 0, %s89
    %s104 = sphi 0, %s90
    %s108 = sphi 0, %s108
    %s110 = sphi 0, %s108
    %s111 = sphi 0, %s110
    %s125 = sphi 0, %s111
    %s131 = sphi 0, %s133
    %s134 = sphi 0, %s131
    %s135 = sphi 0, %s134
    %s151 = sphi 0, %s135
  $region4: #{_lambda_.24} parent=0 // loop_header_branch
    %14 = sbr.rel (%p12) target = $region8
  $region5: #{_lambda_.24} parent=0 // loop_body
    %s16 = ssub.s32 %s11, 1
    %s17 = ssub.s32 %s11, 2
    %s18 = sadd.s32 %s11, 1
    %s19 = ssub.s32 %s11, %s18
    %p20 = scmp.eq.s32.totalorder %s19, 0
    %s22 = sadd.s32 %s21, 1
    %s23 = scalar_select %p20, %s21, %s22
    %p26 = pneg %p20
    %p27 = scmp.eq.s32.totalorder %s11, 1
    %p28 = por %p26, %p27
    %p29 = scmp.ne.s32.totalorder %s21, %s24
    %p30 = scmp.eq.s32.totalorder %s11, 0
    %p31 = por %p29, %p30
    %p32 = scmp.ne.s32.totalorder %s21, %s24
    %p33 = scmp.eq.s32.totalorder %s16, 1
    %p34 = por %p32, %p33
    %p35 = scmp.ne.s32.totalorder %s24, %s25
    %p36 = scmp.eq.s32.totalorder %s16, 0
    %p37 = por %p35, %p36
    %p38 = scmp.ne.s32.totalorder %s24, %s25
    %p39 = scmp.eq.s32.totalorder %s17, 1
    %p40 = por %p38, %p39
    %p42 = scmp.ne.s32.totalorder %s25, %s41
    %p43 = scmp.eq.s32.totalorder %s17, 0
    %p44 = por %p42, %p43
    %s46 = sadd.s32 %s45, 1
    %p49 = scmp.eq.s32.totalorder %s11, 1
    %p50 = scmp.ne.s32.totalorder %s45, %s47
    %p51 = scmp.eq.s32.totalorder %s11, 0
    %p52 = por %p50, %p51
    %p53 = scmp.ne.s32.totalorder %s45, %s47
    %p54 = scmp.eq.s32.totalorder %s16, 1
    %p55 = por %p53, %p54
    %p56 = scmp.ne.s32.totalorder %s47, %s48
    %p57 = scmp.eq.s32.totalorder %s16, 0
    %p58 = por %p56, %p57
    %p59 = scmp.ne.s32.totalorder %s47, %s48
    %p60 = scmp.eq.s32.totalorder %s17, 1
    %p61 = por %p59, %p60
    %p63 = scmp.ne.s32.totalorder %s48, %s62
    %p64 = scmp.eq.s32.totalorder %s17, 0
    %p65 = por %p63, %p64
    %s67 = sadd.s32 %s66, 1
    %p70 = scmp.eq.s32.totalorder %s11, 1
    %p71 = scmp.ne.s32.totalorder %s66, %s68
    %p72 = scmp.eq.s32.totalorder %s11, 0
    %p73 = por %p71, %p72
    %p74 = scmp.ne.s32.totalorder %s66, %s68
    %p75 = scmp.eq.s32.totalorder %s16, 1
    %p76 = por %p74, %p75
    %p77 = scmp.ne.s32.totalorder %s68, %s69
    %p78 = scmp.eq.s32.totalorder %s16, 0
    %p79 = por %p77, %p78
    %p80 = scmp.ne.s32.totalorder %s68, %s69
    %p81 = scmp.eq.s32.totalorder %s17, 1
    %p82 = por %p80, %p81
    %p84 = scmp.ne.s32.totalorder %s69, %s83
    %p85 = scmp.eq.s32.totalorder %s17, 0
    %p86 = por %p84, %p85
    %s88 = sadd.s32 %s87, 1
    %p91 = scmp.eq.s32.totalorder %s11, 1
    %p92 = scmp.ne.s32.totalorder %s87, %s89
    %p93 = scmp.eq.s32.totalorder %s11, 0
    %p94 = por %p92, %p93
    %p95 = scmp.ne.s32.totalorder %s87, %s89
    %p96 = scmp.eq.s32.totalorder %s16, 1
    %p97 = por %p95, %p96
    %p98 = scmp.ne.s32.totalorder %s89, %s90
    %p99 = scmp.eq.s32.totalorder %s16, 0
    %p100 = por %p98, %p99
    %p101 = scmp.ne.s32.totalorder %s89, %s90
    %p102 = scmp.eq.s32.totalorder %s17, 1
    %p103 = por %p101, %p102
    %p105 = scmp.ne.s32.totalorder %s90, %s104
    %p106 = scmp.eq.s32.totalorder %s17, 0
    %p107 = por %p105, %p106
    %s109 = sadd.s32 %s108, 1
    %p112 = scmp.eq.s32.totalorder %s11, 1
    %p113 = scmp.ne.s32.totalorder %s108, %s110
    %p114 = scmp.eq.s32.totalorder %s11, 0
    %p115 = por %p113, %p114
    %p116 = scmp.ne.s32.totalorder %s108, %s110
    %p117 = scmp.eq.s32.totalorder %s16, 1
    %p118 = por %p116, %p117
    %p119 = scmp.ne.s32.totalorder %s110, %s111
    %p120 = scmp.eq.s32.totalorder %s16, 0
    %p121 = por %p119, %p120
    %p122 = scmp.ne.s32.totalorder %s110, %s111
    %p123 = scmp.eq.s32.totalorder %s17, 1
    %p124 = por %p122, %p123
    %p126 = scmp.ne.s32.totalorder %s111, %s125
    %p127 = scmp.eq.s32.totalorder %s17, 0
    %p128 = por %p126, %p127
    %s129 = ssub.s32 %s11, %s18
    %p130 = scmp.eq.s32.totalorder %s129, 0
    %s132 = sadd.s32 %s131, 1
    %s133 = scalar_select %p130, %s131, %s132
    %p136 = pneg %p130
    %p137 = scmp.eq.s32.totalorder %s11, 1
    %p138 = por %p136, %p137
    %p139 = scmp.ne.s32.totalorder %s131, %s134
    %p140 = scmp.eq.s32.totalorder %s11, 0
    %p141 = por %p139, %p140
    %p142 = scmp.ne.s32.totalorder %s131, %s134
    %p143 = scmp.eq.s32.totalorder %s16, 1
    %p144 = por %p142, %p143
    %p145 = scmp.ne.s32.totalorder %s134, %s135
    %p146 = scmp.eq.s32.totalorder %s16, 0
    %p147 = por %p145, %p146
    %p148 = scmp.ne.s32.totalorder %s134, %s135
    %p149 = scmp.eq.s32.totalorder %s17, 1
    %p150 = por %p148, %p149
    %p152 = scmp.ne.s32.totalorder %s135, %s151
    %p153 = scmp.eq.s32.totalorder %s17, 0
    %p154 = por %p152, %p153
    %p155 = scmp.le.s32.totalorder 1, %s11
    %p156 = scmp.lt.s32.totalorder %s11, 3
    %p157 = pnand %p155, %p156
    %p158 = pneg %p157
    // Predicated region
    $region9: #{_lambda_.24} parent=5 // pred_check
      _
    $region10: #{_lambda_.24} parent=5 // pred_check_branch
      %160 = sbr.rel (%p157) target = $region12
    $region11: #{_lambda_.24} parent=5 // pred_region
      %s161 = ssub.s32 %s11, 1
      // Predicated region
      $region13: #{_lambda_.24} parent=11 // pred_check
        %p162 = pneg %p58
      $region14: #{_lambda_.24} parent=11 // pred_check_branch
        %164 = sbr.rel (%p162) target = $region16
      $region15: #{_lambda_.24} parent=11 // pred_region
        _
      $region16: #{_lambda_.24} parent=11 // pred_fallthru
        _
      // Predicated region
      $region17: #{_lambda_.24} parent=11 // pred_check
        %p165 = pneg %p79
      $region18: #{_lambda_.24} parent=11 // pred_check_branch
        %167 = sbr.rel (%p165) target = $region20
      $region19: #{_lambda_.24} parent=11 // pred_region
        _
      $region20: #{_lambda_.24} parent=11 // pred_fallthru
        _
      // Predicated region
      $region21: #{_lambda_.24} parent=11 // pred_check
        %p168 = pneg %p100
      $region22: #{_lambda_.24} parent=11 // pred_check_branch
        %170 = sbr.rel (%p168) target = $region24
      $region23: #{_lambda_.24} parent=11 // pred_region
        _
      $region24: #{_lambda_.24} parent=11 // pred_fallthru
        _
      // Predicated region
      $region25: #{_lambda_.24} parent=11 // pred_check
        %p171 = pneg %p121
      $region26: #{_lambda_.24} parent=11 // pred_check_branch
        %173 = sbr.rel (%p171) target = $region28
      $region27: #{_lambda_.24} parent=11 // pred_region
        _
      $region28: #{_lambda_.24} parent=11 // pred_fallthru
        _
    $region12: #{_lambda_.24} parent=5 // pred_fallthru
      _
    %p174 = scmp.lt.s32.totalorder %s11, 2
    // Predicated region
    $region29: #{_lambda_.24} parent=5 // pred_check
      %p175 = pneg %p174
    $region30: #{_lambda_.24} parent=5 // pred_check_branch
      %177 = sbr.rel (%p175) target = $region32
    $region31: #{_lambda_.24} parent=5 // pred_region
      // Predicated region
      $region33: #{_lambda_.24} parent=31 // pred_check
        %p178 = pneg %p31
      $region34: #{_lambda_.24} parent=31 // pred_check_branch
        %180 = sbr.rel (%p178) target = $region36
      $region35: #{_lambda_.24} parent=31 // pred_region
        %s181 = smul.u32 2, %s11
        %p182 = scmp.lt.s32.totalorder %s181, 3
        %s183 = scalar_select %p182, %s181, 3
        %s184 = smul.addr %s183, 4
        %s185 = scalar_lea.vmem %s0, %s184
        %s186 = smul.u32 2, %s11
      $region36: #{_lambda_.24} parent=31 // pred_fallthru
        _
    $region32: #{_lambda_.24} parent=5 // pred_fallthru
      _
    %p187 = scmp.le.s32.totalorder 1, %s11
    %p188 = scmp.lt.s32.totalorder %s11, 3
    %p189 = pnand %p187, %p188
    %p190 = pneg %p189
    // Predicated region
    $region37: #{_lambda_.24} parent=5 // pred_check
      _
    $region38: #{_lambda_.24} parent=5 // pred_check_branch
      %192 = sbr.rel (%p189) target = $region40
    $region39: #{_lambda_.24} parent=5 // pred_region
      %s193 = ssub.s32 %s11, 1
      %s194 = smul.u32 2, %s16
      %p195 = scmp.lt.s32.totalorder %s194, 3
      %s196 = scalar_select %p195, %s194, 3
      %s197 = smul.addr %s196, 4
      %s198 = scalar_lea.vmem %s0, %s197
      %p199 = pneg %p37
      %p200 = pneg %p34
      %p201 = pneg %p58
      %p202 = pneg %p55
      %p203 = pneg %p79
      %p204 = pneg %p76
      %p205 = pneg %p100
      %p206 = pneg %p97
      %p207 = pneg %p121
      %p208 = pneg %p118
      %p209 = pneg %p147
      %p210 = pneg %p144
      %s211 = smul.u32 2, %s16
      %p212 = scmp.lt.s32.totalorder %s211, 3
      %s213 = scalar_select %p212, %s211, 3
      %s214 = smul.addr %s213, 8
      %s215 = scalar_lea.vmem %s5, %s214
      %s216 = smul.u32 2, %s16
      %p217 = scmp.lt.s32.totalorder %s216, 3
      %s218 = scalar_select %p217, %s216, 3
      %s219 = smul.addr %s218, 4
      %s220 = scalar_lea.vmem %s0, %s219
      %s221 = smul.u32 2, %s16
      %s222 = smul.u32 2, %s16
      %p223 = scmp.lt.s32.totalorder %s222, 3
      %s224 = scalar_select %p223, %s222, 3
      %s225 = smul.addr %s224, 8
      %s226 = scalar_lea.vmem %s5, %s225
      %s227 = smul.u32 2, %s16
      %v229 = vld [vmem:[%s220] sm:$0xf]
      %v230 = vld [vmem:[%s220 + $0x4] sm:$0xf]
      %v231 = vld [vmem:[%s1] sm:$0xf]
      %v232 = vld [vmem:[%s1 + $0x4] sm:$0xf]
      %v233 = vld [vmem:[%s1 + $0x8] sm:$0xf]
      %v234 = vld [vmem:[%s1 + $0xc] sm:$0xf]
      %v235 = vld [vmem:[%s1 + $0x10] sm:$0xf]
      %v236 = vld [vmem:[%s1 + $0x14] sm:$0xf]
      %v237 = vld [vmem:[%s1 + $0x18] sm:$0xf]
      %v238 = vld [vmem:[%s1 + $0x1c] sm:$0xf]
      %v239 = vld [vmem:[%s1 + $0x20] sm:$0xf]
      %v240 = vld [vmem:[%s1 + $0x24] sm:$0xf]
      %v241 = vld [vmem:[%s1 + $0x28] sm:$0xf]
      %v242 = vld [vmem:[%s1 + $0x2c] sm:$0xf]
      %v243 = vld [vmem:[%s1 + $0x30] sm:$0xf]
      %v244 = vld [vmem:[%s1 + $0x34] sm:$0xf]
      %v245 = vld [vmem:[%s1 + $0x38] sm:$0xf]
      %v246 = vld [vmem:[%s1 + $0x3c] sm:$0xf]
      %v247 = vld [vmem:[%s2] sm:$0x1]
      %v249 = vlaneseq
      %v250 = vshrl.u32 %v249, 7
      %v251 = vsub.s32 0, %v250
      %v252 = vrot.slane %v247, %v251
      %v256 = vunpack.c.l.b16 %v229
      %v257 = vunpack.c.l.b16 %v230
      %v258 = vpack.c.b16 %v257, %v256
      %v276 = vunpack.c.l.b16 %v231
      %v277 = vunpack.c.l.b16 %v232
      %v278 = vunpack.c.l.b16 %v233
      %v279 = vunpack.c.l.b16 %v234
      %v280 = vunpack.c.l.b16 %v235
      %v281 = vunpack.c.l.b16 %v236
      %v282 = vunpack.c.l.b16 %v237
      %v283 = vunpack.c.l.b16 %v238
      %v284 = vunpack.c.l.b16 %v239
      %v285 = vunpack.c.l.b16 %v240
      %v286 = vunpack.c.l.b16 %v241
      %v287 = vunpack.c.l.b16 %v242
      %v288 = vunpack.c.l.b16 %v243
      %v289 = vunpack.c.l.b16 %v244
      %v290 = vunpack.c.l.b16 %v245
      %v291 = vunpack.c.l.b16 %v246
      %v292 = vpack.c.b16 %v277, %v276
      %v293 = vpack.c.b16 %v279, %v278
      %v294 = vpack.c.b16 %v281, %v280
      %v295 = vpack.c.b16 %v283, %v282
      %v296 = vpack.c.b16 %v285, %v284
      %v297 = vpack.c.b16 %v287, %v286
      %v298 = vpack.c.b16 %v289, %v288
      %v299 = vpack.c.b16 %v291, %v290
      %308 = vmatprep.subr.bf16.mxu0 0
      %309 = vmatpush1.bf16.msra.mxu0 %v299
      %310 = vmatprep.subr.bf16.mxu0 0
      %311 = vmatpush1.bf16.msra.mxu0 %v298
      %312 = vmatprep.subr.bf16.mxu0 0
      %313 = vmatpush1.bf16.msra.mxu0 %v297
      %314 = vmatprep.subr.bf16.mxu0 0
      %315 = vmatpush1.bf16.msra.mxu0 %v296
      %316 = vmatprep.subr.bf16.mxu0 0
      %317 = vmatpush1.bf16.msra.mxu0 %v295
      %318 = vmatprep.subr.bf16.mxu0 0
      %319 = vmatpush1.bf16.msra.mxu0 %v294
      %320 = vmatprep.subr.bf16.mxu0 0
      %321 = vmatpush1.bf16.msra.mxu0 %v293
      %322 = vmatprep.subr.bf16.mxu0 0
      %323 = vmatpush1.bf16.msra.mxu0 %v292
      %324 = vmatprep.subr.bf16.mxu0 0
      %325 = vmatpush2.bf16.msra.mxu0 0
      %326 = vmatprep.subr.bf16.mxu0 0
      %327 = vmatpush2.bf16.msra.mxu0 0
      %328 = vmatprep.subr.bf16.mxu0 0
      %329 = vmatpush2.bf16.msra.mxu0 0
      %330 = vmatprep.subr.bf16.mxu0 0
      %331 = vmatpush2.bf16.msra.mxu0 0
      %332 = vmatprep.subr.bf16.mxu0 0
      %333 = vmatpush2.bf16.msra.mxu0 0
      %334 = vmatprep.subr.bf16.mxu0 0
      %335 = vmatpush2.bf16.msra.mxu0 0
      %336 = vmatprep.subr.bf16.mxu0 0
      %337 = vmatpush2.bf16.msra.mxu0 0
      %338 = vmatprep.subr.bf16.mxu0 0
      %339 = vmatpush2.bf16.msra.mxu0 0
      %340 = vmatprep.mubr.bf16.mxu0 0
      %341 = vmatmul.mubr.bf16.gmra.mxu0 %v258
      %v342 = vpop.f32.mrf.mxu0
      %v343 = vadd.f32 %v252, %v342
      %v344 = vpop.f32.mrf.mxu0
      %v345 = vpop.f32.mrf.mxu0
      %v346 = vadd.f32 %v252, %v345
      %v347 = vpop.f32.mrf.mxu0
      %348 = vdwg.mxu0
      %v349 = vmul.f32 %v343, %v343
      %v350 = vmul.f32 %v346, %v346
      %v351 = vpack.c.bf16 %v350, %v349
      %v352 = vld [vmem:[%s3] sm:$0xf]
      %v353 = vld [vmem:[%s3 + $0x4] sm:$0xf]
      %v354 = vld [vmem:[%s3 + $0x8] sm:$0xf]
      %v355 = vld [vmem:[%s3 + $0xc] sm:$0xf]
      %v356 = vld [vmem:[%s3 + $0x10] sm:$0xf]
      %v357 = vld [vmem:[%s3 + $0x14] sm:$0xf]
      %v358 = vld [vmem:[%s3 + $0x18] sm:$0xf]
      %v359 = vld [vmem:[%s3 + $0x1c] sm:$0xf]
      %v360 = vld [vmem:[%s3 + $0x20] sm:$0xf]
      %v361 = vld [vmem:[%s3 + $0x24] sm:$0xf]
      %v362 = vld [vmem:[%s3 + $0x28] sm:$0xf]
      %v363 = vld [vmem:[%s3 + $0x2c] sm:$0xf]
      %v364 = vld [vmem:[%s3 + $0x30] sm:$0xf]
      %v365 = vld [vmem:[%s3 + $0x34] sm:$0xf]
      %v366 = vld [vmem:[%s3 + $0x38] sm:$0xf]
      %v367 = vld [vmem:[%s3 + $0x3c] sm:$0xf]
      %v368 = vld [vmem:[%s4] sm:$0x1]
      %v370 = vlaneseq
      %v371 = vshrl.u32 %v370, 7
      %v372 = vsub.s32 0, %v371
      %v373 = vrot.slane %v368, %v372
      %v391 = vunpack.c.l.b16 %v352
      %v392 = vunpack.c.l.b16 %v353
      %v393 = vunpack.c.l.b16 %v354
      %v394 = vunpack.c.l.b16 %v355
      %v395 = vunpack.c.l.b16 %v356
      %v396 = vunpack.c.l.b16 %v357
      %v397 = vunpack.c.l.b16 %v358
      %v398 = vunpack.c.l.b16 %v359
      %v399 = vunpack.c.l.b16 %v360
      %v400 = vunpack.c.l.b16 %v361
      %v401 = vunpack.c.l.b16 %v362
      %v402 = vunpack.c.l.b16 %v363
      %v403 = vunpack.c.l.b16 %v364
      %v404 = vunpack.c.l.b16 %v365
      %v405 = vunpack.c.l.b16 %v366
      %v406 = vunpack.c.l.b16 %v367
      %v407 = vpack.c.b16 %v392, %v391
      %v408 = vpack.c.b16 %v394, %v393
      %v409 = vpack.c.b16 %v396, %v395
      %v410 = vpack.c.b16 %v398, %v397
      %v411 = vpack.c.b16 %v400, %v399
      %v412 = vpack.c.b16 %v402, %v401
      %v413 = vpack.c.b16 %v404, %v403
      %v414 = vpack.c.b16 %v406, %v405
      %423 = vmatprep.subr.bf16.mxu0 0
      %424 = vmatpush1.bf16.msra.mxu0 %v414
      %425 = vmatprep.subr.bf16.mxu0 0
      %426 = vmatpush1.bf16.msra.mxu0 %v413
      %427 = vmatprep.subr.bf16.mxu0 0
      %428 = vmatpush1.bf16.msra.mxu0 %v412
      %429 = vmatprep.subr.bf16.mxu0 0
      %430 = vmatpush1.bf16.msra.mxu0 %v411
      %431 = vmatprep.subr.bf16.mxu0 0
      %432 = vmatpush1.bf16.msra.mxu0 %v410
      %433 = vmatprep.subr.bf16.mxu0 0
      %434 = vmatpush1.bf16.msra.mxu0 %v409
      %435 = vmatprep.subr.bf16.mxu0 0
      %436 = vmatpush1.bf16.msra.mxu0 %v408
      %437 = vmatprep.subr.bf16.mxu0 0
      %438 = vmatpush1.bf16.msra.mxu0 %v407
      %439 = vmatprep.subr.bf16.mxu0 0
      %440 = vmatpush2.bf16.msra.mxu0 0
      %441 = vmatprep.subr.bf16.mxu0 0
      %442 = vmatpush2.bf16.msra.mxu0 0
      %443 = vmatprep.subr.bf16.mxu0 0
      %444 = vmatpush2.bf16.msra.mxu0 0
      %445 = vmatprep.subr.bf16.mxu0 0
      %446 = vmatpush2.bf16.msra.mxu0 0
      %447 = vmatprep.subr.bf16.mxu0 0
      %448 = vmatpush2.bf16.msra.mxu0 0
      %449 = vmatprep.subr.bf16.mxu0 0
      %450 = vmatpush2.bf16.msra.mxu0 0
      %451 = vmatprep.subr.bf16.mxu0 0
      %452 = vmatpush2.bf16.msra.mxu0 0
      %453 = vmatprep.subr.bf16.mxu0 0
      %454 = vmatpush2.bf16.msra.mxu0 0
      %455 = vmatprep.mubr.bf16.mxu0 0
      %456 = vmatmul.mubr.bf16.gmra.mxu0 %v351
      %v457 = vpop.f32.mrf.mxu0
      %v458 = vadd.f32 %v373, %v457
      %v459 = vpop.f32.mrf.mxu0
      %v460 = vpop.f32.mrf.mxu0
      %v461 = vadd.f32 %v373, %v460
      %v462 = vpop.f32.mrf.mxu0
      %463 = vdwg.mxu0
      %v464 = vmax.f32 %v458, 1e-06
      %v465 = vmax.f32 %v461, 1e-06
      %v466 = vrsqrt.pop %v464
      %v467 = vmul.f32 %v464, %v466
      %vm468 = vcmp.eq.f32.partialorder %v464, inf
      %v469 = vsel %vm468, %v464, %v467
      %vm470 = vcmp.eq.f32.partialorder %v464, 0.0
      %v471 = vand.u32 %v464, 2147483648
      %v472 = vsel %vm470, %v471, %v469
      %v473 = vrsqrt.pop %v465
      %v474 = vmul.f32 %v465, %v473
      %vm475 = vcmp.eq.f32.partialorder %v465, inf
      %v476 = vsel %vm475, %v465, %v474
      %vm477 = vcmp.eq.f32.partialorder %v465, 0.0
      %v478 = vand.u32 %v465, 2147483648
      %v479 = vsel %vm477, %v478, %v476
      %v480 = vmul.f32 %v343, %v472
      %v481 = vmul.f32 %v346, %v479
      %482 = vst [vmem:[%s226] sm:$0xff] %v480
      %483 = vst [vmem:[%s226 + $0x8] sm:$0xff] %v481
      %s484 = smul.u32 2, %s16
      %p485 = scmp.lt.s32.totalorder %s484, 3
      %s486 = scalar_select %p485, %s484, 3
      %s487 = smul.addr %s486, 8
      %s488 = scalar_lea.vmem %s5, %s487
      // Predicated region
      $region41: #{_lambda_.24} parent=39 // pred_check
        %p489 = pneg %p144
      $region42: #{_lambda_.24} parent=39 // pred_check_branch
        %491 = sbr.rel (%p489) target = $region44
      $region43: #{_lambda_.24} parent=39 // pred_region
        %s492 = smul.u32 2, %s16
      $region44: #{_lambda_.24} parent=39 // pred_fallthru
        _
    $region40: #{_lambda_.24} parent=5 // pred_fallthru
      _
    %p493 = scmp.le.s32.totalorder 2, %s11
    // Predicated region
    $region45: #{_lambda_.24} parent=5 // pred_check
      %p494 = pneg %p493
    $region46: #{_lambda_.24} parent=5 // pred_check_branch
      %496 = sbr.rel (%p494) target = $region48
    $region47: #{_lambda_.24} parent=5 // pred_region
      %s497 = ssub.s32 %s11, 2
      // Predicated region
      $region49: #{_lambda_.24} parent=47 // pred_check
        %p498 = pneg %p150
      $region50: #{_lambda_.24} parent=47 // pred_check_branch
        %500 = sbr.rel (%p498) target = $region52
      $region51: #{_lambda_.24} parent=47 // pred_region
        %s501 = smul.u32 2, %s17
        %p502 = scmp.lt.s32.totalorder %s501, 3
        %s503 = scalar_select %p502, %s501, 3
        %s504 = smul.addr %s503, 8
        %s505 = scalar_lea.vmem %s5, %s504
      $region52: #{_lambda_.24} parent=47 // pred_fallthru
        _
    $region48: #{_lambda_.24} parent=5 // pred_fallthru
      _
  $region6: #{_lambda_.24} parent=0 // loop_footer
    %s15 = sadd.s32 1, %s11
  $region7: #{_lambda_.24} parent=0 // loop_footer_branch
    %10 = sbr.rel target = $region3
  $region8: #{_lambda_.24} parent=0 // loop_exit
    _

// kernel: _lambda_.25
$region0: #{_lambda_.25}
  #allocation0 [shape = 'u32[]', space=smem, size = 0x4, offset = 0x4, fixed_abs, tag = 'smem constant byte address 0x4 - core index']
  #allocation1 [shape = 'u32[144,128]{1,0:T(1,128)}', space=vmem, size = 0x12000, scoped, tag = 'internal scratch']
  %s0 = inlined_call_operand.vmem [shape: bf16[128,128], index: 0, kind: input, shape index: {}]
  %s1 = inlined_call_operand.vmem [shape: bf16[128,128], index: 1, kind: input, shape index: {}]
  %s2 = inlined_call_operand.vmem [shape: f32[1,128], index: 2, kind: input, shape index: {}]
  %s3 = inlined_call_operand.vmem [shape: bf16[128,128], index: 3, kind: input, shape index: {}]
  %s4 = inlined_call_operand.vmem [shape: f32[1,128], index: 4, kind: input, shape index: {}]
  %s5 = inlined_call_operand.vmem [shape: f32[128,128], index: 5, kind: output, shape index: {}]
  %s6 = sld [smem:[#allocation0]]
  $region53: #{_lambda_.25} parent=0
    _
  %s8 = ssub.s32 1, %s6
  %s9 = scalar_select 0, %s8, %s6
  loop: start=0, step=1, limit=4
  $region2: #{_lambda_.25} parent=0 // loop_pre_header
    _
  $region3: #{_lambda_.25} parent=0 // loop_header
    %s11 = sphi 0, %s15
    %p12 = scmp.ge.s32.totalorder %s11, 4
    %s21 = sphi 0, %s23
    %s24 = sphi 0, %s21
    %s25 = sphi 0, %s24
    %s41 = sphi 0, %s25
    %s45 = sphi 0, %s45
    %s47 = sphi 0, %s45
    %s48 = sphi 0, %s47
    %s62 = sphi 0, %s48
    %s66 = sphi 0, %s66
    %s68 = sphi 0, %s66
    %s69 = sphi 0, %s68
    %s83 = sphi 0, %s69
    %s87 = sphi 0, %s87
    %s89 = sphi 0, %s87
    %s90 = sphi 0, %s89
    %s104 = sphi 0, %s90
    %s108 = sphi 0, %s108
    %s110 = sphi 0, %s108
    %s111 = sphi 0, %s110
    %s125 = sphi 0, %s111
    %s131 = sphi 0, %s133
    %s134 = sphi 0, %s131
    %s135 = sphi 0, %s134
    %s151 = sphi 0, %s135
  $region4: #{_lambda_.25} parent=0 // loop_header_branch
    %14 = sbr.rel (%p12) target = $region8
  $region5: #{_lambda_.25} parent=0 // loop_body
    %s16 = ssub.s32 %s11, 1
    %s17 = ssub.s32 %s11, 2
    %s18 = sadd.s32 %s11, 1
    %s19 = ssub.s32 %s11, %s18
    %p20 = scmp.eq.s32.totalorder %s19, 0
    %s22 = sadd.s32 %s21, 1
    %s23 = scalar_select %p20, %s21, %s22
    %p26 = pneg %p20
    %p27 = scmp.eq.s32.totalorder %s11, 1
    %p28 = por %p26, %p27
    %p29 = scmp.ne.s32.totalorder %s21, %s24
    %p30 = scmp.eq.s32.totalorder %s11, 0
    %p31 = por %p29, %p30
    %p32 = scmp.ne.s32.totalorder %s21, %s24
    %p33 = scmp.eq.s32.totalorder %s16, 1
    %p34 = por %p32, %p33
    %p35 = scmp.ne.s32.totalorder %s24, %s25
    %p36 = scmp.eq.s32.totalorder %s16, 0
    %p37 = por %p35, %p36
    %p38 = scmp.ne.s32.totalorder %s24, %s25
    %p39 = scmp.eq.s32.totalorder %s17, 1
    %p40 = por %p38, %p39
    %p42 = scmp.ne.s32.totalorder %s25, %s41
    %p43 = scmp.eq.s32.totalorder %s17, 0
    %p44 = por %p42, %p43
    %s46 = sadd.s32 %s45, 1
    %p49 = scmp.eq.s32.totalorder %s11, 1
    %p50 = scmp.ne.s32.totalorder %s45, %s47
    %p51 = scmp.eq.s32.totalorder %s11, 0
    %p52 = por %p50, %p51
    %p53 = scmp.ne.s32.totalorder %s45, %s47
    %p54 = scmp.eq.s32.totalorder %s16, 1
    %p55 = por %p53, %p54
    %p56 = scmp.ne.s32.totalorder %s47, %s48
    %p57 = scmp.eq.s32.totalorder %s16, 0
    %p58 = por %p56, %p57
    %p59 = scmp.ne.s32.totalorder %s47, %s48
    %p60 = scmp.eq.s32.totalorder %s17, 1
    %p61 = por %p59, %p60
    %p63 = scmp.ne.s32.totalorder %s48, %s62
    %p64 = scmp.eq.s32.totalorder %s17, 0
    %p65 = por %p63, %p64
    %s67 = sadd.s32 %s66, 1
    %p70 = scmp.eq.s32.totalorder %s11, 1
    %p71 = scmp.ne.s32.totalorder %s66, %s68
    %p72 = scmp.eq.s32.totalorder %s11, 0
    %p73 = por %p71, %p72
    %p74 = scmp.ne.s32.totalorder %s66, %s68
    %p75 = scmp.eq.s32.totalorder %s16, 1
    %p76 = por %p74, %p75
    %p77 = scmp.ne.s32.totalorder %s68, %s69
    %p78 = scmp.eq.s32.totalorder %s16, 0
    %p79 = por %p77, %p78
    %p80 = scmp.ne.s32.totalorder %s68, %s69
    %p81 = scmp.eq.s32.totalorder %s17, 1
    %p82 = por %p80, %p81
    %p84 = scmp.ne.s32.totalorder %s69, %s83
    %p85 = scmp.eq.s32.totalorder %s17, 0
    %p86 = por %p84, %p85
    %s88 = sadd.s32 %s87, 1
    %p91 = scmp.eq.s32.totalorder %s11, 1
    %p92 = scmp.ne.s32.totalorder %s87, %s89
    %p93 = scmp.eq.s32.totalorder %s11, 0
    %p94 = por %p92, %p93
    %p95 = scmp.ne.s32.totalorder %s87, %s89
    %p96 = scmp.eq.s32.totalorder %s16, 1
    %p97 = por %p95, %p96
    %p98 = scmp.ne.s32.totalorder %s89, %s90
    %p99 = scmp.eq.s32.totalorder %s16, 0
    %p100 = por %p98, %p99
    %p101 = scmp.ne.s32.totalorder %s89, %s90
    %p102 = scmp.eq.s32.totalorder %s17, 1
    %p103 = por %p101, %p102
    %p105 = scmp.ne.s32.totalorder %s90, %s104
    %p106 = scmp.eq.s32.totalorder %s17, 0
    %p107 = por %p105, %p106
    %s109 = sadd.s32 %s108, 1
    %p112 = scmp.eq.s32.totalorder %s11, 1
    %p113 = scmp.ne.s32.totalorder %s108, %s110
    %p114 = scmp.eq.s32.totalorder %s11, 0
    %p115 = por %p113, %p114
    %p116 = scmp.ne.s32.totalorder %s108, %s110
    %p117 = scmp.eq.s32.totalorder %s16, 1
    %p118 = por %p116, %p117
    %p119 = scmp.ne.s32.totalorder %s110, %s111
    %p120 = scmp.eq.s32.totalorder %s16, 0
    %p121 = por %p119, %p120
    %p122 = scmp.ne.s32.totalorder %s110, %s111
    %p123 = scmp.eq.s32.totalorder %s17, 1
    %p124 = por %p122, %p123
    %p126 = scmp.ne.s32.totalorder %s111, %s125
    %p127 = scmp.eq.s32.totalorder %s17, 0
    %p128 = por %p126, %p127
    %s129 = ssub.s32 %s11, %s18
    %p130 = scmp.eq.s32.totalorder %s129, 0
    %s132 = sadd.s32 %s131, 1
    %s133 = scalar_select %p130, %s131, %s132
    %p136 = pneg %p130
    %p137 = scmp.eq.s32.totalorder %s11, 1
    %p138 = por %p136, %p137
    %p139 = scmp.ne.s32.totalorder %s131, %s134
    %p140 = scmp.eq.s32.totalorder %s11, 0
    %p141 = por %p139, %p140
    %p142 = scmp.ne.s32.totalorder %s131, %s134
    %p143 = scmp.eq.s32.totalorder %s16, 1
    %p144 = por %p142, %p143
    %p145 = scmp.ne.s32.totalorder %s134, %s135
    %p146 = scmp.eq.s32.totalorder %s16, 0
    %p147 = por %p145, %p146
    %p148 = scmp.ne.s32.totalorder %s134, %s135
    %p149 = scmp.eq.s32.totalorder %s17, 1
    %p150 = por %p148, %p149
    %p152 = scmp.ne.s32.totalorder %s135, %s151
    %p153 = scmp.eq.s32.totalorder %s17, 0
    %p154 = por %p152, %p153
    %p155 = scmp.le.s32.totalorder 1, %s11
    %p156 = scmp.lt.s32.totalorder %s11, 3
    %p157 = pnand %p155, %p156
    %p158 = pneg %p157
    // Predicated region
    $region9: #{_lambda_.25} parent=5 // pred_check
      _
    $region10: #{_lambda_.25} parent=5 // pred_check_branch
      %160 = sbr.rel (%p157) target = $region12
    $region11: #{_lambda_.25} parent=5 // pred_region
      %s161 = ssub.s32 %s11, 1
      // Predicated region
      $region13: #{_lambda_.25} parent=11 // pred_check
        %p162 = pneg %p58
      $region14: #{_lambda_.25} parent=11 // pred_check_branch
        %164 = sbr.rel (%p162) target = $region16
      $region15: #{_lambda_.25} parent=11 // pred_region
        _
      $region16: #{_lambda_.25} parent=11 // pred_fallthru
        _
      // Predicated region
      $region17: #{_lambda_.25} parent=11 // pred_check
        %p165 = pneg %p79
      $region18: #{_lambda_.25} parent=11 // pred_check_branch
        %167 = sbr.rel (%p165) target = $region20
      $region19: #{_lambda_.25} parent=11 // pred_region
        _
      $region20: #{_lambda_.25} parent=11 // pred_fallthru
        _
      // Predicated region
      $region21: #{_lambda_.25} parent=11 // pred_check
        %p168 = pneg %p100
      $region22: #{_lambda_.25} parent=11 // pred_check_branch
        %170 = sbr.rel (%p168) target = $region24
      $region23: #{_lambda_.25} parent=11 // pred_region
        _
      $region24: #{_lambda_.25} parent=11 // pred_fallthru
        _
      // Predicated region
      $region25: #{_lambda_.25} parent=11 // pred_check
        %p171 = pneg %p121
      $region26: #{_lambda_.25} parent=11 // pred_check_branch
        %173 = sbr.rel (%p171) target = $region28
      $region27: #{_lambda_.25} parent=11 // pred_region
        _
      $region28: #{_lambda_.25} parent=11 // pred_fallthru
        _
    $region12: #{_lambda_.25} parent=5 // pred_fallthru
      _
    %p174 = scmp.lt.s32.totalorder %s11, 2
    // Predicated region
    $region29: #{_lambda_.25} parent=5 // pred_check
      %p175 = pneg %p174
    $region30: #{_lambda_.25} parent=5 // pred_check_branch
      %177 = sbr.rel (%p175) target = $region32
    $region31: #{_lambda_.25} parent=5 // pred_region
      // Predicated region
      $region33: #{_lambda_.25} parent=31 // pred_check
        %p178 = pneg %p31
      $region34: #{_lambda_.25} parent=31 // pred_check_branch
        %180 = sbr.rel (%p178) target = $region36
      $region35: #{_lambda_.25} parent=31 // pred_region
        %s181 = smul.u32 8, %s11
        %p182 = scmp.lt.s32.totalorder %s181, 15
        %s183 = scalar_select %p182, %s181, 15
        %s184 = smul.addr %s183, 4
        %s185 = scalar_lea.vmem %s0, %s184
        %s186 = smul.u32 8, %s11
      $region36: #{_lambda_.25} parent=31 // pred_fallthru
        _
    $region32: #{_lambda_.25} parent=5 // pred_fallthru
      _
    %p187 = scmp.le.s32.totalorder 1, %s11
    %p188 = scmp.lt.s32.totalorder %s11, 3
    %p189 = pnand %p187, %p188
    %p190 = pneg %p189
    // Predicated region
    $region37: #{_lambda_.25} parent=5 // pred_check
      _
    $region38: #{_lambda_.25} parent=5 // pred_check_branch
      %192 = sbr.rel (%p189) target = $region40
    $region39: #{_lambda_.25} parent=5 // pred_region
      %s193 = ssub.s32 %s11, 1
      %s194 = smul.u32 8, %s16
      %p195 = scmp.lt.s32.totalorder %s194, 15
      %s196 = scalar_select %p195, %s194, 15
      %s197 = smul.addr %s196, 4
      %s198 = scalar_lea.vmem %s0, %s197
      %p199 = pneg %p37
      %p200 = pneg %p34
      %p201 = pneg %p58
      %p202 = pneg %p55
      %p203 = pneg %p79
      %p204 = pneg %p76
      %p205 = pneg %p100
      %p206 = pneg %p97
      %p207 = pneg %p121
      %p208 = pneg %p118
      %p209 = pneg %p147
      %p210 = pneg %p144
      %s211 = smul.u32 8, %s16
      %p212 = scmp.lt.s32.totalorder %s211, 15
      %s213 = scalar_select %p212, %s211, 15
      %s214 = smul.addr %s213, 8
      %s215 = scalar_lea.vmem %s5, %s214
      %s216 = smul.u32 8, %s16
      %p217 = scmp.lt.s32.totalorder %s216, 15
      %s218 = scalar_select %p217, %s216, 15
      %s219 = smul.addr %s218, 4
      %s220 = scalar_lea.vmem %s0, %s219
      %s221 = smul.u32 8, %s16
      %s222 = smul.u32 8, %s16
      %p223 = scmp.lt.s32.totalorder %s222, 15
      %s224 = scalar_select %p223, %s222, 15
      %s225 = smul.addr %s224, 8
      %s226 = scalar_lea.vmem %s5, %s225
      %s227 = smul.u32 8, %s16
      %v229 = vld [vmem:[%s220] sm:$0xf]
      %v230 = vld [vmem:[%s220 + $0x4] sm:$0xf]
      %v231 = vld [vmem:[%s220 + $0x8] sm:$0xf]
      %v232 = vld [vmem:[%s220 + $0xc] sm:$0xf]
      %v233 = vld [vmem:[%s220 + $0x10] sm:$0xf]
      %v234 = vld [vmem:[%s220 + $0x14] sm:$0xf]
      %v235 = vld [vmem:[%s220 + $0x18] sm:$0xf]
      %v236 = vld [vmem:[%s220 + $0x1c] sm:$0xf]
      %v237 = vld [vmem:[%s1] sm:$0xf]
      %v238 = vld [vmem:[%s1 + $0x4] sm:$0xf]
      %v239 = vld [vmem:[%s1 + $0x8] sm:$0xf]
      %v240 = vld [vmem:[%s1 + $0xc] sm:$0xf]
      %v241 = vld [vmem:[%s1 + $0x10] sm:$0xf]
      %v242 = vld [vmem:[%s1 + $0x14] sm:$0xf]
      %v243 = vld [vmem:[%s1 + $0x18] sm:$0xf]
      %v244 = vld [vmem:[%s1 + $0x1c] sm:$0xf]
      %v245 = vld [vmem:[%s1 + $0x20] sm:$0xf]
      %v246 = vld [vmem:[%s1 + $0x24] sm:$0xf]
      %v247 = vld [vmem:[%s1 + $0x28] sm:$0xf]
      %v248 = vld [vmem:[%s1 + $0x2c] sm:$0xf]
      %v249 = vld [vmem:[%s1 + $0x30] sm:$0xf]
      %v250 = vld [vmem:[%s1 + $0x34] sm:$0xf]
      %v251 = vld [vmem:[%s1 + $0x38] sm:$0xf]
      %v252 = vld [vmem:[%s1 + $0x3c] sm:$0xf]
      %v253 = vld [vmem:[%s2] sm:$0x1]
      %v255 = vlaneseq
      %v256 = vshrl.u32 %v255, 7
      %v257 = vsub.s32 0, %v256
      %v258 = vrot.slane %v253, %v257
      %v268 = vunpack.c.l.b16 %v229
      %v269 = vunpack.c.l.b16 %v230
      %v270 = vunpack.c.l.b16 %v231
      %v271 = vunpack.c.l.b16 %v232
      %v272 = vunpack.c.l.b16 %v233
      %v273 = vunpack.c.l.b16 %v234
      %v274 = vunpack.c.l.b16 %v235
      %v275 = vunpack.c.l.b16 %v236
      %v276 = vpack.c.b16 %v269, %v268
      %v277 = vpack.c.b16 %v271, %v270
      %v278 = vpack.c.b16 %v273, %v272
      %v279 = vpack.c.b16 %v275, %v274
      %v300 = vunpack.c.l.b16 %v237
      %v301 = vunpack.c.l.b16 %v238
      %v302 = vunpack.c.l.b16 %v239
      %v303 = vunpack.c.l.b16 %v240
      %v304 = vunpack.c.l.b16 %v241
      %v305 = vunpack.c.l.b16 %v242
      %v306 = vunpack.c.l.b16 %v243
      %v307 = vunpack.c.l.b16 %v244
      %v308 = vunpack.c.l.b16 %v245
      %v309 = vunpack.c.l.b16 %v246
      %v310 = vunpack.c.l.b16 %v247
      %v311 = vunpack.c.l.b16 %v248
      %v312 = vunpack.c.l.b16 %v249
      %v313 = vunpack.c.l.b16 %v250
      %v314 = vunpack.c.l.b16 %v251
      %v315 = vunpack.c.l.b16 %v252
      %v316 = vpack.c.b16 %v301, %v300
      %v317 = vpack.c.b16 %v303, %v302
      %v318 = vpack.c.b16 %v305, %v304
      %v319 = vpack.c.b16 %v307, %v306
      %v320 = vpack.c.b16 %v309, %v308
      %v321 = vpack.c.b16 %v311, %v310
      %v322 = vpack.c.b16 %v313, %v312
      %v323 = vpack.c.b16 %v315, %v314
      %332 = vmatprep.subr.bf16.mxu0 0
      %333 = vmatpush1.bf16.msra.mxu0 %v323
      %334 = vmatprep.subr.bf16.mxu0 0
      %335 = vmatpush1.bf16.msra.mxu0 %v322
      %336 = vmatprep.subr.bf16.mxu0 0
      %337 = vmatpush1.bf16.msra.mxu0 %v321
      %338 = vmatprep.subr.bf16.mxu0 0
      %339 = vmatpush1.bf16.msra.mxu0 %v320
      %340 = vmatprep.subr.bf16.mxu0 0
      %341 = vmatpush1.bf16.msra.mxu0 %v319
      %342 = vmatprep.subr.bf16.mxu0 0
      %343 = vmatpush1.bf16.msra.mxu0 %v318
      %344 = vmatprep.subr.bf16.mxu0 0
      %345 = vmatpush1.bf16.msra.mxu0 %v317
      %346 = vmatprep.subr.bf16.mxu0 0
      %347 = vmatpush1.bf16.msra.mxu0 %v316
      %348 = vmatprep.subr.bf16.mxu0 0
      %349 = vmatpush2.bf16.msra.mxu0 0
      %350 = vmatprep.subr.bf16.mxu0 0
      %351 = vmatpush2.bf16.msra.mxu0 0
      %352 = vmatprep.subr.bf16.mxu0 0
      %353 = vmatpush2.bf16.msra.mxu0 0
      %354 = vmatprep.subr.bf16.mxu0 0
      %355 = vmatpush2.bf16.msra.mxu0 0
      %356 = vmatprep.subr.bf16.mxu0 0
      %357 = vmatpush2.bf16.msra.mxu0 0
      %358 = vmatprep.subr.bf16.mxu0 0
      %359 = vmatpush2.bf16.msra.mxu0 0
      %360 = vmatprep.subr.bf16.mxu0 0
      %361 = vmatpush2.bf16.msra.mxu0 0
      %362 = vmatprep.subr.bf16.mxu0 0
      %363 = vmatpush2.bf16.msra.mxu0 0
      %364 = vmatprep.mubr.bf16.mxu0 0
      %365 = vmatmul.mubr.bf16.gmra.mxu0 %v276
      %v366 = vpop.f32.mrf.mxu0
      %v367 = vadd.f32 %v258, %v366
      %v368 = vpop.f32.mrf.mxu0
      %v369 = vpop.f32.mrf.mxu0
      %v370 = vadd.f32 %v258, %v369
      %v371 = vpop.f32.mrf.mxu0
      %372 = vmatprep.mubr.bf16.mxu0 0
      %373 = vmatmul.mubr.bf16.gmra.mxu0 %v277
      %v374 = vpop.f32.mrf.mxu0
      %v375 = vadd.f32 %v258, %v374
      %v376 = vpop.f32.mrf.mxu0
      %v377 = vpop.f32.mrf.mxu0
      %v378 = vadd.f32 %v258, %v377
      %v379 = vpop.f32.mrf.mxu0
      %380 = vmatprep.mubr.bf16.mxu0 0
      %381 = vmatmul.mubr.bf16.gmra.mxu0 %v278
      %v382 = vpop.f32.mrf.mxu0
      %v383 = vadd.f32 %v258, %v382
      %v384 = vpop.f32.mrf.mxu0
      %v385 = vpop.f32.mrf.mxu0
      %v386 = vadd.f32 %v258, %v385
      %v387 = vpop.f32.mrf.mxu0
      %388 = vmatprep.mubr.bf16.mxu0 0
      %389 = vmatmul.mubr.bf16.gmra.mxu0 %v279
      %v390 = vpop.f32.mrf.mxu0
      %v391 = vadd.f32 %v258, %v390
      %v392 = vpop.f32.mrf.mxu0
      %v393 = vpop.f32.mrf.mxu0
      %v394 = vadd.f32 %v258, %v393
      %v395 = vpop.f32.mrf.mxu0
      %396 = vdwg.mxu0
      %v397 = vmul.f32 %v367, %v367
      %v398 = vmul.f32 %v370, %v370
      %v399 = vmul.f32 %v375, %v375
      %v400 = vmul.f32 %v378, %v378
      %v401 = vmul.f32 %v383, %v383
      %v402 = vmul.f32 %v386, %v386
      %v403 = vmul.f32 %v391, %v391
      %v404 = vmul.f32 %v394, %v394
      %v405 = vpack.c.bf16 %v398, %v397
      %v406 = vpack.c.bf16 %v400, %v399
      %v407 = vpack.c.bf16 %v402, %v401
      %v408 = vpack.c.bf16 %v404, %v403
      %v409 = vld [vmem:[%s3] sm:$0xf]
      %v410 = vld [vmem:[%s3 + $0x4] sm:$0xf]
      %v411 = vld [vmem:[%s3 + $0x8] sm:$0xf]
      %v412 = vld [vmem:[%s3 + $0xc] sm:$0xf]
      %v413 = vld [vmem:[%s3 + $0x10] sm:$0xf]
      %v414 = vld [vmem:[%s3 + $0x14] sm:$0xf]
      %v415 = vld [vmem:[%s3 + $0x18] sm:$0xf]
      %v416 = vld [vmem:[%s3 + $0x1c] sm:$0xf]
      %v417 = vld [vmem:[%s3 + $0x20] sm:$0xf]
      %v418 = vld [vmem:[%s3 + $0x24] sm:$0xf]
      %v419 = vld [vmem:[%s3 + $0x28] sm:$0xf]
      %v420 = vld [vmem:[%s3 + $0x2c] sm:$0xf]
      %v421 = vld [vmem:[%s3 + $0x30] sm:$0xf]
      %v422 = vld [vmem:[%s3 + $0x34] sm:$0xf]
      %v423 = vld [vmem:[%s3 + $0x38] sm:$0xf]
      %v424 = vld [vmem:[%s3 + $0x3c] sm:$0xf]
      %v425 = vld [vmem:[%s4] sm:$0x1]
      %v427 = vlaneseq
      %v428 = vshrl.u32 %v427, 7
      %v429 = vsub.s32 0, %v428
      %v430 = vrot.slane %v425, %v429
      %v448 = vunpack.c.l.b16 %v409
      %v449 = vunpack.c.l.b16 %v410
      %v450 = vunpack.c.l.b16 %v411
      %v451 = vunpack.c.l.b16 %v412
      %v452 = vunpack.c.l.b16 %v413
      %v453 = vunpack.c.l.b16 %v414
      %v454 = vunpack.c.l.b16 %v415
      %v455 = vunpack.c.l.b16 %v416
      %v456 = vunpack.c.l.b16 %v417
      %v457 = vunpack.c.l.b16 %v418
      %v458 = vunpack.c.l.b16 %v419
      %v459 = vunpack.c.l.b16 %v420
      %v460 = vunpack.c.l.b16 %v421
      %v461 = vunpack.c.l.b16 %v422
      %v462 = vunpack.c.l.b16 %v423
      %v463 = vunpack.c.l.b16 %v424
      %v464 = vpack.c.b16 %v449, %v448
      %v465 = vpack.c.b16 %v451, %v450
      %v466 = vpack.c.b16 %v453, %v452
      %v467 = vpack.c.b16 %v455, %v454
      %v468 = vpack.c.b16 %v457, %v456
      %v469 = vpack.c.b16 %v459, %v458
      %v470 = vpack.c.b16 %v461, %v460
      %v471 = vpack.c.b16 %v463, %v462
      %480 = vmatprep.subr.bf16.mxu0 0
      %481 = vmatpush1.bf16.msra.mxu0 %v471
      %482 = vmatprep.subr.bf16.mxu0 0
      %483 = vmatpush1.bf16.msra.mxu0 %v470
      %484 = vmatprep.subr.bf16.mxu0 0
      %485 = vmatpush1.bf16.msra.mxu0 %v469
      %486 = vmatprep.subr.bf16.mxu0 0
      %487 = vmatpush1.bf16.msra.mxu0 %v468
      %488 = vmatprep.subr.bf16.mxu0 0
      %489 = vmatpush1.bf16.msra.mxu0 %v467
      %490 = vmatprep.subr.bf16.mxu0 0
      %491 = vmatpush1.bf16.msra.mxu0 %v466
      %492 = vmatprep.subr.bf16.mxu0 0
      %493 = vmatpush1.bf16.msra.mxu0 %v465
      %494 = vmatprep.subr.bf16.mxu0 0
      %495 = vmatpush1.bf16.msra.mxu0 %v464
      %496 = vmatprep.subr.bf16.mxu0 0
      %497 = vmatpush2.bf16.msra.mxu0 0
      %498 = vmatprep.subr.bf16.mxu0 0
      %499 = vmatpush2.bf16.msra.mxu0 0
      %500 = vmatprep.subr.bf16.mxu0 0
      %501 = vmatpush2.bf16.msra.mxu0 0
      %502 = vmatprep.subr.bf16.mxu0 0
      %503 = vmatpush2.bf16.msra.mxu0 0
      %504 = vmatprep.subr.bf16.mxu0 0
      %505 = vmatpush2.bf16.msra.mxu0 0
      %506 = vmatprep.subr.bf16.mxu0 0
      %507 = vmatpush2.bf16.msra.mxu0 0
      %508 = vmatprep.subr.bf16.mxu0 0
      %509 = vmatpush2.bf16.msra.mxu0 0
      %510 = vmatprep.subr.bf16.mxu0 0
      %511 = vmatpush2.bf16.msra.mxu0 0
      %512 = vmatprep.mubr.bf16.mxu0 0
      %513 = vmatmul.mubr.bf16.gmra.mxu0 %v405
      %v514 = vpop.f32.mrf.mxu0
      %v515 = vadd.f32 %v430, %v514
      %v516 = vpop.f32.mrf.mxu0
      %v517 = vpop.f32.mrf.mxu0
      %v518 = vadd.f32 %v430, %v517
      %v519 = vpop.f32.mrf.mxu0
      %520 = vmatprep.mubr.bf16.mxu0 0
      %521 = vmatmul.mubr.bf16.gmra.mxu0 %v406
      %v522 = vpop.f32.mrf.mxu0
      %v523 = vadd.f32 %v430, %v522
      %v524 = vpop.f32.mrf.mxu0
      %v525 = vpop.f32.mrf.mxu0
      %v526 = vadd.f32 %v430, %v525
      %v527 = vpop.f32.mrf.mxu0
      %528 = vmatprep.mubr.bf16.mxu0 0
      %529 = vmatmul.mubr.bf16.gmra.mxu0 %v407
      %v530 = vpop.f32.mrf.mxu0
      %v531 = vadd.f32 %v430, %v530
      %v532 = vpop.f32.mrf.mxu0
      %v533 = vpop.f32.mrf.mxu0
      %v534 = vadd.f32 %v430, %v533
      %v535 = vpop.f32.mrf.mxu0
      %536 = vmatprep.mubr.bf16.mxu0 0
      %537 = vmatmul.mubr.bf16.gmra.mxu0 %v408
      %v538 = vpop.f32.mrf.mxu0
      %v539 = vadd.f32 %v430, %v538
      %v540 = vpop.f32.mrf.mxu0
      %v541 = vpop.f32.mrf.mxu0
      %v542 = vadd.f32 %v430, %v541
      %v543 = vpop.f32.mrf.mxu0
      %544 = vdwg.mxu0
      %v545 = vmax.f32 %v515, 1e-06
      %v546 = vmax.f32 %v518, 1e-06
      %v547 = vmax.f32 %v523, 1e-06
      %v548 = vmax.f32 %v526, 1e-06
      %v549 = vmax.f32 %v531, 1e-06
      %v550 = vmax.f32 %v534, 1e-06
      %v551 = vmax.f32 %v539, 1e-06
      %v552 = vmax.f32 %v542, 1e-06
      %v553 = vrsqrt.pop %v545
      %v554 = vmul.f32 %v545, %v553
      %vm555 = vcmp.eq.f32.partialorder %v545, inf
      %v556 = vsel %vm555, %v545, %v554
      %vm557 = vcmp.eq.f32.partialorder %v545, 0.0
      %v558 = vand.u32 %v545, 2147483648
      %v559 = vsel %vm557, %v558, %v556
      %v560 = vrsqrt.pop %v546
      %v561 = vmul.f32 %v546, %v560
      %vm562 = vcmp.eq.f32.partialorder %v546, inf
      %v563 = vsel %vm562, %v546, %v561
      %vm564 = vcmp.eq.f32.partialorder %v546, 0.0
      %v565 = vand.u32 %v546, 2147483648
      %v566 = vsel %vm564, %v565, %v563
      %v567 = vrsqrt.pop %v547
      %v568 = vmul.f32 %v547, %v567
      %vm569 = vcmp.eq.f32.partialorder %v547, inf
      %v570 = vsel %vm569, %v547, %v568
      %vm571 = vcmp.eq.f32.partialorder %v547, 0.0
      %v572 = vand.u32 %v547, 2147483648
      %v573 = vsel %vm571, %v572, %v570
      %v574 = vrsqrt.pop %v548
      %v575 = vmul.f32 %v548, %v574
      %vm576 = vcmp.eq.f32.partialorder %v548, inf
      %v577 = vsel %vm576, %v548, %v575
      %vm578 = vcmp.eq.f32.partialorder %v548, 0.0
      %v579 = vand.u32 %v548, 2147483648
      %v580 = vsel %vm578, %v579, %v577
      %v581 = vrsqrt.pop %v549
      %v582 = vmul.f32 %v549, %v581
      %vm583 = vcmp.eq.f32.partialorder %v549, inf
      %v584 = vsel %vm583, %v549, %v582
      %vm585 = vcmp.eq.f32.partialorder %v549, 0.0
      %v586 = vand.u32 %v549, 2147483648
      %v587 = vsel %vm585, %v586, %v584
      %v588 = vrsqrt.pop %v550
      %v589 = vmul.f32 %v550, %v588
      %vm590 = vcmp.eq.f32.partialorder %v550, inf
      %v591 = vsel %vm590, %v550, %v589
      %vm592 = vcmp.eq.f32.partialorder %v550, 0.0
      %v593 = vand.u32 %v550, 2147483648
      %v594 = vsel %vm592, %v593, %v591
      %v595 = vrsqrt.pop %v551
      %v596 = vmul.f32 %v551, %v595
      %vm597 = vcmp.eq.f32.partialorder %v551, inf
      %v598 = vsel %vm597, %v551, %v596
      %vm599 = vcmp.eq.f32.partialorder %v551, 0.0
      %v600 = vand.u32 %v551, 2147483648
      %v601 = vsel %vm599, %v600, %v598
      %v602 = vrsqrt.pop %v552
      %v603 = vmul.f32 %v552, %v602
      %vm604 = vcmp.eq.f32.partialorder %v552, inf
      %v605 = vsel %vm604, %v552, %v603
      %vm606 = vcmp.eq.f32.partialorder %v552, 0.0
      %v607 = vand.u32 %v552, 2147483648
      %v608 = vsel %vm606, %v607, %v605
      %v609 = vmul.f32 %v367, %v559
      %v610 = vmul.f32 %v370, %v566
      %v611 = vmul.f32 %v375, %v573
      %v612 = vmul.f32 %v378, %v580
      %v613 = vmul.f32 %v383, %v587
      %v614 = vmul.f32 %v386, %v594
      %v615 = vmul.f32 %v391, %v601
      %v616 = vmul.f32 %v394, %v608
      %617 = vst [vmem:[%s226] sm:$0xff] %v609
      %618 = vst [vmem:[%s226 + $0x8] sm:$0xff] %v610
      %619 = vst [vmem:[%s226 + $0x10] sm:$0xff] %v611
      %620 = vst [vmem:[%s226 + $0x18] sm:$0xff] %v612
      %621 = vst [vmem:[%s226 + $0x20] sm:$0xff] %v613
      %622 = vst [vmem:[%s226 + $0x28] sm:$0xff] %v614
      %623 = vst [vmem:[%s226 + $0x30] sm:$0xff] %v615
      %624 = vst [vmem:[%s226 + $0x38] sm:$0xff] %v616
      %s625 = smul.u32 8, %s16
      %p626 = scmp.lt.s32.totalorder %s625, 15
      %s627 = scalar_select %p626, %s625, 15
      %s628 = smul.addr %s627, 8
      %s629 = scalar_lea.vmem %s5, %s628
      // Predicated region
      $region41: #{_lambda_.25} parent=39 // pred_check
        %p630 = pneg %p144
      $region42: #{_lambda_.25} parent=39 // pred_check_branch
        %632 = sbr.rel (%p630) target = $region44
      $region43: #{_lambda_.25} parent=39 // pred_region
        %s633 = smul.u32 8, %s16
      $region44: #{_lambda_.25} parent=39 // pred_fallthru
        _
    $region40: #{_lambda_.25} parent=5 // pred_fallthru
      _
    %p634 = scmp.le.s32.totalorder 2, %s11
    // Predicated region
    $region45: #{_lambda_.25} parent=5 // pred_check
      %p635 = pneg %p634
    $region46: #{_lambda_.25} parent=5 // pred_check_branch
      %637 = sbr.rel (%p635) target = $region48
    $region47: #{_lambda_.25} parent=5 // pred_region
      %s638 = ssub.s32 %s11, 2
      // Predicated region
      $region49: #{_lambda_.25} parent=47 // pred_check
        %p639 = pneg %p150
      $region50: #{_lambda_.25} parent=47 // pred_check_branch
        %641 = sbr.rel (%p639) target = $region52
      $region51: #{_lambda_.25} parent=47 // pred_region
        %s642 = smul.u32 8, %s17
        %p643 = scmp.lt.s32.totalorder %s642, 15
        %s644 = scalar_select %p643, %s642, 15
        %s645 = smul.addr %s644, 8
        %s646 = scalar_lea.vmem %s5, %s645
      $region52: #{_lambda_.25} parent=47 // pred_fallthru
        _
    $region48: #{_lambda_.25} parent=5 // pred_fallthru
      _
  $region6: #{_lambda_.25} parent=0 // loop_footer
    %s15 = sadd.s32 1, %s11
  $region7: #{_lambda_.25} parent=0 // loop_footer_branch
    %10 = sbr.rel target = $region3
  $region8: #{_lambda_.25} parent=0 // loop_exit
    _

// kernel: _lambda_.26
$region0: #{_lambda_.26}
  #allocation0 [shape = 'u32[]', space=smem, size = 0x4, offset = 0x4, fixed_abs, tag = 'smem constant byte address 0x4 - core index']
  #allocation1 [shape = 'u32[144,128]{1,0:T(1,128)}', space=vmem, size = 0x12000, scoped, tag = 'internal scratch']
  %s0 = inlined_call_operand.vmem [shape: bf16[512,128], index: 0, kind: input, shape index: {}]
  %s1 = inlined_call_operand.vmem [shape: bf16[128,128], index: 1, kind: input, shape index: {}]
  %s2 = inlined_call_operand.vmem [shape: f32[1,128], index: 2, kind: input, shape index: {}]
  %s3 = inlined_call_operand.vmem [shape: bf16[128,128], index: 3, kind: input, shape index: {}]
  %s4 = inlined_call_operand.vmem [shape: f32[1,128], index: 4, kind: input, shape index: {}]
  %s5 = inlined_call_operand.vmem [shape: f32[512,128], index: 5, kind: output, shape index: {}]
  %s6 = sld [smem:[#allocation0]]
  $region53: #{_lambda_.26} parent=0
    _
  %s8 = ssub.s32 1, %s6
  %s9 = scalar_select 0, %s8, %s6
  loop: start=0, step=1, limit=4
  $region2: #{_lambda_.26} parent=0 // loop_pre_header
    _
  $region3: #{_lambda_.26} parent=0 // loop_header
    %s11 = sphi 0, %s15
    %p12 = scmp.ge.s32.totalorder %s11, 4
    %s21 = sphi 0, %s23
    %s24 = sphi 0, %s21
    %s25 = sphi 0, %s24
    %s41 = sphi 0, %s25
    %s45 = sphi 0, %s45
    %s47 = sphi 0, %s45
    %s48 = sphi 0, %s47
    %s62 = sphi 0, %s48
    %s66 = sphi 0, %s66
    %s68 = sphi 0, %s66
    %s69 = sphi 0, %s68
    %s83 = sphi 0, %s69
    %s87 = sphi 0, %s87
    %s89 = sphi 0, %s87
    %s90 = sphi 0, %s89
    %s104 = sphi 0, %s90
    %s108 = sphi 0, %s108
    %s110 = sphi 0, %s108
    %s111 = sphi 0, %s110
    %s125 = sphi 0, %s111
    %s131 = sphi 0, %s133
    %s134 = sphi 0, %s131
    %s135 = sphi 0, %s134
    %s151 = sphi 0, %s135
  $region4: #{_lambda_.26} parent=0 // loop_header_branch
    %14 = sbr.rel (%p12) target = $region8
  $region5: #{_lambda_.26} parent=0 // loop_body
    %s16 = ssub.s32 %s11, 1
    %s17 = ssub.s32 %s11, 2
    %s18 = sadd.s32 %s11, 1
    %s19 = ssub.s32 %s11, %s18
    %p20 = scmp.eq.s32.totalorder %s19, 0
    %s22 = sadd.s32 %s21, 1
    %s23 = scalar_select %p20, %s21, %s22
    %p26 = pneg %p20
    %p27 = scmp.eq.s32.totalorder %s11, 1
    %p28 = por %p26, %p27
    %p29 = scmp.ne.s32.totalorder %s21, %s24
    %p30 = scmp.eq.s32.totalorder %s11, 0
    %p31 = por %p29, %p30
    %p32 = scmp.ne.s32.totalorder %s21, %s24
    %p33 = scmp.eq.s32.totalorder %s16, 1
    %p34 = por %p32, %p33
    %p35 = scmp.ne.s32.totalorder %s24, %s25
    %p36 = scmp.eq.s32.totalorder %s16, 0
    %p37 = por %p35, %p36
    %p38 = scmp.ne.s32.totalorder %s24, %s25
    %p39 = scmp.eq.s32.totalorder %s17, 1
    %p40 = por %p38, %p39
    %p42 = scmp.ne.s32.totalorder %s25, %s41
    %p43 = scmp.eq.s32.totalorder %s17, 0
    %p44 = por %p42, %p43
    %s46 = sadd.s32 %s45, 1
    %p49 = scmp.eq.s32.totalorder %s11, 1
    %p50 = scmp.ne.s32.totalorder %s45, %s47
    %p51 = scmp.eq.s32.totalorder %s11, 0
    %p52 = por %p50, %p51
    %p53 = scmp.ne.s32.totalorder %s45, %s47
    %p54 = scmp.eq.s32.totalorder %s16, 1
    %p55 = por %p53, %p54
    %p56 = scmp.ne.s32.totalorder %s47, %s48
    %p57 = scmp.eq.s32.totalorder %s16, 0
    %p58 = por %p56, %p57
    %p59 = scmp.ne.s32.totalorder %s47, %s48
    %p60 = scmp.eq.s32.totalorder %s17, 1
    %p61 = por %p59, %p60
    %p63 = scmp.ne.s32.totalorder %s48, %s62
    %p64 = scmp.eq.s32.totalorder %s17, 0
    %p65 = por %p63, %p64
    %s67 = sadd.s32 %s66, 1
    %p70 = scmp.eq.s32.totalorder %s11, 1
    %p71 = scmp.ne.s32.totalorder %s66, %s68
    %p72 = scmp.eq.s32.totalorder %s11, 0
    %p73 = por %p71, %p72
    %p74 = scmp.ne.s32.totalorder %s66, %s68
    %p75 = scmp.eq.s32.totalorder %s16, 1
    %p76 = por %p74, %p75
    %p77 = scmp.ne.s32.totalorder %s68, %s69
    %p78 = scmp.eq.s32.totalorder %s16, 0
    %p79 = por %p77, %p78
    %p80 = scmp.ne.s32.totalorder %s68, %s69
    %p81 = scmp.eq.s32.totalorder %s17, 1
    %p82 = por %p80, %p81
    %p84 = scmp.ne.s32.totalorder %s69, %s83
    %p85 = scmp.eq.s32.totalorder %s17, 0
    %p86 = por %p84, %p85
    %s88 = sadd.s32 %s87, 1
    %p91 = scmp.eq.s32.totalorder %s11, 1
    %p92 = scmp.ne.s32.totalorder %s87, %s89
    %p93 = scmp.eq.s32.totalorder %s11, 0
    %p94 = por %p92, %p93
    %p95 = scmp.ne.s32.totalorder %s87, %s89
    %p96 = scmp.eq.s32.totalorder %s16, 1
    %p97 = por %p95, %p96
    %p98 = scmp.ne.s32.totalorder %s89, %s90
    %p99 = scmp.eq.s32.totalorder %s16, 0
    %p100 = por %p98, %p99
    %p101 = scmp.ne.s32.totalorder %s89, %s90
    %p102 = scmp.eq.s32.totalorder %s17, 1
    %p103 = por %p101, %p102
    %p105 = scmp.ne.s32.totalorder %s90, %s104
    %p106 = scmp.eq.s32.totalorder %s17, 0
    %p107 = por %p105, %p106
    %s109 = sadd.s32 %s108, 1
    %p112 = scmp.eq.s32.totalorder %s11, 1
    %p113 = scmp.ne.s32.totalorder %s108, %s110
    %p114 = scmp.eq.s32.totalorder %s11, 0
    %p115 = por %p113, %p114
    %p116 = scmp.ne.s32.totalorder %s108, %s110
    %p117 = scmp.eq.s32.totalorder %s16, 1
    %p118 = por %p116, %p117
    %p119 = scmp.ne.s32.totalorder %s110, %s111
    %p120 = scmp.eq.s32.totalorder %s16, 0
    %p121 = por %p119, %p120
    %p122 = scmp.ne.s32.totalorder %s110, %s111
    %p123 = scmp.eq.s32.totalorder %s17, 1
    %p124 = por %p122, %p123
    %p126 = scmp.ne.s32.totalorder %s111, %s125
    %p127 = scmp.eq.s32.totalorder %s17, 0
    %p128 = por %p126, %p127
    %s129 = ssub.s32 %s11, %s18
    %p130 = scmp.eq.s32.totalorder %s129, 0
    %s132 = sadd.s32 %s131, 1
    %s133 = scalar_select %p130, %s131, %s132
    %p136 = pneg %p130
    %p137 = scmp.eq.s32.totalorder %s11, 1
    %p138 = por %p136, %p137
    %p139 = scmp.ne.s32.totalorder %s131, %s134
    %p140 = scmp.eq.s32.totalorder %s11, 0
    %p141 = por %p139, %p140
    %p142 = scmp.ne.s32.totalorder %s131, %s134
    %p143 = scmp.eq.s32.totalorder %s16, 1
    %p144 = por %p142, %p143
    %p145 = scmp.ne.s32.totalorder %s134, %s135
    %p146 = scmp.eq.s32.totalorder %s16, 0
    %p147 = por %p145, %p146
    %p148 = scmp.ne.s32.totalorder %s134, %s135
    %p149 = scmp.eq.s32.totalorder %s17, 1
    %p150 = por %p148, %p149
    %p152 = scmp.ne.s32.totalorder %s135, %s151
    %p153 = scmp.eq.s32.totalorder %s17, 0
    %p154 = por %p152, %p153
    %p155 = scmp.le.s32.totalorder 1, %s11
    %p156 = scmp.lt.s32.totalorder %s11, 3
    %p157 = pnand %p155, %p156
    %p158 = pneg %p157
    // Predicated region
    $region9: #{_lambda_.26} parent=5 // pred_check
      _
    $region10: #{_lambda_.26} parent=5 // pred_check_branch
      %160 = sbr.rel (%p157) target = $region12
    $region11: #{_lambda_.26} parent=5 // pred_region
      %s161 = ssub.s32 %s11, 1
      // Predicated region
      $region13: #{_lambda_.26} parent=11 // pred_check
        %p162 = pneg %p58
      $region14: #{_lambda_.26} parent=11 // pred_check_branch
        %164 = sbr.rel (%p162) target = $region16
      $region15: #{_lambda_.26} parent=11 // pred_region
        _
      $region16: #{_lambda_.26} parent=11 // pred_fallthru
        _
      // Predicated region
      $region17: #{_lambda_.26} parent=11 // pred_check
        %p165 = pneg %p79
      $region18: #{_lambda_.26} parent=11 // pred_check_branch
        %167 = sbr.rel (%p165) target = $region20
      $region19: #{_lambda_.26} parent=11 // pred_region
        _
      $region20: #{_lambda_.26} parent=11 // pred_fallthru
        _
      // Predicated region
      $region21: #{_lambda_.26} parent=11 // pred_check
        %p168 = pneg %p100
      $region22: #{_lambda_.26} parent=11 // pred_check_branch
        %170 = sbr.rel (%p168) target = $region24
      $region23: #{_lambda_.26} parent=11 // pred_region
        _
      $region24: #{_lambda_.26} parent=11 // pred_fallthru
        _
      // Predicated region
      $region25: #{_lambda_.26} parent=11 // pred_check
        %p171 = pneg %p121
      $region26: #{_lambda_.26} parent=11 // pred_check_branch
        %173 = sbr.rel (%p171) target = $region28
      $region27: #{_lambda_.26} parent=11 // pred_region
        _
      $region28: #{_lambda_.26} parent=11 // pred_fallthru
        _
    $region12: #{_lambda_.26} parent=5 // pred_fallthru
      _
    %p174 = scmp.lt.s32.totalorder %s11, 2
    // Predicated region
    $region29: #{_lambda_.26} parent=5 // pred_check
      %p175 = pneg %p174
    $region30: #{_lambda_.26} parent=5 // pred_check_branch
      %177 = sbr.rel (%p175) target = $region32
    $region31: #{_lambda_.26} parent=5 // pred_region
      // Predicated region
      $region33: #{_lambda_.26} parent=31 // pred_check
        %p178 = pneg %p31
      $region34: #{_lambda_.26} parent=31 // pred_check_branch
        %180 = sbr.rel (%p178) target = $region36
      $region35: #{_lambda_.26} parent=31 // pred_region
        %s181 = smul.u32 32, %s11
        %p182 = scmp.lt.s32.totalorder %s181, 63
        %s183 = scalar_select %p182, %s181, 63
        %s184 = smul.addr %s183, 4
        %s185 = scalar_lea.vmem %s0, %s184
        %s186 = smul.u32 32, %s11
      $region36: #{_lambda_.26} parent=31 // pred_fallthru
        _
    $region32: #{_lambda_.26} parent=5 // pred_fallthru
      _
    %p187 = scmp.le.s32.totalorder 1, %s11
    %p188 = scmp.lt.s32.totalorder %s11, 3
    %p189 = pnand %p187, %p188
    %p190 = pneg %p189
    // Predicated region
    $region37: #{_lambda_.26} parent=5 // pred_check
      _
    $region38: #{_lambda_.26} parent=5 // pred_check_branch
      %192 = sbr.rel (%p189) target = $region40
    $region39: #{_lambda_.26} parent=5 // pred_region
      %s193 = ssub.s32 %s11, 1
      %s194 = smul.u32 32, %s16
      %p195 = scmp.lt.s32.totalorder %s194, 63
      %s196 = scalar_select %p195, %s194, 63
      %s197 = smul.addr %s196, 4
      %s198 = scalar_lea.vmem %s0, %s197
      %p199 = pneg %p37
      %p200 = pneg %p34
      %p201 = pneg %p58
      %p202 = pneg %p55
      %p203 = pneg %p79
      %p204 = pneg %p76
      %p205 = pneg %p100
      %p206 = pneg %p97
      %p207 = pneg %p121
      %p208 = pneg %p118
      %p209 = pneg %p147
      %p210 = pneg %p144
      %s211 = smul.u32 32, %s16
      %p212 = scmp.lt.s32.totalorder %s211, 63
      %s213 = scalar_select %p212, %s211, 63
      %s214 = smul.addr %s213, 8
      %s215 = scalar_lea.vmem %s5, %s214
      %s216 = smul.u32 32, %s16
      %p217 = scmp.lt.s32.totalorder %s216, 63
      %s218 = scalar_select %p217, %s216, 63
      %s219 = smul.addr %s218, 4
      %s220 = scalar_lea.vmem %s0, %s219
      %s221 = smul.u32 32, %s16
      %s222 = smul.u32 32, %s16
      %p223 = scmp.lt.s32.totalorder %s222, 63
      %s224 = scalar_select %p223, %s222, 63
      %s225 = smul.addr %s224, 8
      %s226 = scalar_lea.vmem %s5, %s225
      %s227 = smul.u32 32, %s16
      %v229 = vld [vmem:[%s220] sm:$0xf]
      %v230 = vld [vmem:[%s220 + $0x4] sm:$0xf]
      %v231 = vld [vmem:[%s220 + $0x8] sm:$0xf]
      %v232 = vld [vmem:[%s220 + $0xc] sm:$0xf]
      %v233 = vld [vmem:[%s220 + $0x10] sm:$0xf]
      %v234 = vld [vmem:[%s220 + $0x14] sm:$0xf]
      %v235 = vld [vmem:[%s220 + $0x18] sm:$0xf]
      %v236 = vld [vmem:[%s220 + $0x1c] sm:$0xf]
      %v237 = vld [vmem:[%s220 + $0x20] sm:$0xf]
      %v238 = vld [vmem:[%s220 + $0x24] sm:$0xf]
      %v239 = vld [vmem:[%s220 + $0x28] sm:$0xf]
      %v240 = vld [vmem:[%s220 + $0x2c] sm:$0xf]
      %v241 = vld [vmem:[%s220 + $0x30] sm:$0xf]
      %v242 = vld [vmem:[%s220 + $0x34] sm:$0xf]
      %v243 = vld [vmem:[%s220 + $0x38] sm:$0xf]
      %v244 = vld [vmem:[%s220 + $0x3c] sm:$0xf]
      %v245 = vld [vmem:[%s220 + $0x40] sm:$0xf]
      %v246 = vld [vmem:[%s220 + $0x44] sm:$0xf]
      %v247 = vld [vmem:[%s220 + $0x48] sm:$0xf]
      %v248 = vld [vmem:[%s220 + $0x4c] sm:$0xf]
      %v249 = vld [vmem:[%s220 + $0x50] sm:$0xf]
      %v250 = vld [vmem:[%s220 + $0x54] sm:$0xf]
      %v251 = vld [vmem:[%s220 + $0x58] sm:$0xf]
      %v252 = vld [vmem:[%s220 + $0x5c] sm:$0xf]
      %v253 = vld [vmem:[%s220 + $0x60] sm:$0xf]
      %v254 = vld [vmem:[%s220 + $0x64] sm:$0xf]
      %v255 = vld [vmem:[%s220 + $0x68] sm:$0xf]
      %v256 = vld [vmem:[%s220 + $0x6c] sm:$0xf]
      %v257 = vld [vmem:[%s220 + $0x70] sm:$0xf]
      %v258 = vld [vmem:[%s220 + $0x74] sm:$0xf]
      %v259 = vld [vmem:[%s220 + $0x78] sm:$0xf]
      %v260 = vld [vmem:[%s220 + $0x7c] sm:$0xf]
      %v261 = vld [vmem:[%s1] sm:$0xf]
      %v262 = vld [vmem:[%s1 + $0x4] sm:$0xf]
      %v263 = vld [vmem:[%s1 + $0x8] sm:$0xf]
      %v264 = vld [vmem:[%s1 + $0xc] sm:$0xf]
      %v265 = vld [vmem:[%s1 + $0x10] sm:$0xf]
      %v266 = vld [vmem:[%s1 + $0x14] sm:$0xf]
      %v267 = vld [vmem:[%s1 + $0x18] sm:$0xf]
      %v268 = vld [vmem:[%s1 + $0x1c] sm:$0xf]
      %v269 = vld [vmem:[%s1 + $0x20] sm:$0xf]
      %v270 = vld [vmem:[%s1 + $0x24] sm:$0xf]
      %v271 = vld [vmem:[%s1 + $0x28] sm:$0xf]
      %v272 = vld [vmem:[%s1 + $0x2c] sm:$0xf]
      %v273 = vld [vmem:[%s1 + $0x30] sm:$0xf]
      %v274 = vld [vmem:[%s1 + $0x34] sm:$0xf]
      %v275 = vld [vmem:[%s1 + $0x38] sm:$0xf]
      %v276 = vld [vmem:[%s1 + $0x3c] sm:$0xf]
      %v277 = vld [vmem:[%s2] sm:$0x1]
      %v279 = vlaneseq
      %v280 = vshrl.u32 %v279, 7
      %v281 = vsub.s32 0, %v280
      %v282 = vrot.slane %v277, %v281
      %v316 = vunpack.c.l.b16 %v229
      %v317 = vunpack.c.l.b16 %v230
      %v318 = vunpack.c.l.b16 %v231
      %v319 = vunpack.c.l.b16 %v232
      %v320 = vunpack.c.l.b16 %v233
      %v321 = vunpack.c.l.b16 %v234
      %v322 = vunpack.c.l.b16 %v235
      %v323 = vunpack.c.l.b16 %v236
      %v324 = vunpack.c.l.b16 %v237
      %v325 = vunpack.c.l.b16 %v238
      %v326 = vunpack.c.l.b16 %v239
      %v327 = vunpack.c.l.b16 %v240
      %v328 = vunpack.c.l.b16 %v241
      %v329 = vunpack.c.l.b16 %v242
      %v330 = vunpack.c.l.b16 %v243
      %v331 = vunpack.c.l.b16 %v244
      %v332 = vunpack.c.l.b16 %v245
      %v333 = vunpack.c.l.b16 %v246
      %v334 = vunpack.c.l.b16 %v247
      %v335 = vunpack.c.l.b16 %v248
      %v336 = vunpack.c.l.b16 %v249
      %v337 = vunpack.c.l.b16 %v250
      %v338 = vunpack.c.l.b16 %v251
      %v339 = vunpack.c.l.b16 %v252
      %v340 = vunpack.c.l.b16 %v253
      %v341 = vunpack.c.l.b16 %v254
      %v342 = vunpack.c.l.b16 %v255
      %v343 = vunpack.c.l.b16 %v256
      %v344 = vunpack.c.l.b16 %v257
      %v345 = vunpack.c.l.b16 %v258
      %v346 = vunpack.c.l.b16 %v259
      %v347 = vunpack.c.l.b16 %v260
      %v348 = vpack.c.b16 %v317, %v316
      %v349 = vpack.c.b16 %v319, %v318
      %v350 = vpack.c.b16 %v321, %v320
      %v351 = vpack.c.b16 %v323, %v322
      %v352 = vpack.c.b16 %v325, %v324
      %v353 = vpack.c.b16 %v327, %v326
      %v354 = vpack.c.b16 %v329, %v328
      %v355 = vpack.c.b16 %v331, %v330
      %v356 = vpack.c.b16 %v333, %v332
      %v357 = vpack.c.b16 %v335, %v334
      %v358 = vpack.c.b16 %v337, %v336
      %v359 = vpack.c.b16 %v339, %v338
      %v360 = vpack.c.b16 %v341, %v340
      %v361 = vpack.c.b16 %v343, %v342
      %v362 = vpack.c.b16 %v345, %v344
      %v363 = vpack.c.b16 %v347, %v346
      %v396 = vunpack.c.l.b16 %v261
      %v397 = vunpack.c.l.b16 %v262
      %v398 = vunpack.c.l.b16 %v263
      %v399 = vunpack.c.l.b16 %v264
      %v400 = vunpack.c.l.b16 %v265
      %v401 = vunpack.c.l.b16 %v266
      %v402 = vunpack.c.l.b16 %v267
      %v403 = vunpack.c.l.b16 %v268
      %v404 = vunpack.c.l.b16 %v269
      %v405 = vunpack.c.l.b16 %v270
      %v406 = vunpack.c.l.b16 %v271
      %v407 = vunpack.c.l.b16 %v272
      %v408 = vunpack.c.l.b16 %v273
      %v409 = vunpack.c.l.b16 %v274
      %v410 = vunpack.c.l.b16 %v275
      %v411 = vunpack.c.l.b16 %v276
      %v412 = vpack.c.b16 %v397, %v396
      %v413 = vpack.c.b16 %v399, %v398
      %v414 = vpack.c.b16 %v401, %v400
      %v415 = vpack.c.b16 %v403, %v402
      %v416 = vpack.c.b16 %v405, %v404
      %v417 = vpack.c.b16 %v407, %v406
      %v418 = vpack.c.b16 %v409, %v408
      %v419 = vpack.c.b16 %v411, %v410
      %428 = vmatprep.subr.bf16.mxu0 0
      %429 = vmatpush1.bf16.msra.mxu0 %v419
      %430 = vmatprep.subr.bf16.mxu0 0
      %431 = vmatpush1.bf16.msra.mxu0 %v418
      %432 = vmatprep.subr.bf16.mxu0 0
      %433 = vmatpush1.bf16.msra.mxu0 %v417
      %434 = vmatprep.subr.bf16.mxu0 0
      %435 = vmatpush1.bf16.msra.mxu0 %v416
      %436 = vmatprep.subr.bf16.mxu0 0
      %437 = vmatpush1.bf16.msra.mxu0 %v415
      %438 = vmatprep.subr.bf16.mxu0 0
      %439 = vmatpush1.bf16.msra.mxu0 %v414
      %440 = vmatprep.subr.bf16.mxu0 0
      %441 = vmatpush1.bf16.msra.mxu0 %v413
      %442 = vmatprep.subr.bf16.mxu0 0
      %443 = vmatpush1.bf16.msra.mxu0 %v412
      %444 = vmatprep.subr.bf16.mxu0 0
      %445 = vmatpush2.bf16.msra.mxu0 0
      %446 = vmatprep.subr.bf16.mxu0 0
      %447 = vmatpush2.bf16.msra.mxu0 0
      %448 = vmatprep.subr.bf16.mxu0 0
      %449 = vmatpush2.bf16.msra.mxu0 0
      %450 = vmatprep.subr.bf16.mxu0 0
      %451 = vmatpush2.bf16.msra.mxu0 0
      %452 = vmatprep.subr.bf16.mxu0 0
      %453 = vmatpush2.bf16.msra.mxu0 0
      %454 = vmatprep.subr.bf16.mxu0 0
      %455 = vmatpush2.bf16.msra.mxu0 0
      %456 = vmatprep.subr.bf16.mxu0 0
      %457 = vmatpush2.bf16.msra.mxu0 0
      %458 = vmatprep.subr.bf16.mxu0 0
      %459 = vmatpush2.bf16.msra.mxu0 0
      %460 = vmatprep.mubr.bf16.mxu0 0
      %461 = vmatmul.mubr.bf16.gmra.mxu0 %v348
      %v462 = vpop.f32.mrf.mxu0
      %v463 = vadd.f32 %v282, %v462
      %v464 = vpop.f32.mrf.mxu0
      %v465 = vpop.f32.mrf.mxu0
      %v466 = vadd.f32 %v282, %v465
      %v467 = vpop.f32.mrf.mxu0
      %468 = vmatprep.mubr.bf16.mxu0 0
      %469 = vmatmul.mubr.bf16.gmra.mxu0 %v349
      %v470 = vpop.f32.mrf.mxu0
      %v471 = vadd.f32 %v282, %v470
      %v472 = vpop.f32.mrf.mxu0
      %v473 = vpop.f32.mrf.mxu0
      %v474 = vadd.f32 %v282, %v473
      %v475 = vpop.f32.mrf.mxu0
      %476 = vmatprep.mubr.bf16.mxu0 0
      %477 = vmatmul.mubr.bf16.gmra.mxu0 %v350
      %v478 = vpop.f32.mrf.mxu0
      %v479 = vadd.f32 %v282, %v478
      %v480 = vpop.f32.mrf.mxu0
      %v481 = vpop.f32.mrf.mxu0
      %v482 = vadd.f32 %v282, %v481
      %v483 = vpop.f32.mrf.mxu0
      %484 = vmatprep.mubr.bf16.mxu0 0
      %485 = vmatmul.mubr.bf16.gmra.mxu0 %v351
      %v486 = vpop.f32.mrf.mxu0
      %v487 = vadd.f32 %v282, %v486
      %v488 = vpop.f32.mrf.mxu0
      %v489 = vpop.f32.mrf.mxu0
      %v490 = vadd.f32 %v282, %v489
      %v491 = vpop.f32.mrf.mxu0
      %492 = vmatprep.mubr.bf16.mxu0 0
      %493 = vmatmul.mubr.bf16.gmra.mxu0 %v352
      %v494 = vpop.f32.mrf.mxu0
      %v495 = vadd.f32 %v282, %v494
      %v496 = vpop.f32.mrf.mxu0
      %v497 = vpop.f32.mrf.mxu0
      %v498 = vadd.f32 %v282, %v497
      %v499 = vpop.f32.mrf.mxu0
      %500 = vmatprep.mubr.bf16.mxu0 0
      %501 = vmatmul.mubr.bf16.gmra.mxu0 %v353
      %v502 = vpop.f32.mrf.mxu0
      %v503 = vadd.f32 %v282, %v502
      %v504 = vpop.f32.mrf.mxu0
      %v505 = vpop.f32.mrf.mxu0
      %v506 = vadd.f32 %v282, %v505
      %v507 = vpop.f32.mrf.mxu0
      %508 = vmatprep.mubr.bf16.mxu0 0
      %509 = vmatmul.mubr.bf16.gmra.mxu0 %v354
      %v510 = vpop.f32.mrf.mxu0
      %v511 = vadd.f32 %v282, %v510
      %v512 = vpop.f32.mrf.mxu0
      %v513 = vpop.f32.mrf.mxu0
      %v514 = vadd.f32 %v282, %v513
      %v515 = vpop.f32.mrf.mxu0
      %516 = vmatprep.mubr.bf16.mxu0 0
      %517 = vmatmul.mubr.bf16.gmra.mxu0 %v355
      %v518 = vpop.f32.mrf.mxu0
      %v519 = vadd.f32 %v282, %v518
      %v520 = vpop.f32.mrf.mxu0
      %v521 = vpop.f32.mrf.mxu0
      %v522 = vadd.f32 %v282, %v521
      %v523 = vpop.f32.mrf.mxu0
      %524 = vmatprep.mubr.bf16.mxu0 0
      %525 = vmatmul.mubr.bf16.gmra.mxu0 %v356
      %v526 = vpop.f32.mrf.mxu0
      %v527 = vadd.f32 %v282, %v526
      %v528 = vpop.f32.mrf.mxu0
      %v529 = vpop.f32.mrf.mxu0
      %v530 = vadd.f32 %v282, %v529
      %v531 = vpop.f32.mrf.mxu0
      %532 = vmatprep.mubr.bf16.mxu0 0
      %533 = vmatmul.mubr.bf16.gmra.mxu0 %v357
      %v534 = vpop.f32.mrf.mxu0
      %v535 = vadd.f32 %v282, %v534
      %v536 = vpop.f32.mrf.mxu0
      %v537 = vpop.f32.mrf.mxu0
      %v538 = vadd.f32 %v282, %v537
      %v539 = vpop.f32.mrf.mxu0
      %540 = vmatprep.mubr.bf16.mxu0 0
      %541 = vmatmul.mubr.bf16.gmra.mxu0 %v358
      %v542 = vpop.f32.mrf.mxu0
      %v543 = vadd.f32 %v282, %v542
      %v544 = vpop.f32.mrf.mxu0
      %v545 = vpop.f32.mrf.mxu0
      %v546 = vadd.f32 %v282, %v545
      %v547 = vpop.f32.mrf.mxu0
      %548 = vmatprep.mubr.bf16.mxu0 0
      %549 = vmatmul.mubr.bf16.gmra.mxu0 %v359
      %v550 = vpop.f32.mrf.mxu0
      %v551 = vadd.f32 %v282, %v550
      %v552 = vpop.f32.mrf.mxu0
      %v553 = vpop.f32.mrf.mxu0
      %v554 = vadd.f32 %v282, %v553
      %v555 = vpop.f32.mrf.mxu0
      %556 = vmatprep.mubr.bf16.mxu0 0
      %557 = vmatmul.mubr.bf16.gmra.mxu0 %v360
      %v558 = vpop.f32.mrf.mxu0
      %v559 = vadd.f32 %v282, %v558
      %v560 = vpop.f32.mrf.mxu0
      %v561 = vpop.f32.mrf.mxu0
      %v562 = vadd.f32 %v282, %v561
      %v563 = vpop.f32.mrf.mxu0
      %564 = vmatprep.mubr.bf16.mxu0 0
      %565 = vmatmul.mubr.bf16.gmra.mxu0 %v361
      %v566 = vpop.f32.mrf.mxu0
      %v567 = vadd.f32 %v282, %v566
      %v568 = vpop.f32.mrf.mxu0
      %v569 = vpop.f32.mrf.mxu0
      %v570 = vadd.f32 %v282, %v569
      %v571 = vpop.f32.mrf.mxu0
      %572 = vmatprep.mubr.bf16.mxu0 0
      %573 = vmatmul.mubr.bf16.gmra.mxu0 %v362
      %v574 = vpop.f32.mrf.mxu0
      %v575 = vadd.f32 %v282, %v574
      %v576 = vpop.f32.mrf.mxu0
      %v577 = vpop.f32.mrf.mxu0
      %v578 = vadd.f32 %v282, %v577
      %v579 = vpop.f32.mrf.mxu0
      %580 = vmatprep.mubr.bf16.mxu0 0
      %581 = vmatmul.mubr.bf16.gmra.mxu0 %v363
      %v582 = vpop.f32.mrf.mxu0
      %v583 = vadd.f32 %v282, %v582
      %v584 = vpop.f32.mrf.mxu0
      %v585 = vpop.f32.mrf.mxu0
      %v586 = vadd.f32 %v282, %v585
      %v587 = vpop.f32.mrf.mxu0
      %588 = vdwg.mxu0
      %v589 = vmul.f32 %v463, %v463
      %v590 = vmul.f32 %v466, %v466
      %v591 = vmul.f32 %v471, %v471
      %v592 = vmul.f32 %v474, %v474
      %v593 = vmul.f32 %v479, %v479
      %v594 = vmul.f32 %v482, %v482
      %v595 = vmul.f32 %v487, %v487
      %v596 = vmul.f32 %v490, %v490
      %v597 = vmul.f32 %v495, %v495
      %v598 = vmul.f32 %v498, %v498
      %v599 = vmul.f32 %v503, %v503
      %v600 = vmul.f32 %v506, %v506
      %v601 = vmul.f32 %v511, %v511
      %v602 = vmul.f32 %v514, %v514
      %v603 = vmul.f32 %v519, %v519
      %v604 = vmul.f32 %v522, %v522
      %v605 = vmul.f32 %v527, %v527
      %v606 = vmul.f32 %v530, %v530
      %v607 = vmul.f32 %v535, %v535
      %v608 = vmul.f32 %v538, %v538
      %v609 = vmul.f32 %v543, %v543
      %v610 = vmul.f32 %v546, %v546
      %v611 = vmul.f32 %v551, %v551
      %v612 = vmul.f32 %v554, %v554
      %v613 = vmul.f32 %v559, %v559
      %v614 = vmul.f32 %v562, %v562
      %v615 = vmul.f32 %v567, %v567
      %v616 = vmul.f32 %v570, %v570
      %v617 = vmul.f32 %v575, %v575
      %v618 = vmul.f32 %v578, %v578
      %v619 = vmul.f32 %v583, %v583
      %v620 = vmul.f32 %v586, %v586
      %v621 = vpack.c.bf16 %v590, %v589
      %v622 = vpack.c.bf16 %v592, %v591
      %v623 = vpack.c.bf16 %v594, %v593
      %v624 = vpack.c.bf16 %v596, %v595
      %v625 = vpack.c.bf16 %v598, %v597
      %v626 = vpack.c.bf16 %v600, %v599
      %v627 = vpack.c.bf16 %v602, %v601
      %v628 = vpack.c.bf16 %v604, %v603
      %v629 = vpack.c.bf16 %v606, %v605
      %v630 = vpack.c.bf16 %v608, %v607
      %v631 = vpack.c.bf16 %v610, %v609
      %v632 = vpack.c.bf16 %v612, %v611
      %v633 = vpack.c.bf16 %v614, %v613
      %v634 = vpack.c.bf16 %v616, %v615
      %v635 = vpack.c.bf16 %v618, %v617
      %v636 = vpack.c.bf16 %v620, %v619
      %v637 = vld [vmem:[%s3] sm:$0xf]
      %v638 = vld [vmem:[%s3 + $0x4] sm:$0xf]
      %v639 = vld [vmem:[%s3 + $0x8] sm:$0xf]
      %v640 = vld [vmem:[%s3 + $0xc] sm:$0xf]
      %v641 = vld [vmem:[%s3 + $0x10] sm:$0xf]
      %v642 = vld [vmem:[%s3 + $0x14] sm:$0xf]
      %v643 = vld [vmem:[%s3 + $0x18] sm:$0xf]
      %v644 = vld [vmem:[%s3 + $0x1c] sm:$0xf]
      %v645 = vld [vmem:[%s3 + $0x20] sm:$0xf]
      %v646 = vld [vmem:[%s3 + $0x24] sm:$0xf]
      %v647 = vld [vmem:[%s3 + $0x28] sm:$0xf]
      %v648 = vld [vmem:[%s3 + $0x2c] sm:$0xf]
      %v649 = vld [vmem:[%s3 + $0x30] sm:$0xf]
      %v650 = vld [vmem:[%s3 + $0x34] sm:$0xf]
      %v651 = vld [vmem:[%s3 + $0x38] sm:$0xf]
      %v652 = vld [vmem:[%s3 + $0x3c] sm:$0xf]
      %v653 = vld [vmem:[%s4] sm:$0x1]
      %v655 = vlaneseq
      %v656 = vshrl.u32 %v655, 7
      %v657 = vsub.s32 0, %v656
      %v658 = vrot.slane %v653, %v657
      %v676 = vunpack.c.l.b16 %v637
      %v677 = vunpack.c.l.b16 %v638
      %v678 = vunpack.c.l.b16 %v639
      %v679 = vunpack.c.l.b16 %v640
      %v680 = vunpack.c.l.b16 %v641
      %v681 = vunpack.c.l.b16 %v642
      %v682 = vunpack.c.l.b16 %v643
      %v683 = vunpack.c.l.b16 %v644
      %v684 = vunpack.c.l.b16 %v645
      %v685 = vunpack.c.l.b16 %v646
      %v686 = vunpack.c.l.b16 %v647
      %v687 = vunpack.c.l.b16 %v648
      %v688 = vunpack.c.l.b16 %v649
      %v689 = vunpack.c.l.b16 %v650
      %v690 = vunpack.c.l.b16 %v651
      %v691 = vunpack.c.l.b16 %v652
      %v692 = vpack.c.b16 %v677, %v676
      %v693 = vpack.c.b16 %v679, %v678
      %v694 = vpack.c.b16 %v681, %v680
      %v695 = vpack.c.b16 %v683, %v682
      %v696 = vpack.c.b16 %v685, %v684
      %v697 = vpack.c.b16 %v687, %v686
      %v698 = vpack.c.b16 %v689, %v688
      %v699 = vpack.c.b16 %v691, %v690
      %708 = vmatprep.subr.bf16.mxu0 0
      %709 = vmatpush1.bf16.msra.mxu0 %v699
      %710 = vmatprep.subr.bf16.mxu0 0
      %711 = vmatpush1.bf16.msra.mxu0 %v698
      %712 = vmatprep.subr.bf16.mxu0 0
      %713 = vmatpush1.bf16.msra.mxu0 %v697
      %714 = vmatprep.subr.bf16.mxu0 0
      %715 = vmatpush1.bf16.msra.mxu0 %v696
      %716 = vmatprep.subr.bf16.mxu0 0
      %717 = vmatpush1.bf16.msra.mxu0 %v695
      %718 = vmatprep.subr.bf16.mxu0 0
      %719 = vmatpush1.bf16.msra.mxu0 %v694
      %720 = vmatprep.subr.bf16.mxu0 0
      %721 = vmatpush1.bf16.msra.mxu0 %v693
      %722 = vmatprep.subr.bf16.mxu0 0
      %723 = vmatpush1.bf16.msra.mxu0 %v692
      %724 = vmatprep.subr.bf16.mxu0 0
      %725 = vmatpush2.bf16.msra.mxu0 0
      %726 = vmatprep.subr.bf16.mxu0 0
      %727 = vmatpush2.bf16.msra.mxu0 0
      %728 = vmatprep.subr.bf16.mxu0 0
      %729 = vmatpush2.bf16.msra.mxu0 0
      %730 = vmatprep.subr.bf16.mxu0 0
      %731 = vmatpush2.bf16.msra.mxu0 0
      %732 = vmatprep.subr.bf16.mxu0 0
      %733 = vmatpush2.bf16.msra.mxu0 0
      %734 = vmatprep.subr.bf16.mxu0 0
      %735 = vmatpush2.bf16.msra.mxu0 0
      %736 = vmatprep.subr.bf16.mxu0 0
      %737 = vmatpush2.bf16.msra.mxu0 0
      %738 = vmatprep.subr.bf16.mxu0 0
      %739 = vmatpush2.bf16.msra.mxu0 0
      %740 = vmatprep.mubr.bf16.mxu0 0
      %741 = vmatmul.mubr.bf16.gmra.mxu0 %v621
      %v742 = vpop.f32.mrf.mxu0
      %v743 = vadd.f32 %v658, %v742
      %v744 = vpop.f32.mrf.mxu0
      %v745 = vpop.f32.mrf.mxu0
      %v746 = vadd.f32 %v658, %v745
      %v747 = vpop.f32.mrf.mxu0
      %748 = vmatprep.mubr.bf16.mxu0 0
      %749 = vmatmul.mubr.bf16.gmra.mxu0 %v622
      %v750 = vpop.f32.mrf.mxu0
      %v751 = vadd.f32 %v658, %v750
      %v752 = vpop.f32.mrf.mxu0
      %v753 = vpop.f32.mrf.mxu0
      %v754 = vadd.f32 %v658, %v753
      %v755 = vpop.f32.mrf.mxu0
      %756 = vmatprep.mubr.bf16.mxu0 0
      %757 = vmatmul.mubr.bf16.gmra.mxu0 %v623
      %v758 = vpop.f32.mrf.mxu0
      %v759 = vadd.f32 %v658, %v758
      %v760 = vpop.f32.mrf.mxu0
      %v761 = vpop.f32.mrf.mxu0
      %v762 = vadd.f32 %v658, %v761
      %v763 = vpop.f32.mrf.mxu0
      %764 = vmatprep.mubr.bf16.mxu0 0
      %765 = vmatmul.mubr.bf16.gmra.mxu0 %v624
      %v766 = vpop.f32.mrf.mxu0
      %v767 = vadd.f32 %v658, %v766
      %v768 = vpop.f32.mrf.mxu0
      %v769 = vpop.f32.mrf.mxu0
      %v770 = vadd.f32 %v658, %v769
      %v771 = vpop.f32.mrf.mxu0
      %772 = vmatprep.mubr.bf16.mxu0 0
      %773 = vmatmul.mubr.bf16.gmra.mxu0 %v625
      %v774 = vpop.f32.mrf.mxu0
      %v775 = vadd.f32 %v658, %v774
      %v776 = vpop.f32.mrf.mxu0
      %v777 = vpop.f32.mrf.mxu0
      %v778 = vadd.f32 %v658, %v777
      %v779 = vpop.f32.mrf.mxu0
      %780 = vmatprep.mubr.bf16.mxu0 0
      %781 = vmatmul.mubr.bf16.gmra.mxu0 %v626
      %v782 = vpop.f32.mrf.mxu0
      %v783 = vadd.f32 %v658, %v782
      %v784 = vpop.f32.mrf.mxu0
      %v785 = vpop.f32.mrf.mxu0
      %v786 = vadd.f32 %v658, %v785
      %v787 = vpop.f32.mrf.mxu0
      %788 = vmatprep.mubr.bf16.mxu0 0
      %789 = vmatmul.mubr.bf16.gmra.mxu0 %v627
      %v790 = vpop.f32.mrf.mxu0
      %v791 = vadd.f32 %v658, %v790
      %v792 = vpop.f32.mrf.mxu0
      %v793 = vpop.f32.mrf.mxu0
      %v794 = vadd.f32 %v658, %v793
      %v795 = vpop.f32.mrf.mxu0
      %796 = vmatprep.mubr.bf16.mxu0 0
      %797 = vmatmul.mubr.bf16.gmra.mxu0 %v628
      %v798 = vpop.f32.mrf.mxu0
      %v799 = vadd.f32 %v658, %v798
      %v800 = vpop.f32.mrf.mxu0
      %v801 = vpop.f32.mrf.mxu0
      %v802 = vadd.f32 %v658, %v801
      %v803 = vpop.f32.mrf.mxu0
      %804 = vmatprep.mubr.bf16.mxu0 0
      %805 = vmatmul.mubr.bf16.gmra.mxu0 %v629
      %v806 = vpop.f32.mrf.mxu0
      %v807 = vadd.f32 %v658, %v806
      %v808 = vpop.f32.mrf.mxu0
      %v809 = vpop.f32.mrf.mxu0
      %v810 = vadd.f32 %v658, %v809
      %v811 = vpop.f32.mrf.mxu0
      %812 = vmatprep.mubr.bf16.mxu0 0
      %813 = vmatmul.mubr.bf16.gmra.mxu0 %v630
      %v814 = vpop.f32.mrf.mxu0
      %v815 = vadd.f32 %v658, %v814
      %v816 = vpop.f32.mrf.mxu0
      %v817 = vpop.f32.mrf.mxu0
      %v818 = vadd.f32 %v658, %v817
      %v819 = vpop.f32.mrf.mxu0
      %820 = vmatprep.mubr.bf16.mxu0 0
      %821 = vmatmul.mubr.bf16.gmra.mxu0 %v631
      %v822 = vpop.f32.mrf.mxu0
      %v823 = vadd.f32 %v658, %v822
      %v824 = vpop.f32.mrf.mxu0
      %v825 = vpop.f32.mrf.mxu0
      %v826 = vadd.f32 %v658, %v825
      %v827 = vpop.f32.mrf.mxu0
      %828 = vmatprep.mubr.bf16.mxu0 0
      %829 = vmatmul.mubr.bf16.gmra.mxu0 %v632
      %v830 = vpop.f32.mrf.mxu0
      %v831 = vadd.f32 %v658, %v830
      %v832 = vpop.f32.mrf.mxu0
      %v833 = vpop.f32.mrf.mxu0
      %v834 = vadd.f32 %v658, %v833
      %v835 = vpop.f32.mrf.mxu0
      %836 = vmatprep.mubr.bf16.mxu0 0
      %837 = vmatmul.mubr.bf16.gmra.mxu0 %v633
      %v838 = vpop.f32.mrf.mxu0
      %v839 = vadd.f32 %v658, %v838
      %v840 = vpop.f32.mrf.mxu0
      %v841 = vpop.f32.mrf.mxu0
      %v842 = vadd.f32 %v658, %v841
      %v843 = vpop.f32.mrf.mxu0
      %844 = vmatprep.mubr.bf16.mxu0 0
      %845 = vmatmul.mubr.bf16.gmra.mxu0 %v634
      %v846 = vpop.f32.mrf.mxu0
      %v847 = vadd.f32 %v658, %v846
      %v848 = vpop.f32.mrf.mxu0
      %v849 = vpop.f32.mrf.mxu0
      %v850 = vadd.f32 %v658, %v849
      %v851 = vpop.f32.mrf.mxu0
      %852 = vmatprep.mubr.bf16.mxu0 0
      %853 = vmatmul.mubr.bf16.gmra.mxu0 %v635
      %v854 = vpop.f32.mrf.mxu0
      %v855 = vadd.f32 %v658, %v854
      %v856 = vpop.f32.mrf.mxu0
      %v857 = vpop.f32.mrf.mxu0
      %v858 = vadd.f32 %v658, %v857
      %v859 = vpop.f32.mrf.mxu0
      %860 = vmatprep.mubr.bf16.mxu0 0
      %861 = vmatmul.mubr.bf16.gmra.mxu0 %v636
      %v862 = vpop.f32.mrf.mxu0
      %v863 = vadd.f32 %v658, %v862
      %v864 = vpop.f32.mrf.mxu0
      %v865 = vpop.f32.mrf.mxu0
      %v866 = vadd.f32 %v658, %v865
      %v867 = vpop.f32.mrf.mxu0
      %868 = vdwg.mxu0
      %v869 = vmax.f32 %v743, 1e-06
      %v870 = vmax.f32 %v746, 1e-06
      %v871 = vmax.f32 %v751, 1e-06
      %v872 = vmax.f32 %v754, 1e-06
      %v873 = vmax.f32 %v759, 1e-06
      %v874 = vmax.f32 %v762, 1e-06
      %v875 = vmax.f32 %v767, 1e-06
      %v876 = vmax.f32 %v770, 1e-06
      %v877 = vmax.f32 %v775, 1e-06
      %v878 = vmax.f32 %v778, 1e-06
      %v879 = vmax.f32 %v783, 1e-06
      %v880 = vmax.f32 %v786, 1e-06
      %v881 = vmax.f32 %v791, 1e-06
      %v882 = vmax.f32 %v794, 1e-06
      %v883 = vmax.f32 %v799, 1e-06
      %v884 = vmax.f32 %v802, 1e-06
      %v885 = vmax.f32 %v807, 1e-06
      %v886 = vmax.f32 %v810, 1e-06
      %v887 = vmax.f32 %v815, 1e-06
      %v888 = vmax.f32 %v818, 1e-06
      %v889 = vmax.f32 %v823, 1e-06
      %v890 = vmax.f32 %v826, 1e-06
      %v891 = vmax.f32 %v831, 1e-06
      %v892 = vmax.f32 %v834, 1e-06
      %v893 = vmax.f32 %v839, 1e-06
      %v894 = vmax.f32 %v842, 1e-06
      %v895 = vmax.f32 %v847, 1e-06
      %v896 = vmax.f32 %v850, 1e-06
      %v897 = vmax.f32 %v855, 1e-06
      %v898 = vmax.f32 %v858, 1e-06
      %v899 = vmax.f32 %v863, 1e-06
      %v900 = vmax.f32 %v866, 1e-06
      %v901 = vrsqrt.pop %v869
      %v902 = vmul.f32 %v869, %v901
      %vm903 = vcmp.eq.f32.partialorder %v869, inf
      %v904 = vsel %vm903, %v869, %v902
      %vm905 = vcmp.eq.f32.partialorder %v869, 0.0
      %v906 = vand.u32 %v869, 2147483648
      %v907 = vsel %vm905, %v906, %v904
      %v908 = vrsqrt.pop %v870
      %v909 = vmul.f32 %v870, %v908
      %vm910 = vcmp.eq.f32.partialorder %v870, inf
      %v911 = vsel %vm910, %v870, %v909
      %vm912 = vcmp.eq.f32.partialorder %v870, 0.0
      %v913 = vand.u32 %v870, 2147483648
      %v914 = vsel %vm912, %v913, %v911
      %v915 = vrsqrt.pop %v871
      %v916 = vmul.f32 %v871, %v915
      %vm917 = vcmp.eq.f32.partialorder %v871, inf
      %v918 = vsel %vm917, %v871, %v916
      %vm919 = vcmp.eq.f32.partialorder %v871, 0.0
      %v920 = vand.u32 %v871, 2147483648
      %v921 = vsel %vm919, %v920, %v918
      %v922 = vrsqrt.pop %v872
      %v923 = vmul.f32 %v872, %v922
      %vm924 = vcmp.eq.f32.partialorder %v872, inf
      %v925 = vsel %vm924, %v872, %v923
      %vm926 = vcmp.eq.f32.partialorder %v872, 0.0
      %v927 = vand.u32 %v872, 2147483648
      %v928 = vsel %vm926, %v927, %v925
      %v929 = vrsqrt.pop %v873
      %v930 = vmul.f32 %v873, %v929
      %vm931 = vcmp.eq.f32.partialorder %v873, inf
      %v932 = vsel %vm931, %v873, %v930
      %vm933 = vcmp.eq.f32.partialorder %v873, 0.0
      %v934 = vand.u32 %v873, 2147483648
      %v935 = vsel %vm933, %v934, %v932
      %v936 = vrsqrt.pop %v874
      %v937 = vmul.f32 %v874, %v936
      %vm938 = vcmp.eq.f32.partialorder %v874, inf
      %v939 = vsel %vm938, %v874, %v937
      %vm940 = vcmp.eq.f32.partialorder %v874, 0.0
      %v941 = vand.u32 %v874, 2147483648
      %v942 = vsel %vm940, %v941, %v939
      %v943 = vrsqrt.pop %v875
      %v944 = vmul.f32 %v875, %v943
      %vm945 = vcmp.eq.f32.partialorder %v875, inf
      %v946 = vsel %vm945, %v875, %v944
      %vm947 = vcmp.eq.f32.partialorder %v875, 0.0
      %v948 = vand.u32 %v875, 2147483648
      %v949 = vsel %vm947, %v948, %v946
      %v950 = vrsqrt.pop %v876
      %v951 = vmul.f32 %v876, %v950
      %vm952 = vcmp.eq.f32.partialorder %v876, inf
      %v953 = vsel %vm952, %v876, %v951
      %vm954 = vcmp.eq.f32.partialorder %v876, 0.0
      %v955 = vand.u32 %v876, 2147483648
      %v956 = vsel %vm954, %v955, %v953
      %v957 = vrsqrt.pop %v877
      %v958 = vmul.f32 %v877, %v957
      %vm959 = vcmp.eq.f32.partialorder %v877, inf
      %v960 = vsel %vm959, %v877, %v958
      %vm961 = vcmp.eq.f32.partialorder %v877, 0.0
      %v962 = vand.u32 %v877, 2147483648
      %v963 = vsel %vm961, %v962, %v960
      %v964 = vrsqrt.pop %v878
      %v965 = vmul.f32 %v878, %v964
      %vm966 = vcmp.eq.f32.partialorder %v878, inf
      %v967 = vsel %vm966, %v878, %v965
      %vm968 = vcmp.eq.f32.partialorder %v878, 0.0
      %v969 = vand.u32 %v878, 2147483648
      %v970 = vsel %vm968, %v969, %v967
      %v971 = vrsqrt.pop %v879
      %v972 = vmul.f32 %v879, %v971
      %vm973 = vcmp.eq.f32.partialorder %v879, inf
      %v974 = vsel %vm973, %v879, %v972
      %vm975 = vcmp.eq.f32.partialorder %v879, 0.0
      %v976 = vand.u32 %v879, 2147483648
      %v977 = vsel %vm975, %v976, %v974
      %v978 = vrsqrt.pop %v880
      %v979 = vmul.f32 %v880, %v978
      %vm980 = vcmp.eq.f32.partialorder %v880, inf
      %v981 = vsel %vm980, %v880, %v979
      %vm982 = vcmp.eq.f32.partialorder %v880, 0.0
      %v983 = vand.u32 %v880, 2147483648
      %v984 = vsel %vm982, %v983, %v981
      %v985 = vrsqrt.pop %v881
      %v986 = vmul.f32 %v881, %v985
      %vm987 = vcmp.eq.f32.partialorder %v881, inf
      %v988 = vsel %vm987, %v881, %v986
      %vm989 = vcmp.eq.f32.partialorder %v881, 0.0
      %v990 = vand.u32 %v881, 2147483648
      %v991 = vsel %vm989, %v990, %v988
      %v992 = vrsqrt.pop %v882
      %v993 = vmul.f32 %v882, %v992
      %vm994 = vcmp.eq.f32.partialorder %v882, inf
      %v995 = vsel %vm994, %v882, %v993
      %vm996 = vcmp.eq.f32.partialorder %v882, 0.0
      %v997 = vand.u32 %v882, 2147483648
      %v998 = vsel %vm996, %v997, %v995
      %v999 = vrsqrt.pop %v883
      %v1000 = vmul.f32 %v883, %v999
      %vm1001 = vcmp.eq.f32.partialorder %v883, inf
      %v1002 = vsel %vm1001, %v883, %v1000
      %vm1003 = vcmp.eq.f32.partialorder %v883, 0.0
      %v1004 = vand.u32 %v883, 2147483648
      %v1005 = vsel %vm1003, %v1004, %v1002
      %v1006 = vrsqrt.pop %v884
      %v1007 = vmul.f32 %v884, %v1006
      %vm1008 = vcmp.eq.f32.partialorder %v884, inf
      %v1009 = vsel %vm1008, %v884, %v1007
      %vm1010 = vcmp.eq.f32.partialorder %v884, 0.0
      %v1011 = vand.u32 %v884, 2147483648
      %v1012 = vsel %vm1010, %v1011, %v1009
      %v1013 = vrsqrt.pop %v885
      %v1014 = vmul.f32 %v885, %v1013
      %vm1015 = vcmp.eq.f32.partialorder %v885, inf
      %v1016 = vsel %vm1015, %v885, %v1014
      %vm1017 = vcmp.eq.f32.partialorder %v885, 0.0
      %v1018 = vand.u32 %v885, 2147483648
      %v1019 = vsel %vm1017, %v1018, %v1016
      %v1020 = vrsqrt.pop %v886
      %v1021 = vmul.f32 %v886, %v1020
      %vm1022 = vcmp.eq.f32.partialorder %v886, inf
      %v1023 = vsel %vm1022, %v886, %v1021
      %vm1024 = vcmp.eq.f32.partialorder %v886, 0.0
      %v1025 = vand.u32 %v886, 2147483648
      %v1026 = vsel %vm1024, %v1025, %v1023
      %v1027 = vrsqrt.pop %v887
      %v1028 = vmul.f32 %v887, %v1027
      %vm1029 = vcmp.eq.f32.partialorder %v887, inf
      %v1030 = vsel %vm1029, %v887, %v1028
      %vm1031 = vcmp.eq.f32.partialorder %v887, 0.0
      %v1032 = vand.u32 %v887, 2147483648
      %v1033 = vsel %vm1031, %v1032, %v1030
      %v1034 = vrsqrt.pop %v888
      %v1035 = vmul.f32 %v888, %v1034
      %vm1036 = vcmp.eq.f32.partialorder %v888, inf
      %v1037 = vsel %vm1036, %v888, %v1035
      %vm1038 = vcmp.eq.f32.partialorder %v888, 0.0
      %v1039 = vand.u32 %v888, 2147483648
      %v1040 = vsel %vm1038, %v1039, %v1037
      %v1041 = vrsqrt.pop %v889
      %v1042 = vmul.f32 %v889, %v1041
      %vm1043 = vcmp.eq.f32.partialorder %v889, inf
      %v1044 = vsel %vm1043, %v889, %v1042
      %vm1045 = vcmp.eq.f32.partialorder %v889, 0.0
      %v1046 = vand.u32 %v889, 2147483648
      %v1047 = vsel %vm1045, %v1046, %v1044
      %v1048 = vrsqrt.pop %v890
      %v1049 = vmul.f32 %v890, %v1048
      %vm1050 = vcmp.eq.f32.partialorder %v890, inf
      %v1051 = vsel %vm1050, %v890, %v1049
      %vm1052 = vcmp.eq.f32.partialorder %v890, 0.0
      %v1053 = vand.u32 %v890, 2147483648
      %v1054 = vsel %vm1052, %v1053, %v1051
      %v1055 = vrsqrt.pop %v891
      %v1056 = vmul.f32 %v891, %v1055
      %vm1057 = vcmp.eq.f32.partialorder %v891, inf
      %v1058 = vsel %vm1057, %v891, %v1056
      %vm1059 = vcmp.eq.f32.partialorder %v891, 0.0
      %v1060 = vand.u32 %v891, 2147483648
      %v1061 = vsel %vm1059, %v1060, %v1058
      %v1062 = vrsqrt.pop %v892
      %v1063 = vmul.f32 %v892, %v1062
      %vm1064 = vcmp.eq.f32.partialorder %v892, inf
      %v1065 = vsel %vm1064, %v892, %v1063
      %vm1066 = vcmp.eq.f32.partialorder %v892, 0.0
      %v1067 = vand.u32 %v892, 2147483648
      %v1068 = vsel %vm1066, %v1067, %v1065
      %v1069 = vrsqrt.pop %v893
      %v1070 = vmul.f32 %v893, %v1069
      %vm1071 = vcmp.eq.f32.partialorder %v893, inf
      %v1072 = vsel %vm1071, %v893, %v1070
      %vm1073 = vcmp.eq.f32.partialorder %v893, 0.0
      %v1074 = vand.u32 %v893, 2147483648
      %v1075 = vsel %vm1073, %v1074, %v1072
      %v1076 = vrsqrt.pop %v894
      %v1077 = vmul.f32 %v894, %v1076
      %vm1078 = vcmp.eq.f32.partialorder %v894, inf
      %v1079 = vsel %vm1078, %v894, %v1077
      %vm1080 = vcmp.eq.f32.partialorder %v894, 0.0
      %v1081 = vand.u32 %v894, 2147483648
      %v1082 = vsel %vm1080, %v1081, %v1079
      %v1083 = vrsqrt.pop %v895
      %v1084 = vmul.f32 %v895, %v1083
      %vm1085 = vcmp.eq.f32.partialorder %v895, inf
      %v1086 = vsel %vm1085, %v895, %v1084
      %vm1087 = vcmp.eq.f32.partialorder %v895, 0.0
      %v1088 = vand.u32 %v895, 2147483648
      %v1089 = vsel %vm1087, %v1088, %v1086
      %v1090 = vrsqrt.pop %v896
      %v1091 = vmul.f32 %v896, %v1090
      %vm1092 = vcmp.eq.f32.partialorder %v896, inf
      %v1093 = vsel %vm1092, %v896, %v1091
      %vm1094 = vcmp.eq.f32.partialorder %v896, 0.0
      %v1095 = vand.u32 %v896, 2147483648
      %v1096 = vsel %vm1094, %v1095, %v1093
      %v1097 = vrsqrt.pop %v897
      %v1098 = vmul.f32 %v897, %v1097
      %vm1099 = vcmp.eq.f32.partialorder %v897, inf
      %v1100 = vsel %vm1099, %v897, %v1098
      %vm1101 = vcmp.eq.f32.partialorder %v897, 0.0
      %v1102 = vand.u32 %v897, 2147483648
      %v1103 = vsel %vm1101, %v1102, %v1100
      %v1104 = vrsqrt.pop %v898
      %v1105 = vmul.f32 %v898, %v1104
      %vm1106 = vcmp.eq.f32.partialorder %v898, inf
      %v1107 = vsel %vm1106, %v898, %v1105
      %vm1108 = vcmp.eq.f32.partialorder %v898, 0.0
      %v1109 = vand.u32 %v898, 2147483648
      %v1110 = vsel %vm1108, %v1109, %v1107
      %v1111 = vrsqrt.pop %v899
      %v1112 = vmul.f32 %v899, %v1111
      %vm1113 = vcmp.eq.f32.partialorder %v899, inf
      %v1114 = vsel %vm1113, %v899, %v1112
      %vm1115 = vcmp.eq.f32.partialorder %v899, 0.0
      %v1116 = vand.u32 %v899, 2147483648
      %v1117 = vsel %vm1115, %v1116, %v1114
      %v1118 = vrsqrt.pop %v900
      %v1119 = vmul.f32 %v900, %v1118
      %vm1120 = vcmp.eq.f32.partialorder %v900, inf
      %v1121 = vsel %vm1120, %v900, %v1119
      %vm1122 = vcmp.eq.f32.partialorder %v900, 0.0
      %v1123 = vand.u32 %v900, 2147483648
      %v1124 = vsel %vm1122, %v1123, %v1121
      %v1125 = vmul.f32 %v463, %v907
      %v1126 = vmul.f32 %v466, %v914
      %v1127 = vmul.f32 %v471, %v921
      %v1128 = vmul.f32 %v474, %v928
      %v1129 = vmul.f32 %v479, %v935
      %v1130 = vmul.f32 %v482, %v942
      %v1131 = vmul.f32 %v487, %v949
      %v1132 = vmul.f32 %v490, %v956
      %v1133 = vmul.f32 %v495, %v963
      %v1134 = vmul.f32 %v498, %v970
      %v1135 = vmul.f32 %v503, %v977
      %v1136 = vmul.f32 %v506, %v984
      %v1137 = vmul.f32 %v511, %v991
      %v1138 = vmul.f32 %v514, %v998
      %v1139 = vmul.f32 %v519, %v1005
      %v1140 = vmul.f32 %v522, %v1012
      %v1141 = vmul.f32 %v527, %v1019
      %v1142 = vmul.f32 %v530, %v1026
      %v1143 = vmul.f32 %v535, %v1033
      %v1144 = vmul.f32 %v538, %v1040
      %v1145 = vmul.f32 %v543, %v1047
      %v1146 = vmul.f32 %v546, %v1054
      %v1147 = vmul.f32 %v551, %v1061
      %v1148 = vmul.f32 %v554, %v1068
      %v1149 = vmul.f32 %v559, %v1075
      %v1150 = vmul.f32 %v562, %v1082
      %v1151 = vmul.f32 %v567, %v1089
      %v1152 = vmul.f32 %v570, %v1096
      %v1153 = vmul.f32 %v575, %v1103
      %v1154 = vmul.f32 %v578, %v1110
      %v1155 = vmul.f32 %v583, %v1117
      %v1156 = vmul.f32 %v586, %v1124
      %1157 = vst [vmem:[%s226] sm:$0xff] %v1125
      %1158 = vst [vmem:[%s226 + $0x8] sm:$0xff] %v1126
      %1159 = vst [vmem:[%s226 + $0x10] sm:$0xff] %v1127
      %1160 = vst [vmem:[%s226 + $0x18] sm:$0xff] %v1128
      %1161 = vst [vmem:[%s226 + $0x20] sm:$0xff] %v1129
      %1162 = vst [vmem:[%s226 + $0x28] sm:$0xff] %v1130
      %1163 = vst [vmem:[%s226 + $0x30] sm:$0xff] %v1131
      %1164 = vst [vmem:[%s226 + $0x38] sm:$0xff] %v1132
      %1165 = vst [vmem:[%s226 + $0x40] sm:$0xff] %v1133
      %1166 = vst [vmem:[%s226 + $0x48] sm:$0xff] %v1134
      %1167 = vst [vmem:[%s226 + $0x50] sm:$0xff] %v1135
      %1168 = vst [vmem:[%s226 + $0x58] sm:$0xff] %v1136
      %1169 = vst [vmem:[%s226 + $0x60] sm:$0xff] %v1137
      %1170 = vst [vmem:[%s226 + $0x68] sm:$0xff] %v1138
      %1171 = vst [vmem:[%s226 + $0x70] sm:$0xff] %v1139
      %1172 = vst [vmem:[%s226 + $0x78] sm:$0xff] %v1140
      %1173 = vst [vmem:[%s226 + $0x80] sm:$0xff] %v1141
      %1174 = vst [vmem:[%s226 + $0x88] sm:$0xff] %v1142
      %1175 = vst [vmem:[%s226 + $0x90] sm:$0xff] %v1143
      %1176 = vst [vmem:[%s226 + $0x98] sm:$0xff] %v1144
      %1177 = vst [vmem:[%s226 + $0xa0] sm:$0xff] %v1145
      %1178 = vst [vmem:[%s226 + $0xa8] sm:$0xff] %v1146
      %1179 = vst [vmem:[%s226 + $0xb0] sm:$0xff] %v1147
      %1180 = vst [vmem:[%s226 + $0xb8] sm:$0xff] %v1148
      %1181 = vst [vmem:[%s226 + $0xc0] sm:$0xff] %v1149
      %1182 = vst [vmem:[%s226 + $0xc8] sm:$0xff] %v1150
      %1183 = vst [vmem:[%s226 + $0xd0] sm:$0xff] %v1151
      %1184 = vst [vmem:[%s226 + $0xd8] sm:$0xff] %v1152
      %1185 = vst [vmem:[%s226 + $0xe0] sm:$0xff] %v1153
      %1186 = vst [vmem:[%s226 + $0xe8] sm:$0xff] %v1154
      %1187 = vst [vmem:[%s226 + $0xf0] sm:$0xff] %v1155
      %1188 = vst [vmem:[%s226 + $0xf8] sm:$0xff] %v1156
      %s1189 = smul.u32 32, %s16
      %p1190 = scmp.lt.s32.totalorder %s1189, 63
      %s1191 = scalar_select %p1190, %s1189, 63
      %s1192 = smul.addr %s1191, 8
      %s1193 = scalar_lea.vmem %s5, %s1192
      // Predicated region
      $region41: #{_lambda_.26} parent=39 // pred_check
        %p1194 = pneg %p144
      $region42: #{_lambda_.26} parent=39 // pred_check_branch
        %1196 = sbr.rel (%p1194) target = $region44
      $region43: #{_lambda_.26} parent=39 // pred_region
        %s1197 = smul.u32 32, %s16
      $region44: #{_lambda_.26} parent=39 // pred_fallthru
        _
    $region40: #{_lambda_.26} parent=5 // pred_fallthru
      _
    %p1198 = scmp.le.s32.totalorder 2, %s11
    // Predicated region
    $region45: #{_lambda_.26} parent=5 // pred_check
      %p1199 = pneg %p1198
    $region46: #{_lambda_.26} parent=5 // pred_check_branch
      %1201 = sbr.rel (%p1199) target = $region48
    $region47: #{_lambda_.26} parent=5 // pred_region
      %s1202 = ssub.s32 %s11, 2
      // Predicated region
      $region49: #{_lambda_.26} parent=47 // pred_check
        %p1203 = pneg %p150
      $region50: #{_lambda_.26} parent=47 // pred_check_branch
        %1205 = sbr.rel (%p1203) target = $region52
      $region51: #{_lambda_.26} parent=47 // pred_region
        %s1206 = smul.u32 32, %s17
        %p1207 = scmp.lt.s32.totalorder %s1206, 63
        %s1208 = scalar_select %p1207, %s1206, 63
        %s1209 = smul.addr %s1208, 8
        %s1210 = scalar_lea.vmem %s5, %s1209
      $region52: #{_lambda_.26} parent=47 // pred_fallthru
        _
    $region48: #{_lambda_.26} parent=5 // pred_fallthru
      _
  $region6: #{_lambda_.26} parent=0 // loop_footer
    %s15 = sadd.s32 1, %s11
  $region7: #{_lambda_.26} parent=0 // loop_footer_branch
    %10 = sbr.rel target = $region3
  $region8: #{_lambda_.26} parent=0 // loop_exit
    _

// kernel: _lambda_.27
$region0: #{_lambda_.27}
  #allocation0 [shape = 'u32[]', space=smem, size = 0x4, offset = 0x4, fixed_abs, tag = 'smem constant byte address 0x4 - core index']
  #allocation1 [shape = 'u32[144,128]{1,0:T(1,128)}', space=vmem, size = 0x12000, scoped, tag = 'internal scratch']
  %s0 = inlined_call_operand.vmem [shape: bf16[2048,128], index: 0, kind: input, shape index: {}]
  %s1 = inlined_call_operand.vmem [shape: bf16[128,128], index: 1, kind: input, shape index: {}]
  %s2 = inlined_call_operand.vmem [shape: f32[1,128], index: 2, kind: input, shape index: {}]
  %s3 = inlined_call_operand.vmem [shape: f32[2048,128], index: 3, kind: output, shape index: {}]
  %s4 = sld [smem:[#allocation0]]
  $region45: #{_lambda_.27} parent=0
    _
  %s6 = ssub.s32 1, %s4
  %s7 = scalar_select 0, %s6, %s4
  loop: start=0, step=1, limit=6
  $region2: #{_lambda_.27} parent=0 // loop_pre_header
    _
  $region3: #{_lambda_.27} parent=0 // loop_header
    %s9 = sphi 0, %s13
    %p10 = scmp.ge.s32.totalorder %s9, 6
    %s19 = sphi 0, %s21
    %s22 = sphi 0, %s19
    %s23 = sphi 0, %s22
    %s39 = sphi 0, %s23
    %s43 = sphi 0, %s43
    %s45 = sphi 0, %s43
    %s46 = sphi 0, %s45
    %s60 = sphi 0, %s46
    %s64 = sphi 0, %s64
    %s66 = sphi 0, %s64
    %s67 = sphi 0, %s66
    %s81 = sphi 0, %s67
    %s87 = sphi 0, %s89
    %s90 = sphi 0, %s87
    %s91 = sphi 0, %s90
    %s107 = sphi 0, %s91
  $region4: #{_lambda_.27} parent=0 // loop_header_branch
    %12 = sbr.rel (%p10) target = $region8
  $region5: #{_lambda_.27} parent=0 // loop_body
    %s14 = ssub.s32 %s9, 1
    %s15 = ssub.s32 %s9, 2
    %s16 = sadd.s32 %s9, 1
    %s17 = ssub.s32 %s9, %s16
    %p18 = scmp.eq.s32.totalorder %s17, 0
    %s20 = sadd.s32 %s19, 1
    %s21 = scalar_select %p18, %s19, %s20
    %p24 = pneg %p18
    %p25 = scmp.eq.s32.totalorder %s9, 3
    %p26 = por %p24, %p25
    %p27 = scmp.ne.s32.totalorder %s19, %s22
    %p28 = scmp.eq.s32.totalorder %s9, 0
    %p29 = por %p27, %p28
    %p30 = scmp.ne.s32.totalorder %s19, %s22
    %p31 = scmp.eq.s32.totalorder %s14, 3
    %p32 = por %p30, %p31
    %p33 = scmp.ne.s32.totalorder %s22, %s23
    %p34 = scmp.eq.s32.totalorder %s14, 0
    %p35 = por %p33, %p34
    %p36 = scmp.ne.s32.totalorder %s22, %s23
    %p37 = scmp.eq.s32.totalorder %s15, 3
    %p38 = por %p36, %p37
    %p40 = scmp.ne.s32.totalorder %s23, %s39
    %p41 = scmp.eq.s32.totalorder %s15, 0
    %p42 = por %p40, %p41
    %s44 = sadd.s32 %s43, 1
    %p47 = scmp.eq.s32.totalorder %s9, 3
    %p48 = scmp.ne.s32.totalorder %s43, %s45
    %p49 = scmp.eq.s32.totalorder %s9, 0
    %p50 = por %p48, %p49
    %p51 = scmp.ne.s32.totalorder %s43, %s45
    %p52 = scmp.eq.s32.totalorder %s14, 3
    %p53 = por %p51, %p52
    %p54 = scmp.ne.s32.totalorder %s45, %s46
    %p55 = scmp.eq.s32.totalorder %s14, 0
    %p56 = por %p54, %p55
    %p57 = scmp.ne.s32.totalorder %s45, %s46
    %p58 = scmp.eq.s32.totalorder %s15, 3
    %p59 = por %p57, %p58
    %p61 = scmp.ne.s32.totalorder %s46, %s60
    %p62 = scmp.eq.s32.totalorder %s15, 0
    %p63 = por %p61, %p62
    %s65 = sadd.s32 %s64, 1
    %p68 = scmp.eq.s32.totalorder %s9, 3
    %p69 = scmp.ne.s32.totalorder %s64, %s66
    %p70 = scmp.eq.s32.totalorder %s9, 0
    %p71 = por %p69, %p70
    %p72 = scmp.ne.s32.totalorder %s64, %s66
    %p73 = scmp.eq.s32.totalorder %s14, 3
    %p74 = por %p72, %p73
    %p75 = scmp.ne.s32.totalorder %s66, %s67
    %p76 = scmp.eq.s32.totalorder %s14, 0
    %p77 = por %p75, %p76
    %p78 = scmp.ne.s32.totalorder %s66, %s67
    %p79 = scmp.eq.s32.totalorder %s15, 3
    %p80 = por %p78, %p79
    %p82 = scmp.ne.s32.totalorder %s67, %s81
    %p83 = scmp.eq.s32.totalorder %s15, 0
    %p84 = por %p82, %p83
    %s85 = ssub.s32 %s9, %s16
    %p86 = scmp.eq.s32.totalorder %s85, 0
    %s88 = sadd.s32 %s87, 1
    %s89 = scalar_select %p86, %s87, %s88
    %p92 = pneg %p86
    %p93 = scmp.eq.s32.totalorder %s9, 3
    %p94 = por %p92, %p93
    %p95 = scmp.ne.s32.totalorder %s87, %s90
    %p96 = scmp.eq.s32.totalorder %s9, 0
    %p97 = por %p95, %p96
    %p98 = scmp.ne.s32.totalorder %s87, %s90
    %p99 = scmp.eq.s32.totalorder %s14, 3
    %p100 = por %p98, %p99
    %p101 = scmp.ne.s32.totalorder %s90, %s91
    %p102 = scmp.eq.s32.totalorder %s14, 0
    %p103 = por %p101, %p102
    %p104 = scmp.ne.s32.totalorder %s90, %s91
    %p105 = scmp.eq.s32.totalorder %s15, 3
    %p106 = por %p104, %p105
    %p108 = scmp.ne.s32.totalorder %s91, %s107
    %p109 = scmp.eq.s32.totalorder %s15, 0
    %p110 = por %p108, %p109
    %p111 = scmp.le.s32.totalorder 1, %s9
    %p112 = scmp.lt.s32.totalorder %s9, 5
    %p113 = pnand %p111, %p112
    %p114 = pneg %p113
    // Predicated region
    $region9: #{_lambda_.27} parent=5 // pred_check
      _
    $region10: #{_lambda_.27} parent=5 // pred_check_branch
      %116 = sbr.rel (%p113) target = $region12
    $region11: #{_lambda_.27} parent=5 // pred_region
      %s117 = ssub.s32 %s9, 1
      // Predicated region
      $region13: #{_lambda_.27} parent=11 // pred_check
        %p118 = pneg %p56
      $region14: #{_lambda_.27} parent=11 // pred_check_branch
        %120 = sbr.rel (%p118) target = $region16
      $region15: #{_lambda_.27} parent=11 // pred_region
        _
      $region16: #{_lambda_.27} parent=11 // pred_fallthru
        _
      // Predicated region
      $region17: #{_lambda_.27} parent=11 // pred_check
        %p121 = pneg %p77
      $region18: #{_lambda_.27} parent=11 // pred_check_branch
        %123 = sbr.rel (%p121) target = $region20
      $region19: #{_lambda_.27} parent=11 // pred_region
        _
      $region20: #{_lambda_.27} parent=11 // pred_fallthru
        _
    $region12: #{_lambda_.27} parent=5 // pred_fallthru
      _
    %p124 = scmp.lt.s32.totalorder %s9, 4
    // Predicated region
    $region21: #{_lambda_.27} parent=5 // pred_check
      %p125 = pneg %p124
    $region22: #{_lambda_.27} parent=5 // pred_check_branch
      %127 = sbr.rel (%p125) target = $region24
    $region23: #{_lambda_.27} parent=5 // pred_region
      // Predicated region
      $region25: #{_lambda_.27} parent=23 // pred_check
        %p128 = pneg %p29
      $region26: #{_lambda_.27} parent=23 // pred_check_branch
        %130 = sbr.rel (%p128) target = $region28
      $region27: #{_lambda_.27} parent=23 // pred_region
        %s131 = smul.u32 64, %s9
        %p132 = scmp.lt.s32.totalorder %s131, 255
        %s133 = scalar_select %p132, %s131, 255
        %s134 = smul.addr %s133, 4
        %s135 = scalar_lea.vmem %s0, %s134
        %s136 = smul.u32 64, %s9
      $region28: #{_lambda_.27} parent=23 // pred_fallthru
        _
    $region24: #{_lambda_.27} parent=5 // pred_fallthru
      _
    %p137 = scmp.le.s32.totalorder 1, %s9
    %p138 = scmp.lt.s32.totalorder %s9, 5
    %p139 = pnand %p137, %p138
    %p140 = pneg %p139
    // Predicated region
    $region29: #{_lambda_.27} parent=5 // pred_check
      _
    $region30: #{_lambda_.27} parent=5 // pred_check_branch
      %142 = sbr.rel (%p139) target = $region32
    $region31: #{_lambda_.27} parent=5 // pred_region
      %s143 = ssub.s32 %s9, 1
      %s144 = smul.u32 64, %s14
      %p145 = scmp.lt.s32.totalorder %s144, 255
      %s146 = scalar_select %p145, %s144, 255
      %s147 = smul.addr %s146, 4
      %s148 = scalar_lea.vmem %s0, %s147
      %p149 = pneg %p35
      %p150 = pneg %p32
      %p151 = pneg %p56
      %p152 = pneg %p53
      %p153 = pneg %p77
      %p154 = pneg %p74
      %p155 = pneg %p103
      %p156 = pneg %p100
      %s157 = smul.u32 64, %s14
      %p158 = scmp.lt.s32.totalorder %s157, 255
      %s159 = scalar_select %p158, %s157, 255
      %s160 = smul.addr %s159, 8
      %s161 = scalar_lea.vmem %s3, %s160
      %s162 = smul.u32 64, %s14
      %p163 = scmp.lt.s32.totalorder %s162, 255
      %s164 = scalar_select %p163, %s162, 255
      %s165 = smul.addr %s164, 4
      %s166 = scalar_lea.vmem %s0, %s165
      %s167 = smul.u32 64, %s14
      %s168 = smul.u32 64, %s14
      %p169 = scmp.lt.s32.totalorder %s168, 255
      %s170 = scalar_select %p169, %s168, 255
      %s171 = smul.addr %s170, 8
      %s172 = scalar_lea.vmem %s3, %s171
      %s173 = smul.u32 64, %s14
      %v175 = vld [vmem:[%s166] sm:$0xf]
      %v176 = vld [vmem:[%s166 + $0x4] sm:$0xf]
      %v177 = vld [vmem:[%s166 + $0x8] sm:$0xf]
      %v178 = vld [vmem:[%s166 + $0xc] sm:$0xf]
      %v179 = vld [vmem:[%s166 + $0x10] sm:$0xf]
      %v180 = vld [vmem:[%s166 + $0x14] sm:$0xf]
      %v181 = vld [vmem:[%s166 + $0x18] sm:$0xf]
      %v182 = vld [vmem:[%s166 + $0x1c] sm:$0xf]
      %v183 = vld [vmem:[%s166 + $0x20] sm:$0xf]
      %v184 = vld [vmem:[%s166 + $0x24] sm:$0xf]
      %v185 = vld [vmem:[%s166 + $0x28] sm:$0xf]
      %v186 = vld [vmem:[%s166 + $0x2c] sm:$0xf]
      %v187 = vld [vmem:[%s166 + $0x30] sm:$0xf]
      %v188 = vld [vmem:[%s166 + $0x34] sm:$0xf]
      %v189 = vld [vmem:[%s166 + $0x38] sm:$0xf]
      %v190 = vld [vmem:[%s166 + $0x3c] sm:$0xf]
      %v191 = vld [vmem:[%s166 + $0x40] sm:$0xf]
      %v192 = vld [vmem:[%s166 + $0x44] sm:$0xf]
      %v193 = vld [vmem:[%s166 + $0x48] sm:$0xf]
      %v194 = vld [vmem:[%s166 + $0x4c] sm:$0xf]
      %v195 = vld [vmem:[%s166 + $0x50] sm:$0xf]
      %v196 = vld [vmem:[%s166 + $0x54] sm:$0xf]
      %v197 = vld [vmem:[%s166 + $0x58] sm:$0xf]
      %v198 = vld [vmem:[%s166 + $0x5c] sm:$0xf]
      %v199 = vld [vmem:[%s166 + $0x60] sm:$0xf]
      %v200 = vld [vmem:[%s166 + $0x64] sm:$0xf]
      %v201 = vld [vmem:[%s166 + $0x68] sm:$0xf]
      %v202 = vld [vmem:[%s166 + $0x6c] sm:$0xf]
      %v203 = vld [vmem:[%s166 + $0x70] sm:$0xf]
      %v204 = vld [vmem:[%s166 + $0x74] sm:$0xf]
      %v205 = vld [vmem:[%s166 + $0x78] sm:$0xf]
      %v206 = vld [vmem:[%s166 + $0x7c] sm:$0xf]
      %v207 = vld [vmem:[%s166 + $0x80] sm:$0xf]
      %v208 = vld [vmem:[%s166 + $0x84] sm:$0xf]
      %v209 = vld [vmem:[%s166 + $0x88] sm:$0xf]
      %v210 = vld [vmem:[%s166 + $0x8c] sm:$0xf]
      %v211 = vld [vmem:[%s166 + $0x90] sm:$0xf]
      %v212 = vld [vmem:[%s166 + $0x94] sm:$0xf]
      %v213 = vld [vmem:[%s166 + $0x98] sm:$0xf]
      %v214 = vld [vmem:[%s166 + $0x9c] sm:$0xf]
      %v215 = vld [vmem:[%s166 + $0xa0] sm:$0xf]
      %v216 = vld [vmem:[%s166 + $0xa4] sm:$0xf]
      %v217 = vld [vmem:[%s166 + $0xa8] sm:$0xf]
      %v218 = vld [vmem:[%s166 + $0xac] sm:$0xf]
      %v219 = vld [vmem:[%s166 + $0xb0] sm:$0xf]
      %v220 = vld [vmem:[%s166 + $0xb4] sm:$0xf]
      %v221 = vld [vmem:[%s166 + $0xb8] sm:$0xf]
      %v222 = vld [vmem:[%s166 + $0xbc] sm:$0xf]
      %v223 = vld [vmem:[%s166 + $0xc0] sm:$0xf]
      %v224 = vld [vmem:[%s166 + $0xc4] sm:$0xf]
      %v225 = vld [vmem:[%s166 + $0xc8] sm:$0xf]
      %v226 = vld [vmem:[%s166 + $0xcc] sm:$0xf]
      %v227 = vld [vmem:[%s166 + $0xd0] sm:$0xf]
      %v228 = vld [vmem:[%s166 + $0xd4] sm:$0xf]
      %v229 = vld [vmem:[%s166 + $0xd8] sm:$0xf]
      %v230 = vld [vmem:[%s166 + $0xdc] sm:$0xf]
      %v231 = vld [vmem:[%s166 + $0xe0] sm:$0xf]
      %v232 = vld [vmem:[%s166 + $0xe4] sm:$0xf]
      %v233 = vld [vmem:[%s166 + $0xe8] sm:$0xf]
      %v234 = vld [vmem:[%s166 + $0xec] sm:$0xf]
      %v235 = vld [vmem:[%s166 + $0xf0] sm:$0xf]
      %v236 = vld [vmem:[%s166 + $0xf4] sm:$0xf]
      %v237 = vld [vmem:[%s166 + $0xf8] sm:$0xf]
      %v238 = vld [vmem:[%s166 + $0xfc] sm:$0xf]
      %v239 = vld [vmem:[%s1] sm:$0xf]
      %v240 = vld [vmem:[%s1 + $0x4] sm:$0xf]
      %v241 = vld [vmem:[%s1 + $0x8] sm:$0xf]
      %v242 = vld [vmem:[%s1 + $0xc] sm:$0xf]
      %v243 = vld [vmem:[%s1 + $0x10] sm:$0xf]
      %v244 = vld [vmem:[%s1 + $0x14] sm:$0xf]
      %v245 = vld [vmem:[%s1 + $0x18] sm:$0xf]
      %v246 = vld [vmem:[%s1 + $0x1c] sm:$0xf]
      %v247 = vld [vmem:[%s1 + $0x20] sm:$0xf]
      %v248 = vld [vmem:[%s1 + $0x24] sm:$0xf]
      %v249 = vld [vmem:[%s1 + $0x28] sm:$0xf]
      %v250 = vld [vmem:[%s1 + $0x2c] sm:$0xf]
      %v251 = vld [vmem:[%s1 + $0x30] sm:$0xf]
      %v252 = vld [vmem:[%s1 + $0x34] sm:$0xf]
      %v253 = vld [vmem:[%s1 + $0x38] sm:$0xf]
      %v254 = vld [vmem:[%s1 + $0x3c] sm:$0xf]
      %v255 = vld [vmem:[%s2] sm:$0x1]
      %v257 = vlaneseq
      %v258 = vshrl.u32 %v257, 7
      %v259 = vsub.s32 0, %v258
      %v260 = vrot.slane %v255, %v259
      %v326 = vunpack.c.l.b16 %v175
      %v327 = vunpack.c.l.b16 %v176
      %v328 = vunpack.c.l.b16 %v177
      %v329 = vunpack.c.l.b16 %v178
      %v330 = vunpack.c.l.b16 %v179
      %v331 = vunpack.c.l.b16 %v180
      %v332 = vunpack.c.l.b16 %v181
      %v333 = vunpack.c.l.b16 %v182
      %v334 = vunpack.c.l.b16 %v183
      %v335 = vunpack.c.l.b16 %v184
      %v336 = vunpack.c.l.b16 %v185
      %v337 = vunpack.c.l.b16 %v186
      %v338 = vunpack.c.l.b16 %v187
      %v339 = vunpack.c.l.b16 %v188
      %v340 = vunpack.c.l.b16 %v189
      %v341 = vunpack.c.l.b16 %v190
      %v342 = vunpack.c.l.b16 %v191
      %v343 = vunpack.c.l.b16 %v192
      %v344 = vunpack.c.l.b16 %v193
      %v345 = vunpack.c.l.b16 %v194
      %v346 = vunpack.c.l.b16 %v195
      %v347 = vunpack.c.l.b16 %v196
      %v348 = vunpack.c.l.b16 %v197
      %v349 = vunpack.c.l.b16 %v198
      %v350 = vunpack.c.l.b16 %v199
      %v351 = vunpack.c.l.b16 %v200
      %v352 = vunpack.c.l.b16 %v201
      %v353 = vunpack.c.l.b16 %v202
      %v354 = vunpack.c.l.b16 %v203
      %v355 = vunpack.c.l.b16 %v204
      %v356 = vunpack.c.l.b16 %v205
      %v357 = vunpack.c.l.b16 %v206
      %v358 = vunpack.c.l.b16 %v207
      %v359 = vunpack.c.l.b16 %v208
      %v360 = vunpack.c.l.b16 %v209
      %v361 = vunpack.c.l.b16 %v210
      %v362 = vunpack.c.l.b16 %v211
      %v363 = vunpack.c.l.b16 %v212
      %v364 = vunpack.c.l.b16 %v213
      %v365 = vunpack.c.l.b16 %v214
      %v366 = vunpack.c.l.b16 %v215
      %v367 = vunpack.c.l.b16 %v216
      %v368 = vunpack.c.l.b16 %v217
      %v369 = vunpack.c.l.b16 %v218
      %v370 = vunpack.c.l.b16 %v219
      %v371 = vunpack.c.l.b16 %v220
      %v372 = vunpack.c.l.b16 %v221
      %v373 = vunpack.c.l.b16 %v222
      %v374 = vunpack.c.l.b16 %v223
      %v375 = vunpack.c.l.b16 %v224
      %v376 = vunpack.c.l.b16 %v225
      %v377 = vunpack.c.l.b16 %v226
      %v378 = vunpack.c.l.b16 %v227
      %v379 = vunpack.c.l.b16 %v228
      %v380 = vunpack.c.l.b16 %v229
      %v381 = vunpack.c.l.b16 %v230
      %v382 = vunpack.c.l.b16 %v231
      %v383 = vunpack.c.l.b16 %v232
      %v384 = vunpack.c.l.b16 %v233
      %v385 = vunpack.c.l.b16 %v234
      %v386 = vunpack.c.l.b16 %v235
      %v387 = vunpack.c.l.b16 %v236
      %v388 = vunpack.c.l.b16 %v237
      %v389 = vunpack.c.l.b16 %v238
      %v390 = vpack.c.b16 %v327, %v326
      %v391 = vpack.c.b16 %v329, %v328
      %v392 = vpack.c.b16 %v331, %v330
      %v393 = vpack.c.b16 %v333, %v332
      %v394 = vpack.c.b16 %v335, %v334
      %v395 = vpack.c.b16 %v337, %v336
      %v396 = vpack.c.b16 %v339, %v338
      %v397 = vpack.c.b16 %v341, %v340
      %v398 = vpack.c.b16 %v343, %v342
      %v399 = vpack.c.b16 %v345, %v344
      %v400 = vpack.c.b16 %v347, %v346
      %v401 = vpack.c.b16 %v349, %v348
      %v402 = vpack.c.b16 %v351, %v350
      %v403 = vpack.c.b16 %v353, %v352
      %v404 = vpack.c.b16 %v355, %v354
      %v405 = vpack.c.b16 %v357, %v356
      %v406 = vpack.c.b16 %v359, %v358
      %v407 = vpack.c.b16 %v361, %v360
      %v408 = vpack.c.b16 %v363, %v362
      %v409 = vpack.c.b16 %v365, %v364
      %v410 = vpack.c.b16 %v367, %v366
      %v411 = vpack.c.b16 %v369, %v368
      %v412 = vpack.c.b16 %v371, %v370
      %v413 = vpack.c.b16 %v373, %v372
      %v414 = vpack.c.b16 %v375, %v374
      %v415 = vpack.c.b16 %v377, %v376
      %v416 = vpack.c.b16 %v379, %v378
      %v417 = vpack.c.b16 %v381, %v380
      %v418 = vpack.c.b16 %v383, %v382
      %v419 = vpack.c.b16 %v385, %v384
      %v420 = vpack.c.b16 %v387, %v386
      %v421 = vpack.c.b16 %v389, %v388
      %v470 = vunpack.c.l.b16 %v239
      %v471 = vunpack.c.l.b16 %v240
      %v472 = vunpack.c.l.b16 %v241
      %v473 = vunpack.c.l.b16 %v242
      %v474 = vunpack.c.l.b16 %v243
      %v475 = vunpack.c.l.b16 %v244
      %v476 = vunpack.c.l.b16 %v245
      %v477 = vunpack.c.l.b16 %v246
      %v478 = vunpack.c.l.b16 %v247
      %v479 = vunpack.c.l.b16 %v248
      %v480 = vunpack.c.l.b16 %v249
      %v481 = vunpack.c.l.b16 %v250
      %v482 = vunpack.c.l.b16 %v251
      %v483 = vunpack.c.l.b16 %v252
      %v484 = vunpack.c.l.b16 %v253
      %v485 = vunpack.c.l.b16 %v254
      %v486 = vpack.c.b16 %v471, %v470
      %v487 = vpack.c.b16 %v473, %v472
      %v488 = vpack.c.b16 %v475, %v474
      %v489 = vpack.c.b16 %v477, %v476
      %v490 = vpack.c.b16 %v479, %v478
      %v491 = vpack.c.b16 %v481, %v480
      %v492 = vpack.c.b16 %v483, %v482
      %v493 = vpack.c.b16 %v485, %v484
      %502 = vmatprep.subr.bf16.mxu0 0
      %503 = vmatpush1.bf16.msra.mxu0 %v493
      %504 = vmatprep.subr.bf16.mxu0 0
      %505 = vmatpush1.bf16.msra.mxu0 %v492
      %506 = vmatprep.subr.bf16.mxu0 0
      %507 = vmatpush1.bf16.msra.mxu0 %v491
      %508 = vmatprep.subr.bf16.mxu0 0
      %509 = vmatpush1.bf16.msra.mxu0 %v490
      %510 = vmatprep.subr.bf16.mxu0 0
      %511 = vmatpush1.bf16.msra.mxu0 %v489
      %512 = vmatprep.subr.bf16.mxu0 0
      %513 = vmatpush1.bf16.msra.mxu0 %v488
      %514 = vmatprep.subr.bf16.mxu0 0
      %515 = vmatpush1.bf16.msra.mxu0 %v487
      %516 = vmatprep.subr.bf16.mxu0 0
      %517 = vmatpush1.bf16.msra.mxu0 %v486
      %518 = vmatprep.subr.bf16.mxu0 0
      %519 = vmatpush2.bf16.msra.mxu0 0
      %520 = vmatprep.subr.bf16.mxu0 0
      %521 = vmatpush2.bf16.msra.mxu0 0
      %522 = vmatprep.subr.bf16.mxu0 0
      %523 = vmatpush2.bf16.msra.mxu0 0
      %524 = vmatprep.subr.bf16.mxu0 0
      %525 = vmatpush2.bf16.msra.mxu0 0
      %526 = vmatprep.subr.bf16.mxu0 0
      %527 = vmatpush2.bf16.msra.mxu0 0
      %528 = vmatprep.subr.bf16.mxu0 0
      %529 = vmatpush2.bf16.msra.mxu0 0
      %530 = vmatprep.subr.bf16.mxu0 0
      %531 = vmatpush2.bf16.msra.mxu0 0
      %532 = vmatprep.subr.bf16.mxu0 0
      %533 = vmatpush2.bf16.msra.mxu0 0
      %534 = vmatprep.mubr.bf16.mxu0 0
      %535 = vmatmul.mubr.bf16.gmra.mxu0 %v390
      %v536 = vpop.f32.mrf.mxu0
      %v537 = vadd.f32 %v260, %v536
      %v538 = vpop.f32.mrf.mxu0
      %v539 = vpop.f32.mrf.mxu0
      %v540 = vadd.f32 %v260, %v539
      %v541 = vpop.f32.mrf.mxu0
      %542 = vmatprep.mubr.bf16.mxu0 0
      %543 = vmatmul.mubr.bf16.gmra.mxu0 %v391
      %v544 = vpop.f32.mrf.mxu0
      %v545 = vadd.f32 %v260, %v544
      %v546 = vpop.f32.mrf.mxu0
      %v547 = vpop.f32.mrf.mxu0
      %v548 = vadd.f32 %v260, %v547
      %v549 = vpop.f32.mrf.mxu0
      %550 = vmatprep.mubr.bf16.mxu0 0
      %551 = vmatmul.mubr.bf16.gmra.mxu0 %v392
      %v552 = vpop.f32.mrf.mxu0
      %v553 = vadd.f32 %v260, %v552
      %v554 = vpop.f32.mrf.mxu0
      %v555 = vpop.f32.mrf.mxu0
      %v556 = vadd.f32 %v260, %v555
      %v557 = vpop.f32.mrf.mxu0
      %558 = vmatprep.mubr.bf16.mxu0 0
      %559 = vmatmul.mubr.bf16.gmra.mxu0 %v393
      %v560 = vpop.f32.mrf.mxu0
      %v561 = vadd.f32 %v260, %v560
      %v562 = vpop.f32.mrf.mxu0
      %v563 = vpop.f32.mrf.mxu0
      %v564 = vadd.f32 %v260, %v563
      %v565 = vpop.f32.mrf.mxu0
      %566 = vmatprep.mubr.bf16.mxu0 0
      %567 = vmatmul.mubr.bf16.gmra.mxu0 %v394
      %v568 = vpop.f32.mrf.mxu0
      %v569 = vadd.f32 %v260, %v568
      %v570 = vpop.f32.mrf.mxu0
      %v571 = vpop.f32.mrf.mxu0
      %v572 = vadd.f32 %v260, %v571
      %v573 = vpop.f32.mrf.mxu0
      %574 = vmatprep.mubr.bf16.mxu0 0
      %575 = vmatmul.mubr.bf16.gmra.mxu0 %v395
      %v576 = vpop.f32.mrf.mxu0
      %v577 = vadd.f32 %v260, %v576
      %v578 = vpop.f32.mrf.mxu0
      %v579 = vpop.f32.mrf.mxu0
      %v580 = vadd.f32 %v260, %v579
      %v581 = vpop.f32.mrf.mxu0
      %582 = vmatprep.mubr.bf16.mxu0 0
      %583 = vmatmul.mubr.bf16.gmra.mxu0 %v396
      %v584 = vpop.f32.mrf.mxu0
      %v585 = vadd.f32 %v260, %v584
      %v586 = vpop.f32.mrf.mxu0
      %v587 = vpop.f32.mrf.mxu0
      %v588 = vadd.f32 %v260, %v587
      %v589 = vpop.f32.mrf.mxu0
      %590 = vmatprep.mubr.bf16.mxu0 0
      %591 = vmatmul.mubr.bf16.gmra.mxu0 %v397
      %v592 = vpop.f32.mrf.mxu0
      %v593 = vadd.f32 %v260, %v592
      %v594 = vpop.f32.mrf.mxu0
      %v595 = vpop.f32.mrf.mxu0
      %v596 = vadd.f32 %v260, %v595
      %v597 = vpop.f32.mrf.mxu0
      %598 = vmatprep.mubr.bf16.mxu0 0
      %599 = vmatmul.mubr.bf16.gmra.mxu0 %v398
      %v600 = vpop.f32.mrf.mxu0
      %v601 = vadd.f32 %v260, %v600
      %v602 = vpop.f32.mrf.mxu0
      %v603 = vpop.f32.mrf.mxu0
      %v604 = vadd.f32 %v260, %v603
      %v605 = vpop.f32.mrf.mxu0
      %606 = vmatprep.mubr.bf16.mxu0 0
      %607 = vmatmul.mubr.bf16.gmra.mxu0 %v399
      %v608 = vpop.f32.mrf.mxu0
      %v609 = vadd.f32 %v260, %v608
      %v610 = vpop.f32.mrf.mxu0
      %v611 = vpop.f32.mrf.mxu0
      %v612 = vadd.f32 %v260, %v611
      %v613 = vpop.f32.mrf.mxu0
      %614 = vmatprep.mubr.bf16.mxu0 0
      %615 = vmatmul.mubr.bf16.gmra.mxu0 %v400
      %v616 = vpop.f32.mrf.mxu0
      %v617 = vadd.f32 %v260, %v616
      %v618 = vpop.f32.mrf.mxu0
      %v619 = vpop.f32.mrf.mxu0
      %v620 = vadd.f32 %v260, %v619
      %v621 = vpop.f32.mrf.mxu0
      %622 = vmatprep.mubr.bf16.mxu0 0
      %623 = vmatmul.mubr.bf16.gmra.mxu0 %v401
      %v624 = vpop.f32.mrf.mxu0
      %v625 = vadd.f32 %v260, %v624
      %v626 = vpop.f32.mrf.mxu0
      %v627 = vpop.f32.mrf.mxu0
      %v628 = vadd.f32 %v260, %v627
      %v629 = vpop.f32.mrf.mxu0
      %630 = vmatprep.mubr.bf16.mxu0 0
      %631 = vmatmul.mubr.bf16.gmra.mxu0 %v402
      %v632 = vpop.f32.mrf.mxu0
      %v633 = vadd.f32 %v260, %v632
      %v634 = vpop.f32.mrf.mxu0
      %v635 = vpop.f32.mrf.mxu0
      %v636 = vadd.f32 %v260, %v635
      %v637 = vpop.f32.mrf.mxu0
      %638 = vmatprep.mubr.bf16.mxu0 0
      %639 = vmatmul.mubr.bf16.gmra.mxu0 %v403
      %v640 = vpop.f32.mrf.mxu0
      %v641 = vadd.f32 %v260, %v640
      %v642 = vpop.f32.mrf.mxu0
      %v643 = vpop.f32.mrf.mxu0
      %v644 = vadd.f32 %v260, %v643
      %v645 = vpop.f32.mrf.mxu0
      %646 = vmatprep.mubr.bf16.mxu0 0
      %647 = vmatmul.mubr.bf16.gmra.mxu0 %v404
      %v648 = vpop.f32.mrf.mxu0
      %v649 = vadd.f32 %v260, %v648
      %v650 = vpop.f32.mrf.mxu0
      %v651 = vpop.f32.mrf.mxu0
      %v652 = vadd.f32 %v260, %v651
      %v653 = vpop.f32.mrf.mxu0
      %654 = vmatprep.mubr.bf16.mxu0 0
      %655 = vmatmul.mubr.bf16.gmra.mxu0 %v405
      %v656 = vpop.f32.mrf.mxu0
      %v657 = vadd.f32 %v260, %v656
      %v658 = vpop.f32.mrf.mxu0
      %v659 = vpop.f32.mrf.mxu0
      %v660 = vadd.f32 %v260, %v659
      %v661 = vpop.f32.mrf.mxu0
      %662 = vmatprep.mubr.bf16.mxu0 0
      %663 = vmatmul.mubr.bf16.gmra.mxu0 %v406
      %v664 = vpop.f32.mrf.mxu0
      %v665 = vadd.f32 %v260, %v664
      %v666 = vpop.f32.mrf.mxu0
      %v667 = vpop.f32.mrf.mxu0
      %v668 = vadd.f32 %v260, %v667
      %v669 = vpop.f32.mrf.mxu0
      %670 = vmatprep.mubr.bf16.mxu0 0
      %671 = vmatmul.mubr.bf16.gmra.mxu0 %v407
      %v672 = vpop.f32.mrf.mxu0
      %v673 = vadd.f32 %v260, %v672
      %v674 = vpop.f32.mrf.mxu0
      %v675 = vpop.f32.mrf.mxu0
      %v676 = vadd.f32 %v260, %v675
      %v677 = vpop.f32.mrf.mxu0
      %678 = vmatprep.mubr.bf16.mxu0 0
      %679 = vmatmul.mubr.bf16.gmra.mxu0 %v408
      %v680 = vpop.f32.mrf.mxu0
      %v681 = vadd.f32 %v260, %v680
      %v682 = vpop.f32.mrf.mxu0
      %v683 = vpop.f32.mrf.mxu0
      %v684 = vadd.f32 %v260, %v683
      %v685 = vpop.f32.mrf.mxu0
      %686 = vmatprep.mubr.bf16.mxu0 0
      %687 = vmatmul.mubr.bf16.gmra.mxu0 %v409
      %v688 = vpop.f32.mrf.mxu0
      %v689 = vadd.f32 %v260, %v688
      %v690 = vpop.f32.mrf.mxu0
      %v691 = vpop.f32.mrf.mxu0
      %v692 = vadd.f32 %v260, %v691
      %v693 = vpop.f32.mrf.mxu0
      %694 = vmatprep.mubr.bf16.mxu0 0
      %695 = vmatmul.mubr.bf16.gmra.mxu0 %v410
      %v696 = vpop.f32.mrf.mxu0
      %v697 = vadd.f32 %v260, %v696
      %v698 = vpop.f32.mrf.mxu0
      %v699 = vpop.f32.mrf.mxu0
      %v700 = vadd.f32 %v260, %v699
      %v701 = vpop.f32.mrf.mxu0
      %702 = vmatprep.mubr.bf16.mxu0 0
      %703 = vmatmul.mubr.bf16.gmra.mxu0 %v411
      %v704 = vpop.f32.mrf.mxu0
      %v705 = vadd.f32 %v260, %v704
      %v706 = vpop.f32.mrf.mxu0
      %v707 = vpop.f32.mrf.mxu0
      %v708 = vadd.f32 %v260, %v707
      %v709 = vpop.f32.mrf.mxu0
      %710 = vmatprep.mubr.bf16.mxu0 0
      %711 = vmatmul.mubr.bf16.gmra.mxu0 %v412
      %v712 = vpop.f32.mrf.mxu0
      %v713 = vadd.f32 %v260, %v712
      %v714 = vpop.f32.mrf.mxu0
      %v715 = vpop.f32.mrf.mxu0
      %v716 = vadd.f32 %v260, %v715
      %v717 = vpop.f32.mrf.mxu0
      %718 = vmatprep.mubr.bf16.mxu0 0
      %719 = vmatmul.mubr.bf16.gmra.mxu0 %v413
      %v720 = vpop.f32.mrf.mxu0
      %v721 = vadd.f32 %v260, %v720
      %v722 = vpop.f32.mrf.mxu0
      %v723 = vpop.f32.mrf.mxu0
      %v724 = vadd.f32 %v260, %v723
      %v725 = vpop.f32.mrf.mxu0
      %726 = vmatprep.mubr.bf16.mxu0 0
      %727 = vmatmul.mubr.bf16.gmra.mxu0 %v414
      %v728 = vpop.f32.mrf.mxu0
      %v729 = vadd.f32 %v260, %v728
      %v730 = vpop.f32.mrf.mxu0
      %v731 = vpop.f32.mrf.mxu0
      %v732 = vadd.f32 %v260, %v731
      %v733 = vpop.f32.mrf.mxu0
      %734 = vmatprep.mubr.bf16.mxu0 0
      %735 = vmatmul.mubr.bf16.gmra.mxu0 %v415
      %v736 = vpop.f32.mrf.mxu0
      %v737 = vadd.f32 %v260, %v736
      %v738 = vpop.f32.mrf.mxu0
      %v739 = vpop.f32.mrf.mxu0
      %v740 = vadd.f32 %v260, %v739
      %v741 = vpop.f32.mrf.mxu0
      %742 = vmatprep.mubr.bf16.mxu0 0
      %743 = vmatmul.mubr.bf16.gmra.mxu0 %v416
      %v744 = vpop.f32.mrf.mxu0
      %v745 = vadd.f32 %v260, %v744
      %v746 = vpop.f32.mrf.mxu0
      %v747 = vpop.f32.mrf.mxu0
      %v748 = vadd.f32 %v260, %v747
      %v749 = vpop.f32.mrf.mxu0
      %750 = vmatprep.mubr.bf16.mxu0 0
      %751 = vmatmul.mubr.bf16.gmra.mxu0 %v417
      %v752 = vpop.f32.mrf.mxu0
      %v753 = vadd.f32 %v260, %v752
      %v754 = vpop.f32.mrf.mxu0
      %v755 = vpop.f32.mrf.mxu0
      %v756 = vadd.f32 %v260, %v755
      %v757 = vpop.f32.mrf.mxu0
      %758 = vmatprep.mubr.bf16.mxu0 0
      %759 = vmatmul.mubr.bf16.gmra.mxu0 %v418
      %v760 = vpop.f32.mrf.mxu0
      %v761 = vadd.f32 %v260, %v760
      %v762 = vpop.f32.mrf.mxu0
      %v763 = vpop.f32.mrf.mxu0
      %v764 = vadd.f32 %v260, %v763
      %v765 = vpop.f32.mrf.mxu0
      %766 = vmatprep.mubr.bf16.mxu0 0
      %767 = vmatmul.mubr.bf16.gmra.mxu0 %v419
      %v768 = vpop.f32.mrf.mxu0
      %v769 = vadd.f32 %v260, %v768
      %v770 = vpop.f32.mrf.mxu0
      %v771 = vpop.f32.mrf.mxu0
      %v772 = vadd.f32 %v260, %v771
      %v773 = vpop.f32.mrf.mxu0
      %774 = vmatprep.mubr.bf16.mxu0 0
      %775 = vmatmul.mubr.bf16.gmra.mxu0 %v420
      %v776 = vpop.f32.mrf.mxu0
      %v777 = vadd.f32 %v260, %v776
      %v778 = vpop.f32.mrf.mxu0
      %v779 = vpop.f32.mrf.mxu0
      %v780 = vadd.f32 %v260, %v779
      %v781 = vpop.f32.mrf.mxu0
      %782 = vmatprep.mubr.bf16.mxu0 0
      %783 = vmatmul.mubr.bf16.gmra.mxu0 %v421
      %v784 = vpop.f32.mrf.mxu0
      %v785 = vadd.f32 %v260, %v784
      %v786 = vpop.f32.mrf.mxu0
      %v787 = vpop.f32.mrf.mxu0
      %v788 = vadd.f32 %v260, %v787
      %v789 = vpop.f32.mrf.mxu0
      %790 = vdwg.mxu0
      %791 = vst [vmem:[%s172] sm:$0xff] %v537
      %792 = vst [vmem:[%s172 + $0x8] sm:$0xff] %v540
      %793 = vst [vmem:[%s172 + $0x10] sm:$0xff] %v545
      %794 = vst [vmem:[%s172 + $0x18] sm:$0xff] %v548
      %795 = vst [vmem:[%s172 + $0x20] sm:$0xff] %v553
      %796 = vst [vmem:[%s172 + $0x28] sm:$0xff] %v556
      %797 = vst [vmem:[%s172 + $0x30] sm:$0xff] %v561
      %798 = vst [vmem:[%s172 + $0x38] sm:$0xff] %v564
      %799 = vst [vmem:[%s172 + $0x40] sm:$0xff] %v569
      %800 = vst [vmem:[%s172 + $0x48] sm:$0xff] %v572
      %801 = vst [vmem:[%s172 + $0x50] sm:$0xff] %v577
      %802 = vst [vmem:[%s172 + $0x58] sm:$0xff] %v580
      %803 = vst [vmem:[%s172 + $0x60] sm:$0xff] %v585
      %804 = vst [vmem:[%s172 + $0x68] sm:$0xff] %v588
      %805 = vst [vmem:[%s172 + $0x70] sm:$0xff] %v593
      %806 = vst [vmem:[%s172 + $0x78] sm:$0xff] %v596
      %807 = vst [vmem:[%s172 + $0x80] sm:$0xff] %v601
      %808 = vst [vmem:[%s172 + $0x88] sm:$0xff] %v604
      %809 = vst [vmem:[%s172 + $0x90] sm:$0xff] %v609
      %810 = vst [vmem:[%s172 + $0x98] sm:$0xff] %v612
      %811 = vst [vmem:[%s172 + $0xa0] sm:$0xff] %v617
      %812 = vst [vmem:[%s172 + $0xa8] sm:$0xff] %v620
      %813 = vst [vmem:[%s172 + $0xb0] sm:$0xff] %v625
      %814 = vst [vmem:[%s172 + $0xb8] sm:$0xff] %v628
      %815 = vst [vmem:[%s172 + $0xc0] sm:$0xff] %v633
      %816 = vst [vmem:[%s172 + $0xc8] sm:$0xff] %v636
      %817 = vst [vmem:[%s172 + $0xd0] sm:$0xff] %v641
      %818 = vst [vmem:[%s172 + $0xd8] sm:$0xff] %v644
      %819 = vst [vmem:[%s172 + $0xe0] sm:$0xff] %v649
      %820 = vst [vmem:[%s172 + $0xe8] sm:$0xff] %v652
      %821 = vst [vmem:[%s172 + $0xf0] sm:$0xff] %v657
      %822 = vst [vmem:[%s172 + $0xf8] sm:$0xff] %v660
      %823 = vst [vmem:[%s172 + $0x100] sm:$0xff] %v665
      %824 = vst [vmem:[%s172 + $0x108] sm:$0xff] %v668
      %825 = vst [vmem:[%s172 + $0x110] sm:$0xff] %v673
      %826 = vst [vmem:[%s172 + $0x118] sm:$0xff] %v676
      %827 = vst [vmem:[%s172 + $0x120] sm:$0xff] %v681
      %828 = vst [vmem:[%s172 + $0x128] sm:$0xff] %v684
      %829 = vst [vmem:[%s172 + $0x130] sm:$0xff] %v689
      %830 = vst [vmem:[%s172 + $0x138] sm:$0xff] %v692
      %831 = vst [vmem:[%s172 + $0x140] sm:$0xff] %v697
      %832 = vst [vmem:[%s172 + $0x148] sm:$0xff] %v700
      %833 = vst [vmem:[%s172 + $0x150] sm:$0xff] %v705
      %834 = vst [vmem:[%s172 + $0x158] sm:$0xff] %v708
      %835 = vst [vmem:[%s172 + $0x160] sm:$0xff] %v713
      %836 = vst [vmem:[%s172 + $0x168] sm:$0xff] %v716
      %837 = vst [vmem:[%s172 + $0x170] sm:$0xff] %v721
      %838 = vst [vmem:[%s172 + $0x178] sm:$0xff] %v724
      %839 = vst [vmem:[%s172 + $0x180] sm:$0xff] %v729
      %840 = vst [vmem:[%s172 + $0x188] sm:$0xff] %v732
      %841 = vst [vmem:[%s172 + $0x190] sm:$0xff] %v737
      %842 = vst [vmem:[%s172 + $0x198] sm:$0xff] %v740
      %843 = vst [vmem:[%s172 + $0x1a0] sm:$0xff] %v745
      %844 = vst [vmem:[%s172 + $0x1a8] sm:$0xff] %v748
      %845 = vst [vmem:[%s172 + $0x1b0] sm:$0xff] %v753
      %846 = vst [vmem:[%s172 + $0x1b8] sm:$0xff] %v756
      %847 = vst [vmem:[%s172 + $0x1c0] sm:$0xff] %v761
      %848 = vst [vmem:[%s172 + $0x1c8] sm:$0xff] %v764
      %849 = vst [vmem:[%s172 + $0x1d0] sm:$0xff] %v769
      %850 = vst [vmem:[%s172 + $0x1d8] sm:$0xff] %v772
      %851 = vst [vmem:[%s172 + $0x1e0] sm:$0xff] %v777
      %852 = vst [vmem:[%s172 + $0x1e8] sm:$0xff] %v780
      %853 = vst [vmem:[%s172 + $0x1f0] sm:$0xff] %v785
      %854 = vst [vmem:[%s172 + $0x1f8] sm:$0xff] %v788
      %s855 = smul.u32 64, %s14
      %p856 = scmp.lt.s32.totalorder %s855, 255
      %s857 = scalar_select %p856, %s855, 255
      %s858 = smul.addr %s857, 8
      %s859 = scalar_lea.vmem %s3, %s858
      // Predicated region
      $region33: #{_lambda_.27} parent=31 // pred_check
        %p860 = pneg %p100
      $region34: #{_lambda_.27} parent=31 // pred_check_branch
        %862 = sbr.rel (%p860) target = $region36
      $region35: #{_lambda_.27} parent=31 // pred_region
        %s863 = smul.u32 64, %s14
      $region36: #{_lambda_.27} parent=31 // pred_fallthru
        _
    $region32: #{_lambda_.27} parent=5 // pred_fallthru
      _
    %p864 = scmp.le.s32.totalorder 2, %s9
    // Predicated region
    $region37: #{_lambda_.27} parent=5 // pred_check
      %p865 = pneg %p864
    $region38: #{_lambda_.27} parent=5 // pred_check_branch
      %867 = sbr.rel (%p865) target = $region40
    $region39: #{_lambda_.27} parent=5 // pred_region
      %s868 = ssub.s32 %s9, 2
      // Predicated region
      $region41: #{_lambda_.27} parent=39 // pred_check
        %p869 = pneg %p106
      $region42: #{_lambda_.27} parent=39 // pred_check_branch
        %871 = sbr.rel (%p869) target = $region44
      $region43: #{_lambda_.27} parent=39 // pred_region
        %s872 = smul.u32 64, %s15
        %p873 = scmp.lt.s32.totalorder %s872, 255
        %s874 = scalar_select %p873, %s872, 255
        %s875 = smul.addr %s874, 8
        %s876 = scalar_lea.vmem %s3, %s875
      $region44: #{_lambda_.27} parent=39 // pred_fallthru
        _
    $region40: #{_lambda_.27} parent=5 // pred_fallthru
      _
  $region6: #{_lambda_.27} parent=0 // loop_footer
    %s13 = sadd.s32 1, %s9
  $region7: #{_lambda_.27} parent=0 // loop_footer_branch
    %8 = sbr.rel target = $region3
  $region8: #{_lambda_.27} parent=0 // loop_exit
    _

</llo_original>
